<compile_context>
chip_gen: v6e
topology: v6e:2x2x1
jax: 0.10.0
libtpu: 0.0.40
codegen_flags: <defaults>
</compile_context>

<pallas_src>
import numpy as np
import jax
import jax.numpy as jnp
from jax import lax
from jax.experimental import pallas as pl
from jax.experimental.pallas import tpu as pltpu


# ----------------------------------------------------------------------------
# Host-side construction of the structured matrices (deterministic, numpy).
# ----------------------------------------------------------------------------
def conv_band(w, w_in):
    """w: (Cout, Cin, 3, 3) -> A: (3, w_in*Cin, w_out*Cout) banded matrices.

    Conv output row r = sum_dy  x_row[r+dy] @ A[dy], where x_row is the
    (W, Cin) input row flattened channel-fastest."""
    w = np.asarray(w, np.float32)
    cout, cin, kh, kw = w.shape
    w_out = w_in - kw + 1
    A = np.zeros((kh, w_in * cin, w_out * cout), np.float32)
    for dy in range(kh):
        for dx in range(kw):
            blk = w[:, :, dy, dx].T  # (Cin, Cout)
            for wo in range(w_out):
                wi = wo + dx
                A[dy, wi * cin:(wi + 1) * cin, wo * cout:(wo + 1) * cout] = blk
    return A


def pool_cols_even(w_in, c):
    """(w_in*c, (w_in//2)*c) even-column selector (pairs handled by shift+max)."""
    w_out = w_in // 2
    S = np.zeros((w_in * c, w_out * c), np.float32)
    for wo in range(w_out):
        w = 2 * wo
        for ch in range(c):
            S[w * c + ch, wo * c + ch] = 1.0
    return S


def rowpool_plus_adapt_rows(bb):
    """Block-diagonal (bb*4, bb*14) selector: per 14-row image block, picks the
    even rows 2i / 2i+2 (which hold the 2x2 row-pool maxima after shift+max)
    and averages them with weight 0.5 -> the 5->4 adaptive row pool is fused."""
    P = np.zeros((4, 14), np.float32)
    for i in range(4):
        P[i, 2 * i] = 0.5
        P[i, 2 * i + 2] = 0.5
    return np.kron(np.eye(bb, dtype=np.float32), P)


def adapt_cols(c):
    """(5*c, 4*c) adaptive-avg-pool 5->4 column operator (windows [i, i+2), 0.5)."""
    P = np.zeros((5 * c, 4 * c), np.float32)
    for wo in range(4):
        for w in (wo, wo + 1):
            for ch in range(c):
                P[w * c + ch, wo * c + ch] = 0.5
    return P


# ----------------------------------------------------------------------------
# Pallas kernel: bb stacked images per grid step, everything in VMEM.
# ----------------------------------------------------------------------------
def backbone_kernel(x_ref, a1_ref, b1_ref, sw1_ref, a2_ref, b2_ref, sw2_ref,
                    phs_ref, pw_ref, out_ref):
    bf16, f32 = jnp.bfloat16, jnp.float32

    def mm(a, b):
        # bf16 x bf16 MXU matmul with f32 accumulation (single pass).
        return jnp.dot(a, b, preferred_element_type=f32)

    def shift_rows(x, r):
        # x shifted up by r rows, zero rows appended; junk only lands in rows
        # that the downstream selectors provably drop.
        z = jnp.zeros((r, x.shape[1]), x.dtype)
        return jnp.concatenate([x[r:, :], z], axis=0)

    def shift_lanes(x, c):
        z = jnp.zeros((x.shape[0], c), x.dtype)
        return jnp.concatenate([x[:, c:], z], axis=1)

    half = x_ref.shape[0] // 2            # bb*14 rows per even/odd row stream
    xe = x_ref[:half, :]                  # image rows 0,2,...,26 (bb stacked)
    xo = x_ref[half:, :]                  # image rows 1,3,...,27
    xe1 = shift_rows(xe, 1)               # image rows 2j+2
    xo1 = shift_rows(xo, 1)               # image rows 2j+3

    # ---- conv1 (1->20, 3x3) banded, with the 2x2 row max-pool fused ---------
    #   conv row 2j   = x[2j]   A0 + x[2j+1] A1 + x[2j+2] A2
    #   conv row 2j+1 = x[2j+1] A0 + x[2j+2] A1 + x[2j+3] A2
    h1e = mm(xe, a1_ref[0]) + mm(xo, a1_ref[1]) + mm(xe1, a1_ref[2])
    h1o = mm(xo, a1_ref[0]) + mm(xe1, a1_ref[1]) + mm(xo1, a1_ref[2])
    b1 = b1_ref[...]
    h1e = jnp.maximum(h1e + b1, 0.0)
    h1o = jnp.maximum(h1o + b1, 0.0)
    ph1 = jnp.maximum(h1e, h1o).astype(bf16)            # (bb*14, 26*20)

    # ---- maxpool 2x2 #1, columns: shift one W column (20 ch) + max, then a
    # single even-column selection matmul ------------------------------------
    m1 = jnp.maximum(ph1, shift_lanes(ph1, 20))
    p1 = mm(m1, sw1_ref[...]).astype(bf16)              # (bb*14, 13*20)

    # ---- conv2 (20->32, 3x3): banded matmuls over row-shifted p1 ------------
    h2 = mm(p1, a2_ref[0])
    h2 = h2 + mm(shift_rows(p1, 1), a2_ref[1])
    h2 = h2 + mm(shift_rows(p1, 2), a2_ref[2])
    h2 = jnp.maximum(h2 + b2_ref[...], 0.0).astype(bf16)  # (bb*14, 11*32)

    # ---- maxpool 2x2 #2 (cols, then rows) -----------------------------------
    m2 = jnp.maximum(h2, shift_lanes(h2, 32))
    p2 = mm(m2, sw2_ref[...]).astype(bf16)              # (bb*14, 5*32)
    m2r = jnp.maximum(p2, shift_rows(p2, 1))            # even rows = pooled rows

    # ---- fused row-pool pick + 5->4 adaptive row avg (block-diag selector),
    # then 5->4 adaptive column avg -------------------------------------------
    ap = mm(phs_ref[...], m2r).astype(bf16)             # (bb*4, 5*32)
    out_ref[...] = mm(ap, pw_ref[...])                  # (bb*4, 4*32) f32


def _round_up(a, m):
    return ((a + m - 1) // m) * m


def backbone_forward(x_nchw, w1, b1, w2, b2, batch_block=32):
    """x_nchw: (N, 1, 28, 28) float32 -> (N, 512) float32."""
    n = x_nchw.shape[0]

    # bb images per grid step.  Multiple of 8 keeps every sublane slice aligned
    # (bf16 packs 16 rows / vreg); 32 fills the 256-row MXU on v6e/v7x and
    # amortizes the per-step pipeline overhead.  Keep >= 2 grid steps when the
    # batch allows so v7x's two TensorCores both get work.
    bb = max(8, (int(batch_block) // 8) * 8)
    n8 = _round_up(n, 8)
    bb = min(bb, n8)
    if _round_up(n, bb) // bb < 2 and n8 >= 16:
        bb = _round_up(n8 // 2, 8)
    n_pad = _round_up(n, bb)
    n_steps = n_pad // bb
    half = bb * 14

    # ---- wrapper layout prep: bf16, two light passes over the raw pixels ----
    x_img = x_nchw[:, 0, :, :].astype(jnp.bfloat16)     # (N, 28, 28)
    if n_pad != n:
        x_img = jnp.pad(x_img, ((0, n_pad - n), (0, 0), (0, 0)))
    xe = x_img[:, 0::2, :].reshape(n_steps, half, 28)   # even image rows
    xo = x_img[:, 1::2, :].reshape(n_steps, half, 28)   # odd image rows
    x_in = jnp.concatenate([xe, xo], axis=1).reshape(n_pad * 28, 28)

    # ---- structured constants (bf16 on the MXU; biases stay f32) ------------
    bf = jnp.bfloat16
    a1 = jnp.asarray(conv_band(w1, 28), bf)                              # (3, 28, 520)
    b1r = jnp.asarray(np.tile(np.asarray(b1, np.float32), 26)[None, :])  # (1, 520)
    sw1 = jnp.asarray(pool_cols_even(26, 20), bf)                        # (520, 260)
    a2 = jnp.asarray(conv_band(w2, 13), bf)                              # (3, 260, 352)
    b2r = jnp.asarray(np.tile(np.asarray(b2, np.float32), 11)[None, :])  # (1, 352)
    sw2 = jnp.asarray(pool_cols_even(11, 32), bf)                        # (352, 160)
    phs = jnp.asarray(rowpool_plus_adapt_rows(bb), bf)                   # (bb*4, bb*14)
    pw = jnp.asarray(adapt_cols(32), bf)                                 # (160, 128)

    def full_spec(arr):
        nd = arr.ndim
        return pl.BlockSpec(arr.shape, lambda i, _nd=nd: (0,) * _nd)

    # Advisory cost estimate (matmul flops + HBM bytes) for XLA scheduling.
    macs_step = (6 * half * 28 * 520 + half * 520 * 260 + 3 * half * 260 * 352
                 + half * 352 * 160 + (bb * 4) * half * 160 + (bb * 4) * 160 * 128)
    consts = (a1, b1r, sw1, a2, b2r, sw2, phs, pw)
    bytes_accessed = int(x_in.size * x_in.dtype.itemsize
                         + sum(c.size * c.dtype.itemsize for c in consts)
                         + n_pad * 4 * 128 * 4)
    cost = pl.CostEstimate(flops=2 * macs_step * n_steps, transcendentals=0,
                           bytes_accessed=bytes_accessed)

    out = pl.pallas_call(
        backbone_kernel,
        out_shape=jax.ShapeDtypeStruct((n_pad * 4, 128), jnp.float32),
        grid=(n_steps,),
        in_specs=[
            pl.BlockSpec((bb * 28, 28), lambda i: (i, 0)),
            full_spec(a1), full_spec(b1r), full_spec(sw1),
            full_spec(a2), full_spec(b2r), full_spec(sw2),
            full_spec(phs), full_spec(pw),
        ],
        out_specs=pl.BlockSpec((bb * 4, 128), lambda i: (i, 0)),
        compiler_params=pltpu.CompilerParams(dimension_semantics=("parallel",)),
        cost_estimate=cost,
    )(x_in, a1, b1r, sw1, a2, b2r, sw2, phs, pw)

    # kernel output rows are image-major, H(4) minor; lanes are W(4)*C(32),
    # channel fastest.  Final (H, W, C) -> (C, H, W) flatten is layout glue.
    out = out.reshape(n_pad, 4, 4, 32)[:n]              # (N, H, W, C)
    out = jnp.transpose(out, (0, 3, 1, 2))              # (N, C, H, W)
    return out.reshape(n, -1)                           # (N, 512)


# ----------------------------------------------------------------------------
# Pure-JAX reference (XLA ops) for a correctness check.
# ----------------------------------------------------------------------------
def reference(x, w1, b1, w2, b2):
    dn = ("NCHW", "OIHW", "NCHW")
    y = lax.conv_general_dilated(x, w1, (1, 1), "VALID", dimension_numbers=dn)
    y = jnp.maximum(y + b1[None, :, None, None], 0.0)
    y = lax.reduce_window(y, -jnp.inf, lax.max, (1, 1, 2, 2), (1, 1, 2, 2), "VALID")
    y = lax.conv_general_dilated(y, w2, (1, 1), "VALID", dimension_numbers=dn)
    y = jnp.maximum(y + b2[None, :, None, None], 0.0)
    y = lax.reduce_window(y, -jnp.inf, lax.max, (1, 1, 2, 2), (1, 1, 2, 2), "VALID")
    # adaptive avg pool 5->4: size-2 windows, stride 1
    y = lax.reduce_window(y, 0.0, lax.add, (1, 1, 2, 2), (1, 1, 1, 1), "VALID") * 0.25
    return y.reshape(x.shape[0], -1)


if __name__ == "__main__":
    key = jax.random.PRNGKey(0)
    k1, k2, k3, k4, k5, k6 = jax.random.split(key, 6)
    w1 = jax.random.normal(k1, (20, 1, 3, 3), jnp.float32) * 0.2
    b1 = jax.random.normal(k2, (20,), jnp.float32) * 0.1
    w2 = jax.random.normal(k3, (32, 20, 3, 3), jnp.float32) * 0.1
    b2 = jax.random.normal(k4, (32,), jnp.float32) * 0.1

    # MNIST-sized NCHW input (matches the PyTorch module).  Small batch: one
    # grid step of 8 stacked image slots (2 real + 6 padded).
    x = jax.random.normal(k5, (2, 1, 28, 28), jnp.float32)
    out = jax.block_until_ready(backbone_forward(x, w1, b1, w2, b2))
    ref = jax.block_until_ready(reference(x, w1, b1, w2, b2))
    assert out.shape == (2, 512), out.shape
    np.testing.assert_allclose(np.asarray(out), np.asarray(ref), rtol=5e-2, atol=5e-2)

    # Larger batch: exercises batch padding (10 -> 16) and a 2-step parallel
    # grid (both v7x TensorCores get a step).
    x_big = jax.random.normal(k6, (10, 1, 28, 28), jnp.float32)
    out_big = jax.block_until_ready(backbone_forward(x_big, w1, b1, w2, b2))
    ref_big = jax.block_until_ready(reference(x_big, w1, b1, w2, b2))
    np.testing.assert_allclose(np.asarray(out_big), np.asarray(ref_big),
                               rtol=5e-2, atol=5e-2)

    print("KERNEL_OK")
</pallas_src>

<mosaic_0001>
module attributes {stable_mosaic.version = 11 : i64} {
  func.func @backbone_kernel(%arg0: i32, %arg1: memref<224x28xbf16, #tpu.memory_space<vmem>>, %arg2: memref<3x28x520xbf16, #tpu.memory_space<vmem>>, %arg3: memref<1x520xf32, #tpu.memory_space<vmem>>, %arg4: memref<520x260xbf16, #tpu.memory_space<vmem>>, %arg5: memref<3x260x352xbf16, #tpu.memory_space<vmem>>, %arg6: memref<1x352xf32, #tpu.memory_space<vmem>>, %arg7: memref<352x160xbf16, #tpu.memory_space<vmem>>, %arg8: memref<32x112xbf16, #tpu.memory_space<vmem>>, %arg9: memref<160x128xbf16, #tpu.memory_space<vmem>>, %arg10: memref<32x128xf32, #tpu.memory_space<vmem>>) attributes {dimension_semantics = [#tpu.dimension_semantics<parallel>], iteration_bounds = array<i64: 1>, scalar_prefetch = 0 : i64, scratch_operands = 0 : i64, tpu.core_type = #tpu.core_type<tc>, window_params = [{transform_indices = @transform_0, window_bounds = array<i64: 224, 28>}, {pipeline_mode = #tpu.pipeline_mode<synchronous>, transform_indices = @transform_1, window_bounds = array<i64: 3, 28, 520>}, {pipeline_mode = #tpu.pipeline_mode<synchronous>, transform_indices = @transform_2, window_bounds = array<i64: 1, 520>}, {pipeline_mode = #tpu.pipeline_mode<synchronous>, transform_indices = @transform_3, window_bounds = array<i64: 520, 260>}, {pipeline_mode = #tpu.pipeline_mode<synchronous>, transform_indices = @transform_4, window_bounds = array<i64: 3, 260, 352>}, {pipeline_mode = #tpu.pipeline_mode<synchronous>, transform_indices = @transform_5, window_bounds = array<i64: 1, 352>}, {pipeline_mode = #tpu.pipeline_mode<synchronous>, transform_indices = @transform_6, window_bounds = array<i64: 352, 160>}, {pipeline_mode = #tpu.pipeline_mode<synchronous>, transform_indices = @transform_7, window_bounds = array<i64: 32, 112>}, {pipeline_mode = #tpu.pipeline_mode<synchronous>, transform_indices = @transform_8, window_bounds = array<i64: 160, 128>}, {transform_indices = @transform_9, window_bounds = array<i64: 32, 128>}]} {
    %c0 = arith.constant 0 : index
    %c0_0 = arith.constant 0 : index
    %0 = vector.load %arg1[%c0, %c0_0] : memref<224x28xbf16, #tpu.memory_space<vmem>>, vector<112x28xbf16>
    %c112 = arith.constant 112 : index
    %c0_1 = arith.constant 0 : index
    %1 = vector.load %arg1[%c112, %c0_1] : memref<224x28xbf16, #tpu.memory_space<vmem>>, vector<112x28xbf16>
    %cst = arith.constant 0.000000e+00 : bf16
    %2 = vector.broadcast %cst : bf16 to vector<1x28xbf16>
    %3 = vector.extract_strided_slice %0 {offsets = [1, 0], sizes = [111, 28], strides = [1, 1]} : vector<112x28xbf16> to vector<111x28xbf16>
    %4 = tpu.concatenate %3, %2 in 0 : vector<111x28xbf16>, vector<1x28xbf16> -> vector<112x28xbf16>
    %cst_2 = arith.constant 0.000000e+00 : bf16
    %5 = vector.broadcast %cst_2 : bf16 to vector<1x28xbf16>
    %6 = vector.extract_strided_slice %1 {offsets = [1, 0], sizes = [111, 28], strides = [1, 1]} : vector<112x28xbf16> to vector<111x28xbf16>
    %7 = tpu.concatenate %6, %5 in 0 : vector<111x28xbf16>, vector<1x28xbf16> -> vector<112x28xbf16>
    %c0_3 = arith.constant 0 : index
    %c0_4 = arith.constant 0 : index
    %c0_5 = arith.constant 0 : index
    %8 = vector.load %arg2[%c0_3, %c0_4, %c0_5] : memref<3x28x520xbf16, #tpu.memory_space<vmem>>, vector<1x28x520xbf16>
    %9 = vector.shape_cast %8 : vector<1x28x520xbf16> to vector<28x520xbf16>
    %cst_6 = arith.constant dense<0.000000e+00> : vector<112x520xf32>
    %10 = tpu.matmul %0, %9, %cst_6 {dimension_numbers = #tpu.dot_dimension_numbers<[1], [0], [0], [1], [0, 0, 1, 1], [], []>} : vector<112x28xbf16>, vector<28x520xbf16>, vector<112x520xf32> -> vector<112x520xf32>
    %c1 = arith.constant 1 : index
    %c0_7 = arith.constant 0 : index
    %c0_8 = arith.constant 0 : index
    %11 = vector.load %arg2[%c1, %c0_7, %c0_8] : memref<3x28x520xbf16, #tpu.memory_space<vmem>>, vector<1x28x520xbf16>
    %12 = vector.shape_cast %11 : vector<1x28x520xbf16> to vector<28x520xbf16>
    %cst_9 = arith.constant dense<0.000000e+00> : vector<112x520xf32>
    %13 = tpu.matmul %1, %12, %cst_9 {dimension_numbers = #tpu.dot_dimension_numbers<[1], [0], [0], [1], [0, 0, 1, 1], [], []>} : vector<112x28xbf16>, vector<28x520xbf16>, vector<112x520xf32> -> vector<112x520xf32>
    %14 = arith.addf %10, %13 : vector<112x520xf32>
    %c2 = arith.constant 2 : index
    %c0_10 = arith.constant 0 : index
    %c0_11 = arith.constant 0 : index
    %15 = vector.load %arg2[%c2, %c0_10, %c0_11] : memref<3x28x520xbf16, #tpu.memory_space<vmem>>, vector<1x28x520xbf16>
    %16 = vector.shape_cast %15 : vector<1x28x520xbf16> to vector<28x520xbf16>
    %cst_12 = arith.constant dense<0.000000e+00> : vector<112x520xf32>
    %17 = tpu.matmul %4, %16, %cst_12 {dimension_numbers = #tpu.dot_dimension_numbers<[1], [0], [0], [1], [0, 0, 1, 1], [], []>} : vector<112x28xbf16>, vector<28x520xbf16>, vector<112x520xf32> -> vector<112x520xf32>
    %18 = arith.addf %14, %17 : vector<112x520xf32>
    %c0_13 = arith.constant 0 : index
    %c0_14 = arith.constant 0 : index
    %c0_15 = arith.constant 0 : index
    %19 = vector.load %arg2[%c0_13, %c0_14, %c0_15] : memref<3x28x520xbf16, #tpu.memory_space<vmem>>, vector<1x28x520xbf16>
    %20 = vector.shape_cast %19 : vector<1x28x520xbf16> to vector<28x520xbf16>
    %cst_16 = arith.constant dense<0.000000e+00> : vector<112x520xf32>
    %21 = tpu.matmul %1, %20, %cst_16 {dimension_numbers = #tpu.dot_dimension_numbers<[1], [0], [0], [1], [0, 0, 1, 1], [], []>} : vector<112x28xbf16>, vector<28x520xbf16>, vector<112x520xf32> -> vector<112x520xf32>
    %c1_17 = arith.constant 1 : index
    %c0_18 = arith.constant 0 : index
    %c0_19 = arith.constant 0 : index
    %22 = vector.load %arg2[%c1_17, %c0_18, %c0_19] : memref<3x28x520xbf16, #tpu.memory_space<vmem>>, vector<1x28x520xbf16>
    %23 = vector.shape_cast %22 : vector<1x28x520xbf16> to vector<28x520xbf16>
    %cst_20 = arith.constant dense<0.000000e+00> : vector<112x520xf32>
    %24 = tpu.matmul %4, %23, %cst_20 {dimension_numbers = #tpu.dot_dimension_numbers<[1], [0], [0], [1], [0, 0, 1, 1], [], []>} : vector<112x28xbf16>, vector<28x520xbf16>, vector<112x520xf32> -> vector<112x520xf32>
    %25 = arith.addf %21, %24 : vector<112x520xf32>
    %c2_21 = arith.constant 2 : index
    %c0_22 = arith.constant 0 : index
    %c0_23 = arith.constant 0 : index
    %26 = vector.load %arg2[%c2_21, %c0_22, %c0_23] : memref<3x28x520xbf16, #tpu.memory_space<vmem>>, vector<1x28x520xbf16>
    %27 = vector.shape_cast %26 : vector<1x28x520xbf16> to vector<28x520xbf16>
    %cst_24 = arith.constant dense<0.000000e+00> : vector<112x520xf32>
    %28 = tpu.matmul %7, %27, %cst_24 {dimension_numbers = #tpu.dot_dimension_numbers<[1], [0], [0], [1], [0, 0, 1, 1], [], []>} : vector<112x28xbf16>, vector<28x520xbf16>, vector<112x520xf32> -> vector<112x520xf32>
    %29 = arith.addf %25, %28 : vector<112x520xf32>
    %c0_25 = arith.constant 0 : index
    %c0_26 = arith.constant 0 : index
    %30 = vector.load %arg3[%c0_25, %c0_26] : memref<1x520xf32, #tpu.memory_space<vmem>>, vector<1x520xf32>
    %31 = vector.broadcast %30 : vector<1x520xf32> to vector<112x520xf32>
    %32 = arith.addf %18, %31 : vector<112x520xf32>
    %cst_27 = arith.constant 0.000000e+00 : f32
    %33 = vector.broadcast %cst_27 : f32 to vector<112x520xf32>
    %34 = arith.maximumf %32, %33 : vector<112x520xf32>
    %35 = vector.broadcast %30 : vector<1x520xf32> to vector<112x520xf32>
    %36 = arith.addf %29, %35 : vector<112x520xf32>
    %cst_28 = arith.constant 0.000000e+00 : f32
    %37 = vector.broadcast %cst_28 : f32 to vector<112x520xf32>
    %38 = arith.maximumf %36, %37 : vector<112x520xf32>
    %39 = arith.maximumf %34, %38 : vector<112x520xf32>
    %40 = arith.truncf %39 : vector<112x520xf32> to vector<112x520xbf16>
    %cst_29 = arith.constant 0.000000e+00 : bf16
    %41 = vector.broadcast %cst_29 : bf16 to vector<112x20xbf16>
    %42 = vector.extract_strided_slice %40 {offsets = [0, 20], sizes = [112, 500], strides = [1, 1]} : vector<112x520xbf16> to vector<112x500xbf16>
    %43 = tpu.concatenate %42, %41 in 1 : vector<112x500xbf16>, vector<112x20xbf16> -> vector<112x520xbf16>
    %44 = arith.maximumf %40, %43 : vector<112x520xbf16>
    %c0_30 = arith.constant 0 : index
    %c0_31 = arith.constant 0 : index
    %45 = vector.load %arg4[%c0_30, %c0_31] : memref<520x260xbf16, #tpu.memory_space<vmem>>, vector<520x260xbf16>
    %cst_32 = arith.constant dense<0.000000e+00> : vector<112x260xf32>
    %46 = tpu.matmul %44, %45, %cst_32 {dimension_numbers = #tpu.dot_dimension_numbers<[1], [0], [0], [1], [0, 0, 1, 1], [], []>} : vector<112x520xbf16>, vector<520x260xbf16>, vector<112x260xf32> -> vector<112x260xf32>
    %47 = arith.truncf %46 : vector<112x260xf32> to vector<112x260xbf16>
    %c0_33 = arith.constant 0 : index
    %c0_34 = arith.constant 0 : index
    %c0_35 = arith.constant 0 : index
    %48 = vector.load %arg5[%c0_33, %c0_34, %c0_35] : memref<3x260x352xbf16, #tpu.memory_space<vmem>>, vector<1x260x352xbf16>
    %49 = vector.shape_cast %48 : vector<1x260x352xbf16> to vector<260x352xbf16>
    %cst_36 = arith.constant dense<0.000000e+00> : vector<112x352xf32>
    %50 = tpu.matmul %47, %49, %cst_36 {dimension_numbers = #tpu.dot_dimension_numbers<[1], [0], [0], [1], [0, 0, 1, 1], [], []>} : vector<112x260xbf16>, vector<260x352xbf16>, vector<112x352xf32> -> vector<112x352xf32>
    %cst_37 = arith.constant 0.000000e+00 : bf16
    %51 = vector.broadcast %cst_37 : bf16 to vector<1x260xbf16>
    %52 = vector.extract_strided_slice %47 {offsets = [1, 0], sizes = [111, 260], strides = [1, 1]} : vector<112x260xbf16> to vector<111x260xbf16>
    %53 = tpu.concatenate %52, %51 in 0 : vector<111x260xbf16>, vector<1x260xbf16> -> vector<112x260xbf16>
    %c1_38 = arith.constant 1 : index
    %c0_39 = arith.constant 0 : index
    %c0_40 = arith.constant 0 : index
    %54 = vector.load %arg5[%c1_38, %c0_39, %c0_40] : memref<3x260x352xbf16, #tpu.memory_space<vmem>>, vector<1x260x352xbf16>
    %55 = vector.shape_cast %54 : vector<1x260x352xbf16> to vector<260x352xbf16>
    %cst_41 = arith.constant dense<0.000000e+00> : vector<112x352xf32>
    %56 = tpu.matmul %53, %55, %cst_41 {dimension_numbers = #tpu.dot_dimension_numbers<[1], [0], [0], [1], [0, 0, 1, 1], [], []>} : vector<112x260xbf16>, vector<260x352xbf16>, vector<112x352xf32> -> vector<112x352xf32>
    %57 = arith.addf %50, %56 : vector<112x352xf32>
    %cst_42 = arith.constant 0.000000e+00 : bf16
    %58 = vector.broadcast %cst_42 : bf16 to vector<2x260xbf16>
    %59 = vector.extract_strided_slice %47 {offsets = [2, 0], sizes = [110, 260], strides = [1, 1]} : vector<112x260xbf16> to vector<110x260xbf16>
    %60 = tpu.concatenate %59, %58 in 0 : vector<110x260xbf16>, vector<2x260xbf16> -> vector<112x260xbf16>
    %c2_43 = arith.constant 2 : index
    %c0_44 = arith.constant 0 : index
    %c0_45 = arith.constant 0 : index
    %61 = vector.load %arg5[%c2_43, %c0_44, %c0_45] : memref<3x260x352xbf16, #tpu.memory_space<vmem>>, vector<1x260x352xbf16>
    %62 = vector.shape_cast %61 : vector<1x260x352xbf16> to vector<260x352xbf16>
    %cst_46 = arith.constant dense<0.000000e+00> : vector<112x352xf32>
    %63 = tpu.matmul %60, %62, %cst_46 {dimension_numbers = #tpu.dot_dimension_numbers<[1], [0], [0], [1], [0, 0, 1, 1], [], []>} : vector<112x260xbf16>, vector<260x352xbf16>, vector<112x352xf32> -> vector<112x352xf32>
    %64 = arith.addf %57, %63 : vector<112x352xf32>
    %c0_47 = arith.constant 0 : index
    %c0_48 = arith.constant 0 : index
    %65 = vector.load %arg6[%c0_47, %c0_48] : memref<1x352xf32, #tpu.memory_space<vmem>>, vector<1x352xf32>
    %66 = vector.broadcast %65 : vector<1x352xf32> to vector<112x352xf32>
    %67 = arith.addf %64, %66 : vector<112x352xf32>
    %cst_49 = arith.constant 0.000000e+00 : f32
    %68 = vector.broadcast %cst_49 : f32 to vector<112x352xf32>
    %69 = arith.maximumf %67, %68 : vector<112x352xf32>
    %70 = arith.truncf %69 : vector<112x352xf32> to vector<112x352xbf16>
    %cst_50 = arith.constant 0.000000e+00 : bf16
    %71 = vector.broadcast %cst_50 : bf16 to vector<112x32xbf16>
    %72 = vector.extract_strided_slice %70 {offsets = [0, 32], sizes = [112, 320], strides = [1, 1]} : vector<112x352xbf16> to vector<112x320xbf16>
    %73 = tpu.concatenate %72, %71 in 1 : vector<112x320xbf16>, vector<112x32xbf16> -> vector<112x352xbf16>
    %74 = arith.maximumf %70, %73 : vector<112x352xbf16>
    %c0_51 = arith.constant 0 : index
    %c0_52 = arith.constant 0 : index
    %75 = vector.load %arg7[%c0_51, %c0_52] : memref<352x160xbf16, #tpu.memory_space<vmem>>, vector<352x160xbf16>
    %cst_53 = arith.constant dense<0.000000e+00> : vector<112x160xf32>
    %76 = tpu.matmul %74, %75, %cst_53 {dimension_numbers = #tpu.dot_dimension_numbers<[1], [0], [0], [1], [0, 0, 1, 1], [], []>} : vector<112x352xbf16>, vector<352x160xbf16>, vector<112x160xf32> -> vector<112x160xf32>
    %77 = arith.truncf %76 : vector<112x160xf32> to vector<112x160xbf16>
    %cst_54 = arith.constant 0.000000e+00 : bf16
    %78 = vector.broadcast %cst_54 : bf16 to vector<1x160xbf16>
    %79 = vector.extract_strided_slice %77 {offsets = [1, 0], sizes = [111, 160], strides = [1, 1]} : vector<112x160xbf16> to vector<111x160xbf16>
    %80 = tpu.concatenate %79, %78 in 0 : vector<111x160xbf16>, vector<1x160xbf16> -> vector<112x160xbf16>
    %81 = arith.maximumf %77, %80 : vector<112x160xbf16>
    %c0_55 = arith.constant 0 : index
    %c0_56 = arith.constant 0 : index
    %82 = vector.load %arg8[%c0_55, %c0_56] : memref<32x112xbf16, #tpu.memory_space<vmem>>, vector<32x112xbf16>
    %cst_57 = arith.constant dense<0.000000e+00> : vector<32x160xf32>
    %83 = tpu.matmul %82, %81, %cst_57 {dimension_numbers = #tpu.dot_dimension_numbers<[1], [0], [0], [1], [0, 0, 1, 1], [], []>} : vector<32x112xbf16>, vector<112x160xbf16>, vector<32x160xf32> -> vector<32x160xf32>
    %84 = arith.truncf %83 : vector<32x160xf32> to vector<32x160xbf16>
    %c0_58 = arith.constant 0 : index
    %c0_59 = arith.constant 0 : index
    %85 = vector.load %arg9[%c0_58, %c0_59] : memref<160x128xbf16, #tpu.memory_space<vmem>>, vector<160x128xbf16>
    %cst_60 = arith.constant dense<0.000000e+00> : vector<32x128xf32>
    %86 = tpu.matmul %84, %85, %cst_60 {dimension_numbers = #tpu.dot_dimension_numbers<[1], [0], [0], [1], [0, 0, 1, 1], [], []>} : vector<32x160xbf16>, vector<160x128xbf16>, vector<32x128xf32> -> vector<32x128xf32>
    %c0_61 = arith.constant 0 : index
    %c0_62 = arith.constant 0 : index
    %87 = vector.load %arg10[%c0_61, %c0_62] : memref<32x128xf32, #tpu.memory_space<vmem>>, vector<32x128xf32>
    tpu.vector_store %arg10[%c0_61, %c0_62], %86 {strides = array<i32>} : memref<32x128xf32, #tpu.memory_space<vmem>>, vector<32x128xf32>,
    return
  }
  func.func @transform_0(%arg0: i32) -> (i32, i32) {
    %c0_i32 = arith.constant 0 : i32
    %c0_i32_0 = arith.constant 0 : i32
    return %arg0, %c0_i32 : i32, i32
  }
  func.func @transform_1(%arg0: i32) -> (i32, i32, i32) {
    %c0_i32 = arith.constant 0 : i32
    %c0_i32_0 = arith.constant 0 : i32
    %c0_i32_1 = arith.constant 0 : i32
    %c0_i32_2 = arith.constant 0 : i32
    return %c0_i32, %c0_i32_0, %c0_i32_1 : i32, i32, i32
  }
  func.func @transform_2(%arg0: i32) -> (i32, i32) {
    %c0_i32 = arith.constant 0 : i32
    %c0_i32_0 = arith.constant 0 : i32
    %c0_i32_1 = arith.constant 0 : i32
    return %c0_i32, %c0_i32_0 : i32, i32
  }
  func.func @transform_3(%arg0: i32) -> (i32, i32) {
    %c0_i32 = arith.constant 0 : i32
    %c0_i32_0 = arith.constant 0 : i32
    %c0_i32_1 = arith.constant 0 : i32
    return %c0_i32, %c0_i32_0 : i32, i32
  }
  func.func @transform_4(%arg0: i32) -> (i32, i32, i32) {
    %c0_i32 = arith.constant 0 : i32
    %c0_i32_0 = arith.constant 0 : i32
    %c0_i32_1 = arith.constant 0 : i32
    %c0_i32_2 = arith.constant 0 : i32
    return %c0_i32, %c0_i32_0, %c0_i32_1 : i32, i32, i32
  }
  func.func @transform_5(%arg0: i32) -> (i32, i32) {
    %c0_i32 = arith.constant 0 : i32
    %c0_i32_0 = arith.constant 0 : i32
    %c0_i32_1 = arith.constant 0 : i32
    return %c0_i32, %c0_i32_0 : i32, i32
  }
  func.func @transform_6(%arg0: i32) -> (i32, i32) {
    %c0_i32 = arith.constant 0 : i32
    %c0_i32_0 = arith.constant 0 : i32
    %c0_i32_1 = arith.constant 0 : i32
    return %c0_i32, %c0_i32_0 : i32, i32
  }
  func.func @transform_7(%arg0: i32) -> (i32, i32) {
    %c0_i32 = arith.constant 0 : i32
    %c0_i32_0 = arith.constant 0 : i32
    %c0_i32_1 = arith.constant 0 : i32
    return %c0_i32, %c0_i32_0 : i32, i32
  }
  func.func @transform_8(%arg0: i32) -> (i32, i32) {
    %c0_i32 = arith.constant 0 : i32
    %c0_i32_0 = arith.constant 0 : i32
    %c0_i32_1 = arith.constant 0 : i32
    return %c0_i32, %c0_i32_0 : i32, i32
  }
  func.func @transform_9(%arg0: i32) -> (i32, i32) {
    %c0_i32 = arith.constant 0 : i32
    %c0_i32_0 = arith.constant 0 : i32
    return %arg0, %c0_i32 : i32, i32
  }
}

</mosaic_0001>

<llo_original>
// kernel: tpu_custom_call.1
$region0: #{tpu_custom_call.1}
  #allocation0 [shape = 'u32[]', space=smem, size = 0x4, offset = 0x4, fixed_abs, tag = 'smem constant byte address 0x4 - core index']
  #allocation1 [shape = 'u32[144,128]{1,0:T(1,128)}', space=vmem, size = 0x12000, scoped, tag = 'internal scratch']
  %s0 = inlined_call_operand.vmem [shape: bf16[224,28], index: 0, kind: input, shape index: {}]
  %s1 = inlined_call_operand.vmem [shape: bf16[3,28,520], index: 1, kind: input, shape index: {}]
  %s2 = inlined_call_operand.vmem [shape: f32[1,520], index: 2, kind: input, shape index: {}]
  %s3 = inlined_call_operand.vmem [shape: bf16[520,260], index: 3, kind: input, shape index: {}]
  %s4 = inlined_call_operand.vmem [shape: bf16[3,260,352], index: 4, kind: input, shape index: {}]
  %s5 = inlined_call_operand.vmem [shape: f32[1,352], index: 5, kind: input, shape index: {}]
  %s6 = inlined_call_operand.vmem [shape: bf16[352,160], index: 6, kind: input, shape index: {}]
  %s7 = inlined_call_operand.vmem [shape: bf16[32,112], index: 7, kind: input, shape index: {}]
  %s8 = inlined_call_operand.vmem [shape: bf16[160,128], index: 8, kind: input, shape index: {}]
  %s9 = inlined_call_operand.hbm [shape: f32[32,128], index: 9, kind: output, shape index: {}]
  %s10 = sld [smem:[#allocation0]]
  $region46: #{tpu_custom_call.1} parent=0
    _
  %s12 = ssub.s32 1, %s10
  %s13 = scalar_select 0, %s12, %s10
  $region1: #{tpu_custom_call.1} parent=0
    #allocation2 [shape = 'u8[16384]{0}', space=vmem, size = 0x4000, scoped, tag = 'output window, operand 0, single buffered']
    #allocation3 [shape = 's32[1]{0}', space=sflag, size = 0x4, scoped, tag = 'scoped memory for tpu_custom_call.1']
    %14 = vsyncpa [#allocation3], 0
    // Predicated region
    $region2: #{tpu_custom_call.1} parent=1 // pred_check
      _
    $region3: #{tpu_custom_call.1} parent=1 // pred_check_branch
      %16 = sbr.rel (0) target = $region5
    $region4: #{tpu_custom_call.1} parent=1 // pred_region
      _
    $region5: #{tpu_custom_call.1} parent=1 // pred_fallthru
      _
    // Predicated region
    $region6: #{tpu_custom_call.1} parent=1 // pred_check
      _
    $region7: #{tpu_custom_call.1} parent=1 // pred_check_branch
      %18 = sbr.rel (0) target = $region9
    $region8: #{tpu_custom_call.1} parent=1 // pred_region
      _
    $region9: #{tpu_custom_call.1} parent=1 // pred_fallthru
      _
    // Predicated region
    $region10: #{tpu_custom_call.1} parent=1 // pred_check
      _
    $region11: #{tpu_custom_call.1} parent=1 // pred_check_branch
      %20 = sbr.rel (0) target = $region13
    $region12: #{tpu_custom_call.1} parent=1 // pred_region
      _
    $region13: #{tpu_custom_call.1} parent=1 // pred_fallthru
      _
    // Predicated region
    $region14: #{tpu_custom_call.1} parent=1 // pred_check
      _
    $region15: #{tpu_custom_call.1} parent=1 // pred_check_branch
      %22 = sbr.rel (0) target = $region17
    $region16: #{tpu_custom_call.1} parent=1 // pred_region
      _
    $region17: #{tpu_custom_call.1} parent=1 // pred_fallthru
      _
    // Predicated region
    $region18: #{tpu_custom_call.1} parent=1 // pred_check
      _
    $region19: #{tpu_custom_call.1} parent=1 // pred_check_branch
      %24 = sbr.rel (0) target = $region21
    $region20: #{tpu_custom_call.1} parent=1 // pred_region
      _
    $region21: #{tpu_custom_call.1} parent=1 // pred_fallthru
      _
    // Predicated region
    $region22: #{tpu_custom_call.1} parent=1 // pred_check
      _
    $region23: #{tpu_custom_call.1} parent=1 // pred_check_branch
      %26 = sbr.rel (0) target = $region25
    $region24: #{tpu_custom_call.1} parent=1 // pred_region
      _
    $region25: #{tpu_custom_call.1} parent=1 // pred_fallthru
      _
    // Predicated region
    $region26: #{tpu_custom_call.1} parent=1 // pred_check
      _
    $region27: #{tpu_custom_call.1} parent=1 // pred_check_branch
      %28 = sbr.rel (0) target = $region29
    $region28: #{tpu_custom_call.1} parent=1 // pred_region
      _
    $region29: #{tpu_custom_call.1} parent=1 // pred_fallthru
      _
    // Predicated region
    $region30: #{tpu_custom_call.1} parent=1 // pred_check
      _
    $region31: #{tpu_custom_call.1} parent=1 // pred_check_branch
      %30 = sbr.rel (0) target = $region33
    $region32: #{tpu_custom_call.1} parent=1 // pred_region
      _
    $region33: #{tpu_custom_call.1} parent=1 // pred_fallthru
      _
    // Predicated region
    $region34: #{tpu_custom_call.1} parent=1 // pred_check
      _
    $region35: #{tpu_custom_call.1} parent=1 // pred_check_branch
      %32 = sbr.rel (0) target = $region37
    $region36: #{tpu_custom_call.1} parent=1 // pred_region
      _
    $region37: #{tpu_custom_call.1} parent=1 // pred_fallthru
      _
    %v34 = vld [vmem:[%s0] sm:$0xf]
    %v35 = vld [vmem:[%s0 + $0x4] sm:$0xf]
    %v36 = vld [vmem:[%s0 + $0x8] sm:$0xf]
    %v37 = vld [vmem:[%s0 + $0xc] sm:$0xf]
    %v38 = vld [vmem:[%s0 + $0x10] sm:$0xf]
    %v39 = vld [vmem:[%s0 + $0x14] sm:$0xf]
    %v40 = vld [vmem:[%s0 + $0x18] sm:$0xf]
    %v41 = vld [vmem:[%s0 + $0x1c] sm:$0xf]
    %v42 = vld [vmem:[%s0 + $0x20] sm:$0xf]
    %v43 = vld [vmem:[%s0 + $0x24] sm:$0xf]
    %v44 = vld [vmem:[%s0 + $0x28] sm:$0xf]
    %v45 = vld [vmem:[%s0 + $0x2c] sm:$0xf]
    %v46 = vld [vmem:[%s0 + $0x30] sm:$0xf]
    %v47 = vld [vmem:[%s0 + $0x34] sm:$0xf]
    %v48 = vld [vmem:[%s0 + $0x38] sm:$0xf]
    %v49 = vld [vmem:[%s0 + $0x3c] sm:$0xf]
    %v50 = vld [vmem:[%s0 + $0x40] sm:$0xf]
    %v51 = vld [vmem:[%s0 + $0x44] sm:$0xf]
    %v52 = vld [vmem:[%s0 + $0x48] sm:$0xf]
    %v53 = vld [vmem:[%s0 + $0x4c] sm:$0xf]
    %v54 = vld [vmem:[%s0 + $0x50] sm:$0xf]
    %v55 = vld [vmem:[%s0 + $0x54] sm:$0xf]
    %v56 = vld [vmem:[%s0 + $0x58] sm:$0xf]
    %v57 = vld [vmem:[%s0 + $0x5c] sm:$0xf]
    %v58 = vld [vmem:[%s0 + $0x60] sm:$0xf]
    %v59 = vld [vmem:[%s0 + $0x64] sm:$0xf]
    %v60 = vld [vmem:[%s0 + $0x68] sm:$0xf]
    %v61 = vld [vmem:[%s0 + $0x6c] sm:$0xf]
    %v76 = vunpack.c.l.b16 %v34
    %v77 = vunpack.c.l.b16 %v35
    %v78 = vunpack.c.l.b16 %v36
    %v79 = vunpack.c.l.b16 %v37
    %v80 = vunpack.c.l.b16 %v38
    %v81 = vunpack.c.l.b16 %v39
    %v82 = vunpack.c.l.b16 %v40
    %v83 = vunpack.c.l.b16 %v41
    %v84 = vunpack.c.l.b16 %v42
    %v85 = vunpack.c.l.b16 %v43
    %v86 = vunpack.c.l.b16 %v44
    %v87 = vunpack.c.l.b16 %v45
    %v88 = vunpack.c.l.b16 %v46
    %v89 = vunpack.c.l.b16 %v47
    %v90 = vpack.c.b16 %v77, %v76
    %v91 = vpack.c.b16 %v79, %v78
    %v92 = vpack.c.b16 %v81, %v80
    %v93 = vpack.c.b16 %v83, %v82
    %v94 = vpack.c.b16 %v85, %v84
    %v95 = vpack.c.b16 %v87, %v86
    %v96 = vpack.c.b16 %v89, %v88
    %vm97 = vsmask.f32 7424
    %v99 = vshrl.u32 %v90, 16
    %v101 = vshll.u32 %v90, 16
    %v103 = vrot.slane %v101, 1
    %v104 = vor.u32 %v99, %v103
    %v106 = vshll.u32 %v91, 16
    %v108 = vrot.slane %v106, 1
    %v109 = vsel %vm97, %v104, %v108
    %v110 = vshrl.u32 %v91, 16
    %v112 = vor.u32 %v110, %v108
    %v114 = vshll.u32 %v92, 16
    %v116 = vrot.slane %v114, 1
    %v117 = vsel %vm97, %v112, %v116
    %v118 = vshrl.u32 %v92, 16
    %v120 = vor.u32 %v118, %v116
    %v122 = vshll.u32 %v93, 16
    %v124 = vrot.slane %v122, 1
    %v125 = vsel %vm97, %v120, %v124
    %v126 = vshrl.u32 %v93, 16
    %v128 = vor.u32 %v126, %v124
    %v130 = vshll.u32 %v94, 16
    %v132 = vrot.slane %v130, 1
    %v133 = vsel %vm97, %v128, %v132
    %v134 = vshrl.u32 %v94, 16
    %v136 = vor.u32 %v134, %v132
    %v138 = vshll.u32 %v95, 16
    %v140 = vrot.slane %v138, 1
    %v141 = vsel %vm97, %v136, %v140
    %v142 = vshrl.u32 %v95, 16
    %v144 = vor.u32 %v142, %v140
    %v146 = vshll.u32 %v96, 16
    %v148 = vrot.slane %v146, 1
    %v149 = vsel %vm97, %v144, %v148
    %v150 = vshrl.u32 %v96, 16
    %v152 = vor.u32 %v150, %v148
    %vm154 = vcmask 1047552
    %vm155 = vmand %vm154, %vm97
    %v156 = vsel %vm155, %v152, 0
    %v171 = vunpack.c.l.b16 %v48
    %v172 = vunpack.c.l.b16 %v49
    %v173 = vunpack.c.l.b16 %v50
    %v174 = vunpack.c.l.b16 %v51
    %v175 = vunpack.c.l.b16 %v52
    %v176 = vunpack.c.l.b16 %v53
    %v177 = vunpack.c.l.b16 %v54
    %v178 = vunpack.c.l.b16 %v55
    %v179 = vunpack.c.l.b16 %v56
    %v180 = vunpack.c.l.b16 %v57
    %v181 = vunpack.c.l.b16 %v58
    %v182 = vunpack.c.l.b16 %v59
    %v183 = vunpack.c.l.b16 %v60
    %v184 = vunpack.c.l.b16 %v61
    %v185 = vpack.c.b16 %v172, %v171
    %v186 = vpack.c.b16 %v174, %v173
    %v187 = vpack.c.b16 %v176, %v175
    %v188 = vpack.c.b16 %v178, %v177
    %v189 = vpack.c.b16 %v180, %v179
    %v190 = vpack.c.b16 %v182, %v181
    %v191 = vpack.c.b16 %v184, %v183
    %v193 = vshrl.u32 %v185, 16
    %v195 = vshll.u32 %v185, 16
    %v197 = vrot.slane %v195, 1
    %v198 = vor.u32 %v193, %v197
    %v200 = vshll.u32 %v186, 16
    %v202 = vrot.slane %v200, 1
    %v203 = vsel %vm97, %v198, %v202
    %v204 = vshrl.u32 %v186, 16
    %v206 = vor.u32 %v204, %v202
    %v208 = vshll.u32 %v187, 16
    %v210 = vrot.slane %v208, 1
    %v211 = vsel %vm97, %v206, %v210
    %v212 = vshrl.u32 %v187, 16
    %v214 = vor.u32 %v212, %v210
    %v216 = vshll.u32 %v188, 16
    %v218 = vrot.slane %v216, 1
    %v219 = vsel %vm97, %v214, %v218
    %v220 = vshrl.u32 %v188, 16
    %v222 = vor.u32 %v220, %v218
    %v224 = vshll.u32 %v189, 16
    %v226 = vrot.slane %v224, 1
    %v227 = vsel %vm97, %v222, %v226
    %v228 = vshrl.u32 %v189, 16
    %v230 = vor.u32 %v228, %v226
    %v232 = vshll.u32 %v190, 16
    %v234 = vrot.slane %v232, 1
    %v235 = vsel %vm97, %v230, %v234
    %v236 = vshrl.u32 %v190, 16
    %v238 = vor.u32 %v236, %v234
    %v240 = vshll.u32 %v191, 16
    %v242 = vrot.slane %v240, 1
    %v243 = vsel %vm97, %v238, %v242
    %v244 = vshrl.u32 %v191, 16
    %v246 = vor.u32 %v244, %v242
    %v248 = vsel %vm155, %v246, 0
    %v249 = vld [vmem:[%s1] sm:$0xff]
    %v250 = vld [vmem:[%s1 + $0x8] sm:$0xff]
    %v251 = vld [vmem:[%s1 + $0x10] sm:$0xf]
    %v252 = vld [vmem:[%s1 + $0x14] sm:$0xff]
    %v253 = vld [vmem:[%s1 + $0x1c] sm:$0xff]
    %v254 = vld [vmem:[%s1 + $0x24] sm:$0xf]
    %v255 = vld [vmem:[%s1 + $0x28] sm:$0xff]
    %v256 = vld [vmem:[%s1 + $0x30] sm:$0xff]
    %v257 = vld [vmem:[%s1 + $0x38] sm:$0xf]
    %v258 = vld [vmem:[%s1 + $0x3c] sm:$0x33]
    %v259 = vld [vmem:[%s1 + $0x44] sm:$0x33]
    %v260 = vld [vmem:[%s1 + $0x4c] sm:$0x3]
    %s261 = scalar_lea.vmem %s1, 80
    %v262 = vld [vmem:[%s261] sm:$0xff]
    %v263 = vld [vmem:[%s261 + $0x8] sm:$0xff]
    %v264 = vld [vmem:[%s261 + $0x10] sm:$0xf]
    %v265 = vld [vmem:[%s261 + $0x14] sm:$0xff]
    %v266 = vld [vmem:[%s261 + $0x1c] sm:$0xff]
    %v267 = vld [vmem:[%s261 + $0x24] sm:$0xf]
    %v268 = vld [vmem:[%s261 + $0x28] sm:$0xff]
    %v269 = vld [vmem:[%s261 + $0x30] sm:$0xff]
    %v270 = vld [vmem:[%s261 + $0x38] sm:$0xf]
    %v271 = vld [vmem:[%s261 + $0x3c] sm:$0x33]
    %v272 = vld [vmem:[%s261 + $0x44] sm:$0x33]
    %v273 = vld [vmem:[%s261 + $0x4c] sm:$0x3]
    %v286 = vunpack.c.l.b16 %v262
    %v287 = vunpack.c.h.b16 %v262
    %v288 = vunpack.c.l.b16 %v263
    %v289 = vunpack.c.h.b16 %v263
    %v290 = vunpack.c.l.b16 %v264
    %v291 = vunpack.c.l.b16 %v265
    %v292 = vunpack.c.h.b16 %v265
    %v293 = vunpack.c.l.b16 %v266
    %v294 = vunpack.c.h.b16 %v266
    %v295 = vunpack.c.l.b16 %v267
    %v296 = vunpack.c.l.b16 %v268
    %v297 = vunpack.c.h.b16 %v268
    %v298 = vunpack.c.l.b16 %v269
    %v299 = vunpack.c.h.b16 %v269
    %v300 = vunpack.c.l.b16 %v270
    %v301 = vunpack.c.l.b16 %v271
    %v302 = vunpack.c.h.b16 %v271
    %v303 = vunpack.c.l.b16 %v272
    %v304 = vunpack.c.h.b16 %v272
    %v305 = vunpack.c.l.b16 %v273
    %v306 = vpack.c.b16 %v291, %v286
    %v307 = vpack.c.b16 %v292, %v287
    %v308 = vpack.c.b16 %v293, %v288
    %v309 = vpack.c.b16 %v294, %v289
    %v310 = vpack.c.b16 %v295, %v290
    %v311 = vpack.c.b16 %v301, %v296
    %v312 = vpack.c.b16 %v302, %v297
    %v313 = vpack.c.b16 %v303, %v298
    %v314 = vpack.c.b16 %v304, %v299
    %v315 = vpack.c.b16 %v305, %v300
    %vm321 = vcmask 228352
    %v322 = vsel %vm321, %v185, 0
    %v324 = vsel %vm321, %v186, 0
    %v326 = vsel %vm321, %v187, 0
    %v328 = vsel %vm321, %v188, 0
    %v330 = vsel %vm321, %v189, 0
    %v332 = vsel %vm321, %v190, 0
    %v334 = vsel %vm321, %v191, 0
    %vm336 = vcmask 1045504
    %v338 = vsel %vm336, %v311, 0
    %v341 = vsel %vm336, %v312, 0
    %v344 = vsel %vm336, %v313, 0
    %v347 = vsel %vm336, %v314, 0
    %v350 = vsel %vm336, %v315, 0
    %352 = vmatprep.subr.bf16.mxu0 0
    %353 = vmatpush1.bf16.msra.mxu0 0
    %354 = vmatprep.subr.bf16.mxu0 0
    %355 = vmatpush1.bf16.msra.mxu0 0
    %356 = vmatprep.subr.bf16.mxu0 0
    %357 = vmatpush1.bf16.msra.mxu0 0
    %358 = vmatprep.subr.bf16.mxu0 0
    %359 = vmatpush1.bf16.msra.mxu0 0
    %360 = vmatprep.subr.bf16.mxu0 0
    %361 = vmatpush1.bf16.msra.mxu0 0
    %362 = vmatprep.subr.bf16.mxu0 0
    %363 = vmatpush1.bf16.msra.mxu0 0
    %364 = vmatprep.subr.bf16.mxu0 %v341
    %365 = vmatpush1.bf16.msra.mxu0 %v338
    %366 = vmatprep.subr.bf16.mxu0 %v307
    %367 = vmatpush1.bf16.msra.mxu0 %v306
    %368 = vmatprep.subr.bf16.mxu0 0
    %369 = vmatpush2.bf16.msra.mxu0 0
    %370 = vmatprep.subr.bf16.mxu0 0
    %371 = vmatpush2.bf16.msra.mxu0 0
    %372 = vmatprep.subr.bf16.mxu0 0
    %373 = vmatpush2.bf16.msra.mxu0 0
    %374 = vmatprep.subr.bf16.mxu0 0
    %375 = vmatpush2.bf16.msra.mxu0 0
    %376 = vmatprep.subr.bf16.mxu0 0
    %377 = vmatpush2.bf16.msra.mxu0 0
    %378 = vmatprep.subr.bf16.mxu0 0
    %379 = vmatpush2.bf16.msra.mxu0 0
    %380 = vmatprep.subr.bf16.mxu0 0
    %381 = vmatpush2.bf16.msra.mxu0 0
    %382 = vmatprep.subr.bf16.mxu0 0
    %383 = vmatpush2.bf16.msra.mxu0 0
    %384 = vmatprep.mubr.bf16.mxu0 0
    %385 = vmatmul.mubr.bf16.gmra.mxu0 %v322
    %v386 = vpop.f32.mrf.mxu0
    %v387 = vadd.f32 0.0, %v386
    %v388 = vpop.f32.mrf.mxu0
    %v389 = vadd.f32 0.0, %v388
    %v390 = vpop.f32.mrf.mxu0
    %v391 = vadd.f32 0.0, %v390
    %v392 = vpop.f32.mrf.mxu0
    %v393 = vadd.f32 0.0, %v392
    %394 = vmatprep.mubr.bf16.mxu0 0
    %395 = vmatmul.mubr.bf16.gmra.mxu0 %v324
    %v396 = vpop.f32.mrf.mxu0
    %v397 = vadd.f32 0.0, %v396
    %v398 = vpop.f32.mrf.mxu0
    %v399 = vadd.f32 0.0, %v398
    %v400 = vpop.f32.mrf.mxu0
    %v401 = vadd.f32 0.0, %v400
    %v402 = vpop.f32.mrf.mxu0
    %v403 = vadd.f32 0.0, %v402
    %404 = vmatprep.mubr.bf16.mxu0 0
    %405 = vmatmul.mubr.bf16.gmra.mxu0 %v326
    %v406 = vpop.f32.mrf.mxu0
    %v407 = vadd.f32 0.0, %v406
    %v408 = vpop.f32.mrf.mxu0
    %v409 = vadd.f32 0.0, %v408
    %v410 = vpop.f32.mrf.mxu0
    %v411 = vadd.f32 0.0, %v410
    %v412 = vpop.f32.mrf.mxu0
    %v413 = vadd.f32 0.0, %v412
    %414 = vmatprep.mubr.bf16.mxu0 0
    %415 = vmatmul.mubr.bf16.gmra.mxu0 %v328
    %v416 = vpop.f32.mrf.mxu0
    %v417 = vadd.f32 0.0, %v416
    %v418 = vpop.f32.mrf.mxu0
    %v419 = vadd.f32 0.0, %v418
    %v420 = vpop.f32.mrf.mxu0
    %v421 = vadd.f32 0.0, %v420
    %v422 = vpop.f32.mrf.mxu0
    %v423 = vadd.f32 0.0, %v422
    %424 = vmatprep.mubr.bf16.mxu0 0
    %425 = vmatmul.mubr.bf16.gmra.mxu0 %v330
    %v426 = vpop.f32.mrf.mxu0
    %v427 = vadd.f32 0.0, %v426
    %v428 = vpop.f32.mrf.mxu0
    %v429 = vadd.f32 0.0, %v428
    %v430 = vpop.f32.mrf.mxu0
    %v431 = vadd.f32 0.0, %v430
    %v432 = vpop.f32.mrf.mxu0
    %v433 = vadd.f32 0.0, %v432
    %434 = vmatprep.mubr.bf16.mxu0 0
    %435 = vmatmul.mubr.bf16.gmra.mxu0 %v332
    %v436 = vpop.f32.mrf.mxu0
    %v437 = vadd.f32 0.0, %v436
    %v438 = vpop.f32.mrf.mxu0
    %v439 = vadd.f32 0.0, %v438
    %v440 = vpop.f32.mrf.mxu0
    %v441 = vadd.f32 0.0, %v440
    %v442 = vpop.f32.mrf.mxu0
    %v443 = vadd.f32 0.0, %v442
    %444 = vmatprep.mubr.bf16.mxu0 0
    %445 = vmatmul.mubr.bf16.gmra.mxu0 %v334
    %v446 = vpop.f32.mrf.mxu0
    %v447 = vadd.f32 0.0, %v446
    %v448 = vpop.f32.mrf.mxu0
    %v449 = vadd.f32 0.0, %v448
    %v450 = vpop.f32.mrf.mxu0
    %v451 = vadd.f32 0.0, %v450
    %v452 = vpop.f32.mrf.mxu0
    %v453 = vadd.f32 0.0, %v452
    %454 = vdwg.mxu0
    %455 = vmatprep.subr.bf16.mxu0 0
    %456 = vmatpush1.bf16.msra.mxu0 0
    %457 = vmatprep.subr.bf16.mxu0 0
    %458 = vmatpush1.bf16.msra.mxu0 0
    %459 = vmatprep.subr.bf16.mxu0 0
    %460 = vmatpush1.bf16.msra.mxu0 0
    %461 = vmatprep.subr.bf16.mxu0 0
    %462 = vmatpush1.bf16.msra.mxu0 0
    %463 = vmatprep.subr.bf16.mxu0 0
    %464 = vmatpush1.bf16.msra.mxu0 0
    %465 = vmatprep.subr.bf16.mxu0 0
    %466 = vmatpush1.bf16.msra.mxu0 0
    %467 = vmatprep.subr.bf16.mxu0 %v347
    %468 = vmatpush1.bf16.msra.mxu0 %v344
    %469 = vmatprep.subr.bf16.mxu0 %v309
    %470 = vmatpush1.bf16.msra.mxu0 %v308
    %471 = vmatprep.subr.bf16.mxu0 0
    %472 = vmatpush2.bf16.msra.mxu0 0
    %473 = vmatprep.subr.bf16.mxu0 0
    %474 = vmatpush2.bf16.msra.mxu0 0
    %475 = vmatprep.subr.bf16.mxu0 0
    %476 = vmatpush2.bf16.msra.mxu0 0
    %477 = vmatprep.subr.bf16.mxu0 0
    %478 = vmatpush2.bf16.msra.mxu0 0
    %479 = vmatprep.subr.bf16.mxu0 0
    %480 = vmatpush2.bf16.msra.mxu0 0
    %481 = vmatprep.subr.bf16.mxu0 0
    %482 = vmatpush2.bf16.msra.mxu0 0
    %483 = vmatprep.subr.bf16.mxu0 0
    %484 = vmatpush2.bf16.msra.mxu0 0
    %485 = vmatprep.subr.bf16.mxu0 0
    %486 = vmatpush2.bf16.msra.mxu0 0
    %487 = vmatprep.mubr.bf16.mxu0 0
    %488 = vmatmul.mubr.bf16.gmra.mxu0 %v322
    %v489 = vpop.f32.mrf.mxu0
    %v490 = vadd.f32 0.0, %v489
    %v491 = vpop.f32.mrf.mxu0
    %v492 = vadd.f32 0.0, %v491
    %v493 = vpop.f32.mrf.mxu0
    %v494 = vadd.f32 0.0, %v493
    %v495 = vpop.f32.mrf.mxu0
    %v496 = vadd.f32 0.0, %v495
    %497 = vmatprep.mubr.bf16.mxu0 0
    %498 = vmatmul.mubr.bf16.gmra.mxu0 %v324
    %v499 = vpop.f32.mrf.mxu0
    %v500 = vadd.f32 0.0, %v499
    %v501 = vpop.f32.mrf.mxu0
    %v502 = vadd.f32 0.0, %v501
    %v503 = vpop.f32.mrf.mxu0
    %v504 = vadd.f32 0.0, %v503
    %v505 = vpop.f32.mrf.mxu0
    %v506 = vadd.f32 0.0, %v505
    %507 = vmatprep.mubr.bf16.mxu0 0
    %508 = vmatmul.mubr.bf16.gmra.mxu0 %v326
    %v509 = vpop.f32.mrf.mxu0
    %v510 = vadd.f32 0.0, %v509
    %v511 = vpop.f32.mrf.mxu0
    %v512 = vadd.f32 0.0, %v511
    %v513 = vpop.f32.mrf.mxu0
    %v514 = vadd.f32 0.0, %v513
    %v515 = vpop.f32.mrf.mxu0
    %v516 = vadd.f32 0.0, %v515
    %517 = vmatprep.mubr.bf16.mxu0 0
    %518 = vmatmul.mubr.bf16.gmra.mxu0 %v328
    %v519 = vpop.f32.mrf.mxu0
    %v520 = vadd.f32 0.0, %v519
    %v521 = vpop.f32.mrf.mxu0
    %v522 = vadd.f32 0.0, %v521
    %v523 = vpop.f32.mrf.mxu0
    %v524 = vadd.f32 0.0, %v523
    %v525 = vpop.f32.mrf.mxu0
    %v526 = vadd.f32 0.0, %v525
    %527 = vmatprep.mubr.bf16.mxu0 0
    %528 = vmatmul.mubr.bf16.gmra.mxu0 %v330
    %v529 = vpop.f32.mrf.mxu0
    %v530 = vadd.f32 0.0, %v529
    %v531 = vpop.f32.mrf.mxu0
    %v532 = vadd.f32 0.0, %v531
    %v533 = vpop.f32.mrf.mxu0
    %v534 = vadd.f32 0.0, %v533
    %v535 = vpop.f32.mrf.mxu0
    %v536 = vadd.f32 0.0, %v535
    %537 = vmatprep.mubr.bf16.mxu0 0
    %538 = vmatmul.mubr.bf16.gmra.mxu0 %v332
    %v539 = vpop.f32.mrf.mxu0
    %v540 = vadd.f32 0.0, %v539
    %v541 = vpop.f32.mrf.mxu0
    %v542 = vadd.f32 0.0, %v541
    %v543 = vpop.f32.mrf.mxu0
    %v544 = vadd.f32 0.0, %v543
    %v545 = vpop.f32.mrf.mxu0
    %v546 = vadd.f32 0.0, %v545
    %547 = vmatprep.mubr.bf16.mxu0 0
    %548 = vmatmul.mubr.bf16.gmra.mxu0 %v334
    %v549 = vpop.f32.mrf.mxu0
    %v550 = vadd.f32 0.0, %v549
    %v551 = vpop.f32.mrf.mxu0
    %v552 = vadd.f32 0.0, %v551
    %v553 = vpop.f32.mrf.mxu0
    %v554 = vadd.f32 0.0, %v553
    %v555 = vpop.f32.mrf.mxu0
    %v556 = vadd.f32 0.0, %v555
    %557 = vdwg.mxu0
    %558 = vmatprep.subr.bf16.mxu0 0
    %559 = vmatpush1.bf16.msra.mxu0 0
    %560 = vmatprep.subr.bf16.mxu0 0
    %561 = vmatpush1.bf16.msra.mxu0 0
    %562 = vmatprep.subr.bf16.mxu0 0
    %563 = vmatpush1.bf16.msra.mxu0 0
    %564 = vmatprep.subr.bf16.mxu0 0
    %565 = vmatpush1.bf16.msra.mxu0 0
    %566 = vmatprep.subr.bf16.mxu0 0
    %567 = vmatpush1.bf16.msra.mxu0 0
    %568 = vmatprep.subr.bf16.mxu0 0
    %569 = vmatpush1.bf16.msra.mxu0 0
    %570 = vmatprep.subr.bf16.mxu0 0
    %571 = vmatpush1.bf16.msra.mxu0 %v350
    %572 = vmatprep.subr.bf16.mxu0 0
    %573 = vmatpush1.bf16.msra.mxu0 %v310
    %574 = vmatprep.subr.bf16.mxu0 0
    %575 = vmatpush2.bf16.msra.mxu0 0
    %576 = vmatprep.subr.bf16.mxu0 0
    %577 = vmatpush2.bf16.msra.mxu0 0
    %578 = vmatprep.subr.bf16.mxu0 0
    %579 = vmatpush2.bf16.msra.mxu0 0
    %580 = vmatprep.subr.bf16.mxu0 0
    %581 = vmatpush2.bf16.msra.mxu0 0
    %582 = vmatprep.subr.bf16.mxu0 0
    %583 = vmatpush2.bf16.msra.mxu0 0
    %584 = vmatprep.subr.bf16.mxu0 0
    %585 = vmatpush2.bf16.msra.mxu0 0
    %586 = vmatprep.subr.bf16.mxu0 0
    %587 = vmatpush2.bf16.msra.mxu0 0
    %588 = vmatprep.subr.bf16.mxu0 0
    %589 = vmatpush2.bf16.msra.mxu0 0
    %590 = vmatprep.mubr.bf16.mxu0 0
    %591 = vmatmul.mubr.bf16.gmra.mxu0 %v322
    %v592 = vpop.f32.mrf.mxu0
    %v593 = vadd.f32 0.0, %v592
    %v594 = vpop.f32.mrf.mxu0
    %v595 = vpop.f32.mrf.mxu0
    %v596 = vadd.f32 0.0, %v595
    %v597 = vpop.f32.mrf.mxu0
    %598 = vmatprep.mubr.bf16.mxu0 0
    %599 = vmatmul.mubr.bf16.gmra.mxu0 %v324
    %v600 = vpop.f32.mrf.mxu0
    %v601 = vadd.f32 0.0, %v600
    %v602 = vpop.f32.mrf.mxu0
    %v603 = vpop.f32.mrf.mxu0
    %v604 = vadd.f32 0.0, %v603
    %v605 = vpop.f32.mrf.mxu0
    %606 = vmatprep.mubr.bf16.mxu0 0
    %607 = vmatmul.mubr.bf16.gmra.mxu0 %v326
    %v608 = vpop.f32.mrf.mxu0
    %v609 = vadd.f32 0.0, %v608
    %v610 = vpop.f32.mrf.mxu0
    %v611 = vpop.f32.mrf.mxu0
    %v612 = vadd.f32 0.0, %v611
    %v613 = vpop.f32.mrf.mxu0
    %614 = vmatprep.mubr.bf16.mxu0 0
    %615 = vmatmul.mubr.bf16.gmra.mxu0 %v328
    %v616 = vpop.f32.mrf.mxu0
    %v617 = vadd.f32 0.0, %v616
    %v618 = vpop.f32.mrf.mxu0
    %v619 = vpop.f32.mrf.mxu0
    %v620 = vadd.f32 0.0, %v619
    %v621 = vpop.f32.mrf.mxu0
    %622 = vmatprep.mubr.bf16.mxu0 0
    %623 = vmatmul.mubr.bf16.gmra.mxu0 %v330
    %v624 = vpop.f32.mrf.mxu0
    %v625 = vadd.f32 0.0, %v624
    %v626 = vpop.f32.mrf.mxu0
    %v627 = vpop.f32.mrf.mxu0
    %v628 = vadd.f32 0.0, %v627
    %v629 = vpop.f32.mrf.mxu0
    %630 = vmatprep.mubr.bf16.mxu0 0
    %631 = vmatmul.mubr.bf16.gmra.mxu0 %v332
    %v632 = vpop.f32.mrf.mxu0
    %v633 = vadd.f32 0.0, %v632
    %v634 = vpop.f32.mrf.mxu0
    %v635 = vpop.f32.mrf.mxu0
    %v636 = vadd.f32 0.0, %v635
    %v637 = vpop.f32.mrf.mxu0
    %638 = vmatprep.mubr.bf16.mxu0 0
    %639 = vmatmul.mubr.bf16.gmra.mxu0 %v334
    %v640 = vpop.f32.mrf.mxu0
    %v641 = vadd.f32 0.0, %v640
    %v642 = vpop.f32.mrf.mxu0
    %v643 = vpop.f32.mrf.mxu0
    %v644 = vadd.f32 0.0, %v643
    %v645 = vpop.f32.mrf.mxu0
    %646 = vdwg.mxu0
    %v659 = vunpack.c.l.b16 %v249
    %v660 = vunpack.c.h.b16 %v249
    %v661 = vunpack.c.l.b16 %v250
    %v662 = vunpack.c.h.b16 %v250
    %v663 = vunpack.c.l.b16 %v251
    %v664 = vunpack.c.l.b16 %v252
    %v665 = vunpack.c.h.b16 %v252
    %v666 = vunpack.c.l.b16 %v253
    %v667 = vunpack.c.h.b16 %v253
    %v668 = vunpack.c.l.b16 %v254
    %v669 = vunpack.c.l.b16 %v255
    %v670 = vunpack.c.h.b16 %v255
    %v671 = vunpack.c.l.b16 %v256
    %v672 = vunpack.c.h.b16 %v256
    %v673 = vunpack.c.l.b16 %v257
    %v674 = vunpack.c.l.b16 %v258
    %v675 = vunpack.c.h.b16 %v258
    %v676 = vunpack.c.l.b16 %v259
    %v677 = vunpack.c.h.b16 %v259
    %v678 = vunpack.c.l.b16 %v260
    %v679 = vpack.c.b16 %v664, %v659
    %v680 = vpack.c.b16 %v665, %v660
    %v681 = vpack.c.b16 %v666, %v661
    %v682 = vpack.c.b16 %v667, %v662
    %v683 = vpack.c.b16 %v668, %v663
    %v684 = vpack.c.b16 %v674, %v669
    %v685 = vpack.c.b16 %v675, %v670
    %v686 = vpack.c.b16 %v676, %v671
    %v687 = vpack.c.b16 %v677, %v672
    %v688 = vpack.c.b16 %v678, %v673
    %v694 = vsel %vm321, %v90, 0
    %v696 = vsel %vm321, %v91, 0
    %v698 = vsel %vm321, %v92, 0
    %v700 = vsel %vm321, %v93, 0
    %v702 = vsel %vm321, %v94, 0
    %v704 = vsel %vm321, %v95, 0
    %v706 = vsel %vm321, %v96, 0
    %v709 = vsel %vm336, %v684, 0
    %v712 = vsel %vm336, %v685, 0
    %v715 = vsel %vm336, %v686, 0
    %v718 = vsel %vm336, %v687, 0
    %v721 = vsel %vm336, %v688, 0
    %723 = vmatprep.subr.bf16.mxu0 0
    %724 = vmatpush1.bf16.msra.mxu0 0
    %725 = vmatprep.subr.bf16.mxu0 0
    %726 = vmatpush1.bf16.msra.mxu0 0
    %727 = vmatprep.subr.bf16.mxu0 0
    %728 = vmatpush1.bf16.msra.mxu0 0
    %729 = vmatprep.subr.bf16.mxu0 0
    %730 = vmatpush1.bf16.msra.mxu0 0
    %731 = vmatprep.subr.bf16.mxu0 0
    %732 = vmatpush1.bf16.msra.mxu0 0
    %733 = vmatprep.subr.bf16.mxu0 0
    %734 = vmatpush1.bf16.msra.mxu0 0
    %735 = vmatprep.subr.bf16.mxu0 %v712
    %736 = vmatpush1.bf16.msra.mxu0 %v709
    %737 = vmatprep.subr.bf16.mxu0 %v680
    %738 = vmatpush1.bf16.msra.mxu0 %v679
    %739 = vmatprep.subr.bf16.mxu0 0
    %740 = vmatpush2.bf16.msra.mxu0 0
    %741 = vmatprep.subr.bf16.mxu0 0
    %742 = vmatpush2.bf16.msra.mxu0 0
    %743 = vmatprep.subr.bf16.mxu0 0
    %744 = vmatpush2.bf16.msra.mxu0 0
    %745 = vmatprep.subr.bf16.mxu0 0
    %746 = vmatpush2.bf16.msra.mxu0 0
    %747 = vmatprep.subr.bf16.mxu0 0
    %748 = vmatpush2.bf16.msra.mxu0 0
    %749 = vmatprep.subr.bf16.mxu0 0
    %750 = vmatpush2.bf16.msra.mxu0 0
    %751 = vmatprep.subr.bf16.mxu0 0
    %752 = vmatpush2.bf16.msra.mxu0 0
    %753 = vmatprep.subr.bf16.mxu0 0
    %754 = vmatpush2.bf16.msra.mxu0 0
    %755 = vmatprep.mubr.bf16.mxu0 0
    %756 = vmatmul.mubr.bf16.gmra.mxu0 %v694
    %v757 = vpop.f32.mrf.mxu0
    %v758 = vadd.f32 %v387, %v757
    %v759 = vpop.f32.mrf.mxu0
    %v760 = vadd.f32 %v389, %v759
    %v761 = vpop.f32.mrf.mxu0
    %v762 = vadd.f32 %v391, %v761
    %v763 = vpop.f32.mrf.mxu0
    %v764 = vadd.f32 %v393, %v763
    %765 = vmatprep.mubr.bf16.mxu0 0
    %766 = vmatmul.mubr.bf16.gmra.mxu0 %v696
    %v767 = vpop.f32.mrf.mxu0
    %v768 = vadd.f32 %v397, %v767
    %v769 = vpop.f32.mrf.mxu0
    %v770 = vadd.f32 %v399, %v769
    %v771 = vpop.f32.mrf.mxu0
    %v772 = vadd.f32 %v401, %v771
    %v773 = vpop.f32.mrf.mxu0
    %v774 = vadd.f32 %v403, %v773
    %775 = vmatprep.mubr.bf16.mxu0 0
    %776 = vmatmul.mubr.bf16.gmra.mxu0 %v698
    %v777 = vpop.f32.mrf.mxu0
    %v778 = vadd.f32 %v407, %v777
    %v779 = vpop.f32.mrf.mxu0
    %v780 = vadd.f32 %v409, %v779
    %v781 = vpop.f32.mrf.mxu0
    %v782 = vadd.f32 %v411, %v781
    %v783 = vpop.f32.mrf.mxu0
    %v784 = vadd.f32 %v413, %v783
    %785 = vmatprep.mubr.bf16.mxu0 0
    %786 = vmatmul.mubr.bf16.gmra.mxu0 %v700
    %v787 = vpop.f32.mrf.mxu0
    %v788 = vadd.f32 %v417, %v787
    %v789 = vpop.f32.mrf.mxu0
    %v790 = vadd.f32 %v419, %v789
    %v791 = vpop.f32.mrf.mxu0
    %v792 = vadd.f32 %v421, %v791
    %v793 = vpop.f32.mrf.mxu0
    %v794 = vadd.f32 %v423, %v793
    %795 = vmatprep.mubr.bf16.mxu0 0
    %796 = vmatmul.mubr.bf16.gmra.mxu0 %v702
    %v797 = vpop.f32.mrf.mxu0
    %v798 = vadd.f32 %v427, %v797
    %v799 = vpop.f32.mrf.mxu0
    %v800 = vadd.f32 %v429, %v799
    %v801 = vpop.f32.mrf.mxu0
    %v802 = vadd.f32 %v431, %v801
    %v803 = vpop.f32.mrf.mxu0
    %v804 = vadd.f32 %v433, %v803
    %805 = vmatprep.mubr.bf16.mxu0 0
    %806 = vmatmul.mubr.bf16.gmra.mxu0 %v704
    %v807 = vpop.f32.mrf.mxu0
    %v808 = vadd.f32 %v437, %v807
    %v809 = vpop.f32.mrf.mxu0
    %v810 = vadd.f32 %v439, %v809
    %v811 = vpop.f32.mrf.mxu0
    %v812 = vadd.f32 %v441, %v811
    %v813 = vpop.f32.mrf.mxu0
    %v814 = vadd.f32 %v443, %v813
    %815 = vmatprep.mubr.bf16.mxu0 0
    %816 = vmatmul.mubr.bf16.gmra.mxu0 %v706
    %v817 = vpop.f32.mrf.mxu0
    %v818 = vadd.f32 %v447, %v817
    %v819 = vpop.f32.mrf.mxu0
    %v820 = vadd.f32 %v449, %v819
    %v821 = vpop.f32.mrf.mxu0
    %v822 = vadd.f32 %v451, %v821
    %v823 = vpop.f32.mrf.mxu0
    %v824 = vadd.f32 %v453, %v823
    %825 = vdwg.mxu0
    %826 = vmatprep.subr.bf16.mxu0 0
    %827 = vmatpush1.bf16.msra.mxu0 0
    %828 = vmatprep.subr.bf16.mxu0 0
    %829 = vmatpush1.bf16.msra.mxu0 0
    %830 = vmatprep.subr.bf16.mxu0 0
    %831 = vmatpush1.bf16.msra.mxu0 0
    %832 = vmatprep.subr.bf16.mxu0 0
    %833 = vmatpush1.bf16.msra.mxu0 0
    %834 = vmatprep.subr.bf16.mxu0 0
    %835 = vmatpush1.bf16.msra.mxu0 0
    %836 = vmatprep.subr.bf16.mxu0 0
    %837 = vmatpush1.bf16.msra.mxu0 0
    %838 = vmatprep.subr.bf16.mxu0 %v718
    %839 = vmatpush1.bf16.msra.mxu0 %v715
    %840 = vmatprep.subr.bf16.mxu0 %v682
    %841 = vmatpush1.bf16.msra.mxu0 %v681
    %842 = vmatprep.subr.bf16.mxu0 0
    %843 = vmatpush2.bf16.msra.mxu0 0
    %844 = vmatprep.subr.bf16.mxu0 0
    %845 = vmatpush2.bf16.msra.mxu0 0
    %846 = vmatprep.subr.bf16.mxu0 0
    %847 = vmatpush2.bf16.msra.mxu0 0
    %848 = vmatprep.subr.bf16.mxu0 0
    %849 = vmatpush2.bf16.msra.mxu0 0
    %850 = vmatprep.subr.bf16.mxu0 0
    %851 = vmatpush2.bf16.msra.mxu0 0
    %852 = vmatprep.subr.bf16.mxu0 0
    %853 = vmatpush2.bf16.msra.mxu0 0
    %854 = vmatprep.subr.bf16.mxu0 0
    %855 = vmatpush2.bf16.msra.mxu0 0
    %856 = vmatprep.subr.bf16.mxu0 0
    %857 = vmatpush2.bf16.msra.mxu0 0
    %858 = vmatprep.mubr.bf16.mxu0 0
    %859 = vmatmul.mubr.bf16.gmra.mxu0 %v694
    %v860 = vpop.f32.mrf.mxu0
    %v861 = vadd.f32 %v490, %v860
    %v862 = vpop.f32.mrf.mxu0
    %v863 = vadd.f32 %v492, %v862
    %v864 = vpop.f32.mrf.mxu0
    %v865 = vadd.f32 %v494, %v864
    %v866 = vpop.f32.mrf.mxu0
    %v867 = vadd.f32 %v496, %v866
    %868 = vmatprep.mubr.bf16.mxu0 0
    %869 = vmatmul.mubr.bf16.gmra.mxu0 %v696
    %v870 = vpop.f32.mrf.mxu0
    %v871 = vadd.f32 %v500, %v870
    %v872 = vpop.f32.mrf.mxu0
    %v873 = vadd.f32 %v502, %v872
    %v874 = vpop.f32.mrf.mxu0
    %v875 = vadd.f32 %v504, %v874
    %v876 = vpop.f32.mrf.mxu0
    %v877 = vadd.f32 %v506, %v876
    %878 = vmatprep.mubr.bf16.mxu0 0
    %879 = vmatmul.mubr.bf16.gmra.mxu0 %v698
    %v880 = vpop.f32.mrf.mxu0
    %v881 = vadd.f32 %v510, %v880
    %v882 = vpop.f32.mrf.mxu0
    %v883 = vadd.f32 %v512, %v882
    %v884 = vpop.f32.mrf.mxu0
    %v885 = vadd.f32 %v514, %v884
    %v886 = vpop.f32.mrf.mxu0
    %v887 = vadd.f32 %v516, %v886
    %888 = vmatprep.mubr.bf16.mxu0 0
    %889 = vmatmul.mubr.bf16.gmra.mxu0 %v700
    %v890 = vpop.f32.mrf.mxu0
    %v891 = vadd.f32 %v520, %v890
    %v892 = vpop.f32.mrf.mxu0
    %v893 = vadd.f32 %v522, %v892
    %v894 = vpop.f32.mrf.mxu0
    %v895 = vadd.f32 %v524, %v894
    %v896 = vpop.f32.mrf.mxu0
    %v897 = vadd.f32 %v526, %v896
    %898 = vmatprep.mubr.bf16.mxu0 0
    %899 = vmatmul.mubr.bf16.gmra.mxu0 %v702
    %v900 = vpop.f32.mrf.mxu0
    %v901 = vadd.f32 %v530, %v900
    %v902 = vpop.f32.mrf.mxu0
    %v903 = vadd.f32 %v532, %v902
    %v904 = vpop.f32.mrf.mxu0
    %v905 = vadd.f32 %v534, %v904
    %v906 = vpop.f32.mrf.mxu0
    %v907 = vadd.f32 %v536, %v906
    %908 = vmatprep.mubr.bf16.mxu0 0
    %909 = vmatmul.mubr.bf16.gmra.mxu0 %v704
    %v910 = vpop.f32.mrf.mxu0
    %v911 = vadd.f32 %v540, %v910
    %v912 = vpop.f32.mrf.mxu0
    %v913 = vadd.f32 %v542, %v912
    %v914 = vpop.f32.mrf.mxu0
    %v915 = vadd.f32 %v544, %v914
    %v916 = vpop.f32.mrf.mxu0
    %v917 = vadd.f32 %v546, %v916
    %918 = vmatprep.mubr.bf16.mxu0 0
    %919 = vmatmul.mubr.bf16.gmra.mxu0 %v706
    %v920 = vpop.f32.mrf.mxu0
    %v921 = vadd.f32 %v550, %v920
    %v922 = vpop.f32.mrf.mxu0
    %v923 = vadd.f32 %v552, %v922
    %v924 = vpop.f32.mrf.mxu0
    %v925 = vadd.f32 %v554, %v924
    %v926 = vpop.f32.mrf.mxu0
    %v927 = vadd.f32 %v556, %v926
    %928 = vdwg.mxu0
    %929 = vmatprep.subr.bf16.mxu0 0
    %930 = vmatpush1.bf16.msra.mxu0 0
    %931 = vmatprep.subr.bf16.mxu0 0
    %932 = vmatpush1.bf16.msra.mxu0 0
    %933 = vmatprep.subr.bf16.mxu0 0
    %934 = vmatpush1.bf16.msra.mxu0 0
    %935 = vmatprep.subr.bf16.mxu0 0
    %936 = vmatpush1.bf16.msra.mxu0 0
    %937 = vmatprep.subr.bf16.mxu0 0
    %938 = vmatpush1.bf16.msra.mxu0 0
    %939 = vmatprep.subr.bf16.mxu0 0
    %940 = vmatpush1.bf16.msra.mxu0 0
    %941 = vmatprep.subr.bf16.mxu0 0
    %942 = vmatpush1.bf16.msra.mxu0 %v721
    %943 = vmatprep.subr.bf16.mxu0 0
    %944 = vmatpush1.bf16.msra.mxu0 %v683
    %945 = vmatprep.subr.bf16.mxu0 0
    %946 = vmatpush2.bf16.msra.mxu0 0
    %947 = vmatprep.subr.bf16.mxu0 0
    %948 = vmatpush2.bf16.msra.mxu0 0
    %949 = vmatprep.subr.bf16.mxu0 0
    %950 = vmatpush2.bf16.msra.mxu0 0
    %951 = vmatprep.subr.bf16.mxu0 0
    %952 = vmatpush2.bf16.msra.mxu0 0
    %953 = vmatprep.subr.bf16.mxu0 0
    %954 = vmatpush2.bf16.msra.mxu0 0
    %955 = vmatprep.subr.bf16.mxu0 0
    %956 = vmatpush2.bf16.msra.mxu0 0
    %957 = vmatprep.subr.bf16.mxu0 0
    %958 = vmatpush2.bf16.msra.mxu0 0
    %959 = vmatprep.subr.bf16.mxu0 0
    %960 = vmatpush2.bf16.msra.mxu0 0
    %961 = vmatprep.mubr.bf16.mxu0 0
    %962 = vmatmul.mubr.bf16.gmra.mxu0 %v694
    %v963 = vpop.f32.mrf.mxu0
    %v964 = vadd.f32 %v593, %v963
    %v965 = vpop.f32.mrf.mxu0
    %v966 = vpop.f32.mrf.mxu0
    %v967 = vadd.f32 %v596, %v966
    %v968 = vpop.f32.mrf.mxu0
    %969 = vmatprep.mubr.bf16.mxu0 0
    %970 = vmatmul.mubr.bf16.gmra.mxu0 %v696
    %v971 = vpop.f32.mrf.mxu0
    %v972 = vadd.f32 %v601, %v971
    %v973 = vpop.f32.mrf.mxu0
    %v974 = vpop.f32.mrf.mxu0
    %v975 = vadd.f32 %v604, %v974
    %v976 = vpop.f32.mrf.mxu0
    %977 = vmatprep.mubr.bf16.mxu0 0
    %978 = vmatmul.mubr.bf16.gmra.mxu0 %v698
    %v979 = vpop.f32.mrf.mxu0
    %v980 = vadd.f32 %v609, %v979
    %v981 = vpop.f32.mrf.mxu0
    %v982 = vpop.f32.mrf.mxu0
    %v983 = vadd.f32 %v612, %v982
    %v984 = vpop.f32.mrf.mxu0
    %985 = vmatprep.mubr.bf16.mxu0 0
    %986 = vmatmul.mubr.bf16.gmra.mxu0 %v700
    %v987 = vpop.f32.mrf.mxu0
    %v988 = vadd.f32 %v617, %v987
    %v989 = vpop.f32.mrf.mxu0
    %v990 = vpop.f32.mrf.mxu0
    %v991 = vadd.f32 %v620, %v990
    %v992 = vpop.f32.mrf.mxu0
    %993 = vmatprep.mubr.bf16.mxu0 0
    %994 = vmatmul.mubr.bf16.gmra.mxu0 %v702
    %v995 = vpop.f32.mrf.mxu0
    %v996 = vadd.f32 %v625, %v995
    %v997 = vpop.f32.mrf.mxu0
    %v998 = vpop.f32.mrf.mxu0
    %v999 = vadd.f32 %v628, %v998
    %v1000 = vpop.f32.mrf.mxu0
    %1001 = vmatprep.mubr.bf16.mxu0 0
    %1002 = vmatmul.mubr.bf16.gmra.mxu0 %v704
    %v1003 = vpop.f32.mrf.mxu0
    %v1004 = vadd.f32 %v633, %v1003
    %v1005 = vpop.f32.mrf.mxu0
    %v1006 = vpop.f32.mrf.mxu0
    %v1007 = vadd.f32 %v636, %v1006
    %v1008 = vpop.f32.mrf.mxu0
    %1009 = vmatprep.mubr.bf16.mxu0 0
    %1010 = vmatmul.mubr.bf16.gmra.mxu0 %v706
    %v1011 = vpop.f32.mrf.mxu0
    %v1012 = vadd.f32 %v641, %v1011
    %v1013 = vpop.f32.mrf.mxu0
    %v1014 = vpop.f32.mrf.mxu0
    %v1015 = vadd.f32 %v644, %v1014
    %v1016 = vpop.f32.mrf.mxu0
    %1017 = vdwg.mxu0
    %s1018 = scalar_lea.vmem %s1, 160
    %v1019 = vld [vmem:[%s1018] sm:$0xff]
    %v1020 = vld [vmem:[%s1018 + $0x8] sm:$0xff]
    %v1021 = vld [vmem:[%s1018 + $0x10] sm:$0xf]
    %v1022 = vld [vmem:[%s1018 + $0x14] sm:$0xff]
    %v1023 = vld [vmem:[%s1018 + $0x1c] sm:$0xff]
    %v1024 = vld [vmem:[%s1018 + $0x24] sm:$0xf]
    %v1025 = vld [vmem:[%s1018 + $0x28] sm:$0xff]
    %v1026 = vld [vmem:[%s1018 + $0x30] sm:$0xff]
    %v1027 = vld [vmem:[%s1018 + $0x38] sm:$0xf]
    %v1028 = vld [vmem:[%s1018 + $0x3c] sm:$0x33]
    %v1029 = vld [vmem:[%s1018 + $0x44] sm:$0x33]
    %v1030 = vld [vmem:[%s1018 + $0x4c] sm:$0x3]
    %v1043 = vunpack.c.l.b16 %v1019
    %v1044 = vunpack.c.h.b16 %v1019
    %v1045 = vunpack.c.l.b16 %v1020
    %v1046 = vunpack.c.h.b16 %v1020
    %v1047 = vunpack.c.l.b16 %v1021
    %v1048 = vunpack.c.l.b16 %v1022
    %v1049 = vunpack.c.h.b16 %v1022
    %v1050 = vunpack.c.l.b16 %v1023
    %v1051 = vunpack.c.h.b16 %v1023
    %v1052 = vunpack.c.l.b16 %v1024
    %v1053 = vunpack.c.l.b16 %v1025
    %v1054 = vunpack.c.h.b16 %v1025
    %v1055 = vunpack.c.l.b16 %v1026
    %v1056 = vunpack.c.h.b16 %v1026
    %v1057 = vunpack.c.l.b16 %v1027
    %v1058 = vunpack.c.l.b16 %v1028
    %v1059 = vunpack.c.h.b16 %v1028
    %v1060 = vunpack.c.l.b16 %v1029
    %v1061 = vunpack.c.h.b16 %v1029
    %v1062 = vunpack.c.l.b16 %v1030
    %v1063 = vpack.c.b16 %v1048, %v1043
    %v1064 = vpack.c.b16 %v1049, %v1044
    %v1065 = vpack.c.b16 %v1050, %v1045
    %v1066 = vpack.c.b16 %v1051, %v1046
    %v1067 = vpack.c.b16 %v1052, %v1047
    %v1068 = vpack.c.b16 %v1058, %v1053
    %v1069 = vpack.c.b16 %v1059, %v1054
    %v1070 = vpack.c.b16 %v1060, %v1055
    %v1071 = vpack.c.b16 %v1061, %v1056
    %v1072 = vpack.c.b16 %v1062, %v1057
    %v1079 = vsel %vm321, %v109, 0
    %v1082 = vsel %vm321, %v117, 0
    %v1085 = vsel %vm321, %v125, 0
    %v1088 = vsel %vm321, %v133, 0
    %v1091 = vsel %vm321, %v141, 0
    %v1094 = vsel %vm321, %v149, 0
    %v1097 = vsel %vm321, %v156, 0
    %v1100 = vsel %vm336, %v1068, 0
    %v1103 = vsel %vm336, %v1069, 0
    %v1106 = vsel %vm336, %v1070, 0
    %v1109 = vsel %vm336, %v1071, 0
    %v1112 = vsel %vm336, %v1072, 0
    %1114 = vmatprep.subr.bf16.mxu0 0
    %1115 = vmatpush1.bf16.msra.mxu0 0
    %1116 = vmatprep.subr.bf16.mxu0 0
    %1117 = vmatpush1.bf16.msra.mxu0 0
    %1118 = vmatprep.subr.bf16.mxu0 0
    %1119 = vmatpush1.bf16.msra.mxu0 0
    %1120 = vmatprep.subr.bf16.mxu0 0
    %1121 = vmatpush1.bf16.msra.mxu0 0
    %1122 = vmatprep.subr.bf16.mxu0 0
    %1123 = vmatpush1.bf16.msra.mxu0 0
    %1124 = vmatprep.subr.bf16.mxu0 0
    %1125 = vmatpush1.bf16.msra.mxu0 0
    %1126 = vmatprep.subr.bf16.mxu0 %v1103
    %1127 = vmatpush1.bf16.msra.mxu0 %v1100
    %1128 = vmatprep.subr.bf16.mxu0 %v1064
    %1129 = vmatpush1.bf16.msra.mxu0 %v1063
    %1130 = vmatprep.subr.bf16.mxu0 0
    %1131 = vmatpush2.bf16.msra.mxu0 0
    %1132 = vmatprep.subr.bf16.mxu0 0
    %1133 = vmatpush2.bf16.msra.mxu0 0
    %1134 = vmatprep.subr.bf16.mxu0 0
    %1135 = vmatpush2.bf16.msra.mxu0 0
    %1136 = vmatprep.subr.bf16.mxu0 0
    %1137 = vmatpush2.bf16.msra.mxu0 0
    %1138 = vmatprep.subr.bf16.mxu0 0
    %1139 = vmatpush2.bf16.msra.mxu0 0
    %1140 = vmatprep.subr.bf16.mxu0 0
    %1141 = vmatpush2.bf16.msra.mxu0 0
    %1142 = vmatprep.subr.bf16.mxu0 0
    %1143 = vmatpush2.bf16.msra.mxu0 0
    %1144 = vmatprep.subr.bf16.mxu0 0
    %1145 = vmatpush2.bf16.msra.mxu0 0
    %1146 = vmatprep.mubr.bf16.mxu0 0
    %1147 = vmatmul.mubr.bf16.gmra.mxu0 %v1079
    %v1148 = vpop.f32.mrf.mxu0
    %v1149 = vadd.f32 0.0, %v1148
    %v1150 = vpop.f32.mrf.mxu0
    %v1151 = vadd.f32 0.0, %v1150
    %v1152 = vpop.f32.mrf.mxu0
    %v1153 = vadd.f32 0.0, %v1152
    %v1154 = vpop.f32.mrf.mxu0
    %v1155 = vadd.f32 0.0, %v1154
    %1156 = vmatprep.mubr.bf16.mxu0 0
    %1157 = vmatmul.mubr.bf16.gmra.mxu0 %v1082
    %v1158 = vpop.f32.mrf.mxu0
    %v1159 = vadd.f32 0.0, %v1158
    %v1160 = vpop.f32.mrf.mxu0
    %v1161 = vadd.f32 0.0, %v1160
    %v1162 = vpop.f32.mrf.mxu0
    %v1163 = vadd.f32 0.0, %v1162
    %v1164 = vpop.f32.mrf.mxu0
    %v1165 = vadd.f32 0.0, %v1164
    %1166 = vmatprep.mubr.bf16.mxu0 0
    %1167 = vmatmul.mubr.bf16.gmra.mxu0 %v1085
    %v1168 = vpop.f32.mrf.mxu0
    %v1169 = vadd.f32 0.0, %v1168
    %v1170 = vpop.f32.mrf.mxu0
    %v1171 = vadd.f32 0.0, %v1170
    %v1172 = vpop.f32.mrf.mxu0
    %v1173 = vadd.f32 0.0, %v1172
    %v1174 = vpop.f32.mrf.mxu0
    %v1175 = vadd.f32 0.0, %v1174
    %1176 = vmatprep.mubr.bf16.mxu0 0
    %1177 = vmatmul.mubr.bf16.gmra.mxu0 %v1088
    %v1178 = vpop.f32.mrf.mxu0
    %v1179 = vadd.f32 0.0, %v1178
    %v1180 = vpop.f32.mrf.mxu0
    %v1181 = vadd.f32 0.0, %v1180
    %v1182 = vpop.f32.mrf.mxu0
    %v1183 = vadd.f32 0.0, %v1182
    %v1184 = vpop.f32.mrf.mxu0
    %v1185 = vadd.f32 0.0, %v1184
    %1186 = vmatprep.mubr.bf16.mxu0 0
    %1187 = vmatmul.mubr.bf16.gmra.mxu0 %v1091
    %v1188 = vpop.f32.mrf.mxu0
    %v1189 = vadd.f32 0.0, %v1188
    %v1190 = vpop.f32.mrf.mxu0
    %v1191 = vadd.f32 0.0, %v1190
    %v1192 = vpop.f32.mrf.mxu0
    %v1193 = vadd.f32 0.0, %v1192
    %v1194 = vpop.f32.mrf.mxu0
    %v1195 = vadd.f32 0.0, %v1194
    %1196 = vmatprep.mubr.bf16.mxu0 0
    %1197 = vmatmul.mubr.bf16.gmra.mxu0 %v1094
    %v1198 = vpop.f32.mrf.mxu0
    %v1199 = vadd.f32 0.0, %v1198
    %v1200 = vpop.f32.mrf.mxu0
    %v1201 = vadd.f32 0.0, %v1200
    %v1202 = vpop.f32.mrf.mxu0
    %v1203 = vadd.f32 0.0, %v1202
    %v1204 = vpop.f32.mrf.mxu0
    %v1205 = vadd.f32 0.0, %v1204
    %1206 = vmatprep.mubr.bf16.mxu0 0
    %1207 = vmatmul.mubr.bf16.gmra.mxu0 %v1097
    %v1208 = vpop.f32.mrf.mxu0
    %v1209 = vadd.f32 0.0, %v1208
    %v1210 = vpop.f32.mrf.mxu0
    %v1211 = vadd.f32 0.0, %v1210
    %v1212 = vpop.f32.mrf.mxu0
    %v1213 = vadd.f32 0.0, %v1212
    %v1214 = vpop.f32.mrf.mxu0
    %v1215 = vadd.f32 0.0, %v1214
    %1216 = vdwg.mxu0
    %1217 = vmatprep.subr.bf16.mxu0 0
    %1218 = vmatpush1.bf16.msra.mxu0 0
    %1219 = vmatprep.subr.bf16.mxu0 0
    %1220 = vmatpush1.bf16.msra.mxu0 0
    %1221 = vmatprep.subr.bf16.mxu0 0
    %1222 = vmatpush1.bf16.msra.mxu0 0
    %1223 = vmatprep.subr.bf16.mxu0 0
    %1224 = vmatpush1.bf16.msra.mxu0 0
    %1225 = vmatprep.subr.bf16.mxu0 0
    %1226 = vmatpush1.bf16.msra.mxu0 0
    %1227 = vmatprep.subr.bf16.mxu0 0
    %1228 = vmatpush1.bf16.msra.mxu0 0
    %1229 = vmatprep.subr.bf16.mxu0 %v1109
    %1230 = vmatpush1.bf16.msra.mxu0 %v1106
    %1231 = vmatprep.subr.bf16.mxu0 %v1066
    %1232 = vmatpush1.bf16.msra.mxu0 %v1065
    %1233 = vmatprep.subr.bf16.mxu0 0
    %1234 = vmatpush2.bf16.msra.mxu0 0
    %1235 = vmatprep.subr.bf16.mxu0 0
    %1236 = vmatpush2.bf16.msra.mxu0 0
    %1237 = vmatprep.subr.bf16.mxu0 0
    %1238 = vmatpush2.bf16.msra.mxu0 0
    %1239 = vmatprep.subr.bf16.mxu0 0
    %1240 = vmatpush2.bf16.msra.mxu0 0
    %1241 = vmatprep.subr.bf16.mxu0 0
    %1242 = vmatpush2.bf16.msra.mxu0 0
    %1243 = vmatprep.subr.bf16.mxu0 0
    %1244 = vmatpush2.bf16.msra.mxu0 0
    %1245 = vmatprep.subr.bf16.mxu0 0
    %1246 = vmatpush2.bf16.msra.mxu0 0
    %1247 = vmatprep.subr.bf16.mxu0 0
    %1248 = vmatpush2.bf16.msra.mxu0 0
    %1249 = vmatprep.mubr.bf16.mxu0 0
    %1250 = vmatmul.mubr.bf16.gmra.mxu0 %v1079
    %v1251 = vpop.f32.mrf.mxu0
    %v1252 = vadd.f32 0.0, %v1251
    %v1253 = vpop.f32.mrf.mxu0
    %v1254 = vadd.f32 0.0, %v1253
    %v1255 = vpop.f32.mrf.mxu0
    %v1256 = vadd.f32 0.0, %v1255
    %v1257 = vpop.f32.mrf.mxu0
    %v1258 = vadd.f32 0.0, %v1257
    %1259 = vmatprep.mubr.bf16.mxu0 0
    %1260 = vmatmul.mubr.bf16.gmra.mxu0 %v1082
    %v1261 = vpop.f32.mrf.mxu0
    %v1262 = vadd.f32 0.0, %v1261
    %v1263 = vpop.f32.mrf.mxu0
    %v1264 = vadd.f32 0.0, %v1263
    %v1265 = vpop.f32.mrf.mxu0
    %v1266 = vadd.f32 0.0, %v1265
    %v1267 = vpop.f32.mrf.mxu0
    %v1268 = vadd.f32 0.0, %v1267
    %1269 = vmatprep.mubr.bf16.mxu0 0
    %1270 = vmatmul.mubr.bf16.gmra.mxu0 %v1085
    %v1271 = vpop.f32.mrf.mxu0
    %v1272 = vadd.f32 0.0, %v1271
    %v1273 = vpop.f32.mrf.mxu0
    %v1274 = vadd.f32 0.0, %v1273
    %v1275 = vpop.f32.mrf.mxu0
    %v1276 = vadd.f32 0.0, %v1275
    %v1277 = vpop.f32.mrf.mxu0
    %v1278 = vadd.f32 0.0, %v1277
    %1279 = vmatprep.mubr.bf16.mxu0 0
    %1280 = vmatmul.mubr.bf16.gmra.mxu0 %v1088
    %v1281 = vpop.f32.mrf.mxu0
    %v1282 = vadd.f32 0.0, %v1281
    %v1283 = vpop.f32.mrf.mxu0
    %v1284 = vadd.f32 0.0, %v1283
    %v1285 = vpop.f32.mrf.mxu0
    %v1286 = vadd.f32 0.0, %v1285
    %v1287 = vpop.f32.mrf.mxu0
    %v1288 = vadd.f32 0.0, %v1287
    %1289 = vmatprep.mubr.bf16.mxu0 0
    %1290 = vmatmul.mubr.bf16.gmra.mxu0 %v1091
    %v1291 = vpop.f32.mrf.mxu0
    %v1292 = vadd.f32 0.0, %v1291
    %v1293 = vpop.f32.mrf.mxu0
    %v1294 = vadd.f32 0.0, %v1293
    %v1295 = vpop.f32.mrf.mxu0
    %v1296 = vadd.f32 0.0, %v1295
    %v1297 = vpop.f32.mrf.mxu0
    %v1298 = vadd.f32 0.0, %v1297
    %1299 = vmatprep.mubr.bf16.mxu0 0
    %1300 = vmatmul.mubr.bf16.gmra.mxu0 %v1094
    %v1301 = vpop.f32.mrf.mxu0
    %v1302 = vadd.f32 0.0, %v1301
    %v1303 = vpop.f32.mrf.mxu0
    %v1304 = vadd.f32 0.0, %v1303
    %v1305 = vpop.f32.mrf.mxu0
    %v1306 = vadd.f32 0.0, %v1305
    %v1307 = vpop.f32.mrf.mxu0
    %v1308 = vadd.f32 0.0, %v1307
    %1309 = vmatprep.mubr.bf16.mxu0 0
    %1310 = vmatmul.mubr.bf16.gmra.mxu0 %v1097
    %v1311 = vpop.f32.mrf.mxu0
    %v1312 = vadd.f32 0.0, %v1311
    %v1313 = vpop.f32.mrf.mxu0
    %v1314 = vadd.f32 0.0, %v1313
    %v1315 = vpop.f32.mrf.mxu0
    %v1316 = vadd.f32 0.0, %v1315
    %v1317 = vpop.f32.mrf.mxu0
    %v1318 = vadd.f32 0.0, %v1317
    %1319 = vdwg.mxu0
    %1320 = vmatprep.subr.bf16.mxu0 0
    %1321 = vmatpush1.bf16.msra.mxu0 0
    %1322 = vmatprep.subr.bf16.mxu0 0
    %1323 = vmatpush1.bf16.msra.mxu0 0
    %1324 = vmatprep.subr.bf16.mxu0 0
    %1325 = vmatpush1.bf16.msra.mxu0 0
    %1326 = vmatprep.subr.bf16.mxu0 0
    %1327 = vmatpush1.bf16.msra.mxu0 0
    %1328 = vmatprep.subr.bf16.mxu0 0
    %1329 = vmatpush1.bf16.msra.mxu0 0
    %1330 = vmatprep.subr.bf16.mxu0 0
    %1331 = vmatpush1.bf16.msra.mxu0 0
    %1332 = vmatprep.subr.bf16.mxu0 0
    %1333 = vmatpush1.bf16.msra.mxu0 %v1112
    %1334 = vmatprep.subr.bf16.mxu0 0
    %1335 = vmatpush1.bf16.msra.mxu0 %v1067
    %1336 = vmatprep.subr.bf16.mxu0 0
    %1337 = vmatpush2.bf16.msra.mxu0 0
    %1338 = vmatprep.subr.bf16.mxu0 0
    %1339 = vmatpush2.bf16.msra.mxu0 0
    %1340 = vmatprep.subr.bf16.mxu0 0
    %1341 = vmatpush2.bf16.msra.mxu0 0
    %1342 = vmatprep.subr.bf16.mxu0 0
    %1343 = vmatpush2.bf16.msra.mxu0 0
    %1344 = vmatprep.subr.bf16.mxu0 0
    %1345 = vmatpush2.bf16.msra.mxu0 0
    %1346 = vmatprep.subr.bf16.mxu0 0
    %1347 = vmatpush2.bf16.msra.mxu0 0
    %1348 = vmatprep.subr.bf16.mxu0 0
    %1349 = vmatpush2.bf16.msra.mxu0 0
    %1350 = vmatprep.subr.bf16.mxu0 0
    %1351 = vmatpush2.bf16.msra.mxu0 0
    %1352 = vmatprep.mubr.bf16.mxu0 0
    %1353 = vmatmul.mubr.bf16.gmra.mxu0 %v1079
    %v1354 = vpop.f32.mrf.mxu0
    %v1355 = vadd.f32 0.0, %v1354
    %v1356 = vpop.f32.mrf.mxu0
    %v1357 = vpop.f32.mrf.mxu0
    %v1358 = vadd.f32 0.0, %v1357
    %v1359 = vpop.f32.mrf.mxu0
    %1360 = vmatprep.mubr.bf16.mxu0 0
    %1361 = vmatmul.mubr.bf16.gmra.mxu0 %v1082
    %v1362 = vpop.f32.mrf.mxu0
    %v1363 = vadd.f32 0.0, %v1362
    %v1364 = vpop.f32.mrf.mxu0
    %v1365 = vpop.f32.mrf.mxu0
    %v1366 = vadd.f32 0.0, %v1365
    %v1367 = vpop.f32.mrf.mxu0
    %1368 = vmatprep.mubr.bf16.mxu0 0
    %1369 = vmatmul.mubr.bf16.gmra.mxu0 %v1085
    %v1370 = vpop.f32.mrf.mxu0
    %v1371 = vadd.f32 0.0, %v1370
    %v1372 = vpop.f32.mrf.mxu0
    %v1373 = vpop.f32.mrf.mxu0
    %v1374 = vadd.f32 0.0, %v1373
    %v1375 = vpop.f32.mrf.mxu0
    %1376 = vmatprep.mubr.bf16.mxu0 0
    %1377 = vmatmul.mubr.bf16.gmra.mxu0 %v1088
    %v1378 = vpop.f32.mrf.mxu0
    %v1379 = vadd.f32 0.0, %v1378
    %v1380 = vpop.f32.mrf.mxu0
    %v1381 = vpop.f32.mrf.mxu0
    %v1382 = vadd.f32 0.0, %v1381
    %v1383 = vpop.f32.mrf.mxu0
    %1384 = vmatprep.mubr.bf16.mxu0 0
    %1385 = vmatmul.mubr.bf16.gmra.mxu0 %v1091
    %v1386 = vpop.f32.mrf.mxu0
    %v1387 = vadd.f32 0.0, %v1386
    %v1388 = vpop.f32.mrf.mxu0
    %v1389 = vpop.f32.mrf.mxu0
    %v1390 = vadd.f32 0.0, %v1389
    %v1391 = vpop.f32.mrf.mxu0
    %1392 = vmatprep.mubr.bf16.mxu0 0
    %1393 = vmatmul.mubr.bf16.gmra.mxu0 %v1094
    %v1394 = vpop.f32.mrf.mxu0
    %v1395 = vadd.f32 0.0, %v1394
    %v1396 = vpop.f32.mrf.mxu0
    %v1397 = vpop.f32.mrf.mxu0
    %v1398 = vadd.f32 0.0, %v1397
    %v1399 = vpop.f32.mrf.mxu0
    %1400 = vmatprep.mubr.bf16.mxu0 0
    %1401 = vmatmul.mubr.bf16.gmra.mxu0 %v1097
    %v1402 = vpop.f32.mrf.mxu0
    %v1403 = vadd.f32 0.0, %v1402
    %v1404 = vpop.f32.mrf.mxu0
    %v1405 = vpop.f32.mrf.mxu0
    %v1406 = vadd.f32 0.0, %v1405
    %v1407 = vpop.f32.mrf.mxu0
    %1408 = vdwg.mxu0
    %v1409 = vadd.f32 %v758, %v1149
    %v1410 = vadd.f32 %v760, %v1151
    %v1411 = vadd.f32 %v861, %v1252
    %v1412 = vadd.f32 %v863, %v1254
    %v1413 = vadd.f32 %v964, %v1355
    %v1414 = vadd.f32 %v762, %v1153
    %v1415 = vadd.f32 %v764, %v1155
    %v1416 = vadd.f32 %v865, %v1256
    %v1417 = vadd.f32 %v867, %v1258
    %v1418 = vadd.f32 %v967, %v1358
    %v1419 = vadd.f32 %v768, %v1159
    %v1420 = vadd.f32 %v770, %v1161
    %v1421 = vadd.f32 %v871, %v1262
    %v1422 = vadd.f32 %v873, %v1264
    %v1423 = vadd.f32 %v972, %v1363
    %v1424 = vadd.f32 %v772, %v1163
    %v1425 = vadd.f32 %v774, %v1165
    %v1426 = vadd.f32 %v875, %v1266
    %v1427 = vadd.f32 %v877, %v1268
    %v1428 = vadd.f32 %v975, %v1366
    %v1429 = vadd.f32 %v778, %v1169
    %v1430 = vadd.f32 %v780, %v1171
    %v1431 = vadd.f32 %v881, %v1272
    %v1432 = vadd.f32 %v883, %v1274
    %v1433 = vadd.f32 %v980, %v1371
    %v1434 = vadd.f32 %v782, %v1173
    %v1435 = vadd.f32 %v784, %v1175
    %v1436 = vadd.f32 %v885, %v1276
    %v1437 = vadd.f32 %v887, %v1278
    %v1438 = vadd.f32 %v983, %v1374
    %v1439 = vadd.f32 %v788, %v1179
    %v1440 = vadd.f32 %v790, %v1181
    %v1441 = vadd.f32 %v891, %v1282
    %v1442 = vadd.f32 %v893, %v1284
    %v1443 = vadd.f32 %v988, %v1379
    %v1444 = vadd.f32 %v792, %v1183
    %v1445 = vadd.f32 %v794, %v1185
    %v1446 = vadd.f32 %v895, %v1286
    %v1447 = vadd.f32 %v897, %v1288
    %v1448 = vadd.f32 %v991, %v1382
    %v1449 = vadd.f32 %v798, %v1189
    %v1450 = vadd.f32 %v800, %v1191
    %v1451 = vadd.f32 %v901, %v1292
    %v1452 = vadd.f32 %v903, %v1294
    %v1453 = vadd.f32 %v996, %v1387
    %v1454 = vadd.f32 %v802, %v1193
    %v1455 = vadd.f32 %v804, %v1195
    %v1456 = vadd.f32 %v905, %v1296
    %v1457 = vadd.f32 %v907, %v1298
    %v1458 = vadd.f32 %v999, %v1390
    %v1459 = vadd.f32 %v808, %v1199
    %v1460 = vadd.f32 %v810, %v1201
    %v1461 = vadd.f32 %v911, %v1302
    %v1462 = vadd.f32 %v913, %v1304
    %v1463 = vadd.f32 %v1004, %v1395
    %v1464 = vadd.f32 %v812, %v1203
    %v1465 = vadd.f32 %v814, %v1205
    %v1466 = vadd.f32 %v915, %v1306
    %v1467 = vadd.f32 %v917, %v1308
    %v1468 = vadd.f32 %v1007, %v1398
    %v1469 = vadd.f32 %v818, %v1209
    %v1470 = vadd.f32 %v820, %v1211
    %v1471 = vadd.f32 %v921, %v1312
    %v1472 = vadd.f32 %v923, %v1314
    %v1473 = vadd.f32 %v1012, %v1403
    %v1474 = vadd.f32 %v822, %v1213
    %v1475 = vadd.f32 %v824, %v1215
    %v1476 = vadd.f32 %v925, %v1316
    %v1477 = vadd.f32 %v927, %v1318
    %v1478 = vadd.f32 %v1015, %v1406
    %1479 = vmatprep.subr.bf16.mxu0 0
    %1480 = vmatpush1.bf16.msra.mxu0 0
    %1481 = vmatprep.subr.bf16.mxu0 0
    %1482 = vmatpush1.bf16.msra.mxu0 0
    %1483 = vmatprep.subr.bf16.mxu0 0
    %1484 = vmatpush1.bf16.msra.mxu0 0
    %1485 = vmatprep.subr.bf16.mxu0 0
    %1486 = vmatpush1.bf16.msra.mxu0 0
    %1487 = vmatprep.subr.bf16.mxu0 0
    %1488 = vmatpush1.bf16.msra.mxu0 0
    %1489 = vmatprep.subr.bf16.mxu0 0
    %1490 = vmatpush1.bf16.msra.mxu0 0
    %1491 = vmatprep.subr.bf16.mxu0 %v341
    %1492 = vmatpush1.bf16.msra.mxu0 %v338
    %1493 = vmatprep.subr.bf16.mxu0 %v307
    %1494 = vmatpush1.bf16.msra.mxu0 %v306
    %1495 = vmatprep.subr.bf16.mxu0 0
    %1496 = vmatpush2.bf16.msra.mxu0 0
    %1497 = vmatprep.subr.bf16.mxu0 0
    %1498 = vmatpush2.bf16.msra.mxu0 0
    %1499 = vmatprep.subr.bf16.mxu0 0
    %1500 = vmatpush2.bf16.msra.mxu0 0
    %1501 = vmatprep.subr.bf16.mxu0 0
    %1502 = vmatpush2.bf16.msra.mxu0 0
    %1503 = vmatprep.subr.bf16.mxu0 0
    %1504 = vmatpush2.bf16.msra.mxu0 0
    %1505 = vmatprep.subr.bf16.mxu0 0
    %1506 = vmatpush2.bf16.msra.mxu0 0
    %1507 = vmatprep.subr.bf16.mxu0 0
    %1508 = vmatpush2.bf16.msra.mxu0 0
    %1509 = vmatprep.subr.bf16.mxu0 0
    %1510 = vmatpush2.bf16.msra.mxu0 0
    %1511 = vmatprep.mubr.bf16.mxu0 0
    %1512 = vmatmul.mubr.bf16.gmra.mxu0 %v1079
    %v1513 = vpop.f32.mrf.mxu0
    %v1514 = vadd.f32 0.0, %v1513
    %v1515 = vpop.f32.mrf.mxu0
    %v1516 = vadd.f32 0.0, %v1515
    %v1517 = vpop.f32.mrf.mxu0
    %v1518 = vadd.f32 0.0, %v1517
    %v1519 = vpop.f32.mrf.mxu0
    %v1520 = vadd.f32 0.0, %v1519
    %1521 = vmatprep.mubr.bf16.mxu0 0
    %1522 = vmatmul.mubr.bf16.gmra.mxu0 %v1082
    %v1523 = vpop.f32.mrf.mxu0
    %v1524 = vadd.f32 0.0, %v1523
    %v1525 = vpop.f32.mrf.mxu0
    %v1526 = vadd.f32 0.0, %v1525
    %v1527 = vpop.f32.mrf.mxu0
    %v1528 = vadd.f32 0.0, %v1527
    %v1529 = vpop.f32.mrf.mxu0
    %v1530 = vadd.f32 0.0, %v1529
    %1531 = vmatprep.mubr.bf16.mxu0 0
    %1532 = vmatmul.mubr.bf16.gmra.mxu0 %v1085
    %v1533 = vpop.f32.mrf.mxu0
    %v1534 = vadd.f32 0.0, %v1533
    %v1535 = vpop.f32.mrf.mxu0
    %v1536 = vadd.f32 0.0, %v1535
    %v1537 = vpop.f32.mrf.mxu0
    %v1538 = vadd.f32 0.0, %v1537
    %v1539 = vpop.f32.mrf.mxu0
    %v1540 = vadd.f32 0.0, %v1539
    %1541 = vmatprep.mubr.bf16.mxu0 0
    %1542 = vmatmul.mubr.bf16.gmra.mxu0 %v1088
    %v1543 = vpop.f32.mrf.mxu0
    %v1544 = vadd.f32 0.0, %v1543
    %v1545 = vpop.f32.mrf.mxu0
    %v1546 = vadd.f32 0.0, %v1545
    %v1547 = vpop.f32.mrf.mxu0
    %v1548 = vadd.f32 0.0, %v1547
    %v1549 = vpop.f32.mrf.mxu0
    %v1550 = vadd.f32 0.0, %v1549
    %1551 = vmatprep.mubr.bf16.mxu0 0
    %1552 = vmatmul.mubr.bf16.gmra.mxu0 %v1091
    %v1553 = vpop.f32.mrf.mxu0
    %v1554 = vadd.f32 0.0, %v1553
    %v1555 = vpop.f32.mrf.mxu0
    %v1556 = vadd.f32 0.0, %v1555
    %v1557 = vpop.f32.mrf.mxu0
    %v1558 = vadd.f32 0.0, %v1557
    %v1559 = vpop.f32.mrf.mxu0
    %v1560 = vadd.f32 0.0, %v1559
    %1561 = vmatprep.mubr.bf16.mxu0 0
    %1562 = vmatmul.mubr.bf16.gmra.mxu0 %v1094
    %v1563 = vpop.f32.mrf.mxu0
    %v1564 = vadd.f32 0.0, %v1563
    %v1565 = vpop.f32.mrf.mxu0
    %v1566 = vadd.f32 0.0, %v1565
    %v1567 = vpop.f32.mrf.mxu0
    %v1568 = vadd.f32 0.0, %v1567
    %v1569 = vpop.f32.mrf.mxu0
    %v1570 = vadd.f32 0.0, %v1569
    %1571 = vmatprep.mubr.bf16.mxu0 0
    %1572 = vmatmul.mubr.bf16.gmra.mxu0 %v1097
    %v1573 = vpop.f32.mrf.mxu0
    %v1574 = vadd.f32 0.0, %v1573
    %v1575 = vpop.f32.mrf.mxu0
    %v1576 = vadd.f32 0.0, %v1575
    %v1577 = vpop.f32.mrf.mxu0
    %v1578 = vadd.f32 0.0, %v1577
    %v1579 = vpop.f32.mrf.mxu0
    %v1580 = vadd.f32 0.0, %v1579
    %1581 = vdwg.mxu0
    %1582 = vmatprep.subr.bf16.mxu0 0
    %1583 = vmatpush1.bf16.msra.mxu0 0
    %1584 = vmatprep.subr.bf16.mxu0 0
    %1585 = vmatpush1.bf16.msra.mxu0 0
    %1586 = vmatprep.subr.bf16.mxu0 0
    %1587 = vmatpush1.bf16.msra.mxu0 0
    %1588 = vmatprep.subr.bf16.mxu0 0
    %1589 = vmatpush1.bf16.msra.mxu0 0
    %1590 = vmatprep.subr.bf16.mxu0 0
    %1591 = vmatpush1.bf16.msra.mxu0 0
    %1592 = vmatprep.subr.bf16.mxu0 0
    %1593 = vmatpush1.bf16.msra.mxu0 0
    %1594 = vmatprep.subr.bf16.mxu0 %v347
    %1595 = vmatpush1.bf16.msra.mxu0 %v344
    %1596 = vmatprep.subr.bf16.mxu0 %v309
    %1597 = vmatpush1.bf16.msra.mxu0 %v308
    %1598 = vmatprep.subr.bf16.mxu0 0
    %1599 = vmatpush2.bf16.msra.mxu0 0
    %1600 = vmatprep.subr.bf16.mxu0 0
    %1601 = vmatpush2.bf16.msra.mxu0 0
    %1602 = vmatprep.subr.bf16.mxu0 0
    %1603 = vmatpush2.bf16.msra.mxu0 0
    %1604 = vmatprep.subr.bf16.mxu0 0
    %1605 = vmatpush2.bf16.msra.mxu0 0
    %1606 = vmatprep.subr.bf16.mxu0 0
    %1607 = vmatpush2.bf16.msra.mxu0 0
    %1608 = vmatprep.subr.bf16.mxu0 0
    %1609 = vmatpush2.bf16.msra.mxu0 0
    %1610 = vmatprep.subr.bf16.mxu0 0
    %1611 = vmatpush2.bf16.msra.mxu0 0
    %1612 = vmatprep.subr.bf16.mxu0 0
    %1613 = vmatpush2.bf16.msra.mxu0 0
    %1614 = vmatprep.mubr.bf16.mxu0 0
    %1615 = vmatmul.mubr.bf16.gmra.mxu0 %v1079
    %v1616 = vpop.f32.mrf.mxu0
    %v1617 = vadd.f32 0.0, %v1616
    %v1618 = vpop.f32.mrf.mxu0
    %v1619 = vadd.f32 0.0, %v1618
    %v1620 = vpop.f32.mrf.mxu0
    %v1621 = vadd.f32 0.0, %v1620
    %v1622 = vpop.f32.mrf.mxu0
    %v1623 = vadd.f32 0.0, %v1622
    %1624 = vmatprep.mubr.bf16.mxu0 0
    %1625 = vmatmul.mubr.bf16.gmra.mxu0 %v1082
    %v1626 = vpop.f32.mrf.mxu0
    %v1627 = vadd.f32 0.0, %v1626
    %v1628 = vpop.f32.mrf.mxu0
    %v1629 = vadd.f32 0.0, %v1628
    %v1630 = vpop.f32.mrf.mxu0
    %v1631 = vadd.f32 0.0, %v1630
    %v1632 = vpop.f32.mrf.mxu0
    %v1633 = vadd.f32 0.0, %v1632
    %1634 = vmatprep.mubr.bf16.mxu0 0
    %1635 = vmatmul.mubr.bf16.gmra.mxu0 %v1085
    %v1636 = vpop.f32.mrf.mxu0
    %v1637 = vadd.f32 0.0, %v1636
    %v1638 = vpop.f32.mrf.mxu0
    %v1639 = vadd.f32 0.0, %v1638
    %v1640 = vpop.f32.mrf.mxu0
    %v1641 = vadd.f32 0.0, %v1640
    %v1642 = vpop.f32.mrf.mxu0
    %v1643 = vadd.f32 0.0, %v1642
    %1644 = vmatprep.mubr.bf16.mxu0 0
    %1645 = vmatmul.mubr.bf16.gmra.mxu0 %v1088
    %v1646 = vpop.f32.mrf.mxu0
    %v1647 = vadd.f32 0.0, %v1646
    %v1648 = vpop.f32.mrf.mxu0
    %v1649 = vadd.f32 0.0, %v1648
    %v1650 = vpop.f32.mrf.mxu0
    %v1651 = vadd.f32 0.0, %v1650
    %v1652 = vpop.f32.mrf.mxu0
    %v1653 = vadd.f32 0.0, %v1652
    %1654 = vmatprep.mubr.bf16.mxu0 0
    %1655 = vmatmul.mubr.bf16.gmra.mxu0 %v1091
    %v1656 = vpop.f32.mrf.mxu0
    %v1657 = vadd.f32 0.0, %v1656
    %v1658 = vpop.f32.mrf.mxu0
    %v1659 = vadd.f32 0.0, %v1658
    %v1660 = vpop.f32.mrf.mxu0
    %v1661 = vadd.f32 0.0, %v1660
    %v1662 = vpop.f32.mrf.mxu0
    %v1663 = vadd.f32 0.0, %v1662
    %1664 = vmatprep.mubr.bf16.mxu0 0
    %1665 = vmatmul.mubr.bf16.gmra.mxu0 %v1094
    %v1666 = vpop.f32.mrf.mxu0
    %v1667 = vadd.f32 0.0, %v1666
    %v1668 = vpop.f32.mrf.mxu0
    %v1669 = vadd.f32 0.0, %v1668
    %v1670 = vpop.f32.mrf.mxu0
    %v1671 = vadd.f32 0.0, %v1670
    %v1672 = vpop.f32.mrf.mxu0
    %v1673 = vadd.f32 0.0, %v1672
    %1674 = vmatprep.mubr.bf16.mxu0 0
    %1675 = vmatmul.mubr.bf16.gmra.mxu0 %v1097
    %v1676 = vpop.f32.mrf.mxu0
    %v1677 = vadd.f32 0.0, %v1676
    %v1678 = vpop.f32.mrf.mxu0
    %v1679 = vadd.f32 0.0, %v1678
    %v1680 = vpop.f32.mrf.mxu0
    %v1681 = vadd.f32 0.0, %v1680
    %v1682 = vpop.f32.mrf.mxu0
    %v1683 = vadd.f32 0.0, %v1682
    %1684 = vdwg.mxu0
    %1685 = vmatprep.subr.bf16.mxu0 0
    %1686 = vmatpush1.bf16.msra.mxu0 0
    %1687 = vmatprep.subr.bf16.mxu0 0
    %1688 = vmatpush1.bf16.msra.mxu0 0
    %1689 = vmatprep.subr.bf16.mxu0 0
    %1690 = vmatpush1.bf16.msra.mxu0 0
    %1691 = vmatprep.subr.bf16.mxu0 0
    %1692 = vmatpush1.bf16.msra.mxu0 0
    %1693 = vmatprep.subr.bf16.mxu0 0
    %1694 = vmatpush1.bf16.msra.mxu0 0
    %1695 = vmatprep.subr.bf16.mxu0 0
    %1696 = vmatpush1.bf16.msra.mxu0 0
    %1697 = vmatprep.subr.bf16.mxu0 0
    %1698 = vmatpush1.bf16.msra.mxu0 %v350
    %1699 = vmatprep.subr.bf16.mxu0 0
    %1700 = vmatpush1.bf16.msra.mxu0 %v310
    %1701 = vmatprep.subr.bf16.mxu0 0
    %1702 = vmatpush2.bf16.msra.mxu0 0
    %1703 = vmatprep.subr.bf16.mxu0 0
    %1704 = vmatpush2.bf16.msra.mxu0 0
    %1705 = vmatprep.subr.bf16.mxu0 0
    %1706 = vmatpush2.bf16.msra.mxu0 0
    %1707 = vmatprep.subr.bf16.mxu0 0
    %1708 = vmatpush2.bf16.msra.mxu0 0
    %1709 = vmatprep.subr.bf16.mxu0 0
    %1710 = vmatpush2.bf16.msra.mxu0 0
    %1711 = vmatprep.subr.bf16.mxu0 0
    %1712 = vmatpush2.bf16.msra.mxu0 0
    %1713 = vmatprep.subr.bf16.mxu0 0
    %1714 = vmatpush2.bf16.msra.mxu0 0
    %1715 = vmatprep.subr.bf16.mxu0 0
    %1716 = vmatpush2.bf16.msra.mxu0 0
    %1717 = vmatprep.mubr.bf16.mxu0 0
    %1718 = vmatmul.mubr.bf16.gmra.mxu0 %v1079
    %v1719 = vpop.f32.mrf.mxu0
    %v1720 = vadd.f32 0.0, %v1719
    %v1721 = vpop.f32.mrf.mxu0
    %v1722 = vpop.f32.mrf.mxu0
    %v1723 = vadd.f32 0.0, %v1722
    %v1724 = vpop.f32.mrf.mxu0
    %1725 = vmatprep.mubr.bf16.mxu0 0
    %1726 = vmatmul.mubr.bf16.gmra.mxu0 %v1082
    %v1727 = vpop.f32.mrf.mxu0
    %v1728 = vadd.f32 0.0, %v1727
    %v1729 = vpop.f32.mrf.mxu0
    %v1730 = vpop.f32.mrf.mxu0
    %v1731 = vadd.f32 0.0, %v1730
    %v1732 = vpop.f32.mrf.mxu0
    %1733 = vmatprep.mubr.bf16.mxu0 0
    %1734 = vmatmul.mubr.bf16.gmra.mxu0 %v1085
    %v1735 = vpop.f32.mrf.mxu0
    %v1736 = vadd.f32 0.0, %v1735
    %v1737 = vpop.f32.mrf.mxu0
    %v1738 = vpop.f32.mrf.mxu0
    %v1739 = vadd.f32 0.0, %v1738
    %v1740 = vpop.f32.mrf.mxu0
    %1741 = vmatprep.mubr.bf16.mxu0 0
    %1742 = vmatmul.mubr.bf16.gmra.mxu0 %v1088
    %v1743 = vpop.f32.mrf.mxu0
    %v1744 = vadd.f32 0.0, %v1743
    %v1745 = vpop.f32.mrf.mxu0
    %v1746 = vpop.f32.mrf.mxu0
    %v1747 = vadd.f32 0.0, %v1746
    %v1748 = vpop.f32.mrf.mxu0
    %1749 = vmatprep.mubr.bf16.mxu0 0
    %1750 = vmatmul.mubr.bf16.gmra.mxu0 %v1091
    %v1751 = vpop.f32.mrf.mxu0
    %v1752 = vadd.f32 0.0, %v1751
    %v1753 = vpop.f32.mrf.mxu0
    %v1754 = vpop.f32.mrf.mxu0
    %v1755 = vadd.f32 0.0, %v1754
    %v1756 = vpop.f32.mrf.mxu0
    %1757 = vmatprep.mubr.bf16.mxu0 0
    %1758 = vmatmul.mubr.bf16.gmra.mxu0 %v1094
    %v1759 = vpop.f32.mrf.mxu0
    %v1760 = vadd.f32 0.0, %v1759
    %v1761 = vpop.f32.mrf.mxu0
    %v1762 = vpop.f32.mrf.mxu0
    %v1763 = vadd.f32 0.0, %v1762
    %v1764 = vpop.f32.mrf.mxu0
    %1765 = vmatprep.mubr.bf16.mxu0 0
    %1766 = vmatmul.mubr.bf16.gmra.mxu0 %v1097
    %v1767 = vpop.f32.mrf.mxu0
    %v1768 = vadd.f32 0.0, %v1767
    %v1769 = vpop.f32.mrf.mxu0
    %v1770 = vpop.f32.mrf.mxu0
    %v1771 = vadd.f32 0.0, %v1770
    %v1772 = vpop.f32.mrf.mxu0
    %1773 = vdwg.mxu0
    %1774 = vmatprep.subr.bf16.mxu0 0
    %1775 = vmatpush1.bf16.msra.mxu0 0
    %1776 = vmatprep.subr.bf16.mxu0 0
    %1777 = vmatpush1.bf16.msra.mxu0 0
    %1778 = vmatprep.subr.bf16.mxu0 0
    %1779 = vmatpush1.bf16.msra.mxu0 0
    %1780 = vmatprep.subr.bf16.mxu0 0
    %1781 = vmatpush1.bf16.msra.mxu0 0
    %1782 = vmatprep.subr.bf16.mxu0 0
    %1783 = vmatpush1.bf16.msra.mxu0 0
    %1784 = vmatprep.subr.bf16.mxu0 0
    %1785 = vmatpush1.bf16.msra.mxu0 0
    %1786 = vmatprep.subr.bf16.mxu0 %v712
    %1787 = vmatpush1.bf16.msra.mxu0 %v709
    %1788 = vmatprep.subr.bf16.mxu0 %v680
    %1789 = vmatpush1.bf16.msra.mxu0 %v679
    %1790 = vmatprep.subr.bf16.mxu0 0
    %1791 = vmatpush2.bf16.msra.mxu0 0
    %1792 = vmatprep.subr.bf16.mxu0 0
    %1793 = vmatpush2.bf16.msra.mxu0 0
    %1794 = vmatprep.subr.bf16.mxu0 0
    %1795 = vmatpush2.bf16.msra.mxu0 0
    %1796 = vmatprep.subr.bf16.mxu0 0
    %1797 = vmatpush2.bf16.msra.mxu0 0
    %1798 = vmatprep.subr.bf16.mxu0 0
    %1799 = vmatpush2.bf16.msra.mxu0 0
    %1800 = vmatprep.subr.bf16.mxu0 0
    %1801 = vmatpush2.bf16.msra.mxu0 0
    %1802 = vmatprep.subr.bf16.mxu0 0
    %1803 = vmatpush2.bf16.msra.mxu0 0
    %1804 = vmatprep.subr.bf16.mxu0 0
    %1805 = vmatpush2.bf16.msra.mxu0 0
    %1806 = vmatprep.mubr.bf16.mxu0 0
    %1807 = vmatmul.mubr.bf16.gmra.mxu0 %v322
    %v1808 = vpop.f32.mrf.mxu0
    %v1809 = vadd.f32 %v1514, %v1808
    %v1810 = vpop.f32.mrf.mxu0
    %v1811 = vadd.f32 %v1516, %v1810
    %v1812 = vpop.f32.mrf.mxu0
    %v1813 = vadd.f32 %v1518, %v1812
    %v1814 = vpop.f32.mrf.mxu0
    %v1815 = vadd.f32 %v1520, %v1814
    %1816 = vmatprep.mubr.bf16.mxu0 0
    %1817 = vmatmul.mubr.bf16.gmra.mxu0 %v324
    %v1818 = vpop.f32.mrf.mxu0
    %v1819 = vadd.f32 %v1524, %v1818
    %v1820 = vpop.f32.mrf.mxu0
    %v1821 = vadd.f32 %v1526, %v1820
    %v1822 = vpop.f32.mrf.mxu0
    %v1823 = vadd.f32 %v1528, %v1822
    %v1824 = vpop.f32.mrf.mxu0
    %v1825 = vadd.f32 %v1530, %v1824
    %1826 = vmatprep.mubr.bf16.mxu0 0
    %1827 = vmatmul.mubr.bf16.gmra.mxu0 %v326
    %v1828 = vpop.f32.mrf.mxu0
    %v1829 = vadd.f32 %v1534, %v1828
    %v1830 = vpop.f32.mrf.mxu0
    %v1831 = vadd.f32 %v1536, %v1830
    %v1832 = vpop.f32.mrf.mxu0
    %v1833 = vadd.f32 %v1538, %v1832
    %v1834 = vpop.f32.mrf.mxu0
    %v1835 = vadd.f32 %v1540, %v1834
    %1836 = vmatprep.mubr.bf16.mxu0 0
    %1837 = vmatmul.mubr.bf16.gmra.mxu0 %v328
    %v1838 = vpop.f32.mrf.mxu0
    %v1839 = vadd.f32 %v1544, %v1838
    %v1840 = vpop.f32.mrf.mxu0
    %v1841 = vadd.f32 %v1546, %v1840
    %v1842 = vpop.f32.mrf.mxu0
    %v1843 = vadd.f32 %v1548, %v1842
    %v1844 = vpop.f32.mrf.mxu0
    %v1845 = vadd.f32 %v1550, %v1844
    %1846 = vmatprep.mubr.bf16.mxu0 0
    %1847 = vmatmul.mubr.bf16.gmra.mxu0 %v330
    %v1848 = vpop.f32.mrf.mxu0
    %v1849 = vadd.f32 %v1554, %v1848
    %v1850 = vpop.f32.mrf.mxu0
    %v1851 = vadd.f32 %v1556, %v1850
    %v1852 = vpop.f32.mrf.mxu0
    %v1853 = vadd.f32 %v1558, %v1852
    %v1854 = vpop.f32.mrf.mxu0
    %v1855 = vadd.f32 %v1560, %v1854
    %1856 = vmatprep.mubr.bf16.mxu0 0
    %1857 = vmatmul.mubr.bf16.gmra.mxu0 %v332
    %v1858 = vpop.f32.mrf.mxu0
    %v1859 = vadd.f32 %v1564, %v1858
    %v1860 = vpop.f32.mrf.mxu0
    %v1861 = vadd.f32 %v1566, %v1860
    %v1862 = vpop.f32.mrf.mxu0
    %v1863 = vadd.f32 %v1568, %v1862
    %v1864 = vpop.f32.mrf.mxu0
    %v1865 = vadd.f32 %v1570, %v1864
    %1866 = vmatprep.mubr.bf16.mxu0 0
    %1867 = vmatmul.mubr.bf16.gmra.mxu0 %v334
    %v1868 = vpop.f32.mrf.mxu0
    %v1869 = vadd.f32 %v1574, %v1868
    %v1870 = vpop.f32.mrf.mxu0
    %v1871 = vadd.f32 %v1576, %v1870
    %v1872 = vpop.f32.mrf.mxu0
    %v1873 = vadd.f32 %v1578, %v1872
    %v1874 = vpop.f32.mrf.mxu0
    %v1875 = vadd.f32 %v1580, %v1874
    %1876 = vdwg.mxu0
    %1877 = vmatprep.subr.bf16.mxu0 0
    %1878 = vmatpush1.bf16.msra.mxu0 0
    %1879 = vmatprep.subr.bf16.mxu0 0
    %1880 = vmatpush1.bf16.msra.mxu0 0
    %1881 = vmatprep.subr.bf16.mxu0 0
    %1882 = vmatpush1.bf16.msra.mxu0 0
    %1883 = vmatprep.subr.bf16.mxu0 0
    %1884 = vmatpush1.bf16.msra.mxu0 0
    %1885 = vmatprep.subr.bf16.mxu0 0
    %1886 = vmatpush1.bf16.msra.mxu0 0
    %1887 = vmatprep.subr.bf16.mxu0 0
    %1888 = vmatpush1.bf16.msra.mxu0 0
    %1889 = vmatprep.subr.bf16.mxu0 %v718
    %1890 = vmatpush1.bf16.msra.mxu0 %v715
    %1891 = vmatprep.subr.bf16.mxu0 %v682
    %1892 = vmatpush1.bf16.msra.mxu0 %v681
    %1893 = vmatprep.subr.bf16.mxu0 0
    %1894 = vmatpush2.bf16.msra.mxu0 0
    %1895 = vmatprep.subr.bf16.mxu0 0
    %1896 = vmatpush2.bf16.msra.mxu0 0
    %1897 = vmatprep.subr.bf16.mxu0 0
    %1898 = vmatpush2.bf16.msra.mxu0 0
    %1899 = vmatprep.subr.bf16.mxu0 0
    %1900 = vmatpush2.bf16.msra.mxu0 0
    %1901 = vmatprep.subr.bf16.mxu0 0
    %1902 = vmatpush2.bf16.msra.mxu0 0
    %1903 = vmatprep.subr.bf16.mxu0 0
    %1904 = vmatpush2.bf16.msra.mxu0 0
    %1905 = vmatprep.subr.bf16.mxu0 0
    %1906 = vmatpush2.bf16.msra.mxu0 0
    %1907 = vmatprep.subr.bf16.mxu0 0
    %1908 = vmatpush2.bf16.msra.mxu0 0
    %1909 = vmatprep.mubr.bf16.mxu0 0
    %1910 = vmatmul.mubr.bf16.gmra.mxu0 %v322
    %v1911 = vpop.f32.mrf.mxu0
    %v1912 = vadd.f32 %v1617, %v1911
    %v1913 = vpop.f32.mrf.mxu0
    %v1914 = vadd.f32 %v1619, %v1913
    %v1915 = vpop.f32.mrf.mxu0
    %v1916 = vadd.f32 %v1621, %v1915
    %v1917 = vpop.f32.mrf.mxu0
    %v1918 = vadd.f32 %v1623, %v1917
    %1919 = vmatprep.mubr.bf16.mxu0 0
    %1920 = vmatmul.mubr.bf16.gmra.mxu0 %v324
    %v1921 = vpop.f32.mrf.mxu0
    %v1922 = vadd.f32 %v1627, %v1921
    %v1923 = vpop.f32.mrf.mxu0
    %v1924 = vadd.f32 %v1629, %v1923
    %v1925 = vpop.f32.mrf.mxu0
    %v1926 = vadd.f32 %v1631, %v1925
    %v1927 = vpop.f32.mrf.mxu0
    %v1928 = vadd.f32 %v1633, %v1927
    %1929 = vmatprep.mubr.bf16.mxu0 0
    %1930 = vmatmul.mubr.bf16.gmra.mxu0 %v326
    %v1931 = vpop.f32.mrf.mxu0
    %v1932 = vadd.f32 %v1637, %v1931
    %v1933 = vpop.f32.mrf.mxu0
    %v1934 = vadd.f32 %v1639, %v1933
    %v1935 = vpop.f32.mrf.mxu0
    %v1936 = vadd.f32 %v1641, %v1935
    %v1937 = vpop.f32.mrf.mxu0
    %v1938 = vadd.f32 %v1643, %v1937
    %1939 = vmatprep.mubr.bf16.mxu0 0
    %1940 = vmatmul.mubr.bf16.gmra.mxu0 %v328
    %v1941 = vpop.f32.mrf.mxu0
    %v1942 = vadd.f32 %v1647, %v1941
    %v1943 = vpop.f32.mrf.mxu0
    %v1944 = vadd.f32 %v1649, %v1943
    %v1945 = vpop.f32.mrf.mxu0
    %v1946 = vadd.f32 %v1651, %v1945
    %v1947 = vpop.f32.mrf.mxu0
    %v1948 = vadd.f32 %v1653, %v1947
    %1949 = vmatprep.mubr.bf16.mxu0 0
    %1950 = vmatmul.mubr.bf16.gmra.mxu0 %v330
    %v1951 = vpop.f32.mrf.mxu0
    %v1952 = vadd.f32 %v1657, %v1951
    %v1953 = vpop.f32.mrf.mxu0
    %v1954 = vadd.f32 %v1659, %v1953
    %v1955 = vpop.f32.mrf.mxu0
    %v1956 = vadd.f32 %v1661, %v1955
    %v1957 = vpop.f32.mrf.mxu0
    %v1958 = vadd.f32 %v1663, %v1957
    %1959 = vmatprep.mubr.bf16.mxu0 0
    %1960 = vmatmul.mubr.bf16.gmra.mxu0 %v332
    %v1961 = vpop.f32.mrf.mxu0
    %v1962 = vadd.f32 %v1667, %v1961
    %v1963 = vpop.f32.mrf.mxu0
    %v1964 = vadd.f32 %v1669, %v1963
    %v1965 = vpop.f32.mrf.mxu0
    %v1966 = vadd.f32 %v1671, %v1965
    %v1967 = vpop.f32.mrf.mxu0
    %v1968 = vadd.f32 %v1673, %v1967
    %1969 = vmatprep.mubr.bf16.mxu0 0
    %1970 = vmatmul.mubr.bf16.gmra.mxu0 %v334
    %v1971 = vpop.f32.mrf.mxu0
    %v1972 = vadd.f32 %v1677, %v1971
    %v1973 = vpop.f32.mrf.mxu0
    %v1974 = vadd.f32 %v1679, %v1973
    %v1975 = vpop.f32.mrf.mxu0
    %v1976 = vadd.f32 %v1681, %v1975
    %v1977 = vpop.f32.mrf.mxu0
    %v1978 = vadd.f32 %v1683, %v1977
    %1979 = vdwg.mxu0
    %1980 = vmatprep.subr.bf16.mxu0 0
    %1981 = vmatpush1.bf16.msra.mxu0 0
    %1982 = vmatprep.subr.bf16.mxu0 0
    %1983 = vmatpush1.bf16.msra.mxu0 0
    %1984 = vmatprep.subr.bf16.mxu0 0
    %1985 = vmatpush1.bf16.msra.mxu0 0
    %1986 = vmatprep.subr.bf16.mxu0 0
    %1987 = vmatpush1.bf16.msra.mxu0 0
    %1988 = vmatprep.subr.bf16.mxu0 0
    %1989 = vmatpush1.bf16.msra.mxu0 0
    %1990 = vmatprep.subr.bf16.mxu0 0
    %1991 = vmatpush1.bf16.msra.mxu0 0
    %1992 = vmatprep.subr.bf16.mxu0 0
    %1993 = vmatpush1.bf16.msra.mxu0 %v721
    %1994 = vmatprep.subr.bf16.mxu0 0
    %1995 = vmatpush1.bf16.msra.mxu0 %v683
    %1996 = vmatprep.subr.bf16.mxu0 0
    %1997 = vmatpush2.bf16.msra.mxu0 0
    %1998 = vmatprep.subr.bf16.mxu0 0
    %1999 = vmatpush2.bf16.msra.mxu0 0
    %2000 = vmatprep.subr.bf16.mxu0 0
    %2001 = vmatpush2.bf16.msra.mxu0 0
    %2002 = vmatprep.subr.bf16.mxu0 0
    %2003 = vmatpush2.bf16.msra.mxu0 0
    %2004 = vmatprep.subr.bf16.mxu0 0
    %2005 = vmatpush2.bf16.msra.mxu0 0
    %2006 = vmatprep.subr.bf16.mxu0 0
    %2007 = vmatpush2.bf16.msra.mxu0 0
    %2008 = vmatprep.subr.bf16.mxu0 0
    %2009 = vmatpush2.bf16.msra.mxu0 0
    %2010 = vmatprep.subr.bf16.mxu0 0
    %2011 = vmatpush2.bf16.msra.mxu0 0
    %2012 = vmatprep.mubr.bf16.mxu0 0
    %2013 = vmatmul.mubr.bf16.gmra.mxu0 %v322
    %v2014 = vpop.f32.mrf.mxu0
    %v2015 = vadd.f32 %v1720, %v2014
    %v2016 = vpop.f32.mrf.mxu0
    %v2017 = vpop.f32.mrf.mxu0
    %v2018 = vadd.f32 %v1723, %v2017
    %v2019 = vpop.f32.mrf.mxu0
    %2020 = vmatprep.mubr.bf16.mxu0 0
    %2021 = vmatmul.mubr.bf16.gmra.mxu0 %v324
    %v2022 = vpop.f32.mrf.mxu0
    %v2023 = vadd.f32 %v1728, %v2022
    %v2024 = vpop.f32.mrf.mxu0
    %v2025 = vpop.f32.mrf.mxu0
    %v2026 = vadd.f32 %v1731, %v2025
    %v2027 = vpop.f32.mrf.mxu0
    %2028 = vmatprep.mubr.bf16.mxu0 0
    %2029 = vmatmul.mubr.bf16.gmra.mxu0 %v326
    %v2030 = vpop.f32.mrf.mxu0
    %v2031 = vadd.f32 %v1736, %v2030
    %v2032 = vpop.f32.mrf.mxu0
    %v2033 = vpop.f32.mrf.mxu0
    %v2034 = vadd.f32 %v1739, %v2033
    %v2035 = vpop.f32.mrf.mxu0
    %2036 = vmatprep.mubr.bf16.mxu0 0
    %2037 = vmatmul.mubr.bf16.gmra.mxu0 %v328
    %v2038 = vpop.f32.mrf.mxu0
    %v2039 = vadd.f32 %v1744, %v2038
    %v2040 = vpop.f32.mrf.mxu0
    %v2041 = vpop.f32.mrf.mxu0
    %v2042 = vadd.f32 %v1747, %v2041
    %v2043 = vpop.f32.mrf.mxu0
    %2044 = vmatprep.mubr.bf16.mxu0 0
    %2045 = vmatmul.mubr.bf16.gmra.mxu0 %v330
    %v2046 = vpop.f32.mrf.mxu0
    %v2047 = vadd.f32 %v1752, %v2046
    %v2048 = vpop.f32.mrf.mxu0
    %v2049 = vpop.f32.mrf.mxu0
    %v2050 = vadd.f32 %v1755, %v2049
    %v2051 = vpop.f32.mrf.mxu0
    %2052 = vmatprep.mubr.bf16.mxu0 0
    %2053 = vmatmul.mubr.bf16.gmra.mxu0 %v332
    %v2054 = vpop.f32.mrf.mxu0
    %v2055 = vadd.f32 %v1760, %v2054
    %v2056 = vpop.f32.mrf.mxu0
    %v2057 = vpop.f32.mrf.mxu0
    %v2058 = vadd.f32 %v1763, %v2057
    %v2059 = vpop.f32.mrf.mxu0
    %2060 = vmatprep.mubr.bf16.mxu0 0
    %2061 = vmatmul.mubr.bf16.gmra.mxu0 %v334
    %v2062 = vpop.f32.mrf.mxu0
    %v2063 = vadd.f32 %v1768, %v2062
    %v2064 = vpop.f32.mrf.mxu0
    %v2065 = vpop.f32.mrf.mxu0
    %v2066 = vadd.f32 %v1771, %v2065
    %v2067 = vpop.f32.mrf.mxu0
    %2068 = vdwg.mxu0
    %v2070 = vsel %vm321, %v203, 0
    %v2073 = vsel %vm321, %v211, 0
    %v2076 = vsel %vm321, %v219, 0
    %v2079 = vsel %vm321, %v227, 0
    %v2082 = vsel %vm321, %v235, 0
    %v2085 = vsel %vm321, %v243, 0
    %v2088 = vsel %vm321, %v248, 0
    %2090 = vmatprep.subr.bf16.mxu0 0
    %2091 = vmatpush1.bf16.msra.mxu0 0
    %2092 = vmatprep.subr.bf16.mxu0 0
    %2093 = vmatpush1.bf16.msra.mxu0 0
    %2094 = vmatprep.subr.bf16.mxu0 0
    %2095 = vmatpush1.bf16.msra.mxu0 0
    %2096 = vmatprep.subr.bf16.mxu0 0
    %2097 = vmatpush1.bf16.msra.mxu0 0
    %2098 = vmatprep.subr.bf16.mxu0 0
    %2099 = vmatpush1.bf16.msra.mxu0 0
    %2100 = vmatprep.subr.bf16.mxu0 0
    %2101 = vmatpush1.bf16.msra.mxu0 0
    %2102 = vmatprep.subr.bf16.mxu0 %v1103
    %2103 = vmatpush1.bf16.msra.mxu0 %v1100
    %2104 = vmatprep.subr.bf16.mxu0 %v1064
    %2105 = vmatpush1.bf16.msra.mxu0 %v1063
    %2106 = vmatprep.subr.bf16.mxu0 0
    %2107 = vmatpush2.bf16.msra.mxu0 0
    %2108 = vmatprep.subr.bf16.mxu0 0
    %2109 = vmatpush2.bf16.msra.mxu0 0
    %2110 = vmatprep.subr.bf16.mxu0 0
    %2111 = vmatpush2.bf16.msra.mxu0 0
    %2112 = vmatprep.subr.bf16.mxu0 0
    %2113 = vmatpush2.bf16.msra.mxu0 0
    %2114 = vmatprep.subr.bf16.mxu0 0
    %2115 = vmatpush2.bf16.msra.mxu0 0
    %2116 = vmatprep.subr.bf16.mxu0 0
    %2117 = vmatpush2.bf16.msra.mxu0 0
    %2118 = vmatprep.subr.bf16.mxu0 0
    %2119 = vmatpush2.bf16.msra.mxu0 0
    %2120 = vmatprep.subr.bf16.mxu0 0
    %2121 = vmatpush2.bf16.msra.mxu0 0
    %2122 = vmatprep.mubr.bf16.mxu0 0
    %2123 = vmatmul.mubr.bf16.gmra.mxu0 %v2070
    %v2124 = vpop.f32.mrf.mxu0
    %v2125 = vadd.f32 0.0, %v2124
    %v2126 = vpop.f32.mrf.mxu0
    %v2127 = vadd.f32 0.0, %v2126
    %v2128 = vpop.f32.mrf.mxu0
    %v2129 = vadd.f32 0.0, %v2128
    %v2130 = vpop.f32.mrf.mxu0
    %v2131 = vadd.f32 0.0, %v2130
    %2132 = vmatprep.mubr.bf16.mxu0 0
    %2133 = vmatmul.mubr.bf16.gmra.mxu0 %v2073
    %v2134 = vpop.f32.mrf.mxu0
    %v2135 = vadd.f32 0.0, %v2134
    %v2136 = vpop.f32.mrf.mxu0
    %v2137 = vadd.f32 0.0, %v2136
    %v2138 = vpop.f32.mrf.mxu0
    %v2139 = vadd.f32 0.0, %v2138
    %v2140 = vpop.f32.mrf.mxu0
    %v2141 = vadd.f32 0.0, %v2140
    %2142 = vmatprep.mubr.bf16.mxu0 0
    %2143 = vmatmul.mubr.bf16.gmra.mxu0 %v2076
    %v2144 = vpop.f32.mrf.mxu0
    %v2145 = vadd.f32 0.0, %v2144
    %v2146 = vpop.f32.mrf.mxu0
    %v2147 = vadd.f32 0.0, %v2146
    %v2148 = vpop.f32.mrf.mxu0
    %v2149 = vadd.f32 0.0, %v2148
    %v2150 = vpop.f32.mrf.mxu0
    %v2151 = vadd.f32 0.0, %v2150
    %2152 = vmatprep.mubr.bf16.mxu0 0
    %2153 = vmatmul.mubr.bf16.gmra.mxu0 %v2079
    %v2154 = vpop.f32.mrf.mxu0
    %v2155 = vadd.f32 0.0, %v2154
    %v2156 = vpop.f32.mrf.mxu0
    %v2157 = vadd.f32 0.0, %v2156
    %v2158 = vpop.f32.mrf.mxu0
    %v2159 = vadd.f32 0.0, %v2158
    %v2160 = vpop.f32.mrf.mxu0
    %v2161 = vadd.f32 0.0, %v2160
    %2162 = vmatprep.mubr.bf16.mxu0 0
    %2163 = vmatmul.mubr.bf16.gmra.mxu0 %v2082
    %v2164 = vpop.f32.mrf.mxu0
    %v2165 = vadd.f32 0.0, %v2164
    %v2166 = vpop.f32.mrf.mxu0
    %v2167 = vadd.f32 0.0, %v2166
    %v2168 = vpop.f32.mrf.mxu0
    %v2169 = vadd.f32 0.0, %v2168
    %v2170 = vpop.f32.mrf.mxu0
    %v2171 = vadd.f32 0.0, %v2170
    %2172 = vmatprep.mubr.bf16.mxu0 0
    %2173 = vmatmul.mubr.bf16.gmra.mxu0 %v2085
    %v2174 = vpop.f32.mrf.mxu0
    %v2175 = vadd.f32 0.0, %v2174
    %v2176 = vpop.f32.mrf.mxu0
    %v2177 = vadd.f32 0.0, %v2176
    %v2178 = vpop.f32.mrf.mxu0
    %v2179 = vadd.f32 0.0, %v2178
    %v2180 = vpop.f32.mrf.mxu0
    %v2181 = vadd.f32 0.0, %v2180
    %2182 = vmatprep.mubr.bf16.mxu0 0
    %2183 = vmatmul.mubr.bf16.gmra.mxu0 %v2088
    %v2184 = vpop.f32.mrf.mxu0
    %v2185 = vadd.f32 0.0, %v2184
    %v2186 = vpop.f32.mrf.mxu0
    %v2187 = vadd.f32 0.0, %v2186
    %v2188 = vpop.f32.mrf.mxu0
    %v2189 = vadd.f32 0.0, %v2188
    %v2190 = vpop.f32.mrf.mxu0
    %v2191 = vadd.f32 0.0, %v2190
    %2192 = vdwg.mxu0
    %2193 = vmatprep.subr.bf16.mxu0 0
    %2194 = vmatpush1.bf16.msra.mxu0 0
    %2195 = vmatprep.subr.bf16.mxu0 0
    %2196 = vmatpush1.bf16.msra.mxu0 0
    %2197 = vmatprep.subr.bf16.mxu0 0
    %2198 = vmatpush1.bf16.msra.mxu0 0
    %2199 = vmatprep.subr.bf16.mxu0 0
    %2200 = vmatpush1.bf16.msra.mxu0 0
    %2201 = vmatprep.subr.bf16.mxu0 0
    %2202 = vmatpush1.bf16.msra.mxu0 0
    %2203 = vmatprep.subr.bf16.mxu0 0
    %2204 = vmatpush1.bf16.msra.mxu0 0
    %2205 = vmatprep.subr.bf16.mxu0 %v1109
    %2206 = vmatpush1.bf16.msra.mxu0 %v1106
    %2207 = vmatprep.subr.bf16.mxu0 %v1066
    %2208 = vmatpush1.bf16.msra.mxu0 %v1065
    %2209 = vmatprep.subr.bf16.mxu0 0
    %2210 = vmatpush2.bf16.msra.mxu0 0
    %2211 = vmatprep.subr.bf16.mxu0 0
    %2212 = vmatpush2.bf16.msra.mxu0 0
    %2213 = vmatprep.subr.bf16.mxu0 0
    %2214 = vmatpush2.bf16.msra.mxu0 0
    %2215 = vmatprep.subr.bf16.mxu0 0
    %2216 = vmatpush2.bf16.msra.mxu0 0
    %2217 = vmatprep.subr.bf16.mxu0 0
    %2218 = vmatpush2.bf16.msra.mxu0 0
    %2219 = vmatprep.subr.bf16.mxu0 0
    %2220 = vmatpush2.bf16.msra.mxu0 0
    %2221 = vmatprep.subr.bf16.mxu0 0
    %2222 = vmatpush2.bf16.msra.mxu0 0
    %2223 = vmatprep.subr.bf16.mxu0 0
    %2224 = vmatpush2.bf16.msra.mxu0 0
    %2225 = vmatprep.mubr.bf16.mxu0 0
    %2226 = vmatmul.mubr.bf16.gmra.mxu0 %v2070
    %v2227 = vpop.f32.mrf.mxu0
    %v2228 = vadd.f32 0.0, %v2227
    %v2229 = vpop.f32.mrf.mxu0
    %v2230 = vadd.f32 0.0, %v2229
    %v2231 = vpop.f32.mrf.mxu0
    %v2232 = vadd.f32 0.0, %v2231
    %v2233 = vpop.f32.mrf.mxu0
    %v2234 = vadd.f32 0.0, %v2233
    %2235 = vmatprep.mubr.bf16.mxu0 0
    %2236 = vmatmul.mubr.bf16.gmra.mxu0 %v2073
    %v2237 = vpop.f32.mrf.mxu0
    %v2238 = vadd.f32 0.0, %v2237
    %v2239 = vpop.f32.mrf.mxu0
    %v2240 = vadd.f32 0.0, %v2239
    %v2241 = vpop.f32.mrf.mxu0
    %v2242 = vadd.f32 0.0, %v2241
    %v2243 = vpop.f32.mrf.mxu0
    %v2244 = vadd.f32 0.0, %v2243
    %2245 = vmatprep.mubr.bf16.mxu0 0
    %2246 = vmatmul.mubr.bf16.gmra.mxu0 %v2076
    %v2247 = vpop.f32.mrf.mxu0
    %v2248 = vadd.f32 0.0, %v2247
    %v2249 = vpop.f32.mrf.mxu0
    %v2250 = vadd.f32 0.0, %v2249
    %v2251 = vpop.f32.mrf.mxu0
    %v2252 = vadd.f32 0.0, %v2251
    %v2253 = vpop.f32.mrf.mxu0
    %v2254 = vadd.f32 0.0, %v2253
    %2255 = vmatprep.mubr.bf16.mxu0 0
    %2256 = vmatmul.mubr.bf16.gmra.mxu0 %v2079
    %v2257 = vpop.f32.mrf.mxu0
    %v2258 = vadd.f32 0.0, %v2257
    %v2259 = vpop.f32.mrf.mxu0
    %v2260 = vadd.f32 0.0, %v2259
    %v2261 = vpop.f32.mrf.mxu0
    %v2262 = vadd.f32 0.0, %v2261
    %v2263 = vpop.f32.mrf.mxu0
    %v2264 = vadd.f32 0.0, %v2263
    %2265 = vmatprep.mubr.bf16.mxu0 0
    %2266 = vmatmul.mubr.bf16.gmra.mxu0 %v2082
    %v2267 = vpop.f32.mrf.mxu0
    %v2268 = vadd.f32 0.0, %v2267
    %v2269 = vpop.f32.mrf.mxu0
    %v2270 = vadd.f32 0.0, %v2269
    %v2271 = vpop.f32.mrf.mxu0
    %v2272 = vadd.f32 0.0, %v2271
    %v2273 = vpop.f32.mrf.mxu0
    %v2274 = vadd.f32 0.0, %v2273
    %2275 = vmatprep.mubr.bf16.mxu0 0
    %2276 = vmatmul.mubr.bf16.gmra.mxu0 %v2085
    %v2277 = vpop.f32.mrf.mxu0
    %v2278 = vadd.f32 0.0, %v2277
    %v2279 = vpop.f32.mrf.mxu0
    %v2280 = vadd.f32 0.0, %v2279
    %v2281 = vpop.f32.mrf.mxu0
    %v2282 = vadd.f32 0.0, %v2281
    %v2283 = vpop.f32.mrf.mxu0
    %v2284 = vadd.f32 0.0, %v2283
    %2285 = vmatprep.mubr.bf16.mxu0 0
    %2286 = vmatmul.mubr.bf16.gmra.mxu0 %v2088
    %v2287 = vpop.f32.mrf.mxu0
    %v2288 = vadd.f32 0.0, %v2287
    %v2289 = vpop.f32.mrf.mxu0
    %v2290 = vadd.f32 0.0, %v2289
    %v2291 = vpop.f32.mrf.mxu0
    %v2292 = vadd.f32 0.0, %v2291
    %v2293 = vpop.f32.mrf.mxu0
    %v2294 = vadd.f32 0.0, %v2293
    %2295 = vdwg.mxu0
    %2296 = vmatprep.subr.bf16.mxu0 0
    %2297 = vmatpush1.bf16.msra.mxu0 0
    %2298 = vmatprep.subr.bf16.mxu0 0
    %2299 = vmatpush1.bf16.msra.mxu0 0
    %2300 = vmatprep.subr.bf16.mxu0 0
    %2301 = vmatpush1.bf16.msra.mxu0 0
    %2302 = vmatprep.subr.bf16.mxu0 0
    %2303 = vmatpush1.bf16.msra.mxu0 0
    %2304 = vmatprep.subr.bf16.mxu0 0
    %2305 = vmatpush1.bf16.msra.mxu0 0
    %2306 = vmatprep.subr.bf16.mxu0 0
    %2307 = vmatpush1.bf16.msra.mxu0 0
    %2308 = vmatprep.subr.bf16.mxu0 0
    %2309 = vmatpush1.bf16.msra.mxu0 %v1112
    %2310 = vmatprep.subr.bf16.mxu0 0
    %2311 = vmatpush1.bf16.msra.mxu0 %v1067
    %2312 = vmatprep.subr.bf16.mxu0 0
    %2313 = vmatpush2.bf16.msra.mxu0 0
    %2314 = vmatprep.subr.bf16.mxu0 0
    %2315 = vmatpush2.bf16.msra.mxu0 0
    %2316 = vmatprep.subr.bf16.mxu0 0
    %2317 = vmatpush2.bf16.msra.mxu0 0
    %2318 = vmatprep.subr.bf16.mxu0 0
    %2319 = vmatpush2.bf16.msra.mxu0 0
    %2320 = vmatprep.subr.bf16.mxu0 0
    %2321 = vmatpush2.bf16.msra.mxu0 0
    %2322 = vmatprep.subr.bf16.mxu0 0
    %2323 = vmatpush2.bf16.msra.mxu0 0
    %2324 = vmatprep.subr.bf16.mxu0 0
    %2325 = vmatpush2.bf16.msra.mxu0 0
    %2326 = vmatprep.subr.bf16.mxu0 0
    %2327 = vmatpush2.bf16.msra.mxu0 0
    %2328 = vmatprep.mubr.bf16.mxu0 0
    %2329 = vmatmul.mubr.bf16.gmra.mxu0 %v2070
    %v2330 = vpop.f32.mrf.mxu0
    %v2331 = vadd.f32 0.0, %v2330
    %v2332 = vpop.f32.mrf.mxu0
    %v2333 = vpop.f32.mrf.mxu0
    %v2334 = vadd.f32 0.0, %v2333
    %v2335 = vpop.f32.mrf.mxu0
    %2336 = vmatprep.mubr.bf16.mxu0 0
    %2337 = vmatmul.mubr.bf16.gmra.mxu0 %v2073
    %v2338 = vpop.f32.mrf.mxu0
    %v2339 = vadd.f32 0.0, %v2338
    %v2340 = vpop.f32.mrf.mxu0
    %v2341 = vpop.f32.mrf.mxu0
    %v2342 = vadd.f32 0.0, %v2341
    %v2343 = vpop.f32.mrf.mxu0
    %2344 = vmatprep.mubr.bf16.mxu0 0
    %2345 = vmatmul.mubr.bf16.gmra.mxu0 %v2076
    %v2346 = vpop.f32.mrf.mxu0
    %v2347 = vadd.f32 0.0, %v2346
    %v2348 = vpop.f32.mrf.mxu0
    %v2349 = vpop.f32.mrf.mxu0
    %v2350 = vadd.f32 0.0, %v2349
    %v2351 = vpop.f32.mrf.mxu0
    %2352 = vmatprep.mubr.bf16.mxu0 0
    %2353 = vmatmul.mubr.bf16.gmra.mxu0 %v2079
    %v2354 = vpop.f32.mrf.mxu0
    %v2355 = vadd.f32 0.0, %v2354
    %v2356 = vpop.f32.mrf.mxu0
    %v2357 = vpop.f32.mrf.mxu0
    %v2358 = vadd.f32 0.0, %v2357
    %v2359 = vpop.f32.mrf.mxu0
    %2360 = vmatprep.mubr.bf16.mxu0 0
    %2361 = vmatmul.mubr.bf16.gmra.mxu0 %v2082
    %v2362 = vpop.f32.mrf.mxu0
    %v2363 = vadd.f32 0.0, %v2362
    %v2364 = vpop.f32.mrf.mxu0
    %v2365 = vpop.f32.mrf.mxu0
    %v2366 = vadd.f32 0.0, %v2365
    %v2367 = vpop.f32.mrf.mxu0
    %2368 = vmatprep.mubr.bf16.mxu0 0
    %2369 = vmatmul.mubr.bf16.gmra.mxu0 %v2085
    %v2370 = vpop.f32.mrf.mxu0
    %v2371 = vadd.f32 0.0, %v2370
    %v2372 = vpop.f32.mrf.mxu0
    %v2373 = vpop.f32.mrf.mxu0
    %v2374 = vadd.f32 0.0, %v2373
    %v2375 = vpop.f32.mrf.mxu0
    %2376 = vmatprep.mubr.bf16.mxu0 0
    %2377 = vmatmul.mubr.bf16.gmra.mxu0 %v2088
    %v2378 = vpop.f32.mrf.mxu0
    %v2379 = vadd.f32 0.0, %v2378
    %v2380 = vpop.f32.mrf.mxu0
    %v2381 = vpop.f32.mrf.mxu0
    %v2382 = vadd.f32 0.0, %v2381
    %v2383 = vpop.f32.mrf.mxu0
    %2384 = vdwg.mxu0
    %v2385 = vadd.f32 %v1809, %v2125
    %v2386 = vadd.f32 %v1811, %v2127
    %v2387 = vadd.f32 %v1912, %v2228
    %v2388 = vadd.f32 %v1914, %v2230
    %v2389 = vadd.f32 %v2015, %v2331
    %v2390 = vadd.f32 %v1813, %v2129
    %v2391 = vadd.f32 %v1815, %v2131
    %v2392 = vadd.f32 %v1916, %v2232
    %v2393 = vadd.f32 %v1918, %v2234
    %v2394 = vadd.f32 %v2018, %v2334
    %v2395 = vadd.f32 %v1819, %v2135
    %v2396 = vadd.f32 %v1821, %v2137
    %v2397 = vadd.f32 %v1922, %v2238
    %v2398 = vadd.f32 %v1924, %v2240
    %v2399 = vadd.f32 %v2023, %v2339
    %v2400 = vadd.f32 %v1823, %v2139
    %v2401 = vadd.f32 %v1825, %v2141
    %v2402 = vadd.f32 %v1926, %v2242
    %v2403 = vadd.f32 %v1928, %v2244
    %v2404 = vadd.f32 %v2026, %v2342
    %v2405 = vadd.f32 %v1829, %v2145
    %v2406 = vadd.f32 %v1831, %v2147
    %v2407 = vadd.f32 %v1932, %v2248
    %v2408 = vadd.f32 %v1934, %v2250
    %v2409 = vadd.f32 %v2031, %v2347
    %v2410 = vadd.f32 %v1833, %v2149
    %v2411 = vadd.f32 %v1835, %v2151
    %v2412 = vadd.f32 %v1936, %v2252
    %v2413 = vadd.f32 %v1938, %v2254
    %v2414 = vadd.f32 %v2034, %v2350
    %v2415 = vadd.f32 %v1839, %v2155
    %v2416 = vadd.f32 %v1841, %v2157
    %v2417 = vadd.f32 %v1942, %v2258
    %v2418 = vadd.f32 %v1944, %v2260
    %v2419 = vadd.f32 %v2039, %v2355
    %v2420 = vadd.f32 %v1843, %v2159
    %v2421 = vadd.f32 %v1845, %v2161
    %v2422 = vadd.f32 %v1946, %v2262
    %v2423 = vadd.f32 %v1948, %v2264
    %v2424 = vadd.f32 %v2042, %v2358
    %v2425 = vadd.f32 %v1849, %v2165
    %v2426 = vadd.f32 %v1851, %v2167
    %v2427 = vadd.f32 %v1952, %v2268
    %v2428 = vadd.f32 %v1954, %v2270
    %v2429 = vadd.f32 %v2047, %v2363
    %v2430 = vadd.f32 %v1853, %v2169
    %v2431 = vadd.f32 %v1855, %v2171
    %v2432 = vadd.f32 %v1956, %v2272
    %v2433 = vadd.f32 %v1958, %v2274
    %v2434 = vadd.f32 %v2050, %v2366
    %v2435 = vadd.f32 %v1859, %v2175
    %v2436 = vadd.f32 %v1861, %v2177
    %v2437 = vadd.f32 %v1962, %v2278
    %v2438 = vadd.f32 %v1964, %v2280
    %v2439 = vadd.f32 %v2055, %v2371
    %v2440 = vadd.f32 %v1863, %v2179
    %v2441 = vadd.f32 %v1865, %v2181
    %v2442 = vadd.f32 %v1966, %v2282
    %v2443 = vadd.f32 %v1968, %v2284
    %v2444 = vadd.f32 %v2058, %v2374
    %v2445 = vadd.f32 %v1869, %v2185
    %v2446 = vadd.f32 %v1871, %v2187
    %v2447 = vadd.f32 %v1972, %v2288
    %v2448 = vadd.f32 %v1974, %v2290
    %v2449 = vadd.f32 %v2063, %v2379
    %v2450 = vadd.f32 %v1873, %v2189
    %v2451 = vadd.f32 %v1875, %v2191
    %v2452 = vadd.f32 %v1976, %v2292
    %v2453 = vadd.f32 %v1978, %v2294
    %v2454 = vadd.f32 %v2066, %v2382
    %v2455 = vld [vmem:[%s2] sm:$0x1f]
    %v2457 = vlaneseq
    %v2458 = vshrl.u32 %v2457, 7
    %v2459 = vsub.s32 0, %v2458
    %v2460 = vrot.slane %v2455, %v2459
    %v2461 = vlaneseq
    %v2462 = vshrl.u32 %v2461, 7
    %v2463 = vsub.s32 1, %v2462
    %v2464 = vrot.slane %v2455, %v2463
    %v2465 = vlaneseq
    %v2466 = vshrl.u32 %v2465, 7
    %v2467 = vsub.s32 2, %v2466
    %v2468 = vrot.slane %v2455, %v2467
    %v2469 = vlaneseq
    %v2470 = vshrl.u32 %v2469, 7
    %v2471 = vsub.s32 3, %v2470
    %v2472 = vrot.slane %v2455, %v2471
    %v2473 = vlaneseq
    %v2474 = vshrl.u32 %v2473, 7
    %v2475 = vsub.s32 4, %v2474
    %v2476 = vrot.slane %v2455, %v2475
    %v2482 = vadd.f32 %v1409, %v2460
    %v2483 = vadd.f32 %v1410, %v2464
    %v2484 = vadd.f32 %v1411, %v2468
    %v2485 = vadd.f32 %v1412, %v2472
    %v2486 = vadd.f32 %v1413, %v2476
    %v2487 = vadd.f32 %v1414, %v2460
    %v2488 = vadd.f32 %v1415, %v2464
    %v2489 = vadd.f32 %v1416, %v2468
    %v2490 = vadd.f32 %v1417, %v2472
    %v2491 = vadd.f32 %v1418, %v2476
    %v2492 = vadd.f32 %v1419, %v2460
    %v2493 = vadd.f32 %v1420, %v2464
    %v2494 = vadd.f32 %v1421, %v2468
    %v2495 = vadd.f32 %v1422, %v2472
    %v2496 = vadd.f32 %v1423, %v2476
    %v2497 = vadd.f32 %v1424, %v2460
    %v2498 = vadd.f32 %v1425, %v2464
    %v2499 = vadd.f32 %v1426, %v2468
    %v2500 = vadd.f32 %v1427, %v2472
    %v2501 = vadd.f32 %v1428, %v2476
    %v2502 = vadd.f32 %v1429, %v2460
    %v2503 = vadd.f32 %v1430, %v2464
    %v2504 = vadd.f32 %v1431, %v2468
    %v2505 = vadd.f32 %v1432, %v2472
    %v2506 = vadd.f32 %v1433, %v2476
    %v2507 = vadd.f32 %v1434, %v2460
    %v2508 = vadd.f32 %v1435, %v2464
    %v2509 = vadd.f32 %v1436, %v2468
    %v2510 = vadd.f32 %v1437, %v2472
    %v2511 = vadd.f32 %v1438, %v2476
    %v2512 = vadd.f32 %v1439, %v2460
    %v2513 = vadd.f32 %v1440, %v2464
    %v2514 = vadd.f32 %v1441, %v2468
    %v2515 = vadd.f32 %v1442, %v2472
    %v2516 = vadd.f32 %v1443, %v2476
    %v2517 = vadd.f32 %v1444, %v2460
    %v2518 = vadd.f32 %v1445, %v2464
    %v2519 = vadd.f32 %v1446, %v2468
    %v2520 = vadd.f32 %v1447, %v2472
    %v2521 = vadd.f32 %v1448, %v2476
    %v2522 = vadd.f32 %v1449, %v2460
    %v2523 = vadd.f32 %v1450, %v2464
    %v2524 = vadd.f32 %v1451, %v2468
    %v2525 = vadd.f32 %v1452, %v2472
    %v2526 = vadd.f32 %v1453, %v2476
    %v2527 = vadd.f32 %v1454, %v2460
    %v2528 = vadd.f32 %v1455, %v2464
    %v2529 = vadd.f32 %v1456, %v2468
    %v2530 = vadd.f32 %v1457, %v2472
    %v2531 = vadd.f32 %v1458, %v2476
    %v2532 = vadd.f32 %v1459, %v2460
    %v2533 = vadd.f32 %v1460, %v2464
    %v2534 = vadd.f32 %v1461, %v2468
    %v2535 = vadd.f32 %v1462, %v2472
    %v2536 = vadd.f32 %v1463, %v2476
    %v2537 = vadd.f32 %v1464, %v2460
    %v2538 = vadd.f32 %v1465, %v2464
    %v2539 = vadd.f32 %v1466, %v2468
    %v2540 = vadd.f32 %v1467, %v2472
    %v2541 = vadd.f32 %v1468, %v2476
    %v2542 = vadd.f32 %v1469, %v2460
    %v2543 = vadd.f32 %v1470, %v2464
    %v2544 = vadd.f32 %v1471, %v2468
    %v2545 = vadd.f32 %v1472, %v2472
    %v2546 = vadd.f32 %v1473, %v2476
    %v2547 = vadd.f32 %v1474, %v2460
    %v2548 = vadd.f32 %v1475, %v2464
    %v2549 = vadd.f32 %v1476, %v2468
    %v2550 = vadd.f32 %v1477, %v2472
    %v2551 = vadd.f32 %v1478, %v2476
    %v2552 = vmax.f32 %v2482, 0.0
    %v2553 = vmax.f32 %v2483, 0.0
    %v2554 = vmax.f32 %v2484, 0.0
    %v2555 = vmax.f32 %v2485, 0.0
    %v2556 = vmax.f32 %v2486, 0.0
    %v2557 = vmax.f32 %v2487, 0.0
    %v2558 = vmax.f32 %v2488, 0.0
    %v2559 = vmax.f32 %v2489, 0.0
    %v2560 = vmax.f32 %v2490, 0.0
    %v2561 = vmax.f32 %v2491, 0.0
    %v2562 = vmax.f32 %v2492, 0.0
    %v2563 = vmax.f32 %v2493, 0.0
    %v2564 = vmax.f32 %v2494, 0.0
    %v2565 = vmax.f32 %v2495, 0.0
    %v2566 = vmax.f32 %v2496, 0.0
    %v2567 = vmax.f32 %v2497, 0.0
    %v2568 = vmax.f32 %v2498, 0.0
    %v2569 = vmax.f32 %v2499, 0.0
    %v2570 = vmax.f32 %v2500, 0.0
    %v2571 = vmax.f32 %v2501, 0.0
    %v2572 = vmax.f32 %v2502, 0.0
    %v2573 = vmax.f32 %v2503, 0.0
    %v2574 = vmax.f32 %v2504, 0.0
    %v2575 = vmax.f32 %v2505, 0.0
    %v2576 = vmax.f32 %v2506, 0.0
    %v2577 = vmax.f32 %v2507, 0.0
    %v2578 = vmax.f32 %v2508, 0.0
    %v2579 = vmax.f32 %v2509, 0.0
    %v2580 = vmax.f32 %v2510, 0.0
    %v2581 = vmax.f32 %v2511, 0.0
    %v2582 = vmax.f32 %v2512, 0.0
    %v2583 = vmax.f32 %v2513, 0.0
    %v2584 = vmax.f32 %v2514, 0.0
    %v2585 = vmax.f32 %v2515, 0.0
    %v2586 = vmax.f32 %v2516, 0.0
    %v2587 = vmax.f32 %v2517, 0.0
    %v2588 = vmax.f32 %v2518, 0.0
    %v2589 = vmax.f32 %v2519, 0.0
    %v2590 = vmax.f32 %v2520, 0.0
    %v2591 = vmax.f32 %v2521, 0.0
    %v2592 = vmax.f32 %v2522, 0.0
    %v2593 = vmax.f32 %v2523, 0.0
    %v2594 = vmax.f32 %v2524, 0.0
    %v2595 = vmax.f32 %v2525, 0.0
    %v2596 = vmax.f32 %v2526, 0.0
    %v2597 = vmax.f32 %v2527, 0.0
    %v2598 = vmax.f32 %v2528, 0.0
    %v2599 = vmax.f32 %v2529, 0.0
    %v2600 = vmax.f32 %v2530, 0.0
    %v2601 = vmax.f32 %v2531, 0.0
    %v2602 = vmax.f32 %v2532, 0.0
    %v2603 = vmax.f32 %v2533, 0.0
    %v2604 = vmax.f32 %v2534, 0.0
    %v2605 = vmax.f32 %v2535, 0.0
    %v2606 = vmax.f32 %v2536, 0.0
    %v2607 = vmax.f32 %v2537, 0.0
    %v2608 = vmax.f32 %v2538, 0.0
    %v2609 = vmax.f32 %v2539, 0.0
    %v2610 = vmax.f32 %v2540, 0.0
    %v2611 = vmax.f32 %v2541, 0.0
    %v2612 = vmax.f32 %v2542, 0.0
    %v2613 = vmax.f32 %v2543, 0.0
    %v2614 = vmax.f32 %v2544, 0.0
    %v2615 = vmax.f32 %v2545, 0.0
    %v2616 = vmax.f32 %v2546, 0.0
    %v2617 = vmax.f32 %v2547, 0.0
    %v2618 = vmax.f32 %v2548, 0.0
    %v2619 = vmax.f32 %v2549, 0.0
    %v2620 = vmax.f32 %v2550, 0.0
    %v2621 = vmax.f32 %v2551, 0.0
    %v2622 = vadd.f32 %v2385, %v2460
    %v2623 = vadd.f32 %v2386, %v2464
    %v2624 = vadd.f32 %v2387, %v2468
    %v2625 = vadd.f32 %v2388, %v2472
    %v2626 = vadd.f32 %v2389, %v2476
    %v2627 = vadd.f32 %v2390, %v2460
    %v2628 = vadd.f32 %v2391, %v2464
    %v2629 = vadd.f32 %v2392, %v2468
    %v2630 = vadd.f32 %v2393, %v2472
    %v2631 = vadd.f32 %v2394, %v2476
    %v2632 = vadd.f32 %v2395, %v2460
    %v2633 = vadd.f32 %v2396, %v2464
    %v2634 = vadd.f32 %v2397, %v2468
    %v2635 = vadd.f32 %v2398, %v2472
    %v2636 = vadd.f32 %v2399, %v2476
    %v2637 = vadd.f32 %v2400, %v2460
    %v2638 = vadd.f32 %v2401, %v2464
    %v2639 = vadd.f32 %v2402, %v2468
    %v2640 = vadd.f32 %v2403, %v2472
    %v2641 = vadd.f32 %v2404, %v2476
    %v2642 = vadd.f32 %v2405, %v2460
    %v2643 = vadd.f32 %v2406, %v2464
    %v2644 = vadd.f32 %v2407, %v2468
    %v2645 = vadd.f32 %v2408, %v2472
    %v2646 = vadd.f32 %v2409, %v2476
    %v2647 = vadd.f32 %v2410, %v2460
    %v2648 = vadd.f32 %v2411, %v2464
    %v2649 = vadd.f32 %v2412, %v2468
    %v2650 = vadd.f32 %v2413, %v2472
    %v2651 = vadd.f32 %v2414, %v2476
    %v2652 = vadd.f32 %v2415, %v2460
    %v2653 = vadd.f32 %v2416, %v2464
    %v2654 = vadd.f32 %v2417, %v2468
    %v2655 = vadd.f32 %v2418, %v2472
    %v2656 = vadd.f32 %v2419, %v2476
    %v2657 = vadd.f32 %v2420, %v2460
    %v2658 = vadd.f32 %v2421, %v2464
    %v2659 = vadd.f32 %v2422, %v2468
    %v2660 = vadd.f32 %v2423, %v2472
    %v2661 = vadd.f32 %v2424, %v2476
    %v2662 = vadd.f32 %v2425, %v2460
    %v2663 = vadd.f32 %v2426, %v2464
    %v2664 = vadd.f32 %v2427, %v2468
    %v2665 = vadd.f32 %v2428, %v2472
    %v2666 = vadd.f32 %v2429, %v2476
    %v2667 = vadd.f32 %v2430, %v2460
    %v2668 = vadd.f32 %v2431, %v2464
    %v2669 = vadd.f32 %v2432, %v2468
    %v2670 = vadd.f32 %v2433, %v2472
    %v2671 = vadd.f32 %v2434, %v2476
    %v2672 = vadd.f32 %v2435, %v2460
    %v2673 = vadd.f32 %v2436, %v2464
    %v2674 = vadd.f32 %v2437, %v2468
    %v2675 = vadd.f32 %v2438, %v2472
    %v2676 = vadd.f32 %v2439, %v2476
    %v2677 = vadd.f32 %v2440, %v2460
    %v2678 = vadd.f32 %v2441, %v2464
    %v2679 = vadd.f32 %v2442, %v2468
    %v2680 = vadd.f32 %v2443, %v2472
    %v2681 = vadd.f32 %v2444, %v2476
    %v2682 = vadd.f32 %v2445, %v2460
    %v2683 = vadd.f32 %v2446, %v2464
    %v2684 = vadd.f32 %v2447, %v2468
    %v2685 = vadd.f32 %v2448, %v2472
    %v2686 = vadd.f32 %v2449, %v2476
    %v2687 = vadd.f32 %v2450, %v2460
    %v2688 = vadd.f32 %v2451, %v2464
    %v2689 = vadd.f32 %v2452, %v2468
    %v2690 = vadd.f32 %v2453, %v2472
    %v2691 = vadd.f32 %v2454, %v2476
    %v2692 = vmax.f32 %v2622, 0.0
    %v2693 = vmax.f32 %v2623, 0.0
    %v2694 = vmax.f32 %v2624, 0.0
    %v2695 = vmax.f32 %v2625, 0.0
    %v2696 = vmax.f32 %v2626, 0.0
    %v2697 = vmax.f32 %v2627, 0.0
    %v2698 = vmax.f32 %v2628, 0.0
    %v2699 = vmax.f32 %v2629, 0.0
    %v2700 = vmax.f32 %v2630, 0.0
    %v2701 = vmax.f32 %v2631, 0.0
    %v2702 = vmax.f32 %v2632, 0.0
    %v2703 = vmax.f32 %v2633, 0.0
    %v2704 = vmax.f32 %v2634, 0.0
    %v2705 = vmax.f32 %v2635, 0.0
    %v2706 = vmax.f32 %v2636, 0.0
    %v2707 = vmax.f32 %v2637, 0.0
    %v2708 = vmax.f32 %v2638, 0.0
    %v2709 = vmax.f32 %v2639, 0.0
    %v2710 = vmax.f32 %v2640, 0.0
    %v2711 = vmax.f32 %v2641, 0.0
    %v2712 = vmax.f32 %v2642, 0.0
    %v2713 = vmax.f32 %v2643, 0.0
    %v2714 = vmax.f32 %v2644, 0.0
    %v2715 = vmax.f32 %v2645, 0.0
    %v2716 = vmax.f32 %v2646, 0.0
    %v2717 = vmax.f32 %v2647, 0.0
    %v2718 = vmax.f32 %v2648, 0.0
    %v2719 = vmax.f32 %v2649, 0.0
    %v2720 = vmax.f32 %v2650, 0.0
    %v2721 = vmax.f32 %v2651, 0.0
    %v2722 = vmax.f32 %v2652, 0.0
    %v2723 = vmax.f32 %v2653, 0.0
    %v2724 = vmax.f32 %v2654, 0.0
    %v2725 = vmax.f32 %v2655, 0.0
    %v2726 = vmax.f32 %v2656, 0.0
    %v2727 = vmax.f32 %v2657, 0.0
    %v2728 = vmax.f32 %v2658, 0.0
    %v2729 = vmax.f32 %v2659, 0.0
    %v2730 = vmax.f32 %v2660, 0.0
    %v2731 = vmax.f32 %v2661, 0.0
    %v2732 = vmax.f32 %v2662, 0.0
    %v2733 = vmax.f32 %v2663, 0.0
    %v2734 = vmax.f32 %v2664, 0.0
    %v2735 = vmax.f32 %v2665, 0.0
    %v2736 = vmax.f32 %v2666, 0.0
    %v2737 = vmax.f32 %v2667, 0.0
    %v2738 = vmax.f32 %v2668, 0.0
    %v2739 = vmax.f32 %v2669, 0.0
    %v2740 = vmax.f32 %v2670, 0.0
    %v2741 = vmax.f32 %v2671, 0.0
    %v2742 = vmax.f32 %v2672, 0.0
    %v2743 = vmax.f32 %v2673, 0.0
    %v2744 = vmax.f32 %v2674, 0.0
    %v2745 = vmax.f32 %v2675, 0.0
    %v2746 = vmax.f32 %v2676, 0.0
    %v2747 = vmax.f32 %v2677, 0.0
    %v2748 = vmax.f32 %v2678, 0.0
    %v2749 = vmax.f32 %v2679, 0.0
    %v2750 = vmax.f32 %v2680, 0.0
    %v2751 = vmax.f32 %v2681, 0.0
    %v2752 = vmax.f32 %v2682, 0.0
    %v2753 = vmax.f32 %v2683, 0.0
    %v2754 = vmax.f32 %v2684, 0.0
    %v2755 = vmax.f32 %v2685, 0.0
    %v2756 = vmax.f32 %v2686, 0.0
    %v2757 = vmax.f32 %v2687, 0.0
    %v2758 = vmax.f32 %v2688, 0.0
    %v2759 = vmax.f32 %v2689, 0.0
    %v2760 = vmax.f32 %v2690, 0.0
    %v2761 = vmax.f32 %v2691, 0.0
    %v2762 = vmax.f32 %v2552, %v2692
    %v2763 = vmax.f32 %v2553, %v2693
    %v2764 = vmax.f32 %v2554, %v2694
    %v2765 = vmax.f32 %v2555, %v2695
    %v2766 = vmax.f32 %v2556, %v2696
    %v2767 = vmax.f32 %v2557, %v2697
    %v2768 = vmax.f32 %v2558, %v2698
    %v2769 = vmax.f32 %v2559, %v2699
    %v2770 = vmax.f32 %v2560, %v2700
    %v2771 = vmax.f32 %v2561, %v2701
    %v2772 = vmax.f32 %v2562, %v2702
    %v2773 = vmax.f32 %v2563, %v2703
    %v2774 = vmax.f32 %v2564, %v2704
    %v2775 = vmax.f32 %v2565, %v2705
    %v2776 = vmax.f32 %v2566, %v2706
    %v2777 = vmax.f32 %v2567, %v2707
    %v2778 = vmax.f32 %v2568, %v2708
    %v2779 = vmax.f32 %v2569, %v2709
    %v2780 = vmax.f32 %v2570, %v2710
    %v2781 = vmax.f32 %v2571, %v2711
    %v2782 = vmax.f32 %v2572, %v2712
    %v2783 = vmax.f32 %v2573, %v2713
    %v2784 = vmax.f32 %v2574, %v2714
    %v2785 = vmax.f32 %v2575, %v2715
    %v2786 = vmax.f32 %v2576, %v2716
    %v2787 = vmax.f32 %v2577, %v2717
    %v2788 = vmax.f32 %v2578, %v2718
    %v2789 = vmax.f32 %v2579, %v2719
    %v2790 = vmax.f32 %v2580, %v2720
    %v2791 = vmax.f32 %v2581, %v2721
    %v2792 = vmax.f32 %v2582, %v2722
    %v2793 = vmax.f32 %v2583, %v2723
    %v2794 = vmax.f32 %v2584, %v2724
    %v2795 = vmax.f32 %v2585, %v2725
    %v2796 = vmax.f32 %v2586, %v2726
    %v2797 = vmax.f32 %v2587, %v2727
    %v2798 = vmax.f32 %v2588, %v2728
    %v2799 = vmax.f32 %v2589, %v2729
    %v2800 = vmax.f32 %v2590, %v2730
    %v2801 = vmax.f32 %v2591, %v2731
    %v2802 = vmax.f32 %v2592, %v2732
    %v2803 = vmax.f32 %v2593, %v2733
    %v2804 = vmax.f32 %v2594, %v2734
    %v2805 = vmax.f32 %v2595, %v2735
    %v2806 = vmax.f32 %v2596, %v2736
    %v2807 = vmax.f32 %v2597, %v2737
    %v2808 = vmax.f32 %v2598, %v2738
    %v2809 = vmax.f32 %v2599, %v2739
    %v2810 = vmax.f32 %v2600, %v2740
    %v2811 = vmax.f32 %v2601, %v2741
    %v2812 = vmax.f32 %v2602, %v2742
    %v2813 = vmax.f32 %v2603, %v2743
    %v2814 = vmax.f32 %v2604, %v2744
    %v2815 = vmax.f32 %v2605, %v2745
    %v2816 = vmax.f32 %v2606, %v2746
    %v2817 = vmax.f32 %v2607, %v2747
    %v2818 = vmax.f32 %v2608, %v2748
    %v2819 = vmax.f32 %v2609, %v2749
    %v2820 = vmax.f32 %v2610, %v2750
    %v2821 = vmax.f32 %v2611, %v2751
    %v2822 = vmax.f32 %v2612, %v2752
    %v2823 = vmax.f32 %v2613, %v2753
    %v2824 = vmax.f32 %v2614, %v2754
    %v2825 = vmax.f32 %v2615, %v2755
    %v2826 = vmax.f32 %v2616, %v2756
    %v2827 = vmax.f32 %v2617, %v2757
    %v2828 = vmax.f32 %v2618, %v2758
    %v2829 = vmax.f32 %v2619, %v2759
    %v2830 = vmax.f32 %v2620, %v2760
    %v2831 = vmax.f32 %v2621, %v2761
    %v2832 = vpack.c.bf16 %v2767, %v2762
    %v2833 = vpack.c.bf16 %v2768, %v2763
    %v2834 = vpack.c.bf16 %v2769, %v2764
    %v2835 = vpack.c.bf16 %v2770, %v2765
    %v2836 = vpack.c.bf16 %v2771, %v2766
    %v2837 = vpack.c.bf16 %v2777, %v2772
    %v2838 = vpack.c.bf16 %v2778, %v2773
    %v2839 = vpack.c.bf16 %v2779, %v2774
    %v2840 = vpack.c.bf16 %v2780, %v2775
    %v2841 = vpack.c.bf16 %v2781, %v2776
    %v2842 = vpack.c.bf16 %v2787, %v2782
    %v2843 = vpack.c.bf16 %v2788, %v2783
    %v2844 = vpack.c.bf16 %v2789, %v2784
    %v2845 = vpack.c.bf16 %v2790, %v2785
    %v2846 = vpack.c.bf16 %v2791, %v2786
    %v2847 = vpack.c.bf16 %v2797, %v2792
    %v2848 = vpack.c.bf16 %v2798, %v2793
    %v2849 = vpack.c.bf16 %v2799, %v2794
    %v2850 = vpack.c.bf16 %v2800, %v2795
    %v2851 = vpack.c.bf16 %v2801, %v2796
    %v2852 = vpack.c.bf16 %v2807, %v2802
    %v2853 = vpack.c.bf16 %v2808, %v2803
    %v2854 = vpack.c.bf16 %v2809, %v2804
    %v2855 = vpack.c.bf16 %v2810, %v2805
    %v2856 = vpack.c.bf16 %v2811, %v2806
    %v2857 = vpack.c.bf16 %v2817, %v2812
    %v2858 = vpack.c.bf16 %v2818, %v2813
    %v2859 = vpack.c.bf16 %v2819, %v2814
    %v2860 = vpack.c.bf16 %v2820, %v2815
    %v2861 = vpack.c.bf16 %v2821, %v2816
    %v2862 = vpack.c.bf16 %v2827, %v2822
    %v2863 = vpack.c.bf16 %v2828, %v2823
    %v2864 = vpack.c.bf16 %v2829, %v2824
    %v2865 = vpack.c.bf16 %v2830, %v2825
    %v2866 = vpack.c.bf16 %v2831, %v2826
    %2902 = vrot.lane.b32.xlu0 %v2832, 108
    %v2903 = vpop.permute.xlu0 %2902
    %2904 = vrot.lane.b32.xlu0 %v2833, 108
    %v2905 = vpop.permute.xlu0 %2904
    %2906 = vrot.lane.b32.xlu0 %v2834, 108
    %v2907 = vpop.permute.xlu0 %2906
    %2908 = vrot.lane.b32.xlu0 %v2835, 108
    %v2909 = vpop.permute.xlu0 %2908
    %2910 = vrot.lane.b32.xlu0 %v2836, 108
    %v2911 = vpop.permute.xlu0 %2910
    %2912 = vrot.lane.b32.xlu0 %v2837, 108
    %v2913 = vpop.permute.xlu0 %2912
    %2914 = vrot.lane.b32.xlu0 %v2838, 108
    %v2915 = vpop.permute.xlu0 %2914
    %2916 = vrot.lane.b32.xlu0 %v2839, 108
    %v2917 = vpop.permute.xlu0 %2916
    %2918 = vrot.lane.b32.xlu0 %v2840, 108
    %v2919 = vpop.permute.xlu0 %2918
    %2920 = vrot.lane.b32.xlu0 %v2841, 108
    %v2921 = vpop.permute.xlu0 %2920
    %2922 = vrot.lane.b32.xlu0 %v2842, 108
    %v2923 = vpop.permute.xlu0 %2922
    %2924 = vrot.lane.b32.xlu0 %v2843, 108
    %v2925 = vpop.permute.xlu0 %2924
    %2926 = vrot.lane.b32.xlu0 %v2844, 108
    %v2927 = vpop.permute.xlu0 %2926
    %2928 = vrot.lane.b32.xlu0 %v2845, 108
    %v2929 = vpop.permute.xlu0 %2928
    %2930 = vrot.lane.b32.xlu0 %v2846, 108
    %v2931 = vpop.permute.xlu0 %2930
    %2932 = vrot.lane.b32.xlu0 %v2847, 108
    %v2933 = vpop.permute.xlu0 %2932
    %2934 = vrot.lane.b32.xlu0 %v2848, 108
    %v2935 = vpop.permute.xlu0 %2934
    %2936 = vrot.lane.b32.xlu0 %v2849, 108
    %v2937 = vpop.permute.xlu0 %2936
    %2938 = vrot.lane.b32.xlu0 %v2850, 108
    %v2939 = vpop.permute.xlu0 %2938
    %2940 = vrot.lane.b32.xlu0 %v2851, 108
    %v2941 = vpop.permute.xlu0 %2940
    %2942 = vrot.lane.b32.xlu0 %v2852, 108
    %v2943 = vpop.permute.xlu0 %2942
    %2944 = vrot.lane.b32.xlu0 %v2853, 108
    %v2945 = vpop.permute.xlu0 %2944
    %2946 = vrot.lane.b32.xlu0 %v2854, 108
    %v2947 = vpop.permute.xlu0 %2946
    %2948 = vrot.lane.b32.xlu0 %v2855, 108
    %v2949 = vpop.permute.xlu0 %2948
    %2950 = vrot.lane.b32.xlu0 %v2856, 108
    %v2951 = vpop.permute.xlu0 %2950
    %2952 = vrot.lane.b32.xlu0 %v2857, 108
    %v2953 = vpop.permute.xlu0 %2952
    %2954 = vrot.lane.b32.xlu0 %v2858, 108
    %v2955 = vpop.permute.xlu0 %2954
    %2956 = vrot.lane.b32.xlu0 %v2859, 108
    %v2957 = vpop.permute.xlu0 %2956
    %2958 = vrot.lane.b32.xlu0 %v2860, 108
    %v2959 = vpop.permute.xlu0 %2958
    %2960 = vrot.lane.b32.xlu0 %v2861, 108
    %v2961 = vpop.permute.xlu0 %2960
    %2962 = vrot.lane.b32.xlu0 %v2862, 108
    %v2963 = vpop.permute.xlu0 %2962
    %2964 = vrot.lane.b32.xlu0 %v2863, 108
    %v2965 = vpop.permute.xlu0 %2964
    %2966 = vrot.lane.b32.xlu0 %v2864, 108
    %v2967 = vpop.permute.xlu0 %2966
    %2968 = vrot.lane.b32.xlu0 %v2865, 108
    %v2969 = vpop.permute.xlu0 %2968
    %2970 = vrot.lane.b32.xlu0 %v2866, 108
    %v2971 = vpop.permute.xlu0 %2970
    %vm2972 = vcmask 883712
    %v2973 = vsel %vm2972, %v2903, %v2905
    %v2974 = vsel %vm2972, %v2905, %v2907
    %v2975 = vsel %vm2972, %v2907, %v2909
    %v2976 = vsel %vm2972, %v2909, %v2911
    %v2977 = vsel %vm2972, %v2913, %v2915
    %v2978 = vsel %vm2972, %v2915, %v2917
    %v2979 = vsel %vm2972, %v2917, %v2919
    %v2980 = vsel %vm2972, %v2919, %v2921
    %v2981 = vsel %vm2972, %v2923, %v2925
    %v2982 = vsel %vm2972, %v2925, %v2927
    %v2983 = vsel %vm2972, %v2927, %v2929
    %v2984 = vsel %vm2972, %v2929, %v2931
    %v2985 = vsel %vm2972, %v2933, %v2935
    %v2986 = vsel %vm2972, %v2935, %v2937
    %v2987 = vsel %vm2972, %v2937, %v2939
    %v2988 = vsel %vm2972, %v2939, %v2941
    %v2989 = vsel %vm2972, %v2943, %v2945
    %v2990 = vsel %vm2972, %v2945, %v2947
    %v2991 = vsel %vm2972, %v2947, %v2949
    %v2992 = vsel %vm2972, %v2949, %v2951
    %v2993 = vsel %vm2972, %v2953, %v2955
    %v2994 = vsel %vm2972, %v2955, %v2957
    %v2995 = vsel %vm2972, %v2957, %v2959
    %v2996 = vsel %vm2972, %v2959, %v2961
    %v2997 = vsel %vm2972, %v2963, %v2965
    %v2998 = vsel %vm2972, %v2965, %v2967
    %v2999 = vsel %vm2972, %v2967, %v2969
    %v3000 = vsel %vm2972, %v2969, %v2971
    %vm3022 = vcmask 949248
    %v3025 = vsel %vm3022, %v2976, 0
    %v3028 = vsel %vm3022, %v2980, 0
    %v3031 = vsel %vm3022, %v2984, 0
    %v3034 = vsel %vm3022, %v2988, 0
    %v3037 = vsel %vm3022, %v2992, 0
    %v3040 = vsel %vm3022, %v2996, 0
    %v3043 = vsel %vm3022, %v3000, 0
    %v3045 = vmax.bf16 %v2832, %v2973
    %v3046 = vmax.bf16 %v2833, %v2974
    %v3047 = vmax.bf16 %v2834, %v2975
    %v3048 = vmax.bf16 %v2835, %v3025
    %v3049 = vmax.bf16 %v2836, 0
    %v3050 = vmax.bf16 %v2837, %v2977
    %v3051 = vmax.bf16 %v2838, %v2978
    %v3052 = vmax.bf16 %v2839, %v2979
    %v3053 = vmax.bf16 %v2840, %v3028
    %v3054 = vmax.bf16 %v2841, 0
    %v3055 = vmax.bf16 %v2842, %v2981
    %v3056 = vmax.bf16 %v2843, %v2982
    %v3057 = vmax.bf16 %v2844, %v2983
    %v3058 = vmax.bf16 %v2845, %v3031
    %v3059 = vmax.bf16 %v2846, 0
    %v3060 = vmax.bf16 %v2847, %v2985
    %v3061 = vmax.bf16 %v2848, %v2986
    %v3062 = vmax.bf16 %v2849, %v2987
    %v3063 = vmax.bf16 %v2850, %v3034
    %v3064 = vmax.bf16 %v2851, 0
    %v3065 = vmax.bf16 %v2852, %v2989
    %v3066 = vmax.bf16 %v2853, %v2990
    %v3067 = vmax.bf16 %v2854, %v2991
    %v3068 = vmax.bf16 %v2855, %v3037
    %v3069 = vmax.bf16 %v2856, 0
    %v3070 = vmax.bf16 %v2857, %v2993
    %v3071 = vmax.bf16 %v2858, %v2994
    %v3072 = vmax.bf16 %v2859, %v2995
    %v3073 = vmax.bf16 %v2860, %v3040
    %v3074 = vmax.bf16 %v2861, 0
    %v3075 = vmax.bf16 %v2862, %v2997
    %v3076 = vmax.bf16 %v2863, %v2998
    %v3077 = vmax.bf16 %v2864, %v2999
    %v3078 = vmax.bf16 %v2865, %v3043
    %v3079 = vmax.bf16 %v2866, 0
    %v3080 = vld [vmem:[%s3] sm:$0xff]
    %v3081 = vld [vmem:[%s3 + $0x8] sm:$0xf]
    %v3082 = vld [vmem:[%s3 + $0xc] sm:$0xff]
    %v3083 = vld [vmem:[%s3 + $0x14] sm:$0xf]
    %v3084 = vld [vmem:[%s3 + $0x18] sm:$0xff]
    %v3085 = vld [vmem:[%s3 + $0x20] sm:$0xf]
    %v3086 = vld [vmem:[%s3 + $0x24] sm:$0xff]
    %v3087 = vld [vmem:[%s3 + $0x2c] sm:$0xf]
    %v3088 = vld [vmem:[%s3 + $0x30] sm:$0xff]
    %v3089 = vld [vmem:[%s3 + $0x38] sm:$0xf]
    %v3090 = vld [vmem:[%s3 + $0x3c] sm:$0xff]
    %v3091 = vld [vmem:[%s3 + $0x44] sm:$0xf]
    %v3092 = vld [vmem:[%s3 + $0x48] sm:$0xff]
    %v3093 = vld [vmem:[%s3 + $0x50] sm:$0xf]
    %v3094 = vld [vmem:[%s3 + $0x54] sm:$0xff]
    %v3095 = vld [vmem:[%s3 + $0x5c] sm:$0xf]
    %v3096 = vld [vmem:[%s3 + $0x60] sm:$0xff]
    %v3097 = vld [vmem:[%s3 + $0x68] sm:$0xf]
    %v3098 = vld [vmem:[%s3 + $0x6c] sm:$0xff]
    %v3099 = vld [vmem:[%s3 + $0x74] sm:$0xf]
    %v3100 = vld [vmem:[%s3 + $0x78] sm:$0xff]
    %v3101 = vld [vmem:[%s3 + $0x80] sm:$0xf]
    %v3102 = vld [vmem:[%s3 + $0x84] sm:$0xff]
    %v3103 = vld [vmem:[%s3 + $0x8c] sm:$0xf]
    %v3104 = vld [vmem:[%s3 + $0x90] sm:$0xff]
    %v3105 = vld [vmem:[%s3 + $0x98] sm:$0xf]
    %v3106 = vld [vmem:[%s3 + $0x9c] sm:$0xff]
    %v3107 = vld [vmem:[%s3 + $0xa4] sm:$0xf]
    %v3108 = vld [vmem:[%s3 + $0xa8] sm:$0xff]
    %v3109 = vld [vmem:[%s3 + $0xb0] sm:$0xf]
    %v3110 = vld [vmem:[%s3 + $0xb4] sm:$0xff]
    %v3111 = vld [vmem:[%s3 + $0xbc] sm:$0xf]
    %v3112 = vld [vmem:[%s3 + $0xc0] sm:$0xff]
    %v3113 = vld [vmem:[%s3 + $0xc8] sm:$0xf]
    %v3114 = vld [vmem:[%s3 + $0xcc] sm:$0xff]
    %v3115 = vld [vmem:[%s3 + $0xd4] sm:$0xf]
    %v3116 = vld [vmem:[%s3 + $0xd8] sm:$0xff]
    %v3117 = vld [vmem:[%s3 + $0xe0] sm:$0xf]
    %v3118 = vld [vmem:[%s3 + $0xe4] sm:$0xff]
    %v3119 = vld [vmem:[%s3 + $0xec] sm:$0xf]
    %v3120 = vld [vmem:[%s3 + $0xf0] sm:$0xff]
    %v3121 = vld [vmem:[%s3 + $0xf8] sm:$0xf]
    %v3122 = vld [vmem:[%s3 + $0xfc] sm:$0xff]
    %v3123 = vld [vmem:[%s3 + $0x104] sm:$0xf]
    %v3124 = vld [vmem:[%s3 + $0x108] sm:$0xff]
    %v3125 = vld [vmem:[%s3 + $0x110] sm:$0xf]
    %v3126 = vld [vmem:[%s3 + $0x114] sm:$0xff]
    %v3127 = vld [vmem:[%s3 + $0x11c] sm:$0xf]
    %v3128 = vld [vmem:[%s3 + $0x120] sm:$0xff]
    %v3129 = vld [vmem:[%s3 + $0x128] sm:$0xf]
    %v3130 = vld [vmem:[%s3 + $0x12c] sm:$0xff]
    %v3131 = vld [vmem:[%s3 + $0x134] sm:$0xf]
    %v3132 = vld [vmem:[%s3 + $0x138] sm:$0xff]
    %v3133 = vld [vmem:[%s3 + $0x140] sm:$0xf]
    %v3134 = vld [vmem:[%s3 + $0x144] sm:$0xff]
    %v3135 = vld [vmem:[%s3 + $0x14c] sm:$0xf]
    %v3136 = vld [vmem:[%s3 + $0x150] sm:$0xff]
    %v3137 = vld [vmem:[%s3 + $0x158] sm:$0xf]
    %v3138 = vld [vmem:[%s3 + $0x15c] sm:$0xff]
    %v3139 = vld [vmem:[%s3 + $0x164] sm:$0xf]
    %v3140 = vld [vmem:[%s3 + $0x168] sm:$0xff]
    %v3141 = vld [vmem:[%s3 + $0x170] sm:$0xf]
    %v3142 = vld [vmem:[%s3 + $0x174] sm:$0xff]
    %v3143 = vld [vmem:[%s3 + $0x17c] sm:$0xf]
    %v3144 = vld [vmem:[%s3 + $0x180] sm:$0xff]
    %v3145 = vld [vmem:[%s3 + $0x188] sm:$0xf]
    %v3146 = vld [vmem:[%s3 + $0x18c] sm:$0xff]
    %v3147 = vld [vmem:[%s3 + $0x194] sm:$0xf]
    %v3148 = vld [vmem:[%s3 + $0x198] sm:$0xff]
    %v3149 = vld [vmem:[%s3 + $0x1a0] sm:$0xf]
    %v3150 = vld [vmem:[%s3 + $0x1a4] sm:$0xff]
    %v3151 = vld [vmem:[%s3 + $0x1ac] sm:$0xf]
    %v3152 = vld [vmem:[%s3 + $0x1b0] sm:$0xff]
    %v3153 = vld [vmem:[%s3 + $0x1b8] sm:$0xf]
    %v3154 = vld [vmem:[%s3 + $0x1bc] sm:$0xff]
    %v3155 = vld [vmem:[%s3 + $0x1c4] sm:$0xf]
    %v3156 = vld [vmem:[%s3 + $0x1c8] sm:$0xff]
    %v3157 = vld [vmem:[%s3 + $0x1d0] sm:$0xf]
    %v3158 = vld [vmem:[%s3 + $0x1d4] sm:$0xff]
    %v3159 = vld [vmem:[%s3 + $0x1dc] sm:$0xf]
    %v3160 = vld [vmem:[%s3 + $0x1e0] sm:$0xff]
    %v3161 = vld [vmem:[%s3 + $0x1e8] sm:$0xf]
    %v3162 = vld [vmem:[%s3 + $0x1ec] sm:$0xff]
    %v3163 = vld [vmem:[%s3 + $0x1f4] sm:$0xf]
    %v3164 = vld [vmem:[%s3 + $0x1f8] sm:$0xff]
    %v3165 = vld [vmem:[%s3 + $0x200] sm:$0xf]
    %v3166 = vld [vmem:[%s3 + $0x204] sm:$0xff]
    %v3167 = vld [vmem:[%s3 + $0x20c] sm:$0xf]
    %v3168 = vld [vmem:[%s3 + $0x210] sm:$0xff]
    %v3169 = vld [vmem:[%s3 + $0x218] sm:$0xf]
    %v3170 = vld [vmem:[%s3 + $0x21c] sm:$0xff]
    %v3171 = vld [vmem:[%s3 + $0x224] sm:$0xf]
    %v3172 = vld [vmem:[%s3 + $0x228] sm:$0xff]
    %v3173 = vld [vmem:[%s3 + $0x230] sm:$0xf]
    %v3174 = vld [vmem:[%s3 + $0x234] sm:$0xff]
    %v3175 = vld [vmem:[%s3 + $0x23c] sm:$0xf]
    %v3176 = vld [vmem:[%s3 + $0x240] sm:$0xff]
    %v3177 = vld [vmem:[%s3 + $0x248] sm:$0xf]
    %v3178 = vld [vmem:[%s3 + $0x24c] sm:$0xff]
    %v3179 = vld [vmem:[%s3 + $0x254] sm:$0xf]
    %v3180 = vld [vmem:[%s3 + $0x258] sm:$0xff]
    %v3181 = vld [vmem:[%s3 + $0x260] sm:$0xf]
    %v3182 = vld [vmem:[%s3 + $0x264] sm:$0xff]
    %v3183 = vld [vmem:[%s3 + $0x26c] sm:$0xf]
    %v3184 = vld [vmem:[%s3 + $0x270] sm:$0xff]
    %v3185 = vld [vmem:[%s3 + $0x278] sm:$0xf]
    %v3186 = vld [vmem:[%s3 + $0x27c] sm:$0xff]
    %v3187 = vld [vmem:[%s3 + $0x284] sm:$0xf]
    %v3188 = vld [vmem:[%s3 + $0x288] sm:$0xff]
    %v3189 = vld [vmem:[%s3 + $0x290] sm:$0xf]
    %v3190 = vld [vmem:[%s3 + $0x294] sm:$0xff]
    %v3191 = vld [vmem:[%s3 + $0x29c] sm:$0xf]
    %v3192 = vld [vmem:[%s3 + $0x2a0] sm:$0xff]
    %v3193 = vld [vmem:[%s3 + $0x2a8] sm:$0xf]
    %v3194 = vld [vmem:[%s3 + $0x2ac] sm:$0xff]
    %v3195 = vld [vmem:[%s3 + $0x2b4] sm:$0xf]
    %v3196 = vld [vmem:[%s3 + $0x2b8] sm:$0xff]
    %v3197 = vld [vmem:[%s3 + $0x2c0] sm:$0xf]
    %v3198 = vld [vmem:[%s3 + $0x2c4] sm:$0xff]
    %v3199 = vld [vmem:[%s3 + $0x2cc] sm:$0xf]
    %v3200 = vld [vmem:[%s3 + $0x2d0] sm:$0xff]
    %v3201 = vld [vmem:[%s3 + $0x2d8] sm:$0xf]
    %v3202 = vld [vmem:[%s3 + $0x2dc] sm:$0xff]
    %v3203 = vld [vmem:[%s3 + $0x2e4] sm:$0xf]
    %v3204 = vld [vmem:[%s3 + $0x2e8] sm:$0xff]
    %v3205 = vld [vmem:[%s3 + $0x2f0] sm:$0xf]
    %v3206 = vld [vmem:[%s3 + $0x2f4] sm:$0xff]
    %v3207 = vld [vmem:[%s3 + $0x2fc] sm:$0xf]
    %v3208 = vld [vmem:[%s3 + $0x300] sm:$0xff]
    %v3209 = vld [vmem:[%s3 + $0x308] sm:$0xf]
    %v3340 = vunpack.c.l.b16 %v3080
    %v3341 = vunpack.c.h.b16 %v3080
    %v3342 = vunpack.c.l.b16 %v3081
    %v3343 = vunpack.c.l.b16 %v3082
    %v3344 = vunpack.c.h.b16 %v3082
    %v3345 = vunpack.c.l.b16 %v3083
    %v3346 = vunpack.c.l.b16 %v3084
    %v3347 = vunpack.c.h.b16 %v3084
    %v3348 = vunpack.c.l.b16 %v3085
    %v3349 = vunpack.c.l.b16 %v3086
    %v3350 = vunpack.c.h.b16 %v3086
    %v3351 = vunpack.c.l.b16 %v3087
    %v3352 = vunpack.c.l.b16 %v3088
    %v3353 = vunpack.c.h.b16 %v3088
    %v3354 = vunpack.c.l.b16 %v3089
    %v3355 = vunpack.c.l.b16 %v3090
    %v3356 = vunpack.c.h.b16 %v3090
    %v3357 = vunpack.c.l.b16 %v3091
    %v3358 = vunpack.c.l.b16 %v3092
    %v3359 = vunpack.c.h.b16 %v3092
    %v3360 = vunpack.c.l.b16 %v3093
    %v3361 = vunpack.c.l.b16 %v3094
    %v3362 = vunpack.c.h.b16 %v3094
    %v3363 = vunpack.c.l.b16 %v3095
    %v3364 = vunpack.c.l.b16 %v3096
    %v3365 = vunpack.c.h.b16 %v3096
    %v3366 = vunpack.c.l.b16 %v3097
    %v3367 = vunpack.c.l.b16 %v3098
    %v3368 = vunpack.c.h.b16 %v3098
    %v3369 = vunpack.c.l.b16 %v3099
    %v3370 = vunpack.c.l.b16 %v3100
    %v3371 = vunpack.c.h.b16 %v3100
    %v3372 = vunpack.c.l.b16 %v3101
    %v3373 = vunpack.c.l.b16 %v3102
    %v3374 = vunpack.c.h.b16 %v3102
    %v3375 = vunpack.c.l.b16 %v3103
    %v3376 = vunpack.c.l.b16 %v3104
    %v3377 = vunpack.c.h.b16 %v3104
    %v3378 = vunpack.c.l.b16 %v3105
    %v3379 = vunpack.c.l.b16 %v3106
    %v3380 = vunpack.c.h.b16 %v3106
    %v3381 = vunpack.c.l.b16 %v3107
    %v3382 = vunpack.c.l.b16 %v3108
    %v3383 = vunpack.c.h.b16 %v3108
    %v3384 = vunpack.c.l.b16 %v3109
    %v3385 = vunpack.c.l.b16 %v3110
    %v3386 = vunpack.c.h.b16 %v3110
    %v3387 = vunpack.c.l.b16 %v3111
    %v3388 = vunpack.c.l.b16 %v3112
    %v3389 = vunpack.c.h.b16 %v3112
    %v3390 = vunpack.c.l.b16 %v3113
    %v3391 = vunpack.c.l.b16 %v3114
    %v3392 = vunpack.c.h.b16 %v3114
    %v3393 = vunpack.c.l.b16 %v3115
    %v3394 = vunpack.c.l.b16 %v3116
    %v3395 = vunpack.c.h.b16 %v3116
    %v3396 = vunpack.c.l.b16 %v3117
    %v3397 = vunpack.c.l.b16 %v3118
    %v3398 = vunpack.c.h.b16 %v3118
    %v3399 = vunpack.c.l.b16 %v3119
    %v3400 = vunpack.c.l.b16 %v3120
    %v3401 = vunpack.c.h.b16 %v3120
    %v3402 = vunpack.c.l.b16 %v3121
    %v3403 = vunpack.c.l.b16 %v3122
    %v3404 = vunpack.c.h.b16 %v3122
    %v3405 = vunpack.c.l.b16 %v3123
    %v3406 = vunpack.c.l.b16 %v3124
    %v3407 = vunpack.c.h.b16 %v3124
    %v3408 = vunpack.c.l.b16 %v3125
    %v3409 = vunpack.c.l.b16 %v3126
    %v3410 = vunpack.c.h.b16 %v3126
    %v3411 = vunpack.c.l.b16 %v3127
    %v3412 = vunpack.c.l.b16 %v3128
    %v3413 = vunpack.c.h.b16 %v3128
    %v3414 = vunpack.c.l.b16 %v3129
    %v3415 = vunpack.c.l.b16 %v3130
    %v3416 = vunpack.c.h.b16 %v3130
    %v3417 = vunpack.c.l.b16 %v3131
    %v3418 = vunpack.c.l.b16 %v3132
    %v3419 = vunpack.c.h.b16 %v3132
    %v3420 = vunpack.c.l.b16 %v3133
    %v3421 = vunpack.c.l.b16 %v3134
    %v3422 = vunpack.c.h.b16 %v3134
    %v3423 = vunpack.c.l.b16 %v3135
    %v3424 = vunpack.c.l.b16 %v3136
    %v3425 = vunpack.c.h.b16 %v3136
    %v3426 = vunpack.c.l.b16 %v3137
    %v3427 = vunpack.c.l.b16 %v3138
    %v3428 = vunpack.c.h.b16 %v3138
    %v3429 = vunpack.c.l.b16 %v3139
    %v3430 = vunpack.c.l.b16 %v3140
    %v3431 = vunpack.c.h.b16 %v3140
    %v3432 = vunpack.c.l.b16 %v3141
    %v3433 = vunpack.c.l.b16 %v3142
    %v3434 = vunpack.c.h.b16 %v3142
    %v3435 = vunpack.c.l.b16 %v3143
    %v3436 = vunpack.c.l.b16 %v3144
    %v3437 = vunpack.c.h.b16 %v3144
    %v3438 = vunpack.c.l.b16 %v3145
    %v3439 = vunpack.c.l.b16 %v3146
    %v3440 = vunpack.c.h.b16 %v3146
    %v3441 = vunpack.c.l.b16 %v3147
    %v3442 = vunpack.c.l.b16 %v3148
    %v3443 = vunpack.c.h.b16 %v3148
    %v3444 = vunpack.c.l.b16 %v3149
    %v3445 = vunpack.c.l.b16 %v3150
    %v3446 = vunpack.c.h.b16 %v3150
    %v3447 = vunpack.c.l.b16 %v3151
    %v3448 = vunpack.c.l.b16 %v3152
    %v3449 = vunpack.c.h.b16 %v3152
    %v3450 = vunpack.c.l.b16 %v3153
    %v3451 = vunpack.c.l.b16 %v3154
    %v3452 = vunpack.c.h.b16 %v3154
    %v3453 = vunpack.c.l.b16 %v3155
    %v3454 = vunpack.c.l.b16 %v3156
    %v3455 = vunpack.c.h.b16 %v3156
    %v3456 = vunpack.c.l.b16 %v3157
    %v3457 = vunpack.c.l.b16 %v3158
    %v3458 = vunpack.c.h.b16 %v3158
    %v3459 = vunpack.c.l.b16 %v3159
    %v3460 = vunpack.c.l.b16 %v3160
    %v3461 = vunpack.c.h.b16 %v3160
    %v3462 = vunpack.c.l.b16 %v3161
    %v3463 = vunpack.c.l.b16 %v3162
    %v3464 = vunpack.c.h.b16 %v3162
    %v3465 = vunpack.c.l.b16 %v3163
    %v3466 = vunpack.c.l.b16 %v3164
    %v3467 = vunpack.c.h.b16 %v3164
    %v3468 = vunpack.c.l.b16 %v3165
    %v3469 = vunpack.c.l.b16 %v3166
    %v3470 = vunpack.c.h.b16 %v3166
    %v3471 = vunpack.c.l.b16 %v3167
    %v3472 = vunpack.c.l.b16 %v3168
    %v3473 = vunpack.c.h.b16 %v3168
    %v3474 = vunpack.c.l.b16 %v3169
    %v3475 = vunpack.c.l.b16 %v3170
    %v3476 = vunpack.c.h.b16 %v3170
    %v3477 = vunpack.c.l.b16 %v3171
    %v3478 = vunpack.c.l.b16 %v3172
    %v3479 = vunpack.c.h.b16 %v3172
    %v3480 = vunpack.c.l.b16 %v3173
    %v3481 = vunpack.c.l.b16 %v3174
    %v3482 = vunpack.c.h.b16 %v3174
    %v3483 = vunpack.c.l.b16 %v3175
    %v3484 = vunpack.c.l.b16 %v3176
    %v3485 = vunpack.c.h.b16 %v3176
    %v3486 = vunpack.c.l.b16 %v3177
    %v3487 = vunpack.c.l.b16 %v3178
    %v3488 = vunpack.c.h.b16 %v3178
    %v3489 = vunpack.c.l.b16 %v3179
    %v3490 = vunpack.c.l.b16 %v3180
    %v3491 = vunpack.c.h.b16 %v3180
    %v3492 = vunpack.c.l.b16 %v3181
    %v3493 = vunpack.c.l.b16 %v3182
    %v3494 = vunpack.c.h.b16 %v3182
    %v3495 = vunpack.c.l.b16 %v3183
    %v3496 = vunpack.c.l.b16 %v3184
    %v3497 = vunpack.c.h.b16 %v3184
    %v3498 = vunpack.c.l.b16 %v3185
    %v3499 = vunpack.c.l.b16 %v3186
    %v3500 = vunpack.c.h.b16 %v3186
    %v3501 = vunpack.c.l.b16 %v3187
    %v3502 = vunpack.c.l.b16 %v3188
    %v3503 = vunpack.c.h.b16 %v3188
    %v3504 = vunpack.c.l.b16 %v3189
    %v3505 = vunpack.c.l.b16 %v3190
    %v3506 = vunpack.c.h.b16 %v3190
    %v3507 = vunpack.c.l.b16 %v3191
    %v3508 = vunpack.c.l.b16 %v3192
    %v3509 = vunpack.c.h.b16 %v3192
    %v3510 = vunpack.c.l.b16 %v3193
    %v3511 = vunpack.c.l.b16 %v3194
    %v3512 = vunpack.c.h.b16 %v3194
    %v3513 = vunpack.c.l.b16 %v3195
    %v3514 = vunpack.c.l.b16 %v3196
    %v3515 = vunpack.c.h.b16 %v3196
    %v3516 = vunpack.c.l.b16 %v3197
    %v3517 = vunpack.c.l.b16 %v3198
    %v3518 = vunpack.c.h.b16 %v3198
    %v3519 = vunpack.c.l.b16 %v3199
    %v3520 = vunpack.c.l.b16 %v3200
    %v3521 = vunpack.c.h.b16 %v3200
    %v3522 = vunpack.c.l.b16 %v3201
    %v3523 = vunpack.c.l.b16 %v3202
    %v3524 = vunpack.c.h.b16 %v3202
    %v3525 = vunpack.c.l.b16 %v3203
    %v3526 = vunpack.c.l.b16 %v3204
    %v3527 = vunpack.c.h.b16 %v3204
    %v3528 = vunpack.c.l.b16 %v3205
    %v3529 = vunpack.c.l.b16 %v3206
    %v3530 = vunpack.c.h.b16 %v3206
    %v3531 = vunpack.c.l.b16 %v3207
    %v3532 = vunpack.c.l.b16 %v3208
    %v3533 = vunpack.c.h.b16 %v3208
    %v3534 = vunpack.c.l.b16 %v3209
    %v3535 = vpack.c.b16 %v3343, %v3340
    %v3536 = vpack.c.b16 %v3344, %v3341
    %v3537 = vpack.c.b16 %v3345, %v3342
    %v3538 = vpack.c.b16 %v3349, %v3346
    %v3539 = vpack.c.b16 %v3350, %v3347
    %v3540 = vpack.c.b16 %v3351, %v3348
    %v3541 = vpack.c.b16 %v3355, %v3352
    %v3542 = vpack.c.b16 %v3356, %v3353
    %v3543 = vpack.c.b16 %v3357, %v3354
    %v3544 = vpack.c.b16 %v3361, %v3358
    %v3545 = vpack.c.b16 %v3362, %v3359
    %v3546 = vpack.c.b16 %v3363, %v3360
    %v3547 = vpack.c.b16 %v3367, %v3364
    %v3548 = vpack.c.b16 %v3368, %v3365
    %v3549 = vpack.c.b16 %v3369, %v3366
    %v3550 = vpack.c.b16 %v3373, %v3370
    %v3551 = vpack.c.b16 %v3374, %v3371
    %v3552 = vpack.c.b16 %v3375, %v3372
    %v3553 = vpack.c.b16 %v3379, %v3376
    %v3554 = vpack.c.b16 %v3380, %v3377
    %v3555 = vpack.c.b16 %v3381, %v3378
    %v3556 = vpack.c.b16 %v3385, %v3382
    %v3557 = vpack.c.b16 %v3386, %v3383
    %v3558 = vpack.c.b16 %v3387, %v3384
    %v3559 = vpack.c.b16 %v3391, %v3388
    %v3560 = vpack.c.b16 %v3392, %v3389
    %v3561 = vpack.c.b16 %v3393, %v3390
    %v3562 = vpack.c.b16 %v3397, %v3394
    %v3563 = vpack.c.b16 %v3398, %v3395
    %v3564 = vpack.c.b16 %v3399, %v3396
    %v3565 = vpack.c.b16 %v3403, %v3400
    %v3566 = vpack.c.b16 %v3404, %v3401
    %v3567 = vpack.c.b16 %v3405, %v3402
    %v3568 = vpack.c.b16 %v3409, %v3406
    %v3569 = vpack.c.b16 %v3410, %v3407
    %v3570 = vpack.c.b16 %v3411, %v3408
    %v3571 = vpack.c.b16 %v3415, %v3412
    %v3572 = vpack.c.b16 %v3416, %v3413
    %v3573 = vpack.c.b16 %v3417, %v3414
    %v3574 = vpack.c.b16 %v3421, %v3418
    %v3575 = vpack.c.b16 %v3422, %v3419
    %v3576 = vpack.c.b16 %v3423, %v3420
    %v3577 = vpack.c.b16 %v3427, %v3424
    %v3578 = vpack.c.b16 %v3428, %v3425
    %v3579 = vpack.c.b16 %v3429, %v3426
    %v3580 = vpack.c.b16 %v3433, %v3430
    %v3581 = vpack.c.b16 %v3434, %v3431
    %v3582 = vpack.c.b16 %v3435, %v3432
    %v3583 = vpack.c.b16 %v3439, %v3436
    %v3584 = vpack.c.b16 %v3440, %v3437
    %v3585 = vpack.c.b16 %v3441, %v3438
    %v3586 = vpack.c.b16 %v3445, %v3442
    %v3587 = vpack.c.b16 %v3446, %v3443
    %v3588 = vpack.c.b16 %v3447, %v3444
    %v3589 = vpack.c.b16 %v3451, %v3448
    %v3590 = vpack.c.b16 %v3452, %v3449
    %v3591 = vpack.c.b16 %v3453, %v3450
    %v3592 = vpack.c.b16 %v3457, %v3454
    %v3593 = vpack.c.b16 %v3458, %v3455
    %v3594 = vpack.c.b16 %v3459, %v3456
    %v3595 = vpack.c.b16 %v3463, %v3460
    %v3596 = vpack.c.b16 %v3464, %v3461
    %v3597 = vpack.c.b16 %v3465, %v3462
    %v3598 = vpack.c.b16 %v3469, %v3466
    %v3599 = vpack.c.b16 %v3470, %v3467
    %v3600 = vpack.c.b16 %v3471, %v3468
    %v3601 = vpack.c.b16 %v3475, %v3472
    %v3602 = vpack.c.b16 %v3476, %v3473
    %v3603 = vpack.c.b16 %v3477, %v3474
    %v3604 = vpack.c.b16 %v3481, %v3478
    %v3605 = vpack.c.b16 %v3482, %v3479
    %v3606 = vpack.c.b16 %v3483, %v3480
    %v3607 = vpack.c.b16 %v3487, %v3484
    %v3608 = vpack.c.b16 %v3488, %v3485
    %v3609 = vpack.c.b16 %v3489, %v3486
    %v3610 = vpack.c.b16 %v3493, %v3490
    %v3611 = vpack.c.b16 %v3494, %v3491
    %v3612 = vpack.c.b16 %v3495, %v3492
    %v3613 = vpack.c.b16 %v3499, %v3496
    %v3614 = vpack.c.b16 %v3500, %v3497
    %v3615 = vpack.c.b16 %v3501, %v3498
    %v3616 = vpack.c.b16 %v3505, %v3502
    %v3617 = vpack.c.b16 %v3506, %v3503
    %v3618 = vpack.c.b16 %v3507, %v3504
    %v3619 = vpack.c.b16 %v3511, %v3508
    %v3620 = vpack.c.b16 %v3512, %v3509
    %v3621 = vpack.c.b16 %v3513, %v3510
    %v3622 = vpack.c.b16 %v3517, %v3514
    %v3623 = vpack.c.b16 %v3518, %v3515
    %v3624 = vpack.c.b16 %v3519, %v3516
    %v3625 = vpack.c.b16 %v3523, %v3520
    %v3626 = vpack.c.b16 %v3524, %v3521
    %v3627 = vpack.c.b16 %v3525, %v3522
    %v3628 = vpack.c.b16 %v3529, %v3526
    %v3629 = vpack.c.b16 %v3530, %v3527
    %v3630 = vpack.c.b16 %v3531, %v3528
    %v3631 = vpack.c.b16 %v3532, %v3532
    %v3632 = vpack.c.b16 %v3533, %v3533
    %v3633 = vpack.c.b16 %v3534, %v3534
    %vm3730 = vcmask 64512
    %v3732 = vsel %vm3730, %v3049, 0
    %v3735 = vsel %vm3730, %v3054, 0
    %v3738 = vsel %vm3730, %v3059, 0
    %v3741 = vsel %vm3730, %v3064, 0
    %v3744 = vsel %vm3730, %v3069, 0
    %v3747 = vsel %vm3730, %v3074, 0
    %v3750 = vsel %vm3730, %v3079, 0
    %vm3752 = vcmask 1043456
    %v3754 = vsel %vm3752, %v3631, 0
    %v3757 = vsel %vm3752, %v3632, 0
    %v3760 = vsel %vm3752, %v3633, 0
    %3762 = vmatprep.subr.bf16.mxu0 %v3557
    %3763 = vmatpush1.bf16.msra.mxu0 %v3556
    %3764 = vmatprep.subr.bf16.mxu0 %v3554
    %3765 = vmatpush1.bf16.msra.mxu0 %v3553
    %3766 = vmatprep.subr.bf16.mxu0 %v3551
    %3767 = vmatpush1.bf16.msra.mxu0 %v3550
    %3768 = vmatprep.subr.bf16.mxu0 %v3548
    %3769 = vmatpush1.bf16.msra.mxu0 %v3547
    %3770 = vmatprep.subr.bf16.mxu0 %v3545
    %3771 = vmatpush1.bf16.msra.mxu0 %v3544
    %3772 = vmatprep.subr.bf16.mxu0 %v3542
    %3773 = vmatpush1.bf16.msra.mxu0 %v3541
    %3774 = vmatprep.subr.bf16.mxu0 %v3539
    %3775 = vmatpush1.bf16.msra.mxu0 %v3538
    %3776 = vmatprep.subr.bf16.mxu0 %v3536
    %3777 = vmatpush1.bf16.msra.mxu0 %v3535
    %3778 = vmatprep.subr.bf16.mxu0 %v3581
    %3779 = vmatpush2.bf16.msra.mxu0 %v3580
    %3780 = vmatprep.subr.bf16.mxu0 %v3578
    %3781 = vmatpush2.bf16.msra.mxu0 %v3577
    %3782 = vmatprep.subr.bf16.mxu0 %v3575
    %3783 = vmatpush2.bf16.msra.mxu0 %v3574
    %3784 = vmatprep.subr.bf16.mxu0 %v3572
    %3785 = vmatpush2.bf16.msra.mxu0 %v3571
    %3786 = vmatprep.subr.bf16.mxu0 %v3569
    %3787 = vmatpush2.bf16.msra.mxu0 %v3568
    %3788 = vmatprep.subr.bf16.mxu0 %v3566
    %3789 = vmatpush2.bf16.msra.mxu0 %v3565
    %3790 = vmatprep.subr.bf16.mxu0 %v3563
    %3791 = vmatpush2.bf16.msra.mxu0 %v3562
    %3792 = vmatprep.subr.bf16.mxu0 %v3560
    %3793 = vmatpush2.bf16.msra.mxu0 %v3559
    %3794 = vmatprep.mubr.bf16.mxu0 %v3046
    %3795 = vmatmul.mubr.bf16.gmra.mxu0 %v3045
    %v3796 = vpop.f32.mrf.mxu0
    %v3797 = vadd.f32 0.0, %v3796
    %v3798 = vpop.f32.mrf.mxu0
    %v3799 = vadd.f32 0.0, %v3798
    %v3800 = vpop.f32.mrf.mxu0
    %v3801 = vadd.f32 0.0, %v3800
    %v3802 = vpop.f32.mrf.mxu0
    %v3803 = vadd.f32 0.0, %v3802
    %3804 = vmatprep.mubr.bf16.mxu0 %v3051
    %3805 = vmatmul.mubr.bf16.gmra.mxu0 %v3050
    %v3806 = vpop.f32.mrf.mxu0
    %v3807 = vadd.f32 0.0, %v3806
    %v3808 = vpop.f32.mrf.mxu0
    %v3809 = vadd.f32 0.0, %v3808
    %v3810 = vpop.f32.mrf.mxu0
    %v3811 = vadd.f32 0.0, %v3810
    %v3812 = vpop.f32.mrf.mxu0
    %v3813 = vadd.f32 0.0, %v3812
    %3814 = vmatprep.mubr.bf16.mxu0 %v3056
    %3815 = vmatmul.mubr.bf16.gmra.mxu0 %v3055
    %v3816 = vpop.f32.mrf.mxu0
    %v3817 = vadd.f32 0.0, %v3816
    %v3818 = vpop.f32.mrf.mxu0
    %v3819 = vadd.f32 0.0, %v3818
    %v3820 = vpop.f32.mrf.mxu0
    %v3821 = vadd.f32 0.0, %v3820
    %v3822 = vpop.f32.mrf.mxu0
    %v3823 = vadd.f32 0.0, %v3822
    %3824 = vmatprep.mubr.bf16.mxu0 %v3061
    %3825 = vmatmul.mubr.bf16.gmra.mxu0 %v3060
    %v3826 = vpop.f32.mrf.mxu0
    %v3827 = vadd.f32 0.0, %v3826
    %v3828 = vpop.f32.mrf.mxu0
    %v3829 = vadd.f32 0.0, %v3828
    %v3830 = vpop.f32.mrf.mxu0
    %v3831 = vadd.f32 0.0, %v3830
    %v3832 = vpop.f32.mrf.mxu0
    %v3833 = vadd.f32 0.0, %v3832
    %3834 = vmatprep.mubr.bf16.mxu0 %v3066
    %3835 = vmatmul.mubr.bf16.gmra.mxu0 %v3065
    %v3836 = vpop.f32.mrf.mxu0
    %v3837 = vadd.f32 0.0, %v3836
    %v3838 = vpop.f32.mrf.mxu0
    %v3839 = vadd.f32 0.0, %v3838
    %v3840 = vpop.f32.mrf.mxu0
    %v3841 = vadd.f32 0.0, %v3840
    %v3842 = vpop.f32.mrf.mxu0
    %v3843 = vadd.f32 0.0, %v3842
    %3844 = vmatprep.mubr.bf16.mxu0 %v3071
    %3845 = vmatmul.mubr.bf16.gmra.mxu0 %v3070
    %v3846 = vpop.f32.mrf.mxu0
    %v3847 = vadd.f32 0.0, %v3846
    %v3848 = vpop.f32.mrf.mxu0
    %v3849 = vadd.f32 0.0, %v3848
    %v3850 = vpop.f32.mrf.mxu0
    %v3851 = vadd.f32 0.0, %v3850
    %v3852 = vpop.f32.mrf.mxu0
    %v3853 = vadd.f32 0.0, %v3852
    %3854 = vmatprep.mubr.bf16.mxu0 %v3076
    %3855 = vmatmul.mubr.bf16.gmra.mxu0 %v3075
    %v3856 = vpop.f32.mrf.mxu0
    %v3857 = vadd.f32 0.0, %v3856
    %v3858 = vpop.f32.mrf.mxu0
    %v3859 = vadd.f32 0.0, %v3858
    %v3860 = vpop.f32.mrf.mxu0
    %v3861 = vadd.f32 0.0, %v3860
    %v3862 = vpop.f32.mrf.mxu0
    %v3863 = vadd.f32 0.0, %v3862
    %3864 = vdwg.mxu0
    %3865 = vmatprep.subr.bf16.mxu0 %v3605
    %3866 = vmatpush1.bf16.msra.mxu0 %v3604
    %3867 = vmatprep.subr.bf16.mxu0 %v3602
    %3868 = vmatpush1.bf16.msra.mxu0 %v3601
    %3869 = vmatprep.subr.bf16.mxu0 %v3599
    %3870 = vmatpush1.bf16.msra.mxu0 %v3598
    %3871 = vmatprep.subr.bf16.mxu0 %v3596
    %3872 = vmatpush1.bf16.msra.mxu0 %v3595
    %3873 = vmatprep.subr.bf16.mxu0 %v3593
    %3874 = vmatpush1.bf16.msra.mxu0 %v3592
    %3875 = vmatprep.subr.bf16.mxu0 %v3590
    %3876 = vmatpush1.bf16.msra.mxu0 %v3589
    %3877 = vmatprep.subr.bf16.mxu0 %v3587
    %3878 = vmatpush1.bf16.msra.mxu0 %v3586
    %3879 = vmatprep.subr.bf16.mxu0 %v3584
    %3880 = vmatpush1.bf16.msra.mxu0 %v3583
    %3881 = vmatprep.subr.bf16.mxu0 %v3629
    %3882 = vmatpush2.bf16.msra.mxu0 %v3628
    %3883 = vmatprep.subr.bf16.mxu0 %v3626
    %3884 = vmatpush2.bf16.msra.mxu0 %v3625
    %3885 = vmatprep.subr.bf16.mxu0 %v3623
    %3886 = vmatpush2.bf16.msra.mxu0 %v3622
    %3887 = vmatprep.subr.bf16.mxu0 %v3620
    %3888 = vmatpush2.bf16.msra.mxu0 %v3619
    %3889 = vmatprep.subr.bf16.mxu0 %v3617
    %3890 = vmatpush2.bf16.msra.mxu0 %v3616
    %3891 = vmatprep.subr.bf16.mxu0 %v3614
    %3892 = vmatpush2.bf16.msra.mxu0 %v3613
    %3893 = vmatprep.subr.bf16.mxu0 %v3611
    %3894 = vmatpush2.bf16.msra.mxu0 %v3610
    %3895 = vmatprep.subr.bf16.mxu0 %v3608
    %3896 = vmatpush2.bf16.msra.mxu0 %v3607
    %3897 = vmatprep.mubr.bf16.mxu0 %v3048
    %3898 = vmatmul.mubr.bf16.gmra.mxu0 %v3047
    %v3899 = vpop.f32.mrf.mxu0
    %v3900 = vadd.f32 %v3797, %v3899
    %v3901 = vpop.f32.mrf.mxu0
    %v3902 = vadd.f32 %v3799, %v3901
    %v3903 = vpop.f32.mrf.mxu0
    %v3904 = vadd.f32 %v3801, %v3903
    %v3905 = vpop.f32.mrf.mxu0
    %v3906 = vadd.f32 %v3803, %v3905
    %3907 = vmatprep.mubr.bf16.mxu0 %v3053
    %3908 = vmatmul.mubr.bf16.gmra.mxu0 %v3052
    %v3909 = vpop.f32.mrf.mxu0
    %v3910 = vadd.f32 %v3807, %v3909
    %v3911 = vpop.f32.mrf.mxu0
    %v3912 = vadd.f32 %v3809, %v3911
    %v3913 = vpop.f32.mrf.mxu0
    %v3914 = vadd.f32 %v3811, %v3913
    %v3915 = vpop.f32.mrf.mxu0
    %v3916 = vadd.f32 %v3813, %v3915
    %3917 = vmatprep.mubr.bf16.mxu0 %v3058
    %3918 = vmatmul.mubr.bf16.gmra.mxu0 %v3057
    %v3919 = vpop.f32.mrf.mxu0
    %v3920 = vadd.f32 %v3817, %v3919
    %v3921 = vpop.f32.mrf.mxu0
    %v3922 = vadd.f32 %v3819, %v3921
    %v3923 = vpop.f32.mrf.mxu0
    %v3924 = vadd.f32 %v3821, %v3923
    %v3925 = vpop.f32.mrf.mxu0
    %v3926 = vadd.f32 %v3823, %v3925
    %3927 = vmatprep.mubr.bf16.mxu0 %v3063
    %3928 = vmatmul.mubr.bf16.gmra.mxu0 %v3062
    %v3929 = vpop.f32.mrf.mxu0
    %v3930 = vadd.f32 %v3827, %v3929
    %v3931 = vpop.f32.mrf.mxu0
    %v3932 = vadd.f32 %v3829, %v3931
    %v3933 = vpop.f32.mrf.mxu0
    %v3934 = vadd.f32 %v3831, %v3933
    %v3935 = vpop.f32.mrf.mxu0
    %v3936 = vadd.f32 %v3833, %v3935
    %3937 = vmatprep.mubr.bf16.mxu0 %v3068
    %3938 = vmatmul.mubr.bf16.gmra.mxu0 %v3067
    %v3939 = vpop.f32.mrf.mxu0
    %v3940 = vadd.f32 %v3837, %v3939
    %v3941 = vpop.f32.mrf.mxu0
    %v3942 = vadd.f32 %v3839, %v3941
    %v3943 = vpop.f32.mrf.mxu0
    %v3944 = vadd.f32 %v3841, %v3943
    %v3945 = vpop.f32.mrf.mxu0
    %v3946 = vadd.f32 %v3843, %v3945
    %3947 = vmatprep.mubr.bf16.mxu0 %v3073
    %3948 = vmatmul.mubr.bf16.gmra.mxu0 %v3072
    %v3949 = vpop.f32.mrf.mxu0
    %v3950 = vadd.f32 %v3847, %v3949
    %v3951 = vpop.f32.mrf.mxu0
    %v3952 = vadd.f32 %v3849, %v3951
    %v3953 = vpop.f32.mrf.mxu0
    %v3954 = vadd.f32 %v3851, %v3953
    %v3955 = vpop.f32.mrf.mxu0
    %v3956 = vadd.f32 %v3853, %v3955
    %3957 = vmatprep.mubr.bf16.mxu0 %v3078
    %3958 = vmatmul.mubr.bf16.gmra.mxu0 %v3077
    %v3959 = vpop.f32.mrf.mxu0
    %v3960 = vadd.f32 %v3857, %v3959
    %v3961 = vpop.f32.mrf.mxu0
    %v3962 = vadd.f32 %v3859, %v3961
    %v3963 = vpop.f32.mrf.mxu0
    %v3964 = vadd.f32 %v3861, %v3963
    %v3965 = vpop.f32.mrf.mxu0
    %v3966 = vadd.f32 %v3863, %v3965
    %3967 = vdwg.mxu0
    %3968 = vmatprep.subr.bf16.mxu0 0
    %3969 = vmatpush1.bf16.msra.mxu0 0
    %3970 = vmatprep.subr.bf16.mxu0 0
    %3971 = vmatpush1.bf16.msra.mxu0 0
    %3972 = vmatprep.subr.bf16.mxu0 0
    %3973 = vmatpush1.bf16.msra.mxu0 0
    %3974 = vmatprep.subr.bf16.mxu0 0
    %3975 = vmatpush1.bf16.msra.mxu0 0
    %3976 = vmatprep.subr.bf16.mxu0 0
    %3977 = vmatpush1.bf16.msra.mxu0 0
    %3978 = vmatprep.subr.bf16.mxu0 0
    %3979 = vmatpush1.bf16.msra.mxu0 0
    %3980 = vmatprep.subr.bf16.mxu0 0
    %3981 = vmatpush1.bf16.msra.mxu0 0
    %3982 = vmatprep.subr.bf16.mxu0 %v3757
    %3983 = vmatpush1.bf16.msra.mxu0 %v3754
    %3984 = vmatprep.subr.bf16.mxu0 0
    %3985 = vmatpush2.bf16.msra.mxu0 0
    %3986 = vmatprep.subr.bf16.mxu0 0
    %3987 = vmatpush2.bf16.msra.mxu0 0
    %3988 = vmatprep.subr.bf16.mxu0 0
    %3989 = vmatpush2.bf16.msra.mxu0 0
    %3990 = vmatprep.subr.bf16.mxu0 0
    %3991 = vmatpush2.bf16.msra.mxu0 0
    %3992 = vmatprep.subr.bf16.mxu0 0
    %3993 = vmatpush2.bf16.msra.mxu0 0
    %3994 = vmatprep.subr.bf16.mxu0 0
    %3995 = vmatpush2.bf16.msra.mxu0 0
    %3996 = vmatprep.subr.bf16.mxu0 0
    %3997 = vmatpush2.bf16.msra.mxu0 0
    %3998 = vmatprep.subr.bf16.mxu0 0
    %3999 = vmatpush2.bf16.msra.mxu0 0
    %4000 = vmatprep.mubr.bf16.mxu0 0
    %4001 = vmatmul.mubr.bf16.gmra.mxu0 %v3732
    %v4002 = vpop.f32.mrf.mxu0
    %v4003 = vadd.f32 %v3900, %v4002
    %v4004 = vpop.f32.mrf.mxu0
    %v4005 = vadd.f32 %v3902, %v4004
    %v4006 = vpop.f32.mrf.mxu0
    %v4007 = vadd.f32 %v3904, %v4006
    %v4008 = vpop.f32.mrf.mxu0
    %v4009 = vadd.f32 %v3906, %v4008
    %4010 = vmatprep.mubr.bf16.mxu0 0
    %4011 = vmatmul.mubr.bf16.gmra.mxu0 %v3735
    %v4012 = vpop.f32.mrf.mxu0
    %v4013 = vadd.f32 %v3910, %v4012
    %v4014 = vpop.f32.mrf.mxu0
    %v4015 = vadd.f32 %v3912, %v4014
    %v4016 = vpop.f32.mrf.mxu0
    %v4017 = vadd.f32 %v3914, %v4016
    %v4018 = vpop.f32.mrf.mxu0
    %v4019 = vadd.f32 %v3916, %v4018
    %4020 = vmatprep.mubr.bf16.mxu0 0
    %4021 = vmatmul.mubr.bf16.gmra.mxu0 %v3738
    %v4022 = vpop.f32.mrf.mxu0
    %v4023 = vadd.f32 %v3920, %v4022
    %v4024 = vpop.f32.mrf.mxu0
    %v4025 = vadd.f32 %v3922, %v4024
    %v4026 = vpop.f32.mrf.mxu0
    %v4027 = vadd.f32 %v3924, %v4026
    %v4028 = vpop.f32.mrf.mxu0
    %v4029 = vadd.f32 %v3926, %v4028
    %4030 = vmatprep.mubr.bf16.mxu0 0
    %4031 = vmatmul.mubr.bf16.gmra.mxu0 %v3741
    %v4032 = vpop.f32.mrf.mxu0
    %v4033 = vadd.f32 %v3930, %v4032
    %v4034 = vpop.f32.mrf.mxu0
    %v4035 = vadd.f32 %v3932, %v4034
    %v4036 = vpop.f32.mrf.mxu0
    %v4037 = vadd.f32 %v3934, %v4036
    %v4038 = vpop.f32.mrf.mxu0
    %v4039 = vadd.f32 %v3936, %v4038
    %4040 = vmatprep.mubr.bf16.mxu0 0
    %4041 = vmatmul.mubr.bf16.gmra.mxu0 %v3744
    %v4042 = vpop.f32.mrf.mxu0
    %v4043 = vadd.f32 %v3940, %v4042
    %v4044 = vpop.f32.mrf.mxu0
    %v4045 = vadd.f32 %v3942, %v4044
    %v4046 = vpop.f32.mrf.mxu0
    %v4047 = vadd.f32 %v3944, %v4046
    %v4048 = vpop.f32.mrf.mxu0
    %v4049 = vadd.f32 %v3946, %v4048
    %4050 = vmatprep.mubr.bf16.mxu0 0
    %4051 = vmatmul.mubr.bf16.gmra.mxu0 %v3747
    %v4052 = vpop.f32.mrf.mxu0
    %v4053 = vadd.f32 %v3950, %v4052
    %v4054 = vpop.f32.mrf.mxu0
    %v4055 = vadd.f32 %v3952, %v4054
    %v4056 = vpop.f32.mrf.mxu0
    %v4057 = vadd.f32 %v3954, %v4056
    %v4058 = vpop.f32.mrf.mxu0
    %v4059 = vadd.f32 %v3956, %v4058
    %4060 = vmatprep.mubr.bf16.mxu0 0
    %4061 = vmatmul.mubr.bf16.gmra.mxu0 %v3750
    %v4062 = vpop.f32.mrf.mxu0
    %v4063 = vadd.f32 %v3960, %v4062
    %v4064 = vpop.f32.mrf.mxu0
    %v4065 = vadd.f32 %v3962, %v4064
    %v4066 = vpop.f32.mrf.mxu0
    %v4067 = vadd.f32 %v3964, %v4066
    %v4068 = vpop.f32.mrf.mxu0
    %v4069 = vadd.f32 %v3966, %v4068
    %4070 = vdwg.mxu0
    %4071 = vmatprep.subr.bf16.mxu0 0
    %4072 = vmatpush1.bf16.msra.mxu0 %v3558
    %4073 = vmatprep.subr.bf16.mxu0 0
    %4074 = vmatpush1.bf16.msra.mxu0 %v3555
    %4075 = vmatprep.subr.bf16.mxu0 0
    %4076 = vmatpush1.bf16.msra.mxu0 %v3552
    %4077 = vmatprep.subr.bf16.mxu0 0
    %4078 = vmatpush1.bf16.msra.mxu0 %v3549
    %4079 = vmatprep.subr.bf16.mxu0 0
    %4080 = vmatpush1.bf16.msra.mxu0 %v3546
    %4081 = vmatprep.subr.bf16.mxu0 0
    %4082 = vmatpush1.bf16.msra.mxu0 %v3543
    %4083 = vmatprep.subr.bf16.mxu0 0
    %4084 = vmatpush1.bf16.msra.mxu0 %v3540
    %4085 = vmatprep.subr.bf16.mxu0 0
    %4086 = vmatpush1.bf16.msra.mxu0 %v3537
    %4087 = vmatprep.subr.bf16.mxu0 0
    %4088 = vmatpush2.bf16.msra.mxu0 %v3582
    %4089 = vmatprep.subr.bf16.mxu0 0
    %4090 = vmatpush2.bf16.msra.mxu0 %v3579
    %4091 = vmatprep.subr.bf16.mxu0 0
    %4092 = vmatpush2.bf16.msra.mxu0 %v3576
    %4093 = vmatprep.subr.bf16.mxu0 0
    %4094 = vmatpush2.bf16.msra.mxu0 %v3573
    %4095 = vmatprep.subr.bf16.mxu0 0
    %4096 = vmatpush2.bf16.msra.mxu0 %v3570
    %4097 = vmatprep.subr.bf16.mxu0 0
    %4098 = vmatpush2.bf16.msra.mxu0 %v3567
    %4099 = vmatprep.subr.bf16.mxu0 0
    %4100 = vmatpush2.bf16.msra.mxu0 %v3564
    %4101 = vmatprep.subr.bf16.mxu0 0
    %4102 = vmatpush2.bf16.msra.mxu0 %v3561
    %4103 = vmatprep.mubr.bf16.mxu0 %v3046
    %4104 = vmatmul.mubr.bf16.gmra.mxu0 %v3045
    %v4105 = vpop.f32.mrf.mxu0
    %v4106 = vadd.f32 0.0, %v4105
    %v4107 = vpop.f32.mrf.mxu0
    %v4108 = vpop.f32.mrf.mxu0
    %v4109 = vadd.f32 0.0, %v4108
    %v4110 = vpop.f32.mrf.mxu0
    %4111 = vmatprep.mubr.bf16.mxu0 %v3051
    %4112 = vmatmul.mubr.bf16.gmra.mxu0 %v3050
    %v4113 = vpop.f32.mrf.mxu0
    %v4114 = vadd.f32 0.0, %v4113
    %v4115 = vpop.f32.mrf.mxu0
    %v4116 = vpop.f32.mrf.mxu0
    %v4117 = vadd.f32 0.0, %v4116
    %v4118 = vpop.f32.mrf.mxu0
    %4119 = vmatprep.mubr.bf16.mxu0 %v3056
    %4120 = vmatmul.mubr.bf16.gmra.mxu0 %v3055
    %v4121 = vpop.f32.mrf.mxu0
    %v4122 = vadd.f32 0.0, %v4121
    %v4123 = vpop.f32.mrf.mxu0
    %v4124 = vpop.f32.mrf.mxu0
    %v4125 = vadd.f32 0.0, %v4124
    %v4126 = vpop.f32.mrf.mxu0
    %4127 = vmatprep.mubr.bf16.mxu0 %v3061
    %4128 = vmatmul.mubr.bf16.gmra.mxu0 %v3060
    %v4129 = vpop.f32.mrf.mxu0
    %v4130 = vadd.f32 0.0, %v4129
    %v4131 = vpop.f32.mrf.mxu0
    %v4132 = vpop.f32.mrf.mxu0
    %v4133 = vadd.f32 0.0, %v4132
    %v4134 = vpop.f32.mrf.mxu0
    %4135 = vmatprep.mubr.bf16.mxu0 %v3066
    %4136 = vmatmul.mubr.bf16.gmra.mxu0 %v3065
    %v4137 = vpop.f32.mrf.mxu0
    %v4138 = vadd.f32 0.0, %v4137
    %v4139 = vpop.f32.mrf.mxu0
    %v4140 = vpop.f32.mrf.mxu0
    %v4141 = vadd.f32 0.0, %v4140
    %v4142 = vpop.f32.mrf.mxu0
    %4143 = vmatprep.mubr.bf16.mxu0 %v3071
    %4144 = vmatmul.mubr.bf16.gmra.mxu0 %v3070
    %v4145 = vpop.f32.mrf.mxu0
    %v4146 = vadd.f32 0.0, %v4145
    %v4147 = vpop.f32.mrf.mxu0
    %v4148 = vpop.f32.mrf.mxu0
    %v4149 = vadd.f32 0.0, %v4148
    %v4150 = vpop.f32.mrf.mxu0
    %4151 = vmatprep.mubr.bf16.mxu0 %v3076
    %4152 = vmatmul.mubr.bf16.gmra.mxu0 %v3075
    %v4153 = vpop.f32.mrf.mxu0
    %v4154 = vadd.f32 0.0, %v4153
    %v4155 = vpop.f32.mrf.mxu0
    %v4156 = vpop.f32.mrf.mxu0
    %v4157 = vadd.f32 0.0, %v4156
    %v4158 = vpop.f32.mrf.mxu0
    %4159 = vdwg.mxu0
    %4160 = vmatprep.subr.bf16.mxu0 0
    %4161 = vmatpush1.bf16.msra.mxu0 %v3606
    %4162 = vmatprep.subr.bf16.mxu0 0
    %4163 = vmatpush1.bf16.msra.mxu0 %v3603
    %4164 = vmatprep.subr.bf16.mxu0 0
    %4165 = vmatpush1.bf16.msra.mxu0 %v3600
    %4166 = vmatprep.subr.bf16.mxu0 0
    %4167 = vmatpush1.bf16.msra.mxu0 %v3597
    %4168 = vmatprep.subr.bf16.mxu0 0
    %4169 = vmatpush1.bf16.msra.mxu0 %v3594
    %4170 = vmatprep.subr.bf16.mxu0 0
    %4171 = vmatpush1.bf16.msra.mxu0 %v3591
    %4172 = vmatprep.subr.bf16.mxu0 0
    %4173 = vmatpush1.bf16.msra.mxu0 %v3588
    %4174 = vmatprep.subr.bf16.mxu0 0
    %4175 = vmatpush1.bf16.msra.mxu0 %v3585
    %4176 = vmatprep.subr.bf16.mxu0 0
    %4177 = vmatpush2.bf16.msra.mxu0 %v3630
    %4178 = vmatprep.subr.bf16.mxu0 0
    %4179 = vmatpush2.bf16.msra.mxu0 %v3627
    %4180 = vmatprep.subr.bf16.mxu0 0
    %4181 = vmatpush2.bf16.msra.mxu0 %v3624
    %4182 = vmatprep.subr.bf16.mxu0 0
    %4183 = vmatpush2.bf16.msra.mxu0 %v3621
    %4184 = vmatprep.subr.bf16.mxu0 0
    %4185 = vmatpush2.bf16.msra.mxu0 %v3618
    %4186 = vmatprep.subr.bf16.mxu0 0
    %4187 = vmatpush2.bf16.msra.mxu0 %v3615
    %4188 = vmatprep.subr.bf16.mxu0 0
    %4189 = vmatpush2.bf16.msra.mxu0 %v3612
    %4190 = vmatprep.subr.bf16.mxu0 0
    %4191 = vmatpush2.bf16.msra.mxu0 %v3609
    %4192 = vmatprep.mubr.bf16.mxu0 %v3048
    %4193 = vmatmul.mubr.bf16.gmra.mxu0 %v3047
    %v4194 = vpop.f32.mrf.mxu0
    %v4195 = vadd.f32 %v4106, %v4194
    %v4196 = vpop.f32.mrf.mxu0
    %v4197 = vpop.f32.mrf.mxu0
    %v4198 = vadd.f32 %v4109, %v4197
    %v4199 = vpop.f32.mrf.mxu0
    %4200 = vmatprep.mubr.bf16.mxu0 %v3053
    %4201 = vmatmul.mubr.bf16.gmra.mxu0 %v3052
    %v4202 = vpop.f32.mrf.mxu0
    %v4203 = vadd.f32 %v4114, %v4202
    %v4204 = vpop.f32.mrf.mxu0
    %v4205 = vpop.f32.mrf.mxu0
    %v4206 = vadd.f32 %v4117, %v4205
    %v4207 = vpop.f32.mrf.mxu0
    %4208 = vmatprep.mubr.bf16.mxu0 %v3058
    %4209 = vmatmul.mubr.bf16.gmra.mxu0 %v3057
    %v4210 = vpop.f32.mrf.mxu0
    %v4211 = vadd.f32 %v4122, %v4210
    %v4212 = vpop.f32.mrf.mxu0
    %v4213 = vpop.f32.mrf.mxu0
    %v4214 = vadd.f32 %v4125, %v4213
    %v4215 = vpop.f32.mrf.mxu0
    %4216 = vmatprep.mubr.bf16.mxu0 %v3063
    %4217 = vmatmul.mubr.bf16.gmra.mxu0 %v3062
    %v4218 = vpop.f32.mrf.mxu0
    %v4219 = vadd.f32 %v4130, %v4218
    %v4220 = vpop.f32.mrf.mxu0
    %v4221 = vpop.f32.mrf.mxu0
    %v4222 = vadd.f32 %v4133, %v4221
    %v4223 = vpop.f32.mrf.mxu0
    %4224 = vmatprep.mubr.bf16.mxu0 %v3068
    %4225 = vmatmul.mubr.bf16.gmra.mxu0 %v3067
    %v4226 = vpop.f32.mrf.mxu0
    %v4227 = vadd.f32 %v4138, %v4226
    %v4228 = vpop.f32.mrf.mxu0
    %v4229 = vpop.f32.mrf.mxu0
    %v4230 = vadd.f32 %v4141, %v4229
    %v4231 = vpop.f32.mrf.mxu0
    %4232 = vmatprep.mubr.bf16.mxu0 %v3073
    %4233 = vmatmul.mubr.bf16.gmra.mxu0 %v3072
    %v4234 = vpop.f32.mrf.mxu0
    %v4235 = vadd.f32 %v4146, %v4234
    %v4236 = vpop.f32.mrf.mxu0
    %v4237 = vpop.f32.mrf.mxu0
    %v4238 = vadd.f32 %v4149, %v4237
    %v4239 = vpop.f32.mrf.mxu0
    %4240 = vmatprep.mubr.bf16.mxu0 %v3078
    %4241 = vmatmul.mubr.bf16.gmra.mxu0 %v3077
    %v4242 = vpop.f32.mrf.mxu0
    %v4243 = vadd.f32 %v4154, %v4242
    %v4244 = vpop.f32.mrf.mxu0
    %v4245 = vpop.f32.mrf.mxu0
    %v4246 = vadd.f32 %v4157, %v4245
    %v4247 = vpop.f32.mrf.mxu0
    %4248 = vdwg.mxu0
    %4249 = vmatprep.subr.bf16.mxu0 0
    %4250 = vmatpush1.bf16.msra.mxu0 0
    %4251 = vmatprep.subr.bf16.mxu0 0
    %4252 = vmatpush1.bf16.msra.mxu0 0
    %4253 = vmatprep.subr.bf16.mxu0 0
    %4254 = vmatpush1.bf16.msra.mxu0 0
    %4255 = vmatprep.subr.bf16.mxu0 0
    %4256 = vmatpush1.bf16.msra.mxu0 0
    %4257 = vmatprep.subr.bf16.mxu0 0
    %4258 = vmatpush1.bf16.msra.mxu0 0
    %4259 = vmatprep.subr.bf16.mxu0 0
    %4260 = vmatpush1.bf16.msra.mxu0 0
    %4261 = vmatprep.subr.bf16.mxu0 0
    %4262 = vmatpush1.bf16.msra.mxu0 0
    %4263 = vmatprep.subr.bf16.mxu0 0
    %4264 = vmatpush1.bf16.msra.mxu0 %v3760
    %4265 = vmatprep.subr.bf16.mxu0 0
    %4266 = vmatpush2.bf16.msra.mxu0 0
    %4267 = vmatprep.subr.bf16.mxu0 0
    %4268 = vmatpush2.bf16.msra.mxu0 0
    %4269 = vmatprep.subr.bf16.mxu0 0
    %4270 = vmatpush2.bf16.msra.mxu0 0
    %4271 = vmatprep.subr.bf16.mxu0 0
    %4272 = vmatpush2.bf16.msra.mxu0 0
    %4273 = vmatprep.subr.bf16.mxu0 0
    %4274 = vmatpush2.bf16.msra.mxu0 0
    %4275 = vmatprep.subr.bf16.mxu0 0
    %4276 = vmatpush2.bf16.msra.mxu0 0
    %4277 = vmatprep.subr.bf16.mxu0 0
    %4278 = vmatpush2.bf16.msra.mxu0 0
    %4279 = vmatprep.subr.bf16.mxu0 0
    %4280 = vmatpush2.bf16.msra.mxu0 0
    %4281 = vmatprep.mubr.bf16.mxu0 0
    %4282 = vmatmul.mubr.bf16.gmra.mxu0 %v3732
    %v4283 = vpop.f32.mrf.mxu0
    %v4284 = vadd.f32 %v4195, %v4283
    %v4285 = vpop.f32.mrf.mxu0
    %v4286 = vpop.f32.mrf.mxu0
    %v4287 = vadd.f32 %v4198, %v4286
    %v4288 = vpop.f32.mrf.mxu0
    %4289 = vmatprep.mubr.bf16.mxu0 0
    %4290 = vmatmul.mubr.bf16.gmra.mxu0 %v3735
    %v4291 = vpop.f32.mrf.mxu0
    %v4292 = vadd.f32 %v4203, %v4291
    %v4293 = vpop.f32.mrf.mxu0
    %v4294 = vpop.f32.mrf.mxu0
    %v4295 = vadd.f32 %v4206, %v4294
    %v4296 = vpop.f32.mrf.mxu0
    %4297 = vmatprep.mubr.bf16.mxu0 0
    %4298 = vmatmul.mubr.bf16.gmra.mxu0 %v3738
    %v4299 = vpop.f32.mrf.mxu0
    %v4300 = vadd.f32 %v4211, %v4299
    %v4301 = vpop.f32.mrf.mxu0
    %v4302 = vpop.f32.mrf.mxu0
    %v4303 = vadd.f32 %v4214, %v4302
    %v4304 = vpop.f32.mrf.mxu0
    %4305 = vmatprep.mubr.bf16.mxu0 0
    %4306 = vmatmul.mubr.bf16.gmra.mxu0 %v3741
    %v4307 = vpop.f32.mrf.mxu0
    %v4308 = vadd.f32 %v4219, %v4307
    %v4309 = vpop.f32.mrf.mxu0
    %v4310 = vpop.f32.mrf.mxu0
    %v4311 = vadd.f32 %v4222, %v4310
    %v4312 = vpop.f32.mrf.mxu0
    %4313 = vmatprep.mubr.bf16.mxu0 0
    %4314 = vmatmul.mubr.bf16.gmra.mxu0 %v3744
    %v4315 = vpop.f32.mrf.mxu0
    %v4316 = vadd.f32 %v4227, %v4315
    %v4317 = vpop.f32.mrf.mxu0
    %v4318 = vpop.f32.mrf.mxu0
    %v4319 = vadd.f32 %v4230, %v4318
    %v4320 = vpop.f32.mrf.mxu0
    %4321 = vmatprep.mubr.bf16.mxu0 0
    %4322 = vmatmul.mubr.bf16.gmra.mxu0 %v3747
    %v4323 = vpop.f32.mrf.mxu0
    %v4324 = vadd.f32 %v4235, %v4323
    %v4325 = vpop.f32.mrf.mxu0
    %v4326 = vpop.f32.mrf.mxu0
    %v4327 = vadd.f32 %v4238, %v4326
    %v4328 = vpop.f32.mrf.mxu0
    %4329 = vmatprep.mubr.bf16.mxu0 0
    %4330 = vmatmul.mubr.bf16.gmra.mxu0 %v3750
    %v4331 = vpop.f32.mrf.mxu0
    %v4332 = vadd.f32 %v4243, %v4331
    %v4333 = vpop.f32.mrf.mxu0
    %v4334 = vpop.f32.mrf.mxu0
    %v4335 = vadd.f32 %v4246, %v4334
    %v4336 = vpop.f32.mrf.mxu0
    %4337 = vdwg.mxu0
    %v4338 = vpack.c.bf16 %v4007, %v4003
    %v4339 = vpack.c.bf16 %v4009, %v4005
    %v4340 = vpack.c.bf16 %v4287, %v4284
    %v4341 = vpack.c.bf16 %v4017, %v4013
    %v4342 = vpack.c.bf16 %v4019, %v4015
    %v4343 = vpack.c.bf16 %v4295, %v4292
    %v4344 = vpack.c.bf16 %v4027, %v4023
    %v4345 = vpack.c.bf16 %v4029, %v4025
    %v4346 = vpack.c.bf16 %v4303, %v4300
    %v4347 = vpack.c.bf16 %v4037, %v4033
    %v4348 = vpack.c.bf16 %v4039, %v4035
    %v4349 = vpack.c.bf16 %v4311, %v4308
    %v4350 = vpack.c.bf16 %v4047, %v4043
    %v4351 = vpack.c.bf16 %v4049, %v4045
    %v4352 = vpack.c.bf16 %v4319, %v4316
    %v4353 = vpack.c.bf16 %v4057, %v4053
    %v4354 = vpack.c.bf16 %v4059, %v4055
    %v4355 = vpack.c.bf16 %v4327, %v4324
    %v4356 = vpack.c.bf16 %v4067, %v4063
    %v4357 = vpack.c.bf16 %v4069, %v4065
    %v4358 = vpack.c.bf16 %v4335, %v4332
    %v4359 = vld [vmem:[%s4] sm:$0xff]
    %v4360 = vld [vmem:[%s4 + $0x8] sm:$0xf]
    %v4361 = vld [vmem:[%s4 + $0xc] sm:$0xff]
    %v4362 = vld [vmem:[%s4 + $0x14] sm:$0xf]
    %v4363 = vld [vmem:[%s4 + $0x18] sm:$0xff]
    %v4364 = vld [vmem:[%s4 + $0x20] sm:$0xf]
    %v4365 = vld [vmem:[%s4 + $0x24] sm:$0xff]
    %v4366 = vld [vmem:[%s4 + $0x2c] sm:$0xf]
    %v4367 = vld [vmem:[%s4 + $0x30] sm:$0xff]
    %v4368 = vld [vmem:[%s4 + $0x38] sm:$0xf]
    %v4369 = vld [vmem:[%s4 + $0x3c] sm:$0xff]
    %v4370 = vld [vmem:[%s4 + $0x44] sm:$0xf]
    %v4371 = vld [vmem:[%s4 + $0x48] sm:$0xff]
    %v4372 = vld [vmem:[%s4 + $0x50] sm:$0xf]
    %v4373 = vld [vmem:[%s4 + $0x54] sm:$0xff]
    %v4374 = vld [vmem:[%s4 + $0x5c] sm:$0xf]
    %v4375 = vld [vmem:[%s4 + $0x60] sm:$0xff]
    %v4376 = vld [vmem:[%s4 + $0x68] sm:$0xf]
    %v4377 = vld [vmem:[%s4 + $0x6c] sm:$0xff]
    %v4378 = vld [vmem:[%s4 + $0x74] sm:$0xf]
    %v4379 = vld [vmem:[%s4 + $0x78] sm:$0xff]
    %v4380 = vld [vmem:[%s4 + $0x80] sm:$0xf]
    %v4381 = vld [vmem:[%s4 + $0x84] sm:$0xff]
    %v4382 = vld [vmem:[%s4 + $0x8c] sm:$0xf]
    %v4383 = vld [vmem:[%s4 + $0x90] sm:$0xff]
    %v4384 = vld [vmem:[%s4 + $0x98] sm:$0xf]
    %v4385 = vld [vmem:[%s4 + $0x9c] sm:$0xff]
    %v4386 = vld [vmem:[%s4 + $0xa4] sm:$0xf]
    %v4387 = vld [vmem:[%s4 + $0xa8] sm:$0xff]
    %v4388 = vld [vmem:[%s4 + $0xb0] sm:$0xf]
    %v4389 = vld [vmem:[%s4 + $0xb4] sm:$0xff]
    %v4390 = vld [vmem:[%s4 + $0xbc] sm:$0xf]
    %v4391 = vld [vmem:[%s4 + $0xc0] sm:$0xff]
    %v4392 = vld [vmem:[%s4 + $0xc8] sm:$0xf]
    %v4393 = vld [vmem:[%s4 + $0xcc] sm:$0xff]
    %v4394 = vld [vmem:[%s4 + $0xd4] sm:$0xf]
    %v4395 = vld [vmem:[%s4 + $0xd8] sm:$0xff]
    %v4396 = vld [vmem:[%s4 + $0xe0] sm:$0xf]
    %v4397 = vld [vmem:[%s4 + $0xe4] sm:$0xff]
    %v4398 = vld [vmem:[%s4 + $0xec] sm:$0xf]
    %v4399 = vld [vmem:[%s4 + $0xf0] sm:$0xff]
    %v4400 = vld [vmem:[%s4 + $0xf8] sm:$0xf]
    %v4401 = vld [vmem:[%s4 + $0xfc] sm:$0xff]
    %v4402 = vld [vmem:[%s4 + $0x104] sm:$0xf]
    %v4403 = vld [vmem:[%s4 + $0x108] sm:$0xff]
    %v4404 = vld [vmem:[%s4 + $0x110] sm:$0xf]
    %v4405 = vld [vmem:[%s4 + $0x114] sm:$0xff]
    %v4406 = vld [vmem:[%s4 + $0x11c] sm:$0xf]
    %v4407 = vld [vmem:[%s4 + $0x120] sm:$0xff]
    %v4408 = vld [vmem:[%s4 + $0x128] sm:$0xf]
    %v4409 = vld [vmem:[%s4 + $0x12c] sm:$0xff]
    %v4410 = vld [vmem:[%s4 + $0x134] sm:$0xf]
    %v4411 = vld [vmem:[%s4 + $0x138] sm:$0xff]
    %v4412 = vld [vmem:[%s4 + $0x140] sm:$0xf]
    %v4413 = vld [vmem:[%s4 + $0x144] sm:$0xff]
    %v4414 = vld [vmem:[%s4 + $0x14c] sm:$0xf]
    %v4415 = vld [vmem:[%s4 + $0x150] sm:$0xff]
    %v4416 = vld [vmem:[%s4 + $0x158] sm:$0xf]
    %v4417 = vld [vmem:[%s4 + $0x15c] sm:$0xff]
    %v4418 = vld [vmem:[%s4 + $0x164] sm:$0xf]
    %v4419 = vld [vmem:[%s4 + $0x168] sm:$0xff]
    %v4420 = vld [vmem:[%s4 + $0x170] sm:$0xf]
    %v4421 = vld [vmem:[%s4 + $0x174] sm:$0xff]
    %v4422 = vld [vmem:[%s4 + $0x17c] sm:$0xf]
    %v4423 = vld [vmem:[%s4 + $0x180] sm:$0x33]
    %v4424 = vld [vmem:[%s4 + $0x188] sm:$0x3]
    %v4426 = vshrl.u32 %v4338, 16
    %v4428 = vshll.u32 %v4338, 16
    %v4430 = vrot.slane %v4428, 1
    %v4431 = vor.u32 %v4426, %v4430
    %v4433 = vshll.u32 %v4341, 16
    %v4435 = vrot.slane %v4433, 1
    %v4436 = vsel %vm97, %v4431, %v4435
    %v4438 = vshrl.u32 %v4339, 16
    %v4440 = vshll.u32 %v4339, 16
    %v4442 = vrot.slane %v4440, 1
    %v4443 = vor.u32 %v4438, %v4442
    %v4445 = vshll.u32 %v4342, 16
    %v4447 = vrot.slane %v4445, 1
    %v4448 = vsel %vm97, %v4443, %v4447
    %v4450 = vshrl.u32 %v4340, 16
    %v4452 = vshll.u32 %v4340, 16
    %v4454 = vrot.slane %v4452, 1
    %v4455 = vor.u32 %v4450, %v4454
    %v4457 = vshll.u32 %v4343, 16
    %v4459 = vrot.slane %v4457, 1
    %v4460 = vsel %vm97, %v4455, %v4459
    %v4461 = vshrl.u32 %v4341, 16
    %v4463 = vor.u32 %v4461, %v4435
    %v4465 = vshll.u32 %v4344, 16
    %v4467 = vrot.slane %v4465, 1
    %v4468 = vsel %vm97, %v4463, %v4467
    %v4469 = vshrl.u32 %v4342, 16
    %v4471 = vor.u32 %v4469, %v4447
    %v4473 = vshll.u32 %v4345, 16
    %v4475 = vrot.slane %v4473, 1
    %v4476 = vsel %vm97, %v4471, %v4475
    %v4477 = vshrl.u32 %v4343, 16
    %v4479 = vor.u32 %v4477, %v4459
    %v4481 = vshll.u32 %v4346, 16
    %v4483 = vrot.slane %v4481, 1
    %v4484 = vsel %vm97, %v4479, %v4483
    %v4485 = vshrl.u32 %v4344, 16
    %v4487 = vor.u32 %v4485, %v4467
    %v4489 = vshll.u32 %v4347, 16
    %v4491 = vrot.slane %v4489, 1
    %v4492 = vsel %vm97, %v4487, %v4491
    %v4493 = vshrl.u32 %v4345, 16
    %v4495 = vor.u32 %v4493, %v4475
    %v4497 = vshll.u32 %v4348, 16
    %v4499 = vrot.slane %v4497, 1
    %v4500 = vsel %vm97, %v4495, %v4499
    %v4501 = vshrl.u32 %v4346, 16
    %v4503 = vor.u32 %v4501, %v4483
    %v4505 = vshll.u32 %v4349, 16
    %v4507 = vrot.slane %v4505, 1
    %v4508 = vsel %vm97, %v4503, %v4507
    %v4509 = vshrl.u32 %v4347, 16
    %v4511 = vor.u32 %v4509, %v4491
    %v4513 = vshll.u32 %v4350, 16
    %v4515 = vrot.slane %v4513, 1
    %v4516 = vsel %vm97, %v4511, %v4515
    %v4517 = vshrl.u32 %v4348, 16
    %v4519 = vor.u32 %v4517, %v4499
    %v4521 = vshll.u32 %v4351, 16
    %v4523 = vrot.slane %v4521, 1
    %v4524 = vsel %vm97, %v4519, %v4523
    %v4525 = vshrl.u32 %v4349, 16
    %v4527 = vor.u32 %v4525, %v4507
    %v4529 = vshll.u32 %v4352, 16
    %v4531 = vrot.slane %v4529, 1
    %v4532 = vsel %vm97, %v4527, %v4531
    %v4533 = vshrl.u32 %v4350, 16
    %v4535 = vor.u32 %v4533, %v4515
    %v4537 = vshll.u32 %v4353, 16
    %v4539 = vrot.slane %v4537, 1
    %v4540 = vsel %vm97, %v4535, %v4539
    %v4541 = vshrl.u32 %v4351, 16
    %v4543 = vor.u32 %v4541, %v4523
    %v4545 = vshll.u32 %v4354, 16
    %v4547 = vrot.slane %v4545, 1
    %v4548 = vsel %vm97, %v4543, %v4547
    %v4549 = vshrl.u32 %v4352, 16
    %v4551 = vor.u32 %v4549, %v4531
    %v4553 = vshll.u32 %v4355, 16
    %v4555 = vrot.slane %v4553, 1
    %v4556 = vsel %vm97, %v4551, %v4555
    %v4557 = vshrl.u32 %v4353, 16
    %v4559 = vor.u32 %v4557, %v4539
    %v4561 = vshll.u32 %v4356, 16
    %v4563 = vrot.slane %v4561, 1
    %v4564 = vsel %vm97, %v4559, %v4563
    %v4565 = vshrl.u32 %v4354, 16
    %v4567 = vor.u32 %v4565, %v4547
    %v4569 = vshll.u32 %v4357, 16
    %v4571 = vrot.slane %v4569, 1
    %v4572 = vsel %vm97, %v4567, %v4571
    %v4573 = vshrl.u32 %v4355, 16
    %v4575 = vor.u32 %v4573, %v4555
    %v4577 = vshll.u32 %v4358, 16
    %v4579 = vrot.slane %v4577, 1
    %v4580 = vsel %vm97, %v4575, %v4579
    %v4581 = vshrl.u32 %v4356, 16
    %v4583 = vor.u32 %v4581, %v4563
    %v4584 = vshrl.u32 %v4357, 16
    %v4586 = vor.u32 %v4584, %v4571
    %v4587 = vshrl.u32 %v4358, 16
    %v4589 = vor.u32 %v4587, %v4579
    %v4605 = vsel %vm155, %v4583, 0
    %v4606 = vsel %vm155, %v4586, 0
    %v4607 = vsel %vm155, %v4589, 0
    %s4608 = scalar_lea.vmem %s4, 396
    %v4609 = vld [vmem:[%s4608] sm:$0xff]
    %v4610 = vld [vmem:[%s4608 + $0x8] sm:$0xf]
    %v4611 = vld [vmem:[%s4608 + $0xc] sm:$0xff]
    %v4612 = vld [vmem:[%s4608 + $0x14] sm:$0xf]
    %v4613 = vld [vmem:[%s4608 + $0x18] sm:$0xff]
    %v4614 = vld [vmem:[%s4608 + $0x20] sm:$0xf]
    %v4615 = vld [vmem:[%s4608 + $0x24] sm:$0xff]
    %v4616 = vld [vmem:[%s4608 + $0x2c] sm:$0xf]
    %v4617 = vld [vmem:[%s4608 + $0x30] sm:$0xff]
    %v4618 = vld [vmem:[%s4608 + $0x38] sm:$0xf]
    %v4619 = vld [vmem:[%s4608 + $0x3c] sm:$0xff]
    %v4620 = vld [vmem:[%s4608 + $0x44] sm:$0xf]
    %v4621 = vld [vmem:[%s4608 + $0x48] sm:$0xff]
    %v4622 = vld [vmem:[%s4608 + $0x50] sm:$0xf]
    %v4623 = vld [vmem:[%s4608 + $0x54] sm:$0xff]
    %v4624 = vld [vmem:[%s4608 + $0x5c] sm:$0xf]
    %v4625 = vld [vmem:[%s4608 + $0x60] sm:$0xff]
    %v4626 = vld [vmem:[%s4608 + $0x68] sm:$0xf]
    %v4627 = vld [vmem:[%s4608 + $0x6c] sm:$0xff]
    %v4628 = vld [vmem:[%s4608 + $0x74] sm:$0xf]
    %v4629 = vld [vmem:[%s4608 + $0x78] sm:$0xff]
    %v4630 = vld [vmem:[%s4608 + $0x80] sm:$0xf]
    %v4631 = vld [vmem:[%s4608 + $0x84] sm:$0xff]
    %v4632 = vld [vmem:[%s4608 + $0x8c] sm:$0xf]
    %v4633 = vld [vmem:[%s4608 + $0x90] sm:$0xff]
    %v4634 = vld [vmem:[%s4608 + $0x98] sm:$0xf]
    %v4635 = vld [vmem:[%s4608 + $0x9c] sm:$0xff]
    %v4636 = vld [vmem:[%s4608 + $0xa4] sm:$0xf]
    %v4637 = vld [vmem:[%s4608 + $0xa8] sm:$0xff]
    %v4638 = vld [vmem:[%s4608 + $0xb0] sm:$0xf]
    %v4639 = vld [vmem:[%s4608 + $0xb4] sm:$0xff]
    %v4640 = vld [vmem:[%s4608 + $0xbc] sm:$0xf]
    %v4641 = vld [vmem:[%s4608 + $0xc0] sm:$0xff]
    %v4642 = vld [vmem:[%s4608 + $0xc8] sm:$0xf]
    %v4643 = vld [vmem:[%s4608 + $0xcc] sm:$0xff]
    %v4644 = vld [vmem:[%s4608 + $0xd4] sm:$0xf]
    %v4645 = vld [vmem:[%s4608 + $0xd8] sm:$0xff]
    %v4646 = vld [vmem:[%s4608 + $0xe0] sm:$0xf]
    %v4647 = vld [vmem:[%s4608 + $0xe4] sm:$0xff]
    %v4648 = vld [vmem:[%s4608 + $0xec] sm:$0xf]
    %v4649 = vld [vmem:[%s4608 + $0xf0] sm:$0xff]
    %v4650 = vld [vmem:[%s4608 + $0xf8] sm:$0xf]
    %v4651 = vld [vmem:[%s4608 + $0xfc] sm:$0xff]
    %v4652 = vld [vmem:[%s4608 + $0x104] sm:$0xf]
    %v4653 = vld [vmem:[%s4608 + $0x108] sm:$0xff]
    %v4654 = vld [vmem:[%s4608 + $0x110] sm:$0xf]
    %v4655 = vld [vmem:[%s4608 + $0x114] sm:$0xff]
    %v4656 = vld [vmem:[%s4608 + $0x11c] sm:$0xf]
    %v4657 = vld [vmem:[%s4608 + $0x120] sm:$0xff]
    %v4658 = vld [vmem:[%s4608 + $0x128] sm:$0xf]
    %v4659 = vld [vmem:[%s4608 + $0x12c] sm:$0xff]
    %v4660 = vld [vmem:[%s4608 + $0x134] sm:$0xf]
    %v4661 = vld [vmem:[%s4608 + $0x138] sm:$0xff]
    %v4662 = vld [vmem:[%s4608 + $0x140] sm:$0xf]
    %v4663 = vld [vmem:[%s4608 + $0x144] sm:$0xff]
    %v4664 = vld [vmem:[%s4608 + $0x14c] sm:$0xf]
    %v4665 = vld [vmem:[%s4608 + $0x150] sm:$0xff]
    %v4666 = vld [vmem:[%s4608 + $0x158] sm:$0xf]
    %v4667 = vld [vmem:[%s4608 + $0x15c] sm:$0xff]
    %v4668 = vld [vmem:[%s4608 + $0x164] sm:$0xf]
    %v4669 = vld [vmem:[%s4608 + $0x168] sm:$0xff]
    %v4670 = vld [vmem:[%s4608 + $0x170] sm:$0xf]
    %v4671 = vld [vmem:[%s4608 + $0x174] sm:$0xff]
    %v4672 = vld [vmem:[%s4608 + $0x17c] sm:$0xf]
    %v4673 = vld [vmem:[%s4608 + $0x180] sm:$0x33]
    %v4674 = vld [vmem:[%s4608 + $0x188] sm:$0x3]
    %v4741 = vunpack.c.l.b16 %v4609
    %v4742 = vunpack.c.h.b16 %v4609
    %v4743 = vunpack.c.l.b16 %v4610
    %v4744 = vunpack.c.l.b16 %v4611
    %v4745 = vunpack.c.h.b16 %v4611
    %v4746 = vunpack.c.l.b16 %v4612
    %v4747 = vunpack.c.l.b16 %v4613
    %v4748 = vunpack.c.h.b16 %v4613
    %v4749 = vunpack.c.l.b16 %v4614
    %v4750 = vunpack.c.l.b16 %v4615
    %v4751 = vunpack.c.h.b16 %v4615
    %v4752 = vunpack.c.l.b16 %v4616
    %v4753 = vunpack.c.l.b16 %v4617
    %v4754 = vunpack.c.h.b16 %v4617
    %v4755 = vunpack.c.l.b16 %v4618
    %v4756 = vunpack.c.l.b16 %v4619
    %v4757 = vunpack.c.h.b16 %v4619
    %v4758 = vunpack.c.l.b16 %v4620
    %v4759 = vunpack.c.l.b16 %v4621
    %v4760 = vunpack.c.h.b16 %v4621
    %v4761 = vunpack.c.l.b16 %v4622
    %v4762 = vunpack.c.l.b16 %v4623
    %v4763 = vunpack.c.h.b16 %v4623
    %v4764 = vunpack.c.l.b16 %v4624
    %v4765 = vunpack.c.l.b16 %v4625
    %v4766 = vunpack.c.h.b16 %v4625
    %v4767 = vunpack.c.l.b16 %v4626
    %v4768 = vunpack.c.l.b16 %v4627
    %v4769 = vunpack.c.h.b16 %v4627
    %v4770 = vunpack.c.l.b16 %v4628
    %v4771 = vunpack.c.l.b16 %v4629
    %v4772 = vunpack.c.h.b16 %v4629
    %v4773 = vunpack.c.l.b16 %v4630
    %v4774 = vunpack.c.l.b16 %v4631
    %v4775 = vunpack.c.h.b16 %v4631
    %v4776 = vunpack.c.l.b16 %v4632
    %v4777 = vunpack.c.l.b16 %v4633
    %v4778 = vunpack.c.h.b16 %v4633
    %v4779 = vunpack.c.l.b16 %v4634
    %v4780 = vunpack.c.l.b16 %v4635
    %v4781 = vunpack.c.h.b16 %v4635
    %v4782 = vunpack.c.l.b16 %v4636
    %v4783 = vunpack.c.l.b16 %v4637
    %v4784 = vunpack.c.h.b16 %v4637
    %v4785 = vunpack.c.l.b16 %v4638
    %v4786 = vunpack.c.l.b16 %v4639
    %v4787 = vunpack.c.h.b16 %v4639
    %v4788 = vunpack.c.l.b16 %v4640
    %v4789 = vunpack.c.l.b16 %v4641
    %v4790 = vunpack.c.h.b16 %v4641
    %v4791 = vunpack.c.l.b16 %v4642
    %v4792 = vunpack.c.l.b16 %v4643
    %v4793 = vunpack.c.h.b16 %v4643
    %v4794 = vunpack.c.l.b16 %v4644
    %v4795 = vunpack.c.l.b16 %v4645
    %v4796 = vunpack.c.h.b16 %v4645
    %v4797 = vunpack.c.l.b16 %v4646
    %v4798 = vunpack.c.l.b16 %v4647
    %v4799 = vunpack.c.h.b16 %v4647
    %v4800 = vunpack.c.l.b16 %v4648
    %v4801 = vunpack.c.l.b16 %v4649
    %v4802 = vunpack.c.h.b16 %v4649
    %v4803 = vunpack.c.l.b16 %v4650
    %v4804 = vunpack.c.l.b16 %v4651
    %v4805 = vunpack.c.h.b16 %v4651
    %v4806 = vunpack.c.l.b16 %v4652
    %v4807 = vunpack.c.l.b16 %v4653
    %v4808 = vunpack.c.h.b16 %v4653
    %v4809 = vunpack.c.l.b16 %v4654
    %v4810 = vunpack.c.l.b16 %v4655
    %v4811 = vunpack.c.h.b16 %v4655
    %v4812 = vunpack.c.l.b16 %v4656
    %v4813 = vunpack.c.l.b16 %v4657
    %v4814 = vunpack.c.h.b16 %v4657
    %v4815 = vunpack.c.l.b16 %v4658
    %v4816 = vunpack.c.l.b16 %v4659
    %v4817 = vunpack.c.h.b16 %v4659
    %v4818 = vunpack.c.l.b16 %v4660
    %v4819 = vunpack.c.l.b16 %v4661
    %v4820 = vunpack.c.h.b16 %v4661
    %v4821 = vunpack.c.l.b16 %v4662
    %v4822 = vunpack.c.l.b16 %v4663
    %v4823 = vunpack.c.h.b16 %v4663
    %v4824 = vunpack.c.l.b16 %v4664
    %v4825 = vunpack.c.l.b16 %v4665
    %v4826 = vunpack.c.h.b16 %v4665
    %v4827 = vunpack.c.l.b16 %v4666
    %v4828 = vunpack.c.l.b16 %v4667
    %v4829 = vunpack.c.h.b16 %v4667
    %v4830 = vunpack.c.l.b16 %v4668
    %v4831 = vunpack.c.l.b16 %v4669
    %v4832 = vunpack.c.h.b16 %v4669
    %v4833 = vunpack.c.l.b16 %v4670
    %v4834 = vunpack.c.l.b16 %v4671
    %v4835 = vunpack.c.h.b16 %v4671
    %v4836 = vunpack.c.l.b16 %v4672
    %v4837 = vunpack.c.l.b16 %v4673
    %v4838 = vunpack.c.h.b16 %v4673
    %v4839 = vunpack.c.l.b16 %v4674
    %v4840 = vpack.c.b16 %v4744, %v4741
    %v4841 = vpack.c.b16 %v4745, %v4742
    %v4842 = vpack.c.b16 %v4746, %v4743
    %v4843 = vpack.c.b16 %v4750, %v4747
    %v4844 = vpack.c.b16 %v4751, %v4748
    %v4845 = vpack.c.b16 %v4752, %v4749
    %v4846 = vpack.c.b16 %v4756, %v4753
    %v4847 = vpack.c.b16 %v4757, %v4754
    %v4848 = vpack.c.b16 %v4758, %v4755
    %v4849 = vpack.c.b16 %v4762, %v4759
    %v4850 = vpack.c.b16 %v4763, %v4760
    %v4851 = vpack.c.b16 %v4764, %v4761
    %v4852 = vpack.c.b16 %v4768, %v4765
    %v4853 = vpack.c.b16 %v4769, %v4766
    %v4854 = vpack.c.b16 %v4770, %v4767
    %v4855 = vpack.c.b16 %v4774, %v4771
    %v4856 = vpack.c.b16 %v4775, %v4772
    %v4857 = vpack.c.b16 %v4776, %v4773
    %v4858 = vpack.c.b16 %v4780, %v4777
    %v4859 = vpack.c.b16 %v4781, %v4778
    %v4860 = vpack.c.b16 %v4782, %v4779
    %v4861 = vpack.c.b16 %v4786, %v4783
    %v4862 = vpack.c.b16 %v4787, %v4784
    %v4863 = vpack.c.b16 %v4788, %v4785
    %v4864 = vpack.c.b16 %v4792, %v4789
    %v4865 = vpack.c.b16 %v4793, %v4790
    %v4866 = vpack.c.b16 %v4794, %v4791
    %v4867 = vpack.c.b16 %v4798, %v4795
    %v4868 = vpack.c.b16 %v4799, %v4796
    %v4869 = vpack.c.b16 %v4800, %v4797
    %v4870 = vpack.c.b16 %v4804, %v4801
    %v4871 = vpack.c.b16 %v4805, %v4802
    %v4872 = vpack.c.b16 %v4806, %v4803
    %v4873 = vpack.c.b16 %v4810, %v4807
    %v4874 = vpack.c.b16 %v4811, %v4808
    %v4875 = vpack.c.b16 %v4812, %v4809
    %v4876 = vpack.c.b16 %v4816, %v4813
    %v4877 = vpack.c.b16 %v4817, %v4814
    %v4878 = vpack.c.b16 %v4818, %v4815
    %v4879 = vpack.c.b16 %v4822, %v4819
    %v4880 = vpack.c.b16 %v4823, %v4820
    %v4881 = vpack.c.b16 %v4824, %v4821
    %v4882 = vpack.c.b16 %v4828, %v4825
    %v4883 = vpack.c.b16 %v4829, %v4826
    %v4884 = vpack.c.b16 %v4830, %v4827
    %v4885 = vpack.c.b16 %v4834, %v4831
    %v4886 = vpack.c.b16 %v4835, %v4832
    %v4887 = vpack.c.b16 %v4836, %v4833
    %v4888 = vpack.c.b16 %v4837, %v4837
    %v4889 = vpack.c.b16 %v4838, %v4838
    %v4890 = vpack.c.b16 %v4839, %v4839
    %vm4939 = vcmask 31744
    %v4941 = vsel %vm4939, %v4460, 0
    %v4944 = vsel %vm4939, %v4484, 0
    %v4947 = vsel %vm4939, %v4508, 0
    %v4950 = vsel %vm4939, %v4532, 0
    %v4953 = vsel %vm4939, %v4556, 0
    %v4956 = vsel %vm4939, %v4580, 0
    %v4959 = vsel %vm4939, %v4607, 0
    %vm4961 = vcmask 1041408
    %v4963 = vsel %vm4961, %v4888, 0
    %v4966 = vsel %vm4961, %v4889, 0
    %v4969 = vsel %vm4961, %v4890, 0
    %4971 = vmatprep.subr.bf16.mxu0 %v4862
    %4972 = vmatpush1.bf16.msra.mxu0 %v4861
    %4973 = vmatprep.subr.bf16.mxu0 %v4859
    %4974 = vmatpush1.bf16.msra.mxu0 %v4858
    %4975 = vmatprep.subr.bf16.mxu0 %v4856
    %4976 = vmatpush1.bf16.msra.mxu0 %v4855
    %4977 = vmatprep.subr.bf16.mxu0 %v4853
    %4978 = vmatpush1.bf16.msra.mxu0 %v4852
    %4979 = vmatprep.subr.bf16.mxu0 %v4850
    %4980 = vmatpush1.bf16.msra.mxu0 %v4849
    %4981 = vmatprep.subr.bf16.mxu0 %v4847
    %4982 = vmatpush1.bf16.msra.mxu0 %v4846
    %4983 = vmatprep.subr.bf16.mxu0 %v4844
    %4984 = vmatpush1.bf16.msra.mxu0 %v4843
    %4985 = vmatprep.subr.bf16.mxu0 %v4841
    %4986 = vmatpush1.bf16.msra.mxu0 %v4840
    %4987 = vmatprep.subr.bf16.mxu0 %v4886
    %4988 = vmatpush2.bf16.msra.mxu0 %v4885
    %4989 = vmatprep.subr.bf16.mxu0 %v4883
    %4990 = vmatpush2.bf16.msra.mxu0 %v4882
    %4991 = vmatprep.subr.bf16.mxu0 %v4880
    %4992 = vmatpush2.bf16.msra.mxu0 %v4879
    %4993 = vmatprep.subr.bf16.mxu0 %v4877
    %4994 = vmatpush2.bf16.msra.mxu0 %v4876
    %4995 = vmatprep.subr.bf16.mxu0 %v4874
    %4996 = vmatpush2.bf16.msra.mxu0 %v4873
    %4997 = vmatprep.subr.bf16.mxu0 %v4871
    %4998 = vmatpush2.bf16.msra.mxu0 %v4870
    %4999 = vmatprep.subr.bf16.mxu0 %v4868
    %5000 = vmatpush2.bf16.msra.mxu0 %v4867
    %5001 = vmatprep.subr.bf16.mxu0 %v4865
    %5002 = vmatpush2.bf16.msra.mxu0 %v4864
    %5003 = vmatprep.mubr.bf16.mxu0 %v4448
    %5004 = vmatmul.mubr.bf16.gmra.mxu0 %v4436
    %v5005 = vpop.f32.mrf.mxu0
    %v5006 = vadd.f32 0.0, %v5005
    %v5007 = vpop.f32.mrf.mxu0
    %v5008 = vadd.f32 0.0, %v5007
    %v5009 = vpop.f32.mrf.mxu0
    %v5010 = vadd.f32 0.0, %v5009
    %v5011 = vpop.f32.mrf.mxu0
    %v5012 = vadd.f32 0.0, %v5011
    %5013 = vmatprep.mubr.bf16.mxu0 %v4476
    %5014 = vmatmul.mubr.bf16.gmra.mxu0 %v4468
    %v5015 = vpop.f32.mrf.mxu0
    %v5016 = vadd.f32 0.0, %v5015
    %v5017 = vpop.f32.mrf.mxu0
    %v5018 = vadd.f32 0.0, %v5017
    %v5019 = vpop.f32.mrf.mxu0
    %v5020 = vadd.f32 0.0, %v5019
    %v5021 = vpop.f32.mrf.mxu0
    %v5022 = vadd.f32 0.0, %v5021
    %5023 = vmatprep.mubr.bf16.mxu0 %v4500
    %5024 = vmatmul.mubr.bf16.gmra.mxu0 %v4492
    %v5025 = vpop.f32.mrf.mxu0
    %v5026 = vadd.f32 0.0, %v5025
    %v5027 = vpop.f32.mrf.mxu0
    %v5028 = vadd.f32 0.0, %v5027
    %v5029 = vpop.f32.mrf.mxu0
    %v5030 = vadd.f32 0.0, %v5029
    %v5031 = vpop.f32.mrf.mxu0
    %v5032 = vadd.f32 0.0, %v5031
    %5033 = vmatprep.mubr.bf16.mxu0 %v4524
    %5034 = vmatmul.mubr.bf16.gmra.mxu0 %v4516
    %v5035 = vpop.f32.mrf.mxu0
    %v5036 = vadd.f32 0.0, %v5035
    %v5037 = vpop.f32.mrf.mxu0
    %v5038 = vadd.f32 0.0, %v5037
    %v5039 = vpop.f32.mrf.mxu0
    %v5040 = vadd.f32 0.0, %v5039
    %v5041 = vpop.f32.mrf.mxu0
    %v5042 = vadd.f32 0.0, %v5041
    %5043 = vmatprep.mubr.bf16.mxu0 %v4548
    %5044 = vmatmul.mubr.bf16.gmra.mxu0 %v4540
    %v5045 = vpop.f32.mrf.mxu0
    %v5046 = vadd.f32 0.0, %v5045
    %v5047 = vpop.f32.mrf.mxu0
    %v5048 = vadd.f32 0.0, %v5047
    %v5049 = vpop.f32.mrf.mxu0
    %v5050 = vadd.f32 0.0, %v5049
    %v5051 = vpop.f32.mrf.mxu0
    %v5052 = vadd.f32 0.0, %v5051
    %5053 = vmatprep.mubr.bf16.mxu0 %v4572
    %5054 = vmatmul.mubr.bf16.gmra.mxu0 %v4564
    %v5055 = vpop.f32.mrf.mxu0
    %v5056 = vadd.f32 0.0, %v5055
    %v5057 = vpop.f32.mrf.mxu0
    %v5058 = vadd.f32 0.0, %v5057
    %v5059 = vpop.f32.mrf.mxu0
    %v5060 = vadd.f32 0.0, %v5059
    %v5061 = vpop.f32.mrf.mxu0
    %v5062 = vadd.f32 0.0, %v5061
    %5063 = vmatprep.mubr.bf16.mxu0 %v4606
    %5064 = vmatmul.mubr.bf16.gmra.mxu0 %v4605
    %v5065 = vpop.f32.mrf.mxu0
    %v5066 = vadd.f32 0.0, %v5065
    %v5067 = vpop.f32.mrf.mxu0
    %v5068 = vadd.f32 0.0, %v5067
    %v5069 = vpop.f32.mrf.mxu0
    %v5070 = vadd.f32 0.0, %v5069
    %v5071 = vpop.f32.mrf.mxu0
    %v5072 = vadd.f32 0.0, %v5071
    %5073 = vdwg.mxu0
    %5074 = vmatprep.subr.bf16.mxu0 0
    %5075 = vmatpush1.bf16.msra.mxu0 0
    %5076 = vmatprep.subr.bf16.mxu0 0
    %5077 = vmatpush1.bf16.msra.mxu0 0
    %5078 = vmatprep.subr.bf16.mxu0 0
    %5079 = vmatpush1.bf16.msra.mxu0 0
    %5080 = vmatprep.subr.bf16.mxu0 0
    %5081 = vmatpush1.bf16.msra.mxu0 0
    %5082 = vmatprep.subr.bf16.mxu0 0
    %5083 = vmatpush1.bf16.msra.mxu0 0
    %5084 = vmatprep.subr.bf16.mxu0 0
    %5085 = vmatpush1.bf16.msra.mxu0 0
    %5086 = vmatprep.subr.bf16.mxu0 0
    %5087 = vmatpush1.bf16.msra.mxu0 0
    %5088 = vmatprep.subr.bf16.mxu0 %v4966
    %5089 = vmatpush1.bf16.msra.mxu0 %v4963
    %5090 = vmatprep.subr.bf16.mxu0 0
    %5091 = vmatpush2.bf16.msra.mxu0 0
    %5092 = vmatprep.subr.bf16.mxu0 0
    %5093 = vmatpush2.bf16.msra.mxu0 0
    %5094 = vmatprep.subr.bf16.mxu0 0
    %5095 = vmatpush2.bf16.msra.mxu0 0
    %5096 = vmatprep.subr.bf16.mxu0 0
    %5097 = vmatpush2.bf16.msra.mxu0 0
    %5098 = vmatprep.subr.bf16.mxu0 0
    %5099 = vmatpush2.bf16.msra.mxu0 0
    %5100 = vmatprep.subr.bf16.mxu0 0
    %5101 = vmatpush2.bf16.msra.mxu0 0
    %5102 = vmatprep.subr.bf16.mxu0 0
    %5103 = vmatpush2.bf16.msra.mxu0 0
    %5104 = vmatprep.subr.bf16.mxu0 0
    %5105 = vmatpush2.bf16.msra.mxu0 0
    %5106 = vmatprep.mubr.bf16.mxu0 0
    %5107 = vmatmul.mubr.bf16.gmra.mxu0 %v4941
    %v5108 = vpop.f32.mrf.mxu0
    %v5109 = vadd.f32 %v5006, %v5108
    %v5110 = vpop.f32.mrf.mxu0
    %v5111 = vadd.f32 %v5008, %v5110
    %v5112 = vpop.f32.mrf.mxu0
    %v5113 = vadd.f32 %v5010, %v5112
    %v5114 = vpop.f32.mrf.mxu0
    %v5115 = vadd.f32 %v5012, %v5114
    %5116 = vmatprep.mubr.bf16.mxu0 0
    %5117 = vmatmul.mubr.bf16.gmra.mxu0 %v4944
    %v5118 = vpop.f32.mrf.mxu0
    %v5119 = vadd.f32 %v5016, %v5118
    %v5120 = vpop.f32.mrf.mxu0
    %v5121 = vadd.f32 %v5018, %v5120
    %v5122 = vpop.f32.mrf.mxu0
    %v5123 = vadd.f32 %v5020, %v5122
    %v5124 = vpop.f32.mrf.mxu0
    %v5125 = vadd.f32 %v5022, %v5124
    %5126 = vmatprep.mubr.bf16.mxu0 0
    %5127 = vmatmul.mubr.bf16.gmra.mxu0 %v4947
    %v5128 = vpop.f32.mrf.mxu0
    %v5129 = vadd.f32 %v5026, %v5128
    %v5130 = vpop.f32.mrf.mxu0
    %v5131 = vadd.f32 %v5028, %v5130
    %v5132 = vpop.f32.mrf.mxu0
    %v5133 = vadd.f32 %v5030, %v5132
    %v5134 = vpop.f32.mrf.mxu0
    %v5135 = vadd.f32 %v5032, %v5134
    %5136 = vmatprep.mubr.bf16.mxu0 0
    %5137 = vmatmul.mubr.bf16.gmra.mxu0 %v4950
    %v5138 = vpop.f32.mrf.mxu0
    %v5139 = vadd.f32 %v5036, %v5138
    %v5140 = vpop.f32.mrf.mxu0
    %v5141 = vadd.f32 %v5038, %v5140
    %v5142 = vpop.f32.mrf.mxu0
    %v5143 = vadd.f32 %v5040, %v5142
    %v5144 = vpop.f32.mrf.mxu0
    %v5145 = vadd.f32 %v5042, %v5144
    %5146 = vmatprep.mubr.bf16.mxu0 0
    %5147 = vmatmul.mubr.bf16.gmra.mxu0 %v4953
    %v5148 = vpop.f32.mrf.mxu0
    %v5149 = vadd.f32 %v5046, %v5148
    %v5150 = vpop.f32.mrf.mxu0
    %v5151 = vadd.f32 %v5048, %v5150
    %v5152 = vpop.f32.mrf.mxu0
    %v5153 = vadd.f32 %v5050, %v5152
    %v5154 = vpop.f32.mrf.mxu0
    %v5155 = vadd.f32 %v5052, %v5154
    %5156 = vmatprep.mubr.bf16.mxu0 0
    %5157 = vmatmul.mubr.bf16.gmra.mxu0 %v4956
    %v5158 = vpop.f32.mrf.mxu0
    %v5159 = vadd.f32 %v5056, %v5158
    %v5160 = vpop.f32.mrf.mxu0
    %v5161 = vadd.f32 %v5058, %v5160
    %v5162 = vpop.f32.mrf.mxu0
    %v5163 = vadd.f32 %v5060, %v5162
    %v5164 = vpop.f32.mrf.mxu0
    %v5165 = vadd.f32 %v5062, %v5164
    %5166 = vmatprep.mubr.bf16.mxu0 0
    %5167 = vmatmul.mubr.bf16.gmra.mxu0 %v4959
    %v5168 = vpop.f32.mrf.mxu0
    %v5169 = vadd.f32 %v5066, %v5168
    %v5170 = vpop.f32.mrf.mxu0
    %v5171 = vadd.f32 %v5068, %v5170
    %v5172 = vpop.f32.mrf.mxu0
    %v5173 = vadd.f32 %v5070, %v5172
    %v5174 = vpop.f32.mrf.mxu0
    %v5175 = vadd.f32 %v5072, %v5174
    %5176 = vdwg.mxu0
    %5177 = vmatprep.subr.bf16.mxu0 0
    %5178 = vmatpush1.bf16.msra.mxu0 %v4863
    %5179 = vmatprep.subr.bf16.mxu0 0
    %5180 = vmatpush1.bf16.msra.mxu0 %v4860
    %5181 = vmatprep.subr.bf16.mxu0 0
    %5182 = vmatpush1.bf16.msra.mxu0 %v4857
    %5183 = vmatprep.subr.bf16.mxu0 0
    %5184 = vmatpush1.bf16.msra.mxu0 %v4854
    %5185 = vmatprep.subr.bf16.mxu0 0
    %5186 = vmatpush1.bf16.msra.mxu0 %v4851
    %5187 = vmatprep.subr.bf16.mxu0 0
    %5188 = vmatpush1.bf16.msra.mxu0 %v4848
    %5189 = vmatprep.subr.bf16.mxu0 0
    %5190 = vmatpush1.bf16.msra.mxu0 %v4845
    %5191 = vmatprep.subr.bf16.mxu0 0
    %5192 = vmatpush1.bf16.msra.mxu0 %v4842
    %5193 = vmatprep.subr.bf16.mxu0 0
    %5194 = vmatpush2.bf16.msra.mxu0 %v4887
    %5195 = vmatprep.subr.bf16.mxu0 0
    %5196 = vmatpush2.bf16.msra.mxu0 %v4884
    %5197 = vmatprep.subr.bf16.mxu0 0
    %5198 = vmatpush2.bf16.msra.mxu0 %v4881
    %5199 = vmatprep.subr.bf16.mxu0 0
    %5200 = vmatpush2.bf16.msra.mxu0 %v4878
    %5201 = vmatprep.subr.bf16.mxu0 0
    %5202 = vmatpush2.bf16.msra.mxu0 %v4875
    %5203 = vmatprep.subr.bf16.mxu0 0
    %5204 = vmatpush2.bf16.msra.mxu0 %v4872
    %5205 = vmatprep.subr.bf16.mxu0 0
    %5206 = vmatpush2.bf16.msra.mxu0 %v4869
    %5207 = vmatprep.subr.bf16.mxu0 0
    %5208 = vmatpush2.bf16.msra.mxu0 %v4866
    %5209 = vmatprep.mubr.bf16.mxu0 %v4448
    %5210 = vmatmul.mubr.bf16.gmra.mxu0 %v4436
    %v5211 = vpop.f32.mrf.mxu0
    %v5212 = vadd.f32 0.0, %v5211
    %v5213 = vpop.f32.mrf.mxu0
    %v5214 = vpop.f32.mrf.mxu0
    %v5215 = vadd.f32 0.0, %v5214
    %v5216 = vpop.f32.mrf.mxu0
    %5217 = vmatprep.mubr.bf16.mxu0 %v4476
    %5218 = vmatmul.mubr.bf16.gmra.mxu0 %v4468
    %v5219 = vpop.f32.mrf.mxu0
    %v5220 = vadd.f32 0.0, %v5219
    %v5221 = vpop.f32.mrf.mxu0
    %v5222 = vpop.f32.mrf.mxu0
    %v5223 = vadd.f32 0.0, %v5222
    %v5224 = vpop.f32.mrf.mxu0
    %5225 = vmatprep.mubr.bf16.mxu0 %v4500
    %5226 = vmatmul.mubr.bf16.gmra.mxu0 %v4492
    %v5227 = vpop.f32.mrf.mxu0
    %v5228 = vadd.f32 0.0, %v5227
    %v5229 = vpop.f32.mrf.mxu0
    %v5230 = vpop.f32.mrf.mxu0
    %v5231 = vadd.f32 0.0, %v5230
    %v5232 = vpop.f32.mrf.mxu0
    %5233 = vmatprep.mubr.bf16.mxu0 %v4524
    %5234 = vmatmul.mubr.bf16.gmra.mxu0 %v4516
    %v5235 = vpop.f32.mrf.mxu0
    %v5236 = vadd.f32 0.0, %v5235
    %v5237 = vpop.f32.mrf.mxu0
    %v5238 = vpop.f32.mrf.mxu0
    %v5239 = vadd.f32 0.0, %v5238
    %v5240 = vpop.f32.mrf.mxu0
    %5241 = vmatprep.mubr.bf16.mxu0 %v4548
    %5242 = vmatmul.mubr.bf16.gmra.mxu0 %v4540
    %v5243 = vpop.f32.mrf.mxu0
    %v5244 = vadd.f32 0.0, %v5243
    %v5245 = vpop.f32.mrf.mxu0
    %v5246 = vpop.f32.mrf.mxu0
    %v5247 = vadd.f32 0.0, %v5246
    %v5248 = vpop.f32.mrf.mxu0
    %5249 = vmatprep.mubr.bf16.mxu0 %v4572
    %5250 = vmatmul.mubr.bf16.gmra.mxu0 %v4564
    %v5251 = vpop.f32.mrf.mxu0
    %v5252 = vadd.f32 0.0, %v5251
    %v5253 = vpop.f32.mrf.mxu0
    %v5254 = vpop.f32.mrf.mxu0
    %v5255 = vadd.f32 0.0, %v5254
    %v5256 = vpop.f32.mrf.mxu0
    %5257 = vmatprep.mubr.bf16.mxu0 %v4606
    %5258 = vmatmul.mubr.bf16.gmra.mxu0 %v4605
    %v5259 = vpop.f32.mrf.mxu0
    %v5260 = vadd.f32 0.0, %v5259
    %v5261 = vpop.f32.mrf.mxu0
    %v5262 = vpop.f32.mrf.mxu0
    %v5263 = vadd.f32 0.0, %v5262
    %v5264 = vpop.f32.mrf.mxu0
    %5265 = vdwg.mxu0
    %5266 = vmatprep.subr.bf16.mxu0 0
    %5267 = vmatpush1.bf16.msra.mxu0 0
    %5268 = vmatprep.subr.bf16.mxu0 0
    %5269 = vmatpush1.bf16.msra.mxu0 0
    %5270 = vmatprep.subr.bf16.mxu0 0
    %5271 = vmatpush1.bf16.msra.mxu0 0
    %5272 = vmatprep.subr.bf16.mxu0 0
    %5273 = vmatpush1.bf16.msra.mxu0 0
    %5274 = vmatprep.subr.bf16.mxu0 0
    %5275 = vmatpush1.bf16.msra.mxu0 0
    %5276 = vmatprep.subr.bf16.mxu0 0
    %5277 = vmatpush1.bf16.msra.mxu0 0
    %5278 = vmatprep.subr.bf16.mxu0 0
    %5279 = vmatpush1.bf16.msra.mxu0 0
    %5280 = vmatprep.subr.bf16.mxu0 0
    %5281 = vmatpush1.bf16.msra.mxu0 %v4969
    %5282 = vmatprep.subr.bf16.mxu0 0
    %5283 = vmatpush2.bf16.msra.mxu0 0
    %5284 = vmatprep.subr.bf16.mxu0 0
    %5285 = vmatpush2.bf16.msra.mxu0 0
    %5286 = vmatprep.subr.bf16.mxu0 0
    %5287 = vmatpush2.bf16.msra.mxu0 0
    %5288 = vmatprep.subr.bf16.mxu0 0
    %5289 = vmatpush2.bf16.msra.mxu0 0
    %5290 = vmatprep.subr.bf16.mxu0 0
    %5291 = vmatpush2.bf16.msra.mxu0 0
    %5292 = vmatprep.subr.bf16.mxu0 0
    %5293 = vmatpush2.bf16.msra.mxu0 0
    %5294 = vmatprep.subr.bf16.mxu0 0
    %5295 = vmatpush2.bf16.msra.mxu0 0
    %5296 = vmatprep.subr.bf16.mxu0 0
    %5297 = vmatpush2.bf16.msra.mxu0 0
    %5298 = vmatprep.mubr.bf16.mxu0 0
    %5299 = vmatmul.mubr.bf16.gmra.mxu0 %v4941
    %v5300 = vpop.f32.mrf.mxu0
    %v5301 = vadd.f32 %v5212, %v5300
    %v5302 = vpop.f32.mrf.mxu0
    %v5303 = vpop.f32.mrf.mxu0
    %v5304 = vadd.f32 %v5215, %v5303
    %v5305 = vpop.f32.mrf.mxu0
    %5306 = vmatprep.mubr.bf16.mxu0 0
    %5307 = vmatmul.mubr.bf16.gmra.mxu0 %v4944
    %v5308 = vpop.f32.mrf.mxu0
    %v5309 = vadd.f32 %v5220, %v5308
    %v5310 = vpop.f32.mrf.mxu0
    %v5311 = vpop.f32.mrf.mxu0
    %v5312 = vadd.f32 %v5223, %v5311
    %v5313 = vpop.f32.mrf.mxu0
    %5314 = vmatprep.mubr.bf16.mxu0 0
    %5315 = vmatmul.mubr.bf16.gmra.mxu0 %v4947
    %v5316 = vpop.f32.mrf.mxu0
    %v5317 = vadd.f32 %v5228, %v5316
    %v5318 = vpop.f32.mrf.mxu0
    %v5319 = vpop.f32.mrf.mxu0
    %v5320 = vadd.f32 %v5231, %v5319
    %v5321 = vpop.f32.mrf.mxu0
    %5322 = vmatprep.mubr.bf16.mxu0 0
    %5323 = vmatmul.mubr.bf16.gmra.mxu0 %v4950
    %v5324 = vpop.f32.mrf.mxu0
    %v5325 = vadd.f32 %v5236, %v5324
    %v5326 = vpop.f32.mrf.mxu0
    %v5327 = vpop.f32.mrf.mxu0
    %v5328 = vadd.f32 %v5239, %v5327
    %v5329 = vpop.f32.mrf.mxu0
    %5330 = vmatprep.mubr.bf16.mxu0 0
    %5331 = vmatmul.mubr.bf16.gmra.mxu0 %v4953
    %v5332 = vpop.f32.mrf.mxu0
    %v5333 = vadd.f32 %v5244, %v5332
    %v5334 = vpop.f32.mrf.mxu0
    %v5335 = vpop.f32.mrf.mxu0
    %v5336 = vadd.f32 %v5247, %v5335
    %v5337 = vpop.f32.mrf.mxu0
    %5338 = vmatprep.mubr.bf16.mxu0 0
    %5339 = vmatmul.mubr.bf16.gmra.mxu0 %v4956
    %v5340 = vpop.f32.mrf.mxu0
    %v5341 = vadd.f32 %v5252, %v5340
    %v5342 = vpop.f32.mrf.mxu0
    %v5343 = vpop.f32.mrf.mxu0
    %v5344 = vadd.f32 %v5255, %v5343
    %v5345 = vpop.f32.mrf.mxu0
    %5346 = vmatprep.mubr.bf16.mxu0 0
    %5347 = vmatmul.mubr.bf16.gmra.mxu0 %v4959
    %v5348 = vpop.f32.mrf.mxu0
    %v5349 = vadd.f32 %v5260, %v5348
    %v5350 = vpop.f32.mrf.mxu0
    %v5351 = vpop.f32.mrf.mxu0
    %v5352 = vadd.f32 %v5263, %v5351
    %v5353 = vpop.f32.mrf.mxu0
    %5354 = vdwg.mxu0
    %v5421 = vunpack.c.l.b16 %v4359
    %v5422 = vunpack.c.h.b16 %v4359
    %v5423 = vunpack.c.l.b16 %v4360
    %v5424 = vunpack.c.l.b16 %v4361
    %v5425 = vunpack.c.h.b16 %v4361
    %v5426 = vunpack.c.l.b16 %v4362
    %v5427 = vunpack.c.l.b16 %v4363
    %v5428 = vunpack.c.h.b16 %v4363
    %v5429 = vunpack.c.l.b16 %v4364
    %v5430 = vunpack.c.l.b16 %v4365
    %v5431 = vunpack.c.h.b16 %v4365
    %v5432 = vunpack.c.l.b16 %v4366
    %v5433 = vunpack.c.l.b16 %v4367
    %v5434 = vunpack.c.h.b16 %v4367
    %v5435 = vunpack.c.l.b16 %v4368
    %v5436 = vunpack.c.l.b16 %v4369
    %v5437 = vunpack.c.h.b16 %v4369
    %v5438 = vunpack.c.l.b16 %v4370
    %v5439 = vunpack.c.l.b16 %v4371
    %v5440 = vunpack.c.h.b16 %v4371
    %v5441 = vunpack.c.l.b16 %v4372
    %v5442 = vunpack.c.l.b16 %v4373
    %v5443 = vunpack.c.h.b16 %v4373
    %v5444 = vunpack.c.l.b16 %v4374
    %v5445 = vunpack.c.l.b16 %v4375
    %v5446 = vunpack.c.h.b16 %v4375
    %v5447 = vunpack.c.l.b16 %v4376
    %v5448 = vunpack.c.l.b16 %v4377
    %v5449 = vunpack.c.h.b16 %v4377
    %v5450 = vunpack.c.l.b16 %v4378
    %v5451 = vunpack.c.l.b16 %v4379
    %v5452 = vunpack.c.h.b16 %v4379
    %v5453 = vunpack.c.l.b16 %v4380
    %v5454 = vunpack.c.l.b16 %v4381
    %v5455 = vunpack.c.h.b16 %v4381
    %v5456 = vunpack.c.l.b16 %v4382
    %v5457 = vunpack.c.l.b16 %v4383
    %v5458 = vunpack.c.h.b16 %v4383
    %v5459 = vunpack.c.l.b16 %v4384
    %v5460 = vunpack.c.l.b16 %v4385
    %v5461 = vunpack.c.h.b16 %v4385
    %v5462 = vunpack.c.l.b16 %v4386
    %v5463 = vunpack.c.l.b16 %v4387
    %v5464 = vunpack.c.h.b16 %v4387
    %v5465 = vunpack.c.l.b16 %v4388
    %v5466 = vunpack.c.l.b16 %v4389
    %v5467 = vunpack.c.h.b16 %v4389
    %v5468 = vunpack.c.l.b16 %v4390
    %v5469 = vunpack.c.l.b16 %v4391
    %v5470 = vunpack.c.h.b16 %v4391
    %v5471 = vunpack.c.l.b16 %v4392
    %v5472 = vunpack.c.l.b16 %v4393
    %v5473 = vunpack.c.h.b16 %v4393
    %v5474 = vunpack.c.l.b16 %v4394
    %v5475 = vunpack.c.l.b16 %v4395
    %v5476 = vunpack.c.h.b16 %v4395
    %v5477 = vunpack.c.l.b16 %v4396
    %v5478 = vunpack.c.l.b16 %v4397
    %v5479 = vunpack.c.h.b16 %v4397
    %v5480 = vunpack.c.l.b16 %v4398
    %v5481 = vunpack.c.l.b16 %v4399
    %v5482 = vunpack.c.h.b16 %v4399
    %v5483 = vunpack.c.l.b16 %v4400
    %v5484 = vunpack.c.l.b16 %v4401
    %v5485 = vunpack.c.h.b16 %v4401
    %v5486 = vunpack.c.l.b16 %v4402
    %v5487 = vunpack.c.l.b16 %v4403
    %v5488 = vunpack.c.h.b16 %v4403
    %v5489 = vunpack.c.l.b16 %v4404
    %v5490 = vunpack.c.l.b16 %v4405
    %v5491 = vunpack.c.h.b16 %v4405
    %v5492 = vunpack.c.l.b16 %v4406
    %v5493 = vunpack.c.l.b16 %v4407
    %v5494 = vunpack.c.h.b16 %v4407
    %v5495 = vunpack.c.l.b16 %v4408
    %v5496 = vunpack.c.l.b16 %v4409
    %v5497 = vunpack.c.h.b16 %v4409
    %v5498 = vunpack.c.l.b16 %v4410
    %v5499 = vunpack.c.l.b16 %v4411
    %v5500 = vunpack.c.h.b16 %v4411
    %v5501 = vunpack.c.l.b16 %v4412
    %v5502 = vunpack.c.l.b16 %v4413
    %v5503 = vunpack.c.h.b16 %v4413
    %v5504 = vunpack.c.l.b16 %v4414
    %v5505 = vunpack.c.l.b16 %v4415
    %v5506 = vunpack.c.h.b16 %v4415
    %v5507 = vunpack.c.l.b16 %v4416
    %v5508 = vunpack.c.l.b16 %v4417
    %v5509 = vunpack.c.h.b16 %v4417
    %v5510 = vunpack.c.l.b16 %v4418
    %v5511 = vunpack.c.l.b16 %v4419
    %v5512 = vunpack.c.h.b16 %v4419
    %v5513 = vunpack.c.l.b16 %v4420
    %v5514 = vunpack.c.l.b16 %v4421
    %v5515 = vunpack.c.h.b16 %v4421
    %v5516 = vunpack.c.l.b16 %v4422
    %v5517 = vunpack.c.l.b16 %v4423
    %v5518 = vunpack.c.h.b16 %v4423
    %v5519 = vunpack.c.l.b16 %v4424
    %v5520 = vpack.c.b16 %v5424, %v5421
    %v5521 = vpack.c.b16 %v5425, %v5422
    %v5522 = vpack.c.b16 %v5426, %v5423
    %v5523 = vpack.c.b16 %v5430, %v5427
    %v5524 = vpack.c.b16 %v5431, %v5428
    %v5525 = vpack.c.b16 %v5432, %v5429
    %v5526 = vpack.c.b16 %v5436, %v5433
    %v5527 = vpack.c.b16 %v5437, %v5434
    %v5528 = vpack.c.b16 %v5438, %v5435
    %v5529 = vpack.c.b16 %v5442, %v5439
    %v5530 = vpack.c.b16 %v5443, %v5440
    %v5531 = vpack.c.b16 %v5444, %v5441
    %v5532 = vpack.c.b16 %v5448, %v5445
    %v5533 = vpack.c.b16 %v5449, %v5446
    %v5534 = vpack.c.b16 %v5450, %v5447
    %v5535 = vpack.c.b16 %v5454, %v5451
    %v5536 = vpack.c.b16 %v5455, %v5452
    %v5537 = vpack.c.b16 %v5456, %v5453
    %v5538 = vpack.c.b16 %v5460, %v5457
    %v5539 = vpack.c.b16 %v5461, %v5458
    %v5540 = vpack.c.b16 %v5462, %v5459
    %v5541 = vpack.c.b16 %v5466, %v5463
    %v5542 = vpack.c.b16 %v5467, %v5464
    %v5543 = vpack.c.b16 %v5468, %v5465
    %v5544 = vpack.c.b16 %v5472, %v5469
    %v5545 = vpack.c.b16 %v5473, %v5470
    %v5546 = vpack.c.b16 %v5474, %v5471
    %v5547 = vpack.c.b16 %v5478, %v5475
    %v5548 = vpack.c.b16 %v5479, %v5476
    %v5549 = vpack.c.b16 %v5480, %v5477
    %v5550 = vpack.c.b16 %v5484, %v5481
    %v5551 = vpack.c.b16 %v5485, %v5482
    %v5552 = vpack.c.b16 %v5486, %v5483
    %v5553 = vpack.c.b16 %v5490, %v5487
    %v5554 = vpack.c.b16 %v5491, %v5488
    %v5555 = vpack.c.b16 %v5492, %v5489
    %v5556 = vpack.c.b16 %v5496, %v5493
    %v5557 = vpack.c.b16 %v5497, %v5494
    %v5558 = vpack.c.b16 %v5498, %v5495
    %v5559 = vpack.c.b16 %v5502, %v5499
    %v5560 = vpack.c.b16 %v5503, %v5500
    %v5561 = vpack.c.b16 %v5504, %v5501
    %v5562 = vpack.c.b16 %v5508, %v5505
    %v5563 = vpack.c.b16 %v5509, %v5506
    %v5564 = vpack.c.b16 %v5510, %v5507
    %v5565 = vpack.c.b16 %v5514, %v5511
    %v5566 = vpack.c.b16 %v5515, %v5512
    %v5567 = vpack.c.b16 %v5516, %v5513
    %v5568 = vpack.c.b16 %v5517, %v5517
    %v5569 = vpack.c.b16 %v5518, %v5518
    %v5570 = vpack.c.b16 %v5519, %v5519
    %v5619 = vsel %vm4939, %v4340, 0
    %v5621 = vsel %vm4939, %v4343, 0
    %v5623 = vsel %vm4939, %v4346, 0
    %v5625 = vsel %vm4939, %v4349, 0
    %v5627 = vsel %vm4939, %v4352, 0
    %v5629 = vsel %vm4939, %v4355, 0
    %v5631 = vsel %vm4939, %v4358, 0
    %v5634 = vsel %vm4961, %v5568, 0
    %v5637 = vsel %vm4961, %v5569, 0
    %v5640 = vsel %vm4961, %v5570, 0
    %5642 = vmatprep.subr.bf16.mxu0 %v5542
    %5643 = vmatpush1.bf16.msra.mxu0 %v5541
    %5644 = vmatprep.subr.bf16.mxu0 %v5539
    %5645 = vmatpush1.bf16.msra.mxu0 %v5538
    %5646 = vmatprep.subr.bf16.mxu0 %v5536
    %5647 = vmatpush1.bf16.msra.mxu0 %v5535
    %5648 = vmatprep.subr.bf16.mxu0 %v5533
    %5649 = vmatpush1.bf16.msra.mxu0 %v5532
    %5650 = vmatprep.subr.bf16.mxu0 %v5530
    %5651 = vmatpush1.bf16.msra.mxu0 %v5529
    %5652 = vmatprep.subr.bf16.mxu0 %v5527
    %5653 = vmatpush1.bf16.msra.mxu0 %v5526
    %5654 = vmatprep.subr.bf16.mxu0 %v5524
    %5655 = vmatpush1.bf16.msra.mxu0 %v5523
    %5656 = vmatprep.subr.bf16.mxu0 %v5521
    %5657 = vmatpush1.bf16.msra.mxu0 %v5520
    %5658 = vmatprep.subr.bf16.mxu0 %v5566
    %5659 = vmatpush2.bf16.msra.mxu0 %v5565
    %5660 = vmatprep.subr.bf16.mxu0 %v5563
    %5661 = vmatpush2.bf16.msra.mxu0 %v5562
    %5662 = vmatprep.subr.bf16.mxu0 %v5560
    %5663 = vmatpush2.bf16.msra.mxu0 %v5559
    %5664 = vmatprep.subr.bf16.mxu0 %v5557
    %5665 = vmatpush2.bf16.msra.mxu0 %v5556
    %5666 = vmatprep.subr.bf16.mxu0 %v5554
    %5667 = vmatpush2.bf16.msra.mxu0 %v5553
    %5668 = vmatprep.subr.bf16.mxu0 %v5551
    %5669 = vmatpush2.bf16.msra.mxu0 %v5550
    %5670 = vmatprep.subr.bf16.mxu0 %v5548
    %5671 = vmatpush2.bf16.msra.mxu0 %v5547
    %5672 = vmatprep.subr.bf16.mxu0 %v5545
    %5673 = vmatpush2.bf16.msra.mxu0 %v5544
    %5674 = vmatprep.mubr.bf16.mxu0 %v4339
    %5675 = vmatmul.mubr.bf16.gmra.mxu0 %v4338
    %v5676 = vpop.f32.mrf.mxu0
    %v5677 = vadd.f32 %v5109, %v5676
    %v5678 = vpop.f32.mrf.mxu0
    %v5679 = vadd.f32 %v5111, %v5678
    %v5680 = vpop.f32.mrf.mxu0
    %v5681 = vadd.f32 %v5113, %v5680
    %v5682 = vpop.f32.mrf.mxu0
    %v5683 = vadd.f32 %v5115, %v5682
    %5684 = vmatprep.mubr.bf16.mxu0 %v4342
    %5685 = vmatmul.mubr.bf16.gmra.mxu0 %v4341
    %v5686 = vpop.f32.mrf.mxu0
    %v5687 = vadd.f32 %v5119, %v5686
    %v5688 = vpop.f32.mrf.mxu0
    %v5689 = vadd.f32 %v5121, %v5688
    %v5690 = vpop.f32.mrf.mxu0
    %v5691 = vadd.f32 %v5123, %v5690
    %v5692 = vpop.f32.mrf.mxu0
    %v5693 = vadd.f32 %v5125, %v5692
    %5694 = vmatprep.mubr.bf16.mxu0 %v4345
    %5695 = vmatmul.mubr.bf16.gmra.mxu0 %v4344
    %v5696 = vpop.f32.mrf.mxu0
    %v5697 = vadd.f32 %v5129, %v5696
    %v5698 = vpop.f32.mrf.mxu0
    %v5699 = vadd.f32 %v5131, %v5698
    %v5700 = vpop.f32.mrf.mxu0
    %v5701 = vadd.f32 %v5133, %v5700
    %v5702 = vpop.f32.mrf.mxu0
    %v5703 = vadd.f32 %v5135, %v5702
    %5704 = vmatprep.mubr.bf16.mxu0 %v4348
    %5705 = vmatmul.mubr.bf16.gmra.mxu0 %v4347
    %v5706 = vpop.f32.mrf.mxu0
    %v5707 = vadd.f32 %v5139, %v5706
    %v5708 = vpop.f32.mrf.mxu0
    %v5709 = vadd.f32 %v5141, %v5708
    %v5710 = vpop.f32.mrf.mxu0
    %v5711 = vadd.f32 %v5143, %v5710
    %v5712 = vpop.f32.mrf.mxu0
    %v5713 = vadd.f32 %v5145, %v5712
    %5714 = vmatprep.mubr.bf16.mxu0 %v4351
    %5715 = vmatmul.mubr.bf16.gmra.mxu0 %v4350
    %v5716 = vpop.f32.mrf.mxu0
    %v5717 = vadd.f32 %v5149, %v5716
    %v5718 = vpop.f32.mrf.mxu0
    %v5719 = vadd.f32 %v5151, %v5718
    %v5720 = vpop.f32.mrf.mxu0
    %v5721 = vadd.f32 %v5153, %v5720
    %v5722 = vpop.f32.mrf.mxu0
    %v5723 = vadd.f32 %v5155, %v5722
    %5724 = vmatprep.mubr.bf16.mxu0 %v4354
    %5725 = vmatmul.mubr.bf16.gmra.mxu0 %v4353
    %v5726 = vpop.f32.mrf.mxu0
    %v5727 = vadd.f32 %v5159, %v5726
    %v5728 = vpop.f32.mrf.mxu0
    %v5729 = vadd.f32 %v5161, %v5728
    %v5730 = vpop.f32.mrf.mxu0
    %v5731 = vadd.f32 %v5163, %v5730
    %v5732 = vpop.f32.mrf.mxu0
    %v5733 = vadd.f32 %v5165, %v5732
    %5734 = vmatprep.mubr.bf16.mxu0 %v4357
    %5735 = vmatmul.mubr.bf16.gmra.mxu0 %v4356
    %v5736 = vpop.f32.mrf.mxu0
    %v5737 = vadd.f32 %v5169, %v5736
    %v5738 = vpop.f32.mrf.mxu0
    %v5739 = vadd.f32 %v5171, %v5738
    %v5740 = vpop.f32.mrf.mxu0
    %v5741 = vadd.f32 %v5173, %v5740
    %v5742 = vpop.f32.mrf.mxu0
    %v5743 = vadd.f32 %v5175, %v5742
    %5744 = vdwg.mxu0
    %5745 = vmatprep.subr.bf16.mxu0 0
    %5746 = vmatpush1.bf16.msra.mxu0 0
    %5747 = vmatprep.subr.bf16.mxu0 0
    %5748 = vmatpush1.bf16.msra.mxu0 0
    %5749 = vmatprep.subr.bf16.mxu0 0
    %5750 = vmatpush1.bf16.msra.mxu0 0
    %5751 = vmatprep.subr.bf16.mxu0 0
    %5752 = vmatpush1.bf16.msra.mxu0 0
    %5753 = vmatprep.subr.bf16.mxu0 0
    %5754 = vmatpush1.bf16.msra.mxu0 0
    %5755 = vmatprep.subr.bf16.mxu0 0
    %5756 = vmatpush1.bf16.msra.mxu0 0
    %5757 = vmatprep.subr.bf16.mxu0 0
    %5758 = vmatpush1.bf16.msra.mxu0 0
    %5759 = vmatprep.subr.bf16.mxu0 %v5637
    %5760 = vmatpush1.bf16.msra.mxu0 %v5634
    %5761 = vmatprep.subr.bf16.mxu0 0
    %5762 = vmatpush2.bf16.msra.mxu0 0
    %5763 = vmatprep.subr.bf16.mxu0 0
    %5764 = vmatpush2.bf16.msra.mxu0 0
    %5765 = vmatprep.subr.bf16.mxu0 0
    %5766 = vmatpush2.bf16.msra.mxu0 0
    %5767 = vmatprep.subr.bf16.mxu0 0
    %5768 = vmatpush2.bf16.msra.mxu0 0
    %5769 = vmatprep.subr.bf16.mxu0 0
    %5770 = vmatpush2.bf16.msra.mxu0 0
    %5771 = vmatprep.subr.bf16.mxu0 0
    %5772 = vmatpush2.bf16.msra.mxu0 0
    %5773 = vmatprep.subr.bf16.mxu0 0
    %5774 = vmatpush2.bf16.msra.mxu0 0
    %5775 = vmatprep.subr.bf16.mxu0 0
    %5776 = vmatpush2.bf16.msra.mxu0 0
    %5777 = vmatprep.mubr.bf16.mxu0 0
    %5778 = vmatmul.mubr.bf16.gmra.mxu0 %v5619
    %v5779 = vpop.f32.mrf.mxu0
    %v5780 = vadd.f32 %v5677, %v5779
    %v5781 = vpop.f32.mrf.mxu0
    %v5782 = vadd.f32 %v5679, %v5781
    %v5783 = vpop.f32.mrf.mxu0
    %v5784 = vadd.f32 %v5681, %v5783
    %v5785 = vpop.f32.mrf.mxu0
    %v5786 = vadd.f32 %v5683, %v5785
    %5787 = vmatprep.mubr.bf16.mxu0 0
    %5788 = vmatmul.mubr.bf16.gmra.mxu0 %v5621
    %v5789 = vpop.f32.mrf.mxu0
    %v5790 = vadd.f32 %v5687, %v5789
    %v5791 = vpop.f32.mrf.mxu0
    %v5792 = vadd.f32 %v5689, %v5791
    %v5793 = vpop.f32.mrf.mxu0
    %v5794 = vadd.f32 %v5691, %v5793
    %v5795 = vpop.f32.mrf.mxu0
    %v5796 = vadd.f32 %v5693, %v5795
    %5797 = vmatprep.mubr.bf16.mxu0 0
    %5798 = vmatmul.mubr.bf16.gmra.mxu0 %v5623
    %v5799 = vpop.f32.mrf.mxu0
    %v5800 = vadd.f32 %v5697, %v5799
    %v5801 = vpop.f32.mrf.mxu0
    %v5802 = vadd.f32 %v5699, %v5801
    %v5803 = vpop.f32.mrf.mxu0
    %v5804 = vadd.f32 %v5701, %v5803
    %v5805 = vpop.f32.mrf.mxu0
    %v5806 = vadd.f32 %v5703, %v5805
    %5807 = vmatprep.mubr.bf16.mxu0 0
    %5808 = vmatmul.mubr.bf16.gmra.mxu0 %v5625
    %v5809 = vpop.f32.mrf.mxu0
    %v5810 = vadd.f32 %v5707, %v5809
    %v5811 = vpop.f32.mrf.mxu0
    %v5812 = vadd.f32 %v5709, %v5811
    %v5813 = vpop.f32.mrf.mxu0
    %v5814 = vadd.f32 %v5711, %v5813
    %v5815 = vpop.f32.mrf.mxu0
    %v5816 = vadd.f32 %v5713, %v5815
    %5817 = vmatprep.mubr.bf16.mxu0 0
    %5818 = vmatmul.mubr.bf16.gmra.mxu0 %v5627
    %v5819 = vpop.f32.mrf.mxu0
    %v5820 = vadd.f32 %v5717, %v5819
    %v5821 = vpop.f32.mrf.mxu0
    %v5822 = vadd.f32 %v5719, %v5821
    %v5823 = vpop.f32.mrf.mxu0
    %v5824 = vadd.f32 %v5721, %v5823
    %v5825 = vpop.f32.mrf.mxu0
    %v5826 = vadd.f32 %v5723, %v5825
    %5827 = vmatprep.mubr.bf16.mxu0 0
    %5828 = vmatmul.mubr.bf16.gmra.mxu0 %v5629
    %v5829 = vpop.f32.mrf.mxu0
    %v5830 = vadd.f32 %v5727, %v5829
    %v5831 = vpop.f32.mrf.mxu0
    %v5832 = vadd.f32 %v5729, %v5831
    %v5833 = vpop.f32.mrf.mxu0
    %v5834 = vadd.f32 %v5731, %v5833
    %v5835 = vpop.f32.mrf.mxu0
    %v5836 = vadd.f32 %v5733, %v5835
    %5837 = vmatprep.mubr.bf16.mxu0 0
    %5838 = vmatmul.mubr.bf16.gmra.mxu0 %v5631
    %v5839 = vpop.f32.mrf.mxu0
    %v5840 = vadd.f32 %v5737, %v5839
    %v5841 = vpop.f32.mrf.mxu0
    %v5842 = vadd.f32 %v5739, %v5841
    %v5843 = vpop.f32.mrf.mxu0
    %v5844 = vadd.f32 %v5741, %v5843
    %v5845 = vpop.f32.mrf.mxu0
    %v5846 = vadd.f32 %v5743, %v5845
    %5847 = vdwg.mxu0
    %5848 = vmatprep.subr.bf16.mxu0 0
    %5849 = vmatpush1.bf16.msra.mxu0 %v5543
    %5850 = vmatprep.subr.bf16.mxu0 0
    %5851 = vmatpush1.bf16.msra.mxu0 %v5540
    %5852 = vmatprep.subr.bf16.mxu0 0
    %5853 = vmatpush1.bf16.msra.mxu0 %v5537
    %5854 = vmatprep.subr.bf16.mxu0 0
    %5855 = vmatpush1.bf16.msra.mxu0 %v5534
    %5856 = vmatprep.subr.bf16.mxu0 0
    %5857 = vmatpush1.bf16.msra.mxu0 %v5531
    %5858 = vmatprep.subr.bf16.mxu0 0
    %5859 = vmatpush1.bf16.msra.mxu0 %v5528
    %5860 = vmatprep.subr.bf16.mxu0 0
    %5861 = vmatpush1.bf16.msra.mxu0 %v5525
    %5862 = vmatprep.subr.bf16.mxu0 0
    %5863 = vmatpush1.bf16.msra.mxu0 %v5522
    %5864 = vmatprep.subr.bf16.mxu0 0
    %5865 = vmatpush2.bf16.msra.mxu0 %v5567
    %5866 = vmatprep.subr.bf16.mxu0 0
    %5867 = vmatpush2.bf16.msra.mxu0 %v5564
    %5868 = vmatprep.subr.bf16.mxu0 0
    %5869 = vmatpush2.bf16.msra.mxu0 %v5561
    %5870 = vmatprep.subr.bf16.mxu0 0
    %5871 = vmatpush2.bf16.msra.mxu0 %v5558
    %5872 = vmatprep.subr.bf16.mxu0 0
    %5873 = vmatpush2.bf16.msra.mxu0 %v5555
    %5874 = vmatprep.subr.bf16.mxu0 0
    %5875 = vmatpush2.bf16.msra.mxu0 %v5552
    %5876 = vmatprep.subr.bf16.mxu0 0
    %5877 = vmatpush2.bf16.msra.mxu0 %v5549
    %5878 = vmatprep.subr.bf16.mxu0 0
    %5879 = vmatpush2.bf16.msra.mxu0 %v5546
    %5880 = vmatprep.mubr.bf16.mxu0 %v4339
    %5881 = vmatmul.mubr.bf16.gmra.mxu0 %v4338
    %v5882 = vpop.f32.mrf.mxu0
    %v5883 = vadd.f32 %v5301, %v5882
    %v5884 = vpop.f32.mrf.mxu0
    %v5885 = vpop.f32.mrf.mxu0
    %v5886 = vadd.f32 %v5304, %v5885
    %v5887 = vpop.f32.mrf.mxu0
    %5888 = vmatprep.mubr.bf16.mxu0 %v4342
    %5889 = vmatmul.mubr.bf16.gmra.mxu0 %v4341
    %v5890 = vpop.f32.mrf.mxu0
    %v5891 = vadd.f32 %v5309, %v5890
    %v5892 = vpop.f32.mrf.mxu0
    %v5893 = vpop.f32.mrf.mxu0
    %v5894 = vadd.f32 %v5312, %v5893
    %v5895 = vpop.f32.mrf.mxu0
    %5896 = vmatprep.mubr.bf16.mxu0 %v4345
    %5897 = vmatmul.mubr.bf16.gmra.mxu0 %v4344
    %v5898 = vpop.f32.mrf.mxu0
    %v5899 = vadd.f32 %v5317, %v5898
    %v5900 = vpop.f32.mrf.mxu0
    %v5901 = vpop.f32.mrf.mxu0
    %v5902 = vadd.f32 %v5320, %v5901
    %v5903 = vpop.f32.mrf.mxu0
    %5904 = vmatprep.mubr.bf16.mxu0 %v4348
    %5905 = vmatmul.mubr.bf16.gmra.mxu0 %v4347
    %v5906 = vpop.f32.mrf.mxu0
    %v5907 = vadd.f32 %v5325, %v5906
    %v5908 = vpop.f32.mrf.mxu0
    %v5909 = vpop.f32.mrf.mxu0
    %v5910 = vadd.f32 %v5328, %v5909
    %v5911 = vpop.f32.mrf.mxu0
    %5912 = vmatprep.mubr.bf16.mxu0 %v4351
    %5913 = vmatmul.mubr.bf16.gmra.mxu0 %v4350
    %v5914 = vpop.f32.mrf.mxu0
    %v5915 = vadd.f32 %v5333, %v5914
    %v5916 = vpop.f32.mrf.mxu0
    %v5917 = vpop.f32.mrf.mxu0
    %v5918 = vadd.f32 %v5336, %v5917
    %v5919 = vpop.f32.mrf.mxu0
    %5920 = vmatprep.mubr.bf16.mxu0 %v4354
    %5921 = vmatmul.mubr.bf16.gmra.mxu0 %v4353
    %v5922 = vpop.f32.mrf.mxu0
    %v5923 = vadd.f32 %v5341, %v5922
    %v5924 = vpop.f32.mrf.mxu0
    %v5925 = vpop.f32.mrf.mxu0
    %v5926 = vadd.f32 %v5344, %v5925
    %v5927 = vpop.f32.mrf.mxu0
    %5928 = vmatprep.mubr.bf16.mxu0 %v4357
    %5929 = vmatmul.mubr.bf16.gmra.mxu0 %v4356
    %v5930 = vpop.f32.mrf.mxu0
    %v5931 = vadd.f32 %v5349, %v5930
    %v5932 = vpop.f32.mrf.mxu0
    %v5933 = vpop.f32.mrf.mxu0
    %v5934 = vadd.f32 %v5352, %v5933
    %v5935 = vpop.f32.mrf.mxu0
    %5936 = vdwg.mxu0
    %5937 = vmatprep.subr.bf16.mxu0 0
    %5938 = vmatpush1.bf16.msra.mxu0 0
    %5939 = vmatprep.subr.bf16.mxu0 0
    %5940 = vmatpush1.bf16.msra.mxu0 0
    %5941 = vmatprep.subr.bf16.mxu0 0
    %5942 = vmatpush1.bf16.msra.mxu0 0
    %5943 = vmatprep.subr.bf16.mxu0 0
    %5944 = vmatpush1.bf16.msra.mxu0 0
    %5945 = vmatprep.subr.bf16.mxu0 0
    %5946 = vmatpush1.bf16.msra.mxu0 0
    %5947 = vmatprep.subr.bf16.mxu0 0
    %5948 = vmatpush1.bf16.msra.mxu0 0
    %5949 = vmatprep.subr.bf16.mxu0 0
    %5950 = vmatpush1.bf16.msra.mxu0 0
    %5951 = vmatprep.subr.bf16.mxu0 0
    %5952 = vmatpush1.bf16.msra.mxu0 %v5640
    %5953 = vmatprep.subr.bf16.mxu0 0
    %5954 = vmatpush2.bf16.msra.mxu0 0
    %5955 = vmatprep.subr.bf16.mxu0 0
    %5956 = vmatpush2.bf16.msra.mxu0 0
    %5957 = vmatprep.subr.bf16.mxu0 0
    %5958 = vmatpush2.bf16.msra.mxu0 0
    %5959 = vmatprep.subr.bf16.mxu0 0
    %5960 = vmatpush2.bf16.msra.mxu0 0
    %5961 = vmatprep.subr.bf16.mxu0 0
    %5962 = vmatpush2.bf16.msra.mxu0 0
    %5963 = vmatprep.subr.bf16.mxu0 0
    %5964 = vmatpush2.bf16.msra.mxu0 0
    %5965 = vmatprep.subr.bf16.mxu0 0
    %5966 = vmatpush2.bf16.msra.mxu0 0
    %5967 = vmatprep.subr.bf16.mxu0 0
    %5968 = vmatpush2.bf16.msra.mxu0 0
    %5969 = vmatprep.mubr.bf16.mxu0 0
    %5970 = vmatmul.mubr.bf16.gmra.mxu0 %v5619
    %v5971 = vpop.f32.mrf.mxu0
    %v5972 = vadd.f32 %v5883, %v5971
    %v5973 = vpop.f32.mrf.mxu0
    %v5974 = vpop.f32.mrf.mxu0
    %v5975 = vadd.f32 %v5886, %v5974
    %v5976 = vpop.f32.mrf.mxu0
    %5977 = vmatprep.mubr.bf16.mxu0 0
    %5978 = vmatmul.mubr.bf16.gmra.mxu0 %v5621
    %v5979 = vpop.f32.mrf.mxu0
    %v5980 = vadd.f32 %v5891, %v5979
    %v5981 = vpop.f32.mrf.mxu0
    %v5982 = vpop.f32.mrf.mxu0
    %v5983 = vadd.f32 %v5894, %v5982
    %v5984 = vpop.f32.mrf.mxu0
    %5985 = vmatprep.mubr.bf16.mxu0 0
    %5986 = vmatmul.mubr.bf16.gmra.mxu0 %v5623
    %v5987 = vpop.f32.mrf.mxu0
    %v5988 = vadd.f32 %v5899, %v5987
    %v5989 = vpop.f32.mrf.mxu0
    %v5990 = vpop.f32.mrf.mxu0
    %v5991 = vadd.f32 %v5902, %v5990
    %v5992 = vpop.f32.mrf.mxu0
    %5993 = vmatprep.mubr.bf16.mxu0 0
    %5994 = vmatmul.mubr.bf16.gmra.mxu0 %v5625
    %v5995 = vpop.f32.mrf.mxu0
    %v5996 = vadd.f32 %v5907, %v5995
    %v5997 = vpop.f32.mrf.mxu0
    %v5998 = vpop.f32.mrf.mxu0
    %v5999 = vadd.f32 %v5910, %v5998
    %v6000 = vpop.f32.mrf.mxu0
    %6001 = vmatprep.mubr.bf16.mxu0 0
    %6002 = vmatmul.mubr.bf16.gmra.mxu0 %v5627
    %v6003 = vpop.f32.mrf.mxu0
    %v6004 = vadd.f32 %v5915, %v6003
    %v6005 = vpop.f32.mrf.mxu0
    %v6006 = vpop.f32.mrf.mxu0
    %v6007 = vadd.f32 %v5918, %v6006
    %v6008 = vpop.f32.mrf.mxu0
    %6009 = vmatprep.mubr.bf16.mxu0 0
    %6010 = vmatmul.mubr.bf16.gmra.mxu0 %v5629
    %v6011 = vpop.f32.mrf.mxu0
    %v6012 = vadd.f32 %v5923, %v6011
    %v6013 = vpop.f32.mrf.mxu0
    %v6014 = vpop.f32.mrf.mxu0
    %v6015 = vadd.f32 %v5926, %v6014
    %v6016 = vpop.f32.mrf.mxu0
    %6017 = vmatprep.mubr.bf16.mxu0 0
    %6018 = vmatmul.mubr.bf16.gmra.mxu0 %v5631
    %v6019 = vpop.f32.mrf.mxu0
    %v6020 = vadd.f32 %v5931, %v6019
    %v6021 = vpop.f32.mrf.mxu0
    %v6022 = vpop.f32.mrf.mxu0
    %v6023 = vadd.f32 %v5934, %v6022
    %v6024 = vpop.f32.mrf.mxu0
    %6025 = vdwg.mxu0
    %vm6047 = vcmask 1046528
    %v6048 = vrot.slane %v4338, 1
    %v6049 = vrot.slane %v4341, 1
    %v6050 = vsel %vm6047, %v6048, %v6049
    %v6051 = vrot.slane %v4339, 1
    %v6052 = vrot.slane %v4342, 1
    %v6053 = vsel %vm6047, %v6051, %v6052
    %v6054 = vrot.slane %v4340, 1
    %v6055 = vrot.slane %v4343, 1
    %v6056 = vsel %vm6047, %v6054, %v6055
    %v6057 = vrot.slane %v4344, 1
    %v6058 = vsel %vm6047, %v6049, %v6057
    %v6059 = vrot.slane %v4345, 1
    %v6060 = vsel %vm6047, %v6052, %v6059
    %v6061 = vrot.slane %v4346, 1
    %v6062 = vsel %vm6047, %v6055, %v6061
    %v6063 = vrot.slane %v4347, 1
    %v6064 = vsel %vm6047, %v6057, %v6063
    %v6065 = vrot.slane %v4348, 1
    %v6066 = vsel %vm6047, %v6059, %v6065
    %v6067 = vrot.slane %v4349, 1
    %v6068 = vsel %vm6047, %v6061, %v6067
    %v6069 = vrot.slane %v4350, 1
    %v6070 = vsel %vm6047, %v6063, %v6069
    %v6071 = vrot.slane %v4351, 1
    %v6072 = vsel %vm6047, %v6065, %v6071
    %v6073 = vrot.slane %v4352, 1
    %v6074 = vsel %vm6047, %v6067, %v6073
    %v6075 = vrot.slane %v4353, 1
    %v6076 = vsel %vm6047, %v6069, %v6075
    %v6077 = vrot.slane %v4354, 1
    %v6078 = vsel %vm6047, %v6071, %v6077
    %v6079 = vrot.slane %v4355, 1
    %v6080 = vsel %vm6047, %v6073, %v6079
    %v6081 = vrot.slane %v4356, 1
    %v6082 = vsel %vm6047, %v6075, %v6081
    %v6083 = vrot.slane %v4357, 1
    %v6084 = vsel %vm6047, %v6077, %v6083
    %v6085 = vrot.slane %v4358, 1
    %v6086 = vsel %vm6047, %v6079, %v6085
    %vm6099 = vcmask 1046528
    %v6101 = vsel %vm6099, %v6081, 0
    %v6104 = vsel %vm6099, %v6083, 0
    %v6107 = vsel %vm6099, %v6085, 0
    %s6108 = scalar_lea.vmem %s4, 792
    %v6109 = vld [vmem:[%s6108] sm:$0xff]
    %v6110 = vld [vmem:[%s6108 + $0x8] sm:$0xf]
    %v6111 = vld [vmem:[%s6108 + $0xc] sm:$0xff]
    %v6112 = vld [vmem:[%s6108 + $0x14] sm:$0xf]
    %v6113 = vld [vmem:[%s6108 + $0x18] sm:$0xff]
    %v6114 = vld [vmem:[%s6108 + $0x20] sm:$0xf]
    %v6115 = vld [vmem:[%s6108 + $0x24] sm:$0xff]
    %v6116 = vld [vmem:[%s6108 + $0x2c] sm:$0xf]
    %v6117 = vld [vmem:[%s6108 + $0x30] sm:$0xff]
    %v6118 = vld [vmem:[%s6108 + $0x38] sm:$0xf]
    %v6119 = vld [vmem:[%s6108 + $0x3c] sm:$0xff]
    %v6120 = vld [vmem:[%s6108 + $0x44] sm:$0xf]
    %v6121 = vld [vmem:[%s6108 + $0x48] sm:$0xff]
    %v6122 = vld [vmem:[%s6108 + $0x50] sm:$0xf]
    %v6123 = vld [vmem:[%s6108 + $0x54] sm:$0xff]
    %v6124 = vld [vmem:[%s6108 + $0x5c] sm:$0xf]
    %v6125 = vld [vmem:[%s6108 + $0x60] sm:$0xff]
    %v6126 = vld [vmem:[%s6108 + $0x68] sm:$0xf]
    %v6127 = vld [vmem:[%s6108 + $0x6c] sm:$0xff]
    %v6128 = vld [vmem:[%s6108 + $0x74] sm:$0xf]
    %v6129 = vld [vmem:[%s6108 + $0x78] sm:$0xff]
    %v6130 = vld [vmem:[%s6108 + $0x80] sm:$0xf]
    %v6131 = vld [vmem:[%s6108 + $0x84] sm:$0xff]
    %v6132 = vld [vmem:[%s6108 + $0x8c] sm:$0xf]
    %v6133 = vld [vmem:[%s6108 + $0x90] sm:$0xff]
    %v6134 = vld [vmem:[%s6108 + $0x98] sm:$0xf]
    %v6135 = vld [vmem:[%s6108 + $0x9c] sm:$0xff]
    %v6136 = vld [vmem:[%s6108 + $0xa4] sm:$0xf]
    %v6137 = vld [vmem:[%s6108 + $0xa8] sm:$0xff]
    %v6138 = vld [vmem:[%s6108 + $0xb0] sm:$0xf]
    %v6139 = vld [vmem:[%s6108 + $0xb4] sm:$0xff]
    %v6140 = vld [vmem:[%s6108 + $0xbc] sm:$0xf]
    %v6141 = vld [vmem:[%s6108 + $0xc0] sm:$0xff]
    %v6142 = vld [vmem:[%s6108 + $0xc8] sm:$0xf]
    %v6143 = vld [vmem:[%s6108 + $0xcc] sm:$0xff]
    %v6144 = vld [vmem:[%s6108 + $0xd4] sm:$0xf]
    %v6145 = vld [vmem:[%s6108 + $0xd8] sm:$0xff]
    %v6146 = vld [vmem:[%s6108 + $0xe0] sm:$0xf]
    %v6147 = vld [vmem:[%s6108 + $0xe4] sm:$0xff]
    %v6148 = vld [vmem:[%s6108 + $0xec] sm:$0xf]
    %v6149 = vld [vmem:[%s6108 + $0xf0] sm:$0xff]
    %v6150 = vld [vmem:[%s6108 + $0xf8] sm:$0xf]
    %v6151 = vld [vmem:[%s6108 + $0xfc] sm:$0xff]
    %v6152 = vld [vmem:[%s6108 + $0x104] sm:$0xf]
    %v6153 = vld [vmem:[%s6108 + $0x108] sm:$0xff]
    %v6154 = vld [vmem:[%s6108 + $0x110] sm:$0xf]
    %v6155 = vld [vmem:[%s6108 + $0x114] sm:$0xff]
    %v6156 = vld [vmem:[%s6108 + $0x11c] sm:$0xf]
    %v6157 = vld [vmem:[%s6108 + $0x120] sm:$0xff]
    %v6158 = vld [vmem:[%s6108 + $0x128] sm:$0xf]
    %v6159 = vld [vmem:[%s6108 + $0x12c] sm:$0xff]
    %v6160 = vld [vmem:[%s6108 + $0x134] sm:$0xf]
    %v6161 = vld [vmem:[%s6108 + $0x138] sm:$0xff]
    %v6162 = vld [vmem:[%s6108 + $0x140] sm:$0xf]
    %v6163 = vld [vmem:[%s6108 + $0x144] sm:$0xff]
    %v6164 = vld [vmem:[%s6108 + $0x14c] sm:$0xf]
    %v6165 = vld [vmem:[%s6108 + $0x150] sm:$0xff]
    %v6166 = vld [vmem:[%s6108 + $0x158] sm:$0xf]
    %v6167 = vld [vmem:[%s6108 + $0x15c] sm:$0xff]
    %v6168 = vld [vmem:[%s6108 + $0x164] sm:$0xf]
    %v6169 = vld [vmem:[%s6108 + $0x168] sm:$0xff]
    %v6170 = vld [vmem:[%s6108 + $0x170] sm:$0xf]
    %v6171 = vld [vmem:[%s6108 + $0x174] sm:$0xff]
    %v6172 = vld [vmem:[%s6108 + $0x17c] sm:$0xf]
    %v6173 = vld [vmem:[%s6108 + $0x180] sm:$0x33]
    %v6174 = vld [vmem:[%s6108 + $0x188] sm:$0x3]
    %v6241 = vunpack.c.l.b16 %v6109
    %v6242 = vunpack.c.h.b16 %v6109
    %v6243 = vunpack.c.l.b16 %v6110
    %v6244 = vunpack.c.l.b16 %v6111
    %v6245 = vunpack.c.h.b16 %v6111
    %v6246 = vunpack.c.l.b16 %v6112
    %v6247 = vunpack.c.l.b16 %v6113
    %v6248 = vunpack.c.h.b16 %v6113
    %v6249 = vunpack.c.l.b16 %v6114
    %v6250 = vunpack.c.l.b16 %v6115
    %v6251 = vunpack.c.h.b16 %v6115
    %v6252 = vunpack.c.l.b16 %v6116
    %v6253 = vunpack.c.l.b16 %v6117
    %v6254 = vunpack.c.h.b16 %v6117
    %v6255 = vunpack.c.l.b16 %v6118
    %v6256 = vunpack.c.l.b16 %v6119
    %v6257 = vunpack.c.h.b16 %v6119
    %v6258 = vunpack.c.l.b16 %v6120
    %v6259 = vunpack.c.l.b16 %v6121
    %v6260 = vunpack.c.h.b16 %v6121
    %v6261 = vunpack.c.l.b16 %v6122
    %v6262 = vunpack.c.l.b16 %v6123
    %v6263 = vunpack.c.h.b16 %v6123
    %v6264 = vunpack.c.l.b16 %v6124
    %v6265 = vunpack.c.l.b16 %v6125
    %v6266 = vunpack.c.h.b16 %v6125
    %v6267 = vunpack.c.l.b16 %v6126
    %v6268 = vunpack.c.l.b16 %v6127
    %v6269 = vunpack.c.h.b16 %v6127
    %v6270 = vunpack.c.l.b16 %v6128
    %v6271 = vunpack.c.l.b16 %v6129
    %v6272 = vunpack.c.h.b16 %v6129
    %v6273 = vunpack.c.l.b16 %v6130
    %v6274 = vunpack.c.l.b16 %v6131
    %v6275 = vunpack.c.h.b16 %v6131
    %v6276 = vunpack.c.l.b16 %v6132
    %v6277 = vunpack.c.l.b16 %v6133
    %v6278 = vunpack.c.h.b16 %v6133
    %v6279 = vunpack.c.l.b16 %v6134
    %v6280 = vunpack.c.l.b16 %v6135
    %v6281 = vunpack.c.h.b16 %v6135
    %v6282 = vunpack.c.l.b16 %v6136
    %v6283 = vunpack.c.l.b16 %v6137
    %v6284 = vunpack.c.h.b16 %v6137
    %v6285 = vunpack.c.l.b16 %v6138
    %v6286 = vunpack.c.l.b16 %v6139
    %v6287 = vunpack.c.h.b16 %v6139
    %v6288 = vunpack.c.l.b16 %v6140
    %v6289 = vunpack.c.l.b16 %v6141
    %v6290 = vunpack.c.h.b16 %v6141
    %v6291 = vunpack.c.l.b16 %v6142
    %v6292 = vunpack.c.l.b16 %v6143
    %v6293 = vunpack.c.h.b16 %v6143
    %v6294 = vunpack.c.l.b16 %v6144
    %v6295 = vunpack.c.l.b16 %v6145
    %v6296 = vunpack.c.h.b16 %v6145
    %v6297 = vunpack.c.l.b16 %v6146
    %v6298 = vunpack.c.l.b16 %v6147
    %v6299 = vunpack.c.h.b16 %v6147
    %v6300 = vunpack.c.l.b16 %v6148
    %v6301 = vunpack.c.l.b16 %v6149
    %v6302 = vunpack.c.h.b16 %v6149
    %v6303 = vunpack.c.l.b16 %v6150
    %v6304 = vunpack.c.l.b16 %v6151
    %v6305 = vunpack.c.h.b16 %v6151
    %v6306 = vunpack.c.l.b16 %v6152
    %v6307 = vunpack.c.l.b16 %v6153
    %v6308 = vunpack.c.h.b16 %v6153
    %v6309 = vunpack.c.l.b16 %v6154
    %v6310 = vunpack.c.l.b16 %v6155
    %v6311 = vunpack.c.h.b16 %v6155
    %v6312 = vunpack.c.l.b16 %v6156
    %v6313 = vunpack.c.l.b16 %v6157
    %v6314 = vunpack.c.h.b16 %v6157
    %v6315 = vunpack.c.l.b16 %v6158
    %v6316 = vunpack.c.l.b16 %v6159
    %v6317 = vunpack.c.h.b16 %v6159
    %v6318 = vunpack.c.l.b16 %v6160
    %v6319 = vunpack.c.l.b16 %v6161
    %v6320 = vunpack.c.h.b16 %v6161
    %v6321 = vunpack.c.l.b16 %v6162
    %v6322 = vunpack.c.l.b16 %v6163
    %v6323 = vunpack.c.h.b16 %v6163
    %v6324 = vunpack.c.l.b16 %v6164
    %v6325 = vunpack.c.l.b16 %v6165
    %v6326 = vunpack.c.h.b16 %v6165
    %v6327 = vunpack.c.l.b16 %v6166
    %v6328 = vunpack.c.l.b16 %v6167
    %v6329 = vunpack.c.h.b16 %v6167
    %v6330 = vunpack.c.l.b16 %v6168
    %v6331 = vunpack.c.l.b16 %v6169
    %v6332 = vunpack.c.h.b16 %v6169
    %v6333 = vunpack.c.l.b16 %v6170
    %v6334 = vunpack.c.l.b16 %v6171
    %v6335 = vunpack.c.h.b16 %v6171
    %v6336 = vunpack.c.l.b16 %v6172
    %v6337 = vunpack.c.l.b16 %v6173
    %v6338 = vunpack.c.h.b16 %v6173
    %v6339 = vunpack.c.l.b16 %v6174
    %v6340 = vpack.c.b16 %v6244, %v6241
    %v6341 = vpack.c.b16 %v6245, %v6242
    %v6342 = vpack.c.b16 %v6246, %v6243
    %v6343 = vpack.c.b16 %v6250, %v6247
    %v6344 = vpack.c.b16 %v6251, %v6248
    %v6345 = vpack.c.b16 %v6252, %v6249
    %v6346 = vpack.c.b16 %v6256, %v6253
    %v6347 = vpack.c.b16 %v6257, %v6254
    %v6348 = vpack.c.b16 %v6258, %v6255
    %v6349 = vpack.c.b16 %v6262, %v6259
    %v6350 = vpack.c.b16 %v6263, %v6260
    %v6351 = vpack.c.b16 %v6264, %v6261
    %v6352 = vpack.c.b16 %v6268, %v6265
    %v6353 = vpack.c.b16 %v6269, %v6266
    %v6354 = vpack.c.b16 %v6270, %v6267
    %v6355 = vpack.c.b16 %v6274, %v6271
    %v6356 = vpack.c.b16 %v6275, %v6272
    %v6357 = vpack.c.b16 %v6276, %v6273
    %v6358 = vpack.c.b16 %v6280, %v6277
    %v6359 = vpack.c.b16 %v6281, %v6278
    %v6360 = vpack.c.b16 %v6282, %v6279
    %v6361 = vpack.c.b16 %v6286, %v6283
    %v6362 = vpack.c.b16 %v6287, %v6284
    %v6363 = vpack.c.b16 %v6288, %v6285
    %v6364 = vpack.c.b16 %v6292, %v6289
    %v6365 = vpack.c.b16 %v6293, %v6290
    %v6366 = vpack.c.b16 %v6294, %v6291
    %v6367 = vpack.c.b16 %v6298, %v6295
    %v6368 = vpack.c.b16 %v6299, %v6296
    %v6369 = vpack.c.b16 %v6300, %v6297
    %v6370 = vpack.c.b16 %v6304, %v6301
    %v6371 = vpack.c.b16 %v6305, %v6302
    %v6372 = vpack.c.b16 %v6306, %v6303
    %v6373 = vpack.c.b16 %v6310, %v6307
    %v6374 = vpack.c.b16 %v6311, %v6308
    %v6375 = vpack.c.b16 %v6312, %v6309
    %v6376 = vpack.c.b16 %v6316, %v6313
    %v6377 = vpack.c.b16 %v6317, %v6314
    %v6378 = vpack.c.b16 %v6318, %v6315
    %v6379 = vpack.c.b16 %v6322, %v6319
    %v6380 = vpack.c.b16 %v6323, %v6320
    %v6381 = vpack.c.b16 %v6324, %v6321
    %v6382 = vpack.c.b16 %v6328, %v6325
    %v6383 = vpack.c.b16 %v6329, %v6326
    %v6384 = vpack.c.b16 %v6330, %v6327
    %v6385 = vpack.c.b16 %v6334, %v6331
    %v6386 = vpack.c.b16 %v6335, %v6332
    %v6387 = vpack.c.b16 %v6336, %v6333
    %v6388 = vpack.c.b16 %v6337, %v6337
    %v6389 = vpack.c.b16 %v6338, %v6338
    %v6390 = vpack.c.b16 %v6339, %v6339
    %v6440 = vsel %vm4939, %v6056, 0
    %v6443 = vsel %vm4939, %v6062, 0
    %v6446 = vsel %vm4939, %v6068, 0
    %v6449 = vsel %vm4939, %v6074, 0
    %v6452 = vsel %vm4939, %v6080, 0
    %v6455 = vsel %vm4939, %v6086, 0
    %v6457 = vsel %vm4939, %v6107, 0
    %v6460 = vsel %vm4961, %v6388, 0
    %v6463 = vsel %vm4961, %v6389, 0
    %v6466 = vsel %vm4961, %v6390, 0
    %6468 = vmatprep.subr.bf16.mxu0 %v6362
    %6469 = vmatpush1.bf16.msra.mxu0 %v6361
    %6470 = vmatprep.subr.bf16.mxu0 %v6359
    %6471 = vmatpush1.bf16.msra.mxu0 %v6358
    %6472 = vmatprep.subr.bf16.mxu0 %v6356
    %6473 = vmatpush1.bf16.msra.mxu0 %v6355
    %6474 = vmatprep.subr.bf16.mxu0 %v6353
    %6475 = vmatpush1.bf16.msra.mxu0 %v6352
    %6476 = vmatprep.subr.bf16.mxu0 %v6350
    %6477 = vmatpush1.bf16.msra.mxu0 %v6349
    %6478 = vmatprep.subr.bf16.mxu0 %v6347
    %6479 = vmatpush1.bf16.msra.mxu0 %v6346
    %6480 = vmatprep.subr.bf16.mxu0 %v6344
    %6481 = vmatpush1.bf16.msra.mxu0 %v6343
    %6482 = vmatprep.subr.bf16.mxu0 %v6341
    %6483 = vmatpush1.bf16.msra.mxu0 %v6340
    %6484 = vmatprep.subr.bf16.mxu0 %v6386
    %6485 = vmatpush2.bf16.msra.mxu0 %v6385
    %6486 = vmatprep.subr.bf16.mxu0 %v6383
    %6487 = vmatpush2.bf16.msra.mxu0 %v6382
    %6488 = vmatprep.subr.bf16.mxu0 %v6380
    %6489 = vmatpush2.bf16.msra.mxu0 %v6379
    %6490 = vmatprep.subr.bf16.mxu0 %v6377
    %6491 = vmatpush2.bf16.msra.mxu0 %v6376
    %6492 = vmatprep.subr.bf16.mxu0 %v6374
    %6493 = vmatpush2.bf16.msra.mxu0 %v6373
    %6494 = vmatprep.subr.bf16.mxu0 %v6371
    %6495 = vmatpush2.bf16.msra.mxu0 %v6370
    %6496 = vmatprep.subr.bf16.mxu0 %v6368
    %6497 = vmatpush2.bf16.msra.mxu0 %v6367
    %6498 = vmatprep.subr.bf16.mxu0 %v6365
    %6499 = vmatpush2.bf16.msra.mxu0 %v6364
    %6500 = vmatprep.mubr.bf16.mxu0 %v6053
    %6501 = vmatmul.mubr.bf16.gmra.mxu0 %v6050
    %v6502 = vpop.f32.mrf.mxu0
    %v6503 = vadd.f32 0.0, %v6502
    %v6504 = vpop.f32.mrf.mxu0
    %v6505 = vadd.f32 0.0, %v6504
    %v6506 = vpop.f32.mrf.mxu0
    %v6507 = vadd.f32 0.0, %v6506
    %v6508 = vpop.f32.mrf.mxu0
    %v6509 = vadd.f32 0.0, %v6508
    %6510 = vmatprep.mubr.bf16.mxu0 %v6060
    %6511 = vmatmul.mubr.bf16.gmra.mxu0 %v6058
    %v6512 = vpop.f32.mrf.mxu0
    %v6513 = vadd.f32 0.0, %v6512
    %v6514 = vpop.f32.mrf.mxu0
    %v6515 = vadd.f32 0.0, %v6514
    %v6516 = vpop.f32.mrf.mxu0
    %v6517 = vadd.f32 0.0, %v6516
    %v6518 = vpop.f32.mrf.mxu0
    %v6519 = vadd.f32 0.0, %v6518
    %6520 = vmatprep.mubr.bf16.mxu0 %v6066
    %6521 = vmatmul.mubr.bf16.gmra.mxu0 %v6064
    %v6522 = vpop.f32.mrf.mxu0
    %v6523 = vadd.f32 0.0, %v6522
    %v6524 = vpop.f32.mrf.mxu0
    %v6525 = vadd.f32 0.0, %v6524
    %v6526 = vpop.f32.mrf.mxu0
    %v6527 = vadd.f32 0.0, %v6526
    %v6528 = vpop.f32.mrf.mxu0
    %v6529 = vadd.f32 0.0, %v6528
    %6530 = vmatprep.mubr.bf16.mxu0 %v6072
    %6531 = vmatmul.mubr.bf16.gmra.mxu0 %v6070
    %v6532 = vpop.f32.mrf.mxu0
    %v6533 = vadd.f32 0.0, %v6532
    %v6534 = vpop.f32.mrf.mxu0
    %v6535 = vadd.f32 0.0, %v6534
    %v6536 = vpop.f32.mrf.mxu0
    %v6537 = vadd.f32 0.0, %v6536
    %v6538 = vpop.f32.mrf.mxu0
    %v6539 = vadd.f32 0.0, %v6538
    %6540 = vmatprep.mubr.bf16.mxu0 %v6078
    %6541 = vmatmul.mubr.bf16.gmra.mxu0 %v6076
    %v6542 = vpop.f32.mrf.mxu0
    %v6543 = vadd.f32 0.0, %v6542
    %v6544 = vpop.f32.mrf.mxu0
    %v6545 = vadd.f32 0.0, %v6544
    %v6546 = vpop.f32.mrf.mxu0
    %v6547 = vadd.f32 0.0, %v6546
    %v6548 = vpop.f32.mrf.mxu0
    %v6549 = vadd.f32 0.0, %v6548
    %6550 = vmatprep.mubr.bf16.mxu0 %v6084
    %6551 = vmatmul.mubr.bf16.gmra.mxu0 %v6082
    %v6552 = vpop.f32.mrf.mxu0
    %v6553 = vadd.f32 0.0, %v6552
    %v6554 = vpop.f32.mrf.mxu0
    %v6555 = vadd.f32 0.0, %v6554
    %v6556 = vpop.f32.mrf.mxu0
    %v6557 = vadd.f32 0.0, %v6556
    %v6558 = vpop.f32.mrf.mxu0
    %v6559 = vadd.f32 0.0, %v6558
    %6560 = vmatprep.mubr.bf16.mxu0 %v6104
    %6561 = vmatmul.mubr.bf16.gmra.mxu0 %v6101
    %v6562 = vpop.f32.mrf.mxu0
    %v6563 = vadd.f32 0.0, %v6562
    %v6564 = vpop.f32.mrf.mxu0
    %v6565 = vadd.f32 0.0, %v6564
    %v6566 = vpop.f32.mrf.mxu0
    %v6567 = vadd.f32 0.0, %v6566
    %v6568 = vpop.f32.mrf.mxu0
    %v6569 = vadd.f32 0.0, %v6568
    %6570 = vdwg.mxu0
    %6571 = vmatprep.subr.bf16.mxu0 0
    %6572 = vmatpush1.bf16.msra.mxu0 0
    %6573 = vmatprep.subr.bf16.mxu0 0
    %6574 = vmatpush1.bf16.msra.mxu0 0
    %6575 = vmatprep.subr.bf16.mxu0 0
    %6576 = vmatpush1.bf16.msra.mxu0 0
    %6577 = vmatprep.subr.bf16.mxu0 0
    %6578 = vmatpush1.bf16.msra.mxu0 0
    %6579 = vmatprep.subr.bf16.mxu0 0
    %6580 = vmatpush1.bf16.msra.mxu0 0
    %6581 = vmatprep.subr.bf16.mxu0 0
    %6582 = vmatpush1.bf16.msra.mxu0 0
    %6583 = vmatprep.subr.bf16.mxu0 0
    %6584 = vmatpush1.bf16.msra.mxu0 0
    %6585 = vmatprep.subr.bf16.mxu0 %v6463
    %6586 = vmatpush1.bf16.msra.mxu0 %v6460
    %6587 = vmatprep.subr.bf16.mxu0 0
    %6588 = vmatpush2.bf16.msra.mxu0 0
    %6589 = vmatprep.subr.bf16.mxu0 0
    %6590 = vmatpush2.bf16.msra.mxu0 0
    %6591 = vmatprep.subr.bf16.mxu0 0
    %6592 = vmatpush2.bf16.msra.mxu0 0
    %6593 = vmatprep.subr.bf16.mxu0 0
    %6594 = vmatpush2.bf16.msra.mxu0 0
    %6595 = vmatprep.subr.bf16.mxu0 0
    %6596 = vmatpush2.bf16.msra.mxu0 0
    %6597 = vmatprep.subr.bf16.mxu0 0
    %6598 = vmatpush2.bf16.msra.mxu0 0
    %6599 = vmatprep.subr.bf16.mxu0 0
    %6600 = vmatpush2.bf16.msra.mxu0 0
    %6601 = vmatprep.subr.bf16.mxu0 0
    %6602 = vmatpush2.bf16.msra.mxu0 0
    %6603 = vmatprep.mubr.bf16.mxu0 0
    %6604 = vmatmul.mubr.bf16.gmra.mxu0 %v6440
    %v6605 = vpop.f32.mrf.mxu0
    %v6606 = vadd.f32 %v6503, %v6605
    %v6607 = vpop.f32.mrf.mxu0
    %v6608 = vadd.f32 %v6505, %v6607
    %v6609 = vpop.f32.mrf.mxu0
    %v6610 = vadd.f32 %v6507, %v6609
    %v6611 = vpop.f32.mrf.mxu0
    %v6612 = vadd.f32 %v6509, %v6611
    %6613 = vmatprep.mubr.bf16.mxu0 0
    %6614 = vmatmul.mubr.bf16.gmra.mxu0 %v6443
    %v6615 = vpop.f32.mrf.mxu0
    %v6616 = vadd.f32 %v6513, %v6615
    %v6617 = vpop.f32.mrf.mxu0
    %v6618 = vadd.f32 %v6515, %v6617
    %v6619 = vpop.f32.mrf.mxu0
    %v6620 = vadd.f32 %v6517, %v6619
    %v6621 = vpop.f32.mrf.mxu0
    %v6622 = vadd.f32 %v6519, %v6621
    %6623 = vmatprep.mubr.bf16.mxu0 0
    %6624 = vmatmul.mubr.bf16.gmra.mxu0 %v6446
    %v6625 = vpop.f32.mrf.mxu0
    %v6626 = vadd.f32 %v6523, %v6625
    %v6627 = vpop.f32.mrf.mxu0
    %v6628 = vadd.f32 %v6525, %v6627
    %v6629 = vpop.f32.mrf.mxu0
    %v6630 = vadd.f32 %v6527, %v6629
    %v6631 = vpop.f32.mrf.mxu0
    %v6632 = vadd.f32 %v6529, %v6631
    %6633 = vmatprep.mubr.bf16.mxu0 0
    %6634 = vmatmul.mubr.bf16.gmra.mxu0 %v6449
    %v6635 = vpop.f32.mrf.mxu0
    %v6636 = vadd.f32 %v6533, %v6635
    %v6637 = vpop.f32.mrf.mxu0
    %v6638 = vadd.f32 %v6535, %v6637
    %v6639 = vpop.f32.mrf.mxu0
    %v6640 = vadd.f32 %v6537, %v6639
    %v6641 = vpop.f32.mrf.mxu0
    %v6642 = vadd.f32 %v6539, %v6641
    %6643 = vmatprep.mubr.bf16.mxu0 0
    %6644 = vmatmul.mubr.bf16.gmra.mxu0 %v6452
    %v6645 = vpop.f32.mrf.mxu0
    %v6646 = vadd.f32 %v6543, %v6645
    %v6647 = vpop.f32.mrf.mxu0
    %v6648 = vadd.f32 %v6545, %v6647
    %v6649 = vpop.f32.mrf.mxu0
    %v6650 = vadd.f32 %v6547, %v6649
    %v6651 = vpop.f32.mrf.mxu0
    %v6652 = vadd.f32 %v6549, %v6651
    %6653 = vmatprep.mubr.bf16.mxu0 0
    %6654 = vmatmul.mubr.bf16.gmra.mxu0 %v6455
    %v6655 = vpop.f32.mrf.mxu0
    %v6656 = vadd.f32 %v6553, %v6655
    %v6657 = vpop.f32.mrf.mxu0
    %v6658 = vadd.f32 %v6555, %v6657
    %v6659 = vpop.f32.mrf.mxu0
    %v6660 = vadd.f32 %v6557, %v6659
    %v6661 = vpop.f32.mrf.mxu0
    %v6662 = vadd.f32 %v6559, %v6661
    %6663 = vmatprep.mubr.bf16.mxu0 0
    %6664 = vmatmul.mubr.bf16.gmra.mxu0 %v6457
    %v6665 = vpop.f32.mrf.mxu0
    %v6666 = vadd.f32 %v6563, %v6665
    %v6667 = vpop.f32.mrf.mxu0
    %v6668 = vadd.f32 %v6565, %v6667
    %v6669 = vpop.f32.mrf.mxu0
    %v6670 = vadd.f32 %v6567, %v6669
    %v6671 = vpop.f32.mrf.mxu0
    %v6672 = vadd.f32 %v6569, %v6671
    %6673 = vdwg.mxu0
    %6674 = vmatprep.subr.bf16.mxu0 0
    %6675 = vmatpush1.bf16.msra.mxu0 %v6363
    %6676 = vmatprep.subr.bf16.mxu0 0
    %6677 = vmatpush1.bf16.msra.mxu0 %v6360
    %6678 = vmatprep.subr.bf16.mxu0 0
    %6679 = vmatpush1.bf16.msra.mxu0 %v6357
    %6680 = vmatprep.subr.bf16.mxu0 0
    %6681 = vmatpush1.bf16.msra.mxu0 %v6354
    %6682 = vmatprep.subr.bf16.mxu0 0
    %6683 = vmatpush1.bf16.msra.mxu0 %v6351
    %6684 = vmatprep.subr.bf16.mxu0 0
    %6685 = vmatpush1.bf16.msra.mxu0 %v6348
    %6686 = vmatprep.subr.bf16.mxu0 0
    %6687 = vmatpush1.bf16.msra.mxu0 %v6345
    %6688 = vmatprep.subr.bf16.mxu0 0
    %6689 = vmatpush1.bf16.msra.mxu0 %v6342
    %6690 = vmatprep.subr.bf16.mxu0 0
    %6691 = vmatpush2.bf16.msra.mxu0 %v6387
    %6692 = vmatprep.subr.bf16.mxu0 0
    %6693 = vmatpush2.bf16.msra.mxu0 %v6384
    %6694 = vmatprep.subr.bf16.mxu0 0
    %6695 = vmatpush2.bf16.msra.mxu0 %v6381
    %6696 = vmatprep.subr.bf16.mxu0 0
    %6697 = vmatpush2.bf16.msra.mxu0 %v6378
    %6698 = vmatprep.subr.bf16.mxu0 0
    %6699 = vmatpush2.bf16.msra.mxu0 %v6375
    %6700 = vmatprep.subr.bf16.mxu0 0
    %6701 = vmatpush2.bf16.msra.mxu0 %v6372
    %6702 = vmatprep.subr.bf16.mxu0 0
    %6703 = vmatpush2.bf16.msra.mxu0 %v6369
    %6704 = vmatprep.subr.bf16.mxu0 0
    %6705 = vmatpush2.bf16.msra.mxu0 %v6366
    %6706 = vmatprep.mubr.bf16.mxu0 %v6053
    %6707 = vmatmul.mubr.bf16.gmra.mxu0 %v6050
    %v6708 = vpop.f32.mrf.mxu0
    %v6709 = vadd.f32 0.0, %v6708
    %v6710 = vpop.f32.mrf.mxu0
    %v6711 = vpop.f32.mrf.mxu0
    %v6712 = vadd.f32 0.0, %v6711
    %v6713 = vpop.f32.mrf.mxu0
    %6714 = vmatprep.mubr.bf16.mxu0 %v6060
    %6715 = vmatmul.mubr.bf16.gmra.mxu0 %v6058
    %v6716 = vpop.f32.mrf.mxu0
    %v6717 = vadd.f32 0.0, %v6716
    %v6718 = vpop.f32.mrf.mxu0
    %v6719 = vpop.f32.mrf.mxu0
    %v6720 = vadd.f32 0.0, %v6719
    %v6721 = vpop.f32.mrf.mxu0
    %6722 = vmatprep.mubr.bf16.mxu0 %v6066
    %6723 = vmatmul.mubr.bf16.gmra.mxu0 %v6064
    %v6724 = vpop.f32.mrf.mxu0
    %v6725 = vadd.f32 0.0, %v6724
    %v6726 = vpop.f32.mrf.mxu0
    %v6727 = vpop.f32.mrf.mxu0
    %v6728 = vadd.f32 0.0, %v6727
    %v6729 = vpop.f32.mrf.mxu0
    %6730 = vmatprep.mubr.bf16.mxu0 %v6072
    %6731 = vmatmul.mubr.bf16.gmra.mxu0 %v6070
    %v6732 = vpop.f32.mrf.mxu0
    %v6733 = vadd.f32 0.0, %v6732
    %v6734 = vpop.f32.mrf.mxu0
    %v6735 = vpop.f32.mrf.mxu0
    %v6736 = vadd.f32 0.0, %v6735
    %v6737 = vpop.f32.mrf.mxu0
    %6738 = vmatprep.mubr.bf16.mxu0 %v6078
    %6739 = vmatmul.mubr.bf16.gmra.mxu0 %v6076
    %v6740 = vpop.f32.mrf.mxu0
    %v6741 = vadd.f32 0.0, %v6740
    %v6742 = vpop.f32.mrf.mxu0
    %v6743 = vpop.f32.mrf.mxu0
    %v6744 = vadd.f32 0.0, %v6743
    %v6745 = vpop.f32.mrf.mxu0
    %6746 = vmatprep.mubr.bf16.mxu0 %v6084
    %6747 = vmatmul.mubr.bf16.gmra.mxu0 %v6082
    %v6748 = vpop.f32.mrf.mxu0
    %v6749 = vadd.f32 0.0, %v6748
    %v6750 = vpop.f32.mrf.mxu0
    %v6751 = vpop.f32.mrf.mxu0
    %v6752 = vadd.f32 0.0, %v6751
    %v6753 = vpop.f32.mrf.mxu0
    %6754 = vmatprep.mubr.bf16.mxu0 %v6104
    %6755 = vmatmul.mubr.bf16.gmra.mxu0 %v6101
    %v6756 = vpop.f32.mrf.mxu0
    %v6757 = vadd.f32 0.0, %v6756
    %v6758 = vpop.f32.mrf.mxu0
    %v6759 = vpop.f32.mrf.mxu0
    %v6760 = vadd.f32 0.0, %v6759
    %v6761 = vpop.f32.mrf.mxu0
    %6762 = vdwg.mxu0
    %6763 = vmatprep.subr.bf16.mxu0 0
    %6764 = vmatpush1.bf16.msra.mxu0 0
    %6765 = vmatprep.subr.bf16.mxu0 0
    %6766 = vmatpush1.bf16.msra.mxu0 0
    %6767 = vmatprep.subr.bf16.mxu0 0
    %6768 = vmatpush1.bf16.msra.mxu0 0
    %6769 = vmatprep.subr.bf16.mxu0 0
    %6770 = vmatpush1.bf16.msra.mxu0 0
    %6771 = vmatprep.subr.bf16.mxu0 0
    %6772 = vmatpush1.bf16.msra.mxu0 0
    %6773 = vmatprep.subr.bf16.mxu0 0
    %6774 = vmatpush1.bf16.msra.mxu0 0
    %6775 = vmatprep.subr.bf16.mxu0 0
    %6776 = vmatpush1.bf16.msra.mxu0 0
    %6777 = vmatprep.subr.bf16.mxu0 0
    %6778 = vmatpush1.bf16.msra.mxu0 %v6466
    %6779 = vmatprep.subr.bf16.mxu0 0
    %6780 = vmatpush2.bf16.msra.mxu0 0
    %6781 = vmatprep.subr.bf16.mxu0 0
    %6782 = vmatpush2.bf16.msra.mxu0 0
    %6783 = vmatprep.subr.bf16.mxu0 0
    %6784 = vmatpush2.bf16.msra.mxu0 0
    %6785 = vmatprep.subr.bf16.mxu0 0
    %6786 = vmatpush2.bf16.msra.mxu0 0
    %6787 = vmatprep.subr.bf16.mxu0 0
    %6788 = vmatpush2.bf16.msra.mxu0 0
    %6789 = vmatprep.subr.bf16.mxu0 0
    %6790 = vmatpush2.bf16.msra.mxu0 0
    %6791 = vmatprep.subr.bf16.mxu0 0
    %6792 = vmatpush2.bf16.msra.mxu0 0
    %6793 = vmatprep.subr.bf16.mxu0 0
    %6794 = vmatpush2.bf16.msra.mxu0 0
    %6795 = vmatprep.mubr.bf16.mxu0 0
    %6796 = vmatmul.mubr.bf16.gmra.mxu0 %v6440
    %v6797 = vpop.f32.mrf.mxu0
    %v6798 = vadd.f32 %v6709, %v6797
    %v6799 = vpop.f32.mrf.mxu0
    %v6800 = vpop.f32.mrf.mxu0
    %v6801 = vadd.f32 %v6712, %v6800
    %v6802 = vpop.f32.mrf.mxu0
    %6803 = vmatprep.mubr.bf16.mxu0 0
    %6804 = vmatmul.mubr.bf16.gmra.mxu0 %v6443
    %v6805 = vpop.f32.mrf.mxu0
    %v6806 = vadd.f32 %v6717, %v6805
    %v6807 = vpop.f32.mrf.mxu0
    %v6808 = vpop.f32.mrf.mxu0
    %v6809 = vadd.f32 %v6720, %v6808
    %v6810 = vpop.f32.mrf.mxu0
    %6811 = vmatprep.mubr.bf16.mxu0 0
    %6812 = vmatmul.mubr.bf16.gmra.mxu0 %v6446
    %v6813 = vpop.f32.mrf.mxu0
    %v6814 = vadd.f32 %v6725, %v6813
    %v6815 = vpop.f32.mrf.mxu0
    %v6816 = vpop.f32.mrf.mxu0
    %v6817 = vadd.f32 %v6728, %v6816
    %v6818 = vpop.f32.mrf.mxu0
    %6819 = vmatprep.mubr.bf16.mxu0 0
    %6820 = vmatmul.mubr.bf16.gmra.mxu0 %v6449
    %v6821 = vpop.f32.mrf.mxu0
    %v6822 = vadd.f32 %v6733, %v6821
    %v6823 = vpop.f32.mrf.mxu0
    %v6824 = vpop.f32.mrf.mxu0
    %v6825 = vadd.f32 %v6736, %v6824
    %v6826 = vpop.f32.mrf.mxu0
    %6827 = vmatprep.mubr.bf16.mxu0 0
    %6828 = vmatmul.mubr.bf16.gmra.mxu0 %v6452
    %v6829 = vpop.f32.mrf.mxu0
    %v6830 = vadd.f32 %v6741, %v6829
    %v6831 = vpop.f32.mrf.mxu0
    %v6832 = vpop.f32.mrf.mxu0
    %v6833 = vadd.f32 %v6744, %v6832
    %v6834 = vpop.f32.mrf.mxu0
    %6835 = vmatprep.mubr.bf16.mxu0 0
    %6836 = vmatmul.mubr.bf16.gmra.mxu0 %v6455
    %v6837 = vpop.f32.mrf.mxu0
    %v6838 = vadd.f32 %v6749, %v6837
    %v6839 = vpop.f32.mrf.mxu0
    %v6840 = vpop.f32.mrf.mxu0
    %v6841 = vadd.f32 %v6752, %v6840
    %v6842 = vpop.f32.mrf.mxu0
    %6843 = vmatprep.mubr.bf16.mxu0 0
    %6844 = vmatmul.mubr.bf16.gmra.mxu0 %v6457
    %v6845 = vpop.f32.mrf.mxu0
    %v6846 = vadd.f32 %v6757, %v6845
    %v6847 = vpop.f32.mrf.mxu0
    %v6848 = vpop.f32.mrf.mxu0
    %v6849 = vadd.f32 %v6760, %v6848
    %v6850 = vpop.f32.mrf.mxu0
    %6851 = vdwg.mxu0
    %v6852 = vadd.f32 %v5780, %v6606
    %v6853 = vadd.f32 %v5782, %v6608
    %v6854 = vadd.f32 %v5972, %v6798
    %v6855 = vadd.f32 %v5784, %v6610
    %v6856 = vadd.f32 %v5786, %v6612
    %v6857 = vadd.f32 %v5975, %v6801
    %v6858 = vadd.f32 %v5790, %v6616
    %v6859 = vadd.f32 %v5792, %v6618
    %v6860 = vadd.f32 %v5980, %v6806
    %v6861 = vadd.f32 %v5794, %v6620
    %v6862 = vadd.f32 %v5796, %v6622
    %v6863 = vadd.f32 %v5983, %v6809
    %v6864 = vadd.f32 %v5800, %v6626
    %v6865 = vadd.f32 %v5802, %v6628
    %v6866 = vadd.f32 %v5988, %v6814
    %v6867 = vadd.f32 %v5804, %v6630
    %v6868 = vadd.f32 %v5806, %v6632
    %v6869 = vadd.f32 %v5991, %v6817
    %v6870 = vadd.f32 %v5810, %v6636
    %v6871 = vadd.f32 %v5812, %v6638
    %v6872 = vadd.f32 %v5996, %v6822
    %v6873 = vadd.f32 %v5814, %v6640
    %v6874 = vadd.f32 %v5816, %v6642
    %v6875 = vadd.f32 %v5999, %v6825
    %v6876 = vadd.f32 %v5820, %v6646
    %v6877 = vadd.f32 %v5822, %v6648
    %v6878 = vadd.f32 %v6004, %v6830
    %v6879 = vadd.f32 %v5824, %v6650
    %v6880 = vadd.f32 %v5826, %v6652
    %v6881 = vadd.f32 %v6007, %v6833
    %v6882 = vadd.f32 %v5830, %v6656
    %v6883 = vadd.f32 %v5832, %v6658
    %v6884 = vadd.f32 %v6012, %v6838
    %v6885 = vadd.f32 %v5834, %v6660
    %v6886 = vadd.f32 %v5836, %v6662
    %v6887 = vadd.f32 %v6015, %v6841
    %v6888 = vadd.f32 %v5840, %v6666
    %v6889 = vadd.f32 %v5842, %v6668
    %v6890 = vadd.f32 %v6020, %v6846
    %v6891 = vadd.f32 %v5844, %v6670
    %v6892 = vadd.f32 %v5846, %v6672
    %v6893 = vadd.f32 %v6023, %v6849
    %v6894 = vld [vmem:[%s5] sm:$0x7]
    %v6896 = vlaneseq
    %v6897 = vshrl.u32 %v6896, 7
    %v6898 = vsub.s32 0, %v6897
    %v6899 = vrot.slane %v6894, %v6898
    %v6900 = vlaneseq
    %v6901 = vshrl.u32 %v6900, 7
    %v6902 = vsub.s32 1, %v6901
    %v6903 = vrot.slane %v6894, %v6902
    %v6904 = vlaneseq
    %v6905 = vshrl.u32 %v6904, 7
    %v6906 = vsub.s32 2, %v6905
    %v6907 = vrot.slane %v6894, %v6906
    %v6911 = vadd.f32 %v6852, %v6899
    %v6912 = vadd.f32 %v6853, %v6903
    %v6913 = vadd.f32 %v6854, %v6907
    %v6914 = vadd.f32 %v6855, %v6899
    %v6915 = vadd.f32 %v6856, %v6903
    %v6916 = vadd.f32 %v6857, %v6907
    %v6917 = vadd.f32 %v6858, %v6899
    %v6918 = vadd.f32 %v6859, %v6903
    %v6919 = vadd.f32 %v6860, %v6907
    %v6920 = vadd.f32 %v6861, %v6899
    %v6921 = vadd.f32 %v6862, %v6903
    %v6922 = vadd.f32 %v6863, %v6907
    %v6923 = vadd.f32 %v6864, %v6899
    %v6924 = vadd.f32 %v6865, %v6903
    %v6925 = vadd.f32 %v6866, %v6907
    %v6926 = vadd.f32 %v6867, %v6899
    %v6927 = vadd.f32 %v6868, %v6903
    %v6928 = vadd.f32 %v6869, %v6907
    %v6929 = vadd.f32 %v6870, %v6899
    %v6930 = vadd.f32 %v6871, %v6903
    %v6931 = vadd.f32 %v6872, %v6907
    %v6932 = vadd.f32 %v6873, %v6899
    %v6933 = vadd.f32 %v6874, %v6903
    %v6934 = vadd.f32 %v6875, %v6907
    %v6935 = vadd.f32 %v6876, %v6899
    %v6936 = vadd.f32 %v6877, %v6903
    %v6937 = vadd.f32 %v6878, %v6907
    %v6938 = vadd.f32 %v6879, %v6899
    %v6939 = vadd.f32 %v6880, %v6903
    %v6940 = vadd.f32 %v6881, %v6907
    %v6941 = vadd.f32 %v6882, %v6899
    %v6942 = vadd.f32 %v6883, %v6903
    %v6943 = vadd.f32 %v6884, %v6907
    %v6944 = vadd.f32 %v6885, %v6899
    %v6945 = vadd.f32 %v6886, %v6903
    %v6946 = vadd.f32 %v6887, %v6907
    %v6947 = vadd.f32 %v6888, %v6899
    %v6948 = vadd.f32 %v6889, %v6903
    %v6949 = vadd.f32 %v6890, %v6907
    %v6950 = vadd.f32 %v6891, %v6899
    %v6951 = vadd.f32 %v6892, %v6903
    %v6952 = vadd.f32 %v6893, %v6907
    %v6953 = vmax.f32 %v6911, 0.0
    %v6954 = vmax.f32 %v6912, 0.0
    %v6955 = vmax.f32 %v6913, 0.0
    %v6956 = vmax.f32 %v6914, 0.0
    %v6957 = vmax.f32 %v6915, 0.0
    %v6958 = vmax.f32 %v6916, 0.0
    %v6959 = vmax.f32 %v6917, 0.0
    %v6960 = vmax.f32 %v6918, 0.0
    %v6961 = vmax.f32 %v6919, 0.0
    %v6962 = vmax.f32 %v6920, 0.0
    %v6963 = vmax.f32 %v6921, 0.0
    %v6964 = vmax.f32 %v6922, 0.0
    %v6965 = vmax.f32 %v6923, 0.0
    %v6966 = vmax.f32 %v6924, 0.0
    %v6967 = vmax.f32 %v6925, 0.0
    %v6968 = vmax.f32 %v6926, 0.0
    %v6969 = vmax.f32 %v6927, 0.0
    %v6970 = vmax.f32 %v6928, 0.0
    %v6971 = vmax.f32 %v6929, 0.0
    %v6972 = vmax.f32 %v6930, 0.0
    %v6973 = vmax.f32 %v6931, 0.0
    %v6974 = vmax.f32 %v6932, 0.0
    %v6975 = vmax.f32 %v6933, 0.0
    %v6976 = vmax.f32 %v6934, 0.0
    %v6977 = vmax.f32 %v6935, 0.0
    %v6978 = vmax.f32 %v6936, 0.0
    %v6979 = vmax.f32 %v6937, 0.0
    %v6980 = vmax.f32 %v6938, 0.0
    %v6981 = vmax.f32 %v6939, 0.0
    %v6982 = vmax.f32 %v6940, 0.0
    %v6983 = vmax.f32 %v6941, 0.0
    %v6984 = vmax.f32 %v6942, 0.0
    %v6985 = vmax.f32 %v6943, 0.0
    %v6986 = vmax.f32 %v6944, 0.0
    %v6987 = vmax.f32 %v6945, 0.0
    %v6988 = vmax.f32 %v6946, 0.0
    %v6989 = vmax.f32 %v6947, 0.0
    %v6990 = vmax.f32 %v6948, 0.0
    %v6991 = vmax.f32 %v6949, 0.0
    %v6992 = vmax.f32 %v6950, 0.0
    %v6993 = vmax.f32 %v6951, 0.0
    %v6994 = vmax.f32 %v6952, 0.0
    %v6995 = vpack.c.bf16 %v6956, %v6953
    %v6996 = vpack.c.bf16 %v6957, %v6954
    %v6997 = vpack.c.bf16 %v6958, %v6955
    %v6998 = vpack.c.bf16 %v6962, %v6959
    %v6999 = vpack.c.bf16 %v6963, %v6960
    %v7000 = vpack.c.bf16 %v6964, %v6961
    %v7001 = vpack.c.bf16 %v6968, %v6965
    %v7002 = vpack.c.bf16 %v6969, %v6966
    %v7003 = vpack.c.bf16 %v6970, %v6967
    %v7004 = vpack.c.bf16 %v6974, %v6971
    %v7005 = vpack.c.bf16 %v6975, %v6972
    %v7006 = vpack.c.bf16 %v6976, %v6973
    %v7007 = vpack.c.bf16 %v6980, %v6977
    %v7008 = vpack.c.bf16 %v6981, %v6978
    %v7009 = vpack.c.bf16 %v6982, %v6979
    %v7010 = vpack.c.bf16 %v6986, %v6983
    %v7011 = vpack.c.bf16 %v6987, %v6984
    %v7012 = vpack.c.bf16 %v6988, %v6985
    %v7013 = vpack.c.bf16 %v6992, %v6989
    %v7014 = vpack.c.bf16 %v6993, %v6990
    %v7015 = vpack.c.bf16 %v6994, %v6991
    %7037 = vrot.lane.b32.xlu0 %v6995, 96
    %v7038 = vpop.permute.xlu0 %7037
    %7039 = vrot.lane.b32.xlu0 %v6996, 96
    %v7040 = vpop.permute.xlu0 %7039
    %7041 = vrot.lane.b32.xlu0 %v6997, 96
    %v7042 = vpop.permute.xlu0 %7041
    %7043 = vrot.lane.b32.xlu0 %v6998, 96
    %v7044 = vpop.permute.xlu0 %7043
    %7045 = vrot.lane.b32.xlu0 %v6999, 96
    %v7046 = vpop.permute.xlu0 %7045
    %7047 = vrot.lane.b32.xlu0 %v7000, 96
    %v7048 = vpop.permute.xlu0 %7047
    %7049 = vrot.lane.b32.xlu0 %v7001, 96
    %v7050 = vpop.permute.xlu0 %7049
    %7051 = vrot.lane.b32.xlu0 %v7002, 96
    %v7052 = vpop.permute.xlu0 %7051
    %7053 = vrot.lane.b32.xlu0 %v7003, 96
    %v7054 = vpop.permute.xlu0 %7053
    %7055 = vrot.lane.b32.xlu0 %v7004, 96
    %v7056 = vpop.permute.xlu0 %7055
    %7057 = vrot.lane.b32.xlu0 %v7005, 96
    %v7058 = vpop.permute.xlu0 %7057
    %7059 = vrot.lane.b32.xlu0 %v7006, 96
    %v7060 = vpop.permute.xlu0 %7059
    %7061 = vrot.lane.b32.xlu0 %v7007, 96
    %v7062 = vpop.permute.xlu0 %7061
    %7063 = vrot.lane.b32.xlu0 %v7008, 96
    %v7064 = vpop.permute.xlu0 %7063
    %7065 = vrot.lane.b32.xlu0 %v7009, 96
    %v7066 = vpop.permute.xlu0 %7065
    %7067 = vrot.lane.b32.xlu0 %v7010, 96
    %v7068 = vpop.permute.xlu0 %7067
    %7069 = vrot.lane.b32.xlu0 %v7011, 96
    %v7070 = vpop.permute.xlu0 %7069
    %7071 = vrot.lane.b32.xlu0 %v7012, 96
    %v7072 = vpop.permute.xlu0 %7071
    %7073 = vrot.lane.b32.xlu0 %v7013, 96
    %v7074 = vpop.permute.xlu0 %7073
    %7075 = vrot.lane.b32.xlu0 %v7014, 96
    %v7076 = vpop.permute.xlu0 %7075
    %7077 = vrot.lane.b32.xlu0 %v7015, 96
    %v7078 = vpop.permute.xlu0 %7077
    %vm7079 = vcmask 785408
    %v7080 = vsel %vm7079, %v7038, %v7040
    %v7081 = vsel %vm7079, %v7040, %v7042
    %v7082 = vsel %vm7079, %v7044, %v7046
    %v7083 = vsel %vm7079, %v7046, %v7048
    %v7084 = vsel %vm7079, %v7050, %v7052
    %v7085 = vsel %vm7079, %v7052, %v7054
    %v7086 = vsel %vm7079, %v7056, %v7058
    %v7087 = vsel %vm7079, %v7058, %v7060
    %v7088 = vsel %vm7079, %v7062, %v7064
    %v7089 = vsel %vm7079, %v7064, %v7066
    %v7090 = vsel %vm7079, %v7068, %v7070
    %v7091 = vsel %vm7079, %v7070, %v7072
    %v7092 = vsel %vm7079, %v7074, %v7076
    %v7093 = vsel %vm7079, %v7076, %v7078
    %vm7108 = vcmask 523264
    %v7110 = vsel %vm7108, %v7042, 0
    %v7113 = vsel %vm7108, %v7048, 0
    %v7116 = vsel %vm7108, %v7054, 0
    %v7119 = vsel %vm7108, %v7060, 0
    %v7122 = vsel %vm7108, %v7066, 0
    %v7125 = vsel %vm7108, %v7072, 0
    %v7128 = vsel %vm7108, %v7078, 0
    %v7130 = vmax.bf16 %v6995, %v7080
    %v7131 = vmax.bf16 %v6996, %v7081
    %v7132 = vmax.bf16 %v6997, %v7110
    %v7133 = vmax.bf16 %v6998, %v7082
    %v7134 = vmax.bf16 %v6999, %v7083
    %v7135 = vmax.bf16 %v7000, %v7113
    %v7136 = vmax.bf16 %v7001, %v7084
    %v7137 = vmax.bf16 %v7002, %v7085
    %v7138 = vmax.bf16 %v7003, %v7116
    %v7139 = vmax.bf16 %v7004, %v7086
    %v7140 = vmax.bf16 %v7005, %v7087
    %v7141 = vmax.bf16 %v7006, %v7119
    %v7142 = vmax.bf16 %v7007, %v7088
    %v7143 = vmax.bf16 %v7008, %v7089
    %v7144 = vmax.bf16 %v7009, %v7122
    %v7145 = vmax.bf16 %v7010, %v7090
    %v7146 = vmax.bf16 %v7011, %v7091
    %v7147 = vmax.bf16 %v7012, %v7125
    %v7148 = vmax.bf16 %v7013, %v7092
    %v7149 = vmax.bf16 %v7014, %v7093
    %v7150 = vmax.bf16 %v7015, %v7128
    %v7151 = vld [vmem:[%s6] sm:$0xff]
    %v7152 = vld [vmem:[%s6 + $0x8] sm:$0xff]
    %v7153 = vld [vmem:[%s6 + $0x10] sm:$0xff]
    %v7154 = vld [vmem:[%s6 + $0x18] sm:$0xff]
    %v7155 = vld [vmem:[%s6 + $0x20] sm:$0xff]
    %v7156 = vld [vmem:[%s6 + $0x28] sm:$0xff]
    %v7157 = vld [vmem:[%s6 + $0x30] sm:$0xff]
    %v7158 = vld [vmem:[%s6 + $0x38] sm:$0xff]
    %v7159 = vld [vmem:[%s6 + $0x40] sm:$0xff]
    %v7160 = vld [vmem:[%s6 + $0x48] sm:$0xff]
    %v7161 = vld [vmem:[%s6 + $0x50] sm:$0xff]
    %v7162 = vld [vmem:[%s6 + $0x58] sm:$0xff]
    %v7163 = vld [vmem:[%s6 + $0x60] sm:$0xff]
    %v7164 = vld [vmem:[%s6 + $0x68] sm:$0xff]
    %v7165 = vld [vmem:[%s6 + $0x70] sm:$0xff]
    %v7166 = vld [vmem:[%s6 + $0x78] sm:$0xff]
    %v7167 = vld [vmem:[%s6 + $0x80] sm:$0xff]
    %v7168 = vld [vmem:[%s6 + $0x88] sm:$0xff]
    %v7169 = vld [vmem:[%s6 + $0x90] sm:$0xff]
    %v7170 = vld [vmem:[%s6 + $0x98] sm:$0xff]
    %v7171 = vld [vmem:[%s6 + $0xa0] sm:$0xff]
    %v7172 = vld [vmem:[%s6 + $0xa8] sm:$0xff]
    %v7173 = vld [vmem:[%s6 + $0xb0] sm:$0xff]
    %v7174 = vld [vmem:[%s6 + $0xb8] sm:$0xff]
    %v7175 = vld [vmem:[%s6 + $0xc0] sm:$0xff]
    %v7176 = vld [vmem:[%s6 + $0xc8] sm:$0xff]
    %v7177 = vld [vmem:[%s6 + $0xd0] sm:$0xff]
    %v7178 = vld [vmem:[%s6 + $0xd8] sm:$0xff]
    %v7179 = vld [vmem:[%s6 + $0xe0] sm:$0xff]
    %v7180 = vld [vmem:[%s6 + $0xe8] sm:$0xff]
    %v7181 = vld [vmem:[%s6 + $0xf0] sm:$0xff]
    %v7182 = vld [vmem:[%s6 + $0xf8] sm:$0xff]
    %v7183 = vld [vmem:[%s6 + $0x100] sm:$0xff]
    %v7184 = vld [vmem:[%s6 + $0x108] sm:$0xff]
    %v7185 = vld [vmem:[%s6 + $0x110] sm:$0xff]
    %v7186 = vld [vmem:[%s6 + $0x118] sm:$0xff]
    %v7187 = vld [vmem:[%s6 + $0x120] sm:$0xff]
    %v7188 = vld [vmem:[%s6 + $0x128] sm:$0xff]
    %v7189 = vld [vmem:[%s6 + $0x130] sm:$0xff]
    %v7190 = vld [vmem:[%s6 + $0x138] sm:$0xff]
    %v7191 = vld [vmem:[%s6 + $0x140] sm:$0xff]
    %v7192 = vld [vmem:[%s6 + $0x148] sm:$0xff]
    %v7193 = vld [vmem:[%s6 + $0x150] sm:$0xff]
    %v7194 = vld [vmem:[%s6 + $0x158] sm:$0xff]
    %v7239 = vunpack.c.l.b16 %v7151
    %v7240 = vunpack.c.h.b16 %v7151
    %v7241 = vunpack.c.l.b16 %v7152
    %v7242 = vunpack.c.h.b16 %v7152
    %v7243 = vunpack.c.l.b16 %v7153
    %v7244 = vunpack.c.h.b16 %v7153
    %v7245 = vunpack.c.l.b16 %v7154
    %v7246 = vunpack.c.h.b16 %v7154
    %v7247 = vunpack.c.l.b16 %v7155
    %v7248 = vunpack.c.h.b16 %v7155
    %v7249 = vunpack.c.l.b16 %v7156
    %v7250 = vunpack.c.h.b16 %v7156
    %v7251 = vunpack.c.l.b16 %v7157
    %v7252 = vunpack.c.h.b16 %v7157
    %v7253 = vunpack.c.l.b16 %v7158
    %v7254 = vunpack.c.h.b16 %v7158
    %v7255 = vunpack.c.l.b16 %v7159
    %v7256 = vunpack.c.h.b16 %v7159
    %v7257 = vunpack.c.l.b16 %v7160
    %v7258 = vunpack.c.h.b16 %v7160
    %v7259 = vunpack.c.l.b16 %v7161
    %v7260 = vunpack.c.h.b16 %v7161
    %v7261 = vunpack.c.l.b16 %v7162
    %v7262 = vunpack.c.h.b16 %v7162
    %v7263 = vunpack.c.l.b16 %v7163
    %v7264 = vunpack.c.h.b16 %v7163
    %v7265 = vunpack.c.l.b16 %v7164
    %v7266 = vunpack.c.h.b16 %v7164
    %v7267 = vunpack.c.l.b16 %v7165
    %v7268 = vunpack.c.h.b16 %v7165
    %v7269 = vunpack.c.l.b16 %v7166
    %v7270 = vunpack.c.h.b16 %v7166
    %v7271 = vunpack.c.l.b16 %v7167
    %v7272 = vunpack.c.h.b16 %v7167
    %v7273 = vunpack.c.l.b16 %v7168
    %v7274 = vunpack.c.h.b16 %v7168
    %v7275 = vunpack.c.l.b16 %v7169
    %v7276 = vunpack.c.h.b16 %v7169
    %v7277 = vunpack.c.l.b16 %v7170
    %v7278 = vunpack.c.h.b16 %v7170
    %v7279 = vunpack.c.l.b16 %v7171
    %v7280 = vunpack.c.h.b16 %v7171
    %v7281 = vunpack.c.l.b16 %v7172
    %v7282 = vunpack.c.h.b16 %v7172
    %v7283 = vunpack.c.l.b16 %v7173
    %v7284 = vunpack.c.h.b16 %v7173
    %v7285 = vunpack.c.l.b16 %v7174
    %v7286 = vunpack.c.h.b16 %v7174
    %v7287 = vunpack.c.l.b16 %v7175
    %v7288 = vunpack.c.h.b16 %v7175
    %v7289 = vunpack.c.l.b16 %v7176
    %v7290 = vunpack.c.h.b16 %v7176
    %v7291 = vunpack.c.l.b16 %v7177
    %v7292 = vunpack.c.h.b16 %v7177
    %v7293 = vunpack.c.l.b16 %v7178
    %v7294 = vunpack.c.h.b16 %v7178
    %v7295 = vunpack.c.l.b16 %v7179
    %v7296 = vunpack.c.h.b16 %v7179
    %v7297 = vunpack.c.l.b16 %v7180
    %v7298 = vunpack.c.h.b16 %v7180
    %v7299 = vunpack.c.l.b16 %v7181
    %v7300 = vunpack.c.h.b16 %v7181
    %v7301 = vunpack.c.l.b16 %v7182
    %v7302 = vunpack.c.h.b16 %v7182
    %v7303 = vunpack.c.l.b16 %v7183
    %v7304 = vunpack.c.h.b16 %v7183
    %v7305 = vunpack.c.l.b16 %v7184
    %v7306 = vunpack.c.h.b16 %v7184
    %v7307 = vunpack.c.l.b16 %v7185
    %v7308 = vunpack.c.h.b16 %v7185
    %v7309 = vunpack.c.l.b16 %v7186
    %v7310 = vunpack.c.h.b16 %v7186
    %v7311 = vunpack.c.l.b16 %v7187
    %v7312 = vunpack.c.h.b16 %v7187
    %v7313 = vunpack.c.l.b16 %v7188
    %v7314 = vunpack.c.h.b16 %v7188
    %v7315 = vunpack.c.l.b16 %v7189
    %v7316 = vunpack.c.h.b16 %v7189
    %v7317 = vunpack.c.l.b16 %v7190
    %v7318 = vunpack.c.h.b16 %v7190
    %v7319 = vunpack.c.l.b16 %v7191
    %v7320 = vunpack.c.h.b16 %v7191
    %v7321 = vunpack.c.l.b16 %v7192
    %v7322 = vunpack.c.h.b16 %v7192
    %v7323 = vunpack.c.l.b16 %v7193
    %v7324 = vunpack.c.h.b16 %v7193
    %v7325 = vunpack.c.l.b16 %v7194
    %v7326 = vunpack.c.h.b16 %v7194
    %v7327 = vpack.c.b16 %v7241, %v7239
    %v7328 = vpack.c.b16 %v7242, %v7240
    %v7329 = vpack.c.b16 %v7245, %v7243
    %v7330 = vpack.c.b16 %v7246, %v7244
    %v7331 = vpack.c.b16 %v7249, %v7247
    %v7332 = vpack.c.b16 %v7250, %v7248
    %v7333 = vpack.c.b16 %v7253, %v7251
    %v7334 = vpack.c.b16 %v7254, %v7252
    %v7335 = vpack.c.b16 %v7257, %v7255
    %v7336 = vpack.c.b16 %v7258, %v7256
    %v7337 = vpack.c.b16 %v7261, %v7259
    %v7338 = vpack.c.b16 %v7262, %v7260
    %v7339 = vpack.c.b16 %v7265, %v7263
    %v7340 = vpack.c.b16 %v7266, %v7264
    %v7341 = vpack.c.b16 %v7269, %v7267
    %v7342 = vpack.c.b16 %v7270, %v7268
    %v7343 = vpack.c.b16 %v7273, %v7271
    %v7344 = vpack.c.b16 %v7274, %v7272
    %v7345 = vpack.c.b16 %v7277, %v7275
    %v7346 = vpack.c.b16 %v7278, %v7276
    %v7347 = vpack.c.b16 %v7281, %v7279
    %v7348 = vpack.c.b16 %v7282, %v7280
    %v7349 = vpack.c.b16 %v7285, %v7283
    %v7350 = vpack.c.b16 %v7286, %v7284
    %v7351 = vpack.c.b16 %v7289, %v7287
    %v7352 = vpack.c.b16 %v7290, %v7288
    %v7353 = vpack.c.b16 %v7293, %v7291
    %v7354 = vpack.c.b16 %v7294, %v7292
    %v7355 = vpack.c.b16 %v7297, %v7295
    %v7356 = vpack.c.b16 %v7298, %v7296
    %v7357 = vpack.c.b16 %v7301, %v7299
    %v7358 = vpack.c.b16 %v7302, %v7300
    %v7359 = vpack.c.b16 %v7305, %v7303
    %v7360 = vpack.c.b16 %v7306, %v7304
    %v7361 = vpack.c.b16 %v7309, %v7307
    %v7362 = vpack.c.b16 %v7310, %v7308
    %v7363 = vpack.c.b16 %v7313, %v7311
    %v7364 = vpack.c.b16 %v7314, %v7312
    %v7365 = vpack.c.b16 %v7317, %v7315
    %v7366 = vpack.c.b16 %v7318, %v7316
    %v7367 = vpack.c.b16 %v7321, %v7319
    %v7368 = vpack.c.b16 %v7322, %v7320
    %v7369 = vpack.c.b16 %v7325, %v7323
    %v7370 = vpack.c.b16 %v7326, %v7324
    %vm7415 = vcmask 785408
    %v7417 = vsel %vm7415, %v7132, 0
    %v7420 = vsel %vm7415, %v7135, 0
    %v7423 = vsel %vm7415, %v7138, 0
    %v7426 = vsel %vm7415, %v7141, 0
    %v7429 = vsel %vm7415, %v7144, 0
    %v7432 = vsel %vm7415, %v7147, 0
    %v7435 = vsel %vm7415, %v7150, 0
    %7437 = vmatprep.subr.bf16.mxu0 %v7342
    %7438 = vmatpush1.bf16.msra.mxu0 %v7341
    %7439 = vmatprep.subr.bf16.mxu0 %v7340
    %7440 = vmatpush1.bf16.msra.mxu0 %v7339
    %7441 = vmatprep.subr.bf16.mxu0 %v7338
    %7442 = vmatpush1.bf16.msra.mxu0 %v7337
    %7443 = vmatprep.subr.bf16.mxu0 %v7336
    %7444 = vmatpush1.bf16.msra.mxu0 %v7335
    %7445 = vmatprep.subr.bf16.mxu0 %v7334
    %7446 = vmatpush1.bf16.msra.mxu0 %v7333
    %7447 = vmatprep.subr.bf16.mxu0 %v7332
    %7448 = vmatpush1.bf16.msra.mxu0 %v7331
    %7449 = vmatprep.subr.bf16.mxu0 %v7330
    %7450 = vmatpush1.bf16.msra.mxu0 %v7329
    %7451 = vmatprep.subr.bf16.mxu0 %v7328
    %7452 = vmatpush1.bf16.msra.mxu0 %v7327
    %7453 = vmatprep.subr.bf16.mxu0 %v7358
    %7454 = vmatpush2.bf16.msra.mxu0 %v7357
    %7455 = vmatprep.subr.bf16.mxu0 %v7356
    %7456 = vmatpush2.bf16.msra.mxu0 %v7355
    %7457 = vmatprep.subr.bf16.mxu0 %v7354
    %7458 = vmatpush2.bf16.msra.mxu0 %v7353
    %7459 = vmatprep.subr.bf16.mxu0 %v7352
    %7460 = vmatpush2.bf16.msra.mxu0 %v7351
    %7461 = vmatprep.subr.bf16.mxu0 %v7350
    %7462 = vmatpush2.bf16.msra.mxu0 %v7349
    %7463 = vmatprep.subr.bf16.mxu0 %v7348
    %7464 = vmatpush2.bf16.msra.mxu0 %v7347
    %7465 = vmatprep.subr.bf16.mxu0 %v7346
    %7466 = vmatpush2.bf16.msra.mxu0 %v7345
    %7467 = vmatprep.subr.bf16.mxu0 %v7344
    %7468 = vmatpush2.bf16.msra.mxu0 %v7343
    %7469 = vmatprep.mubr.bf16.mxu0 %v7131
    %7470 = vmatmul.mubr.bf16.gmra.mxu0 %v7130
    %v7471 = vpop.f32.mrf.mxu0
    %v7472 = vadd.f32 0.0, %v7471
    %v7473 = vpop.f32.mrf.mxu0
    %v7474 = vadd.f32 0.0, %v7473
    %v7475 = vpop.f32.mrf.mxu0
    %v7476 = vadd.f32 0.0, %v7475
    %v7477 = vpop.f32.mrf.mxu0
    %v7478 = vadd.f32 0.0, %v7477
    %7479 = vmatprep.mubr.bf16.mxu0 %v7134
    %7480 = vmatmul.mubr.bf16.gmra.mxu0 %v7133
    %v7481 = vpop.f32.mrf.mxu0
    %v7482 = vadd.f32 0.0, %v7481
    %v7483 = vpop.f32.mrf.mxu0
    %v7484 = vadd.f32 0.0, %v7483
    %v7485 = vpop.f32.mrf.mxu0
    %v7486 = vadd.f32 0.0, %v7485
    %v7487 = vpop.f32.mrf.mxu0
    %v7488 = vadd.f32 0.0, %v7487
    %7489 = vmatprep.mubr.bf16.mxu0 %v7137
    %7490 = vmatmul.mubr.bf16.gmra.mxu0 %v7136
    %v7491 = vpop.f32.mrf.mxu0
    %v7492 = vadd.f32 0.0, %v7491
    %v7493 = vpop.f32.mrf.mxu0
    %v7494 = vadd.f32 0.0, %v7493
    %v7495 = vpop.f32.mrf.mxu0
    %v7496 = vadd.f32 0.0, %v7495
    %v7497 = vpop.f32.mrf.mxu0
    %v7498 = vadd.f32 0.0, %v7497
    %7499 = vmatprep.mubr.bf16.mxu0 %v7140
    %7500 = vmatmul.mubr.bf16.gmra.mxu0 %v7139
    %v7501 = vpop.f32.mrf.mxu0
    %v7502 = vadd.f32 0.0, %v7501
    %v7503 = vpop.f32.mrf.mxu0
    %v7504 = vadd.f32 0.0, %v7503
    %v7505 = vpop.f32.mrf.mxu0
    %v7506 = vadd.f32 0.0, %v7505
    %v7507 = vpop.f32.mrf.mxu0
    %v7508 = vadd.f32 0.0, %v7507
    %7509 = vmatprep.mubr.bf16.mxu0 %v7143
    %7510 = vmatmul.mubr.bf16.gmra.mxu0 %v7142
    %v7511 = vpop.f32.mrf.mxu0
    %v7512 = vadd.f32 0.0, %v7511
    %v7513 = vpop.f32.mrf.mxu0
    %v7514 = vadd.f32 0.0, %v7513
    %v7515 = vpop.f32.mrf.mxu0
    %v7516 = vadd.f32 0.0, %v7515
    %v7517 = vpop.f32.mrf.mxu0
    %v7518 = vadd.f32 0.0, %v7517
    %7519 = vmatprep.mubr.bf16.mxu0 %v7146
    %7520 = vmatmul.mubr.bf16.gmra.mxu0 %v7145
    %v7521 = vpop.f32.mrf.mxu0
    %v7522 = vadd.f32 0.0, %v7521
    %v7523 = vpop.f32.mrf.mxu0
    %v7524 = vadd.f32 0.0, %v7523
    %v7525 = vpop.f32.mrf.mxu0
    %v7526 = vadd.f32 0.0, %v7525
    %v7527 = vpop.f32.mrf.mxu0
    %v7528 = vadd.f32 0.0, %v7527
    %7529 = vmatprep.mubr.bf16.mxu0 %v7149
    %7530 = vmatmul.mubr.bf16.gmra.mxu0 %v7148
    %v7531 = vpop.f32.mrf.mxu0
    %v7532 = vadd.f32 0.0, %v7531
    %v7533 = vpop.f32.mrf.mxu0
    %v7534 = vadd.f32 0.0, %v7533
    %v7535 = vpop.f32.mrf.mxu0
    %v7536 = vadd.f32 0.0, %v7535
    %v7537 = vpop.f32.mrf.mxu0
    %v7538 = vadd.f32 0.0, %v7537
    %7539 = vdwg.mxu0
    %7540 = vmatprep.subr.bf16.mxu0 0
    %7541 = vmatpush1.bf16.msra.mxu0 0
    %7542 = vmatprep.subr.bf16.mxu0 0
    %7543 = vmatpush1.bf16.msra.mxu0 0
    %7544 = vmatprep.subr.bf16.mxu0 %v7370
    %7545 = vmatpush1.bf16.msra.mxu0 %v7369
    %7546 = vmatprep.subr.bf16.mxu0 %v7368
    %7547 = vmatpush1.bf16.msra.mxu0 %v7367
    %7548 = vmatprep.subr.bf16.mxu0 %v7366
    %7549 = vmatpush1.bf16.msra.mxu0 %v7365
    %7550 = vmatprep.subr.bf16.mxu0 %v7364
    %7551 = vmatpush1.bf16.msra.mxu0 %v7363
    %7552 = vmatprep.subr.bf16.mxu0 %v7362
    %7553 = vmatpush1.bf16.msra.mxu0 %v7361
    %7554 = vmatprep.subr.bf16.mxu0 %v7360
    %7555 = vmatpush1.bf16.msra.mxu0 %v7359
    %7556 = vmatprep.subr.bf16.mxu0 0
    %7557 = vmatpush2.bf16.msra.mxu0 0
    %7558 = vmatprep.subr.bf16.mxu0 0
    %7559 = vmatpush2.bf16.msra.mxu0 0
    %7560 = vmatprep.subr.bf16.mxu0 0
    %7561 = vmatpush2.bf16.msra.mxu0 0
    %7562 = vmatprep.subr.bf16.mxu0 0
    %7563 = vmatpush2.bf16.msra.mxu0 0
    %7564 = vmatprep.subr.bf16.mxu0 0
    %7565 = vmatpush2.bf16.msra.mxu0 0
    %7566 = vmatprep.subr.bf16.mxu0 0
    %7567 = vmatpush2.bf16.msra.mxu0 0
    %7568 = vmatprep.subr.bf16.mxu0 0
    %7569 = vmatpush2.bf16.msra.mxu0 0
    %7570 = vmatprep.subr.bf16.mxu0 0
    %7571 = vmatpush2.bf16.msra.mxu0 0
    %7572 = vmatprep.mubr.bf16.mxu0 0
    %7573 = vmatmul.mubr.bf16.gmra.mxu0 %v7417
    %v7574 = vpop.f32.mrf.mxu0
    %v7575 = vadd.f32 %v7472, %v7574
    %v7576 = vpop.f32.mrf.mxu0
    %v7577 = vadd.f32 %v7474, %v7576
    %v7578 = vpop.f32.mrf.mxu0
    %v7579 = vadd.f32 %v7476, %v7578
    %v7580 = vpop.f32.mrf.mxu0
    %v7581 = vadd.f32 %v7478, %v7580
    %7582 = vmatprep.mubr.bf16.mxu0 0
    %7583 = vmatmul.mubr.bf16.gmra.mxu0 %v7420
    %v7584 = vpop.f32.mrf.mxu0
    %v7585 = vadd.f32 %v7482, %v7584
    %v7586 = vpop.f32.mrf.mxu0
    %v7587 = vadd.f32 %v7484, %v7586
    %v7588 = vpop.f32.mrf.mxu0
    %v7589 = vadd.f32 %v7486, %v7588
    %v7590 = vpop.f32.mrf.mxu0
    %v7591 = vadd.f32 %v7488, %v7590
    %7592 = vmatprep.mubr.bf16.mxu0 0
    %7593 = vmatmul.mubr.bf16.gmra.mxu0 %v7423
    %v7594 = vpop.f32.mrf.mxu0
    %v7595 = vadd.f32 %v7492, %v7594
    %v7596 = vpop.f32.mrf.mxu0
    %v7597 = vadd.f32 %v7494, %v7596
    %v7598 = vpop.f32.mrf.mxu0
    %v7599 = vadd.f32 %v7496, %v7598
    %v7600 = vpop.f32.mrf.mxu0
    %v7601 = vadd.f32 %v7498, %v7600
    %7602 = vmatprep.mubr.bf16.mxu0 0
    %7603 = vmatmul.mubr.bf16.gmra.mxu0 %v7426
    %v7604 = vpop.f32.mrf.mxu0
    %v7605 = vadd.f32 %v7502, %v7604
    %v7606 = vpop.f32.mrf.mxu0
    %v7607 = vadd.f32 %v7504, %v7606
    %v7608 = vpop.f32.mrf.mxu0
    %v7609 = vadd.f32 %v7506, %v7608
    %v7610 = vpop.f32.mrf.mxu0
    %v7611 = vadd.f32 %v7508, %v7610
    %7612 = vmatprep.mubr.bf16.mxu0 0
    %7613 = vmatmul.mubr.bf16.gmra.mxu0 %v7429
    %v7614 = vpop.f32.mrf.mxu0
    %v7615 = vadd.f32 %v7512, %v7614
    %v7616 = vpop.f32.mrf.mxu0
    %v7617 = vadd.f32 %v7514, %v7616
    %v7618 = vpop.f32.mrf.mxu0
    %v7619 = vadd.f32 %v7516, %v7618
    %v7620 = vpop.f32.mrf.mxu0
    %v7621 = vadd.f32 %v7518, %v7620
    %7622 = vmatprep.mubr.bf16.mxu0 0
    %7623 = vmatmul.mubr.bf16.gmra.mxu0 %v7432
    %v7624 = vpop.f32.mrf.mxu0
    %v7625 = vadd.f32 %v7522, %v7624
    %v7626 = vpop.f32.mrf.mxu0
    %v7627 = vadd.f32 %v7524, %v7626
    %v7628 = vpop.f32.mrf.mxu0
    %v7629 = vadd.f32 %v7526, %v7628
    %v7630 = vpop.f32.mrf.mxu0
    %v7631 = vadd.f32 %v7528, %v7630
    %7632 = vmatprep.mubr.bf16.mxu0 0
    %7633 = vmatmul.mubr.bf16.gmra.mxu0 %v7435
    %v7634 = vpop.f32.mrf.mxu0
    %v7635 = vadd.f32 %v7532, %v7634
    %v7636 = vpop.f32.mrf.mxu0
    %v7637 = vadd.f32 %v7534, %v7636
    %v7638 = vpop.f32.mrf.mxu0
    %v7639 = vadd.f32 %v7536, %v7638
    %v7640 = vpop.f32.mrf.mxu0
    %v7641 = vadd.f32 %v7538, %v7640
    %7642 = vdwg.mxu0
    %v7643 = vpack.c.bf16 %v7579, %v7575
    %v7644 = vpack.c.bf16 %v7581, %v7577
    %v7645 = vpack.c.bf16 %v7589, %v7585
    %v7646 = vpack.c.bf16 %v7591, %v7587
    %v7647 = vpack.c.bf16 %v7599, %v7595
    %v7648 = vpack.c.bf16 %v7601, %v7597
    %v7649 = vpack.c.bf16 %v7609, %v7605
    %v7650 = vpack.c.bf16 %v7611, %v7607
    %v7651 = vpack.c.bf16 %v7619, %v7615
    %v7652 = vpack.c.bf16 %v7621, %v7617
    %v7653 = vpack.c.bf16 %v7629, %v7625
    %v7654 = vpack.c.bf16 %v7631, %v7627
    %v7655 = vpack.c.bf16 %v7639, %v7635
    %v7656 = vpack.c.bf16 %v7641, %v7637
    %v7658 = vshrl.u32 %v7643, 16
    %v7660 = vshll.u32 %v7643, 16
    %v7662 = vrot.slane %v7660, 1
    %v7663 = vor.u32 %v7658, %v7662
    %v7665 = vshll.u32 %v7645, 16
    %v7667 = vrot.slane %v7665, 1
    %v7668 = vsel %vm97, %v7663, %v7667
    %v7670 = vshrl.u32 %v7644, 16
    %v7672 = vshll.u32 %v7644, 16
    %v7674 = vrot.slane %v7672, 1
    %v7675 = vor.u32 %v7670, %v7674
    %v7677 = vshll.u32 %v7646, 16
    %v7679 = vrot.slane %v7677, 1
    %v7680 = vsel %vm97, %v7675, %v7679
    %v7681 = vshrl.u32 %v7645, 16
    %v7683 = vor.u32 %v7681, %v7667
    %v7685 = vshll.u32 %v7647, 16
    %v7687 = vrot.slane %v7685, 1
    %v7688 = vsel %vm97, %v7683, %v7687
    %v7689 = vshrl.u32 %v7646, 16
    %v7691 = vor.u32 %v7689, %v7679
    %v7693 = vshll.u32 %v7648, 16
    %v7695 = vrot.slane %v7693, 1
    %v7696 = vsel %vm97, %v7691, %v7695
    %v7697 = vshrl.u32 %v7647, 16
    %v7699 = vor.u32 %v7697, %v7687
    %v7701 = vshll.u32 %v7649, 16
    %v7703 = vrot.slane %v7701, 1
    %v7704 = vsel %vm97, %v7699, %v7703
    %v7705 = vshrl.u32 %v7648, 16
    %v7707 = vor.u32 %v7705, %v7695
    %v7709 = vshll.u32 %v7650, 16
    %v7711 = vrot.slane %v7709, 1
    %v7712 = vsel %vm97, %v7707, %v7711
    %v7713 = vshrl.u32 %v7649, 16
    %v7715 = vor.u32 %v7713, %v7703
    %v7717 = vshll.u32 %v7651, 16
    %v7719 = vrot.slane %v7717, 1
    %v7720 = vsel %vm97, %v7715, %v7719
    %v7721 = vshrl.u32 %v7650, 16
    %v7723 = vor.u32 %v7721, %v7711
    %v7725 = vshll.u32 %v7652, 16
    %v7727 = vrot.slane %v7725, 1
    %v7728 = vsel %vm97, %v7723, %v7727
    %v7729 = vshrl.u32 %v7651, 16
    %v7731 = vor.u32 %v7729, %v7719
    %v7733 = vshll.u32 %v7653, 16
    %v7735 = vrot.slane %v7733, 1
    %v7736 = vsel %vm97, %v7731, %v7735
    %v7737 = vshrl.u32 %v7652, 16
    %v7739 = vor.u32 %v7737, %v7727
    %v7741 = vshll.u32 %v7654, 16
    %v7743 = vrot.slane %v7741, 1
    %v7744 = vsel %vm97, %v7739, %v7743
    %v7745 = vshrl.u32 %v7653, 16
    %v7747 = vor.u32 %v7745, %v7735
    %v7749 = vshll.u32 %v7655, 16
    %v7751 = vrot.slane %v7749, 1
    %v7752 = vsel %vm97, %v7747, %v7751
    %v7753 = vshrl.u32 %v7654, 16
    %v7755 = vor.u32 %v7753, %v7743
    %v7757 = vshll.u32 %v7656, 16
    %v7759 = vrot.slane %v7757, 1
    %v7760 = vsel %vm97, %v7755, %v7759
    %v7761 = vshrl.u32 %v7655, 16
    %v7763 = vor.u32 %v7761, %v7751
    %v7764 = vshrl.u32 %v7656, 16
    %v7766 = vor.u32 %v7764, %v7759
    %v7781 = vsel %vm155, %v7763, 0
    %v7782 = vsel %vm155, %v7766, 0
    %v7783 = vmax.bf16 %v7643, %v7668
    %v7784 = vmax.bf16 %v7644, %v7680
    %v7785 = vmax.bf16 %v7645, %v7688
    %v7786 = vmax.bf16 %v7646, %v7696
    %v7787 = vmax.bf16 %v7647, %v7704
    %v7788 = vmax.bf16 %v7648, %v7712
    %v7789 = vmax.bf16 %v7649, %v7720
    %v7790 = vmax.bf16 %v7650, %v7728
    %v7791 = vmax.bf16 %v7651, %v7736
    %v7792 = vmax.bf16 %v7652, %v7744
    %v7793 = vmax.bf16 %v7653, %v7752
    %v7794 = vmax.bf16 %v7654, %v7760
    %v7795 = vmax.bf16 %v7655, %v7781
    %v7796 = vmax.bf16 %v7656, %v7782
    %v7797 = vld [vmem:[%s7] sm:$0xf]
    %v7798 = vld [vmem:[%s7 + $0x4] sm:$0xf]
    %v7799 = vld [vmem:[%s7 + $0x8] sm:$0xf]
    %v7800 = vld [vmem:[%s7 + $0xc] sm:$0xf]
    %v7805 = vunpack.c.l.b16 %v7797
    %v7806 = vunpack.c.l.b16 %v7798
    %v7807 = vunpack.c.l.b16 %v7799
    %v7808 = vunpack.c.l.b16 %v7800
    %v7809 = vpack.c.b16 %v7806, %v7805
    %v7810 = vpack.c.b16 %v7808, %v7807
    %vm7811 = vcmask 916480
    %v7813 = vsel %vm7811, %v7809, 0
    %v7816 = vsel %vm7811, %v7810, 0
    %7818 = vmatprep.subr.bf16.mxu0 0
    %7819 = vmatpush1.bf16.msra.mxu0 0
    %7820 = vmatprep.subr.bf16.mxu0 %v7796
    %7821 = vmatpush1.bf16.msra.mxu0 %v7795
    %7822 = vmatprep.subr.bf16.mxu0 %v7794
    %7823 = vmatpush1.bf16.msra.mxu0 %v7793
    %7824 = vmatprep.subr.bf16.mxu0 %v7792
    %7825 = vmatpush1.bf16.msra.mxu0 %v7791
    %7826 = vmatprep.subr.bf16.mxu0 %v7790
    %7827 = vmatpush1.bf16.msra.mxu0 %v7789
    %7828 = vmatprep.subr.bf16.mxu0 %v7788
    %7829 = vmatpush1.bf16.msra.mxu0 %v7787
    %7830 = vmatprep.subr.bf16.mxu0 %v7786
    %7831 = vmatpush1.bf16.msra.mxu0 %v7785
    %7832 = vmatprep.subr.bf16.mxu0 %v7784
    %7833 = vmatpush1.bf16.msra.mxu0 %v7783
    %7834 = vmatprep.subr.bf16.mxu0 0
    %7835 = vmatpush2.bf16.msra.mxu0 0
    %7836 = vmatprep.subr.bf16.mxu0 0
    %7837 = vmatpush2.bf16.msra.mxu0 0
    %7838 = vmatprep.subr.bf16.mxu0 0
    %7839 = vmatpush2.bf16.msra.mxu0 0
    %7840 = vmatprep.subr.bf16.mxu0 0
    %7841 = vmatpush2.bf16.msra.mxu0 0
    %7842 = vmatprep.subr.bf16.mxu0 0
    %7843 = vmatpush2.bf16.msra.mxu0 0
    %7844 = vmatprep.subr.bf16.mxu0 0
    %7845 = vmatpush2.bf16.msra.mxu0 0
    %7846 = vmatprep.subr.bf16.mxu0 0
    %7847 = vmatpush2.bf16.msra.mxu0 0
    %7848 = vmatprep.subr.bf16.mxu0 0
    %7849 = vmatpush2.bf16.msra.mxu0 0
    %7850 = vmatprep.mubr.bf16.mxu0 0
    %7851 = vmatmul.mubr.bf16.gmra.mxu0 %v7813
    %v7852 = vpop.f32.mrf.mxu0
    %v7853 = vadd.f32 0.0, %v7852
    %v7854 = vpop.f32.mrf.mxu0
    %v7855 = vadd.f32 0.0, %v7854
    %v7856 = vpop.f32.mrf.mxu0
    %v7857 = vadd.f32 0.0, %v7856
    %v7858 = vpop.f32.mrf.mxu0
    %v7859 = vadd.f32 0.0, %v7858
    %7860 = vmatprep.mubr.bf16.mxu0 0
    %7861 = vmatmul.mubr.bf16.gmra.mxu0 %v7816
    %v7862 = vpop.f32.mrf.mxu0
    %v7863 = vadd.f32 0.0, %v7862
    %v7864 = vpop.f32.mrf.mxu0
    %v7865 = vadd.f32 0.0, %v7864
    %v7866 = vpop.f32.mrf.mxu0
    %v7867 = vadd.f32 0.0, %v7866
    %v7868 = vpop.f32.mrf.mxu0
    %v7869 = vadd.f32 0.0, %v7868
    %7870 = vdwg.mxu0
    %v7871 = vpack.c.bf16 %v7857, %v7853
    %v7872 = vpack.c.bf16 %v7859, %v7855
    %v7873 = vpack.c.bf16 %v7867, %v7863
    %v7874 = vpack.c.bf16 %v7869, %v7865
    %v7875 = vld [vmem:[%s8] sm:$0xf]
    %v7876 = vld [vmem:[%s8 + $0x4] sm:$0xf]
    %v7877 = vld [vmem:[%s8 + $0x8] sm:$0xf]
    %v7878 = vld [vmem:[%s8 + $0xc] sm:$0xf]
    %v7879 = vld [vmem:[%s8 + $0x10] sm:$0xf]
    %v7880 = vld [vmem:[%s8 + $0x14] sm:$0xf]
    %v7881 = vld [vmem:[%s8 + $0x18] sm:$0xf]
    %v7882 = vld [vmem:[%s8 + $0x1c] sm:$0xf]
    %v7883 = vld [vmem:[%s8 + $0x20] sm:$0xf]
    %v7884 = vld [vmem:[%s8 + $0x24] sm:$0xf]
    %v7885 = vld [vmem:[%s8 + $0x28] sm:$0xf]
    %v7886 = vld [vmem:[%s8 + $0x2c] sm:$0xf]
    %v7887 = vld [vmem:[%s8 + $0x30] sm:$0xf]
    %v7888 = vld [vmem:[%s8 + $0x34] sm:$0xf]
    %v7889 = vld [vmem:[%s8 + $0x38] sm:$0xf]
    %v7890 = vld [vmem:[%s8 + $0x3c] sm:$0xf]
    %v7891 = vld [vmem:[%s8 + $0x40] sm:$0xf]
    %v7892 = vld [vmem:[%s8 + $0x44] sm:$0xf]
    %v7893 = vld [vmem:[%s8 + $0x48] sm:$0xf]
    %v7894 = vld [vmem:[%s8 + $0x4c] sm:$0xf]
    %v7915 = vunpack.c.l.b16 %v7875
    %v7916 = vunpack.c.l.b16 %v7876
    %v7917 = vunpack.c.l.b16 %v7877
    %v7918 = vunpack.c.l.b16 %v7878
    %v7919 = vunpack.c.l.b16 %v7879
    %v7920 = vunpack.c.l.b16 %v7880
    %v7921 = vunpack.c.l.b16 %v7881
    %v7922 = vunpack.c.l.b16 %v7882
    %v7923 = vunpack.c.l.b16 %v7883
    %v7924 = vunpack.c.l.b16 %v7884
    %v7925 = vunpack.c.l.b16 %v7885
    %v7926 = vunpack.c.l.b16 %v7886
    %v7927 = vunpack.c.l.b16 %v7887
    %v7928 = vunpack.c.l.b16 %v7888
    %v7929 = vunpack.c.l.b16 %v7889
    %v7930 = vunpack.c.l.b16 %v7890
    %v7931 = vunpack.c.l.b16 %v7891
    %v7932 = vunpack.c.l.b16 %v7892
    %v7933 = vunpack.c.l.b16 %v7893
    %v7934 = vunpack.c.l.b16 %v7894
    %v7935 = vpack.c.b16 %v7916, %v7915
    %v7936 = vpack.c.b16 %v7918, %v7917
    %v7937 = vpack.c.b16 %v7920, %v7919
    %v7938 = vpack.c.b16 %v7922, %v7921
    %v7939 = vpack.c.b16 %v7924, %v7923
    %v7940 = vpack.c.b16 %v7926, %v7925
    %v7941 = vpack.c.b16 %v7928, %v7927
    %v7942 = vpack.c.b16 %v7930, %v7929
    %v7943 = vpack.c.b16 %v7932, %v7931
    %v7944 = vpack.c.b16 %v7934, %v7933
    %vm7955 = vcmask 261120
    %v7957 = vsel %vm7955, %v7872, 0
    %v7960 = vsel %vm7955, %v7874, 0
    %7962 = vmatprep.subr.bf16.mxu0 0
    %7963 = vmatpush1.bf16.msra.mxu0 %v7942
    %7964 = vmatprep.subr.bf16.mxu0 0
    %7965 = vmatpush1.bf16.msra.mxu0 %v7941
    %7966 = vmatprep.subr.bf16.mxu0 0
    %7967 = vmatpush1.bf16.msra.mxu0 %v7940
    %7968 = vmatprep.subr.bf16.mxu0 0
    %7969 = vmatpush1.bf16.msra.mxu0 %v7939
    %7970 = vmatprep.subr.bf16.mxu0 0
    %7971 = vmatpush1.bf16.msra.mxu0 %v7938
    %7972 = vmatprep.subr.bf16.mxu0 0
    %7973 = vmatpush1.bf16.msra.mxu0 %v7937
    %7974 = vmatprep.subr.bf16.mxu0 0
    %7975 = vmatpush1.bf16.msra.mxu0 %v7936
    %7976 = vmatprep.subr.bf16.mxu0 0
    %7977 = vmatpush1.bf16.msra.mxu0 %v7935
    %7978 = vmatprep.subr.bf16.mxu0 0
    %7979 = vmatpush2.bf16.msra.mxu0 0
    %7980 = vmatprep.subr.bf16.mxu0 0
    %7981 = vmatpush2.bf16.msra.mxu0 0
    %7982 = vmatprep.subr.bf16.mxu0 0
    %7983 = vmatpush2.bf16.msra.mxu0 0
    %7984 = vmatprep.subr.bf16.mxu0 0
    %7985 = vmatpush2.bf16.msra.mxu0 0
    %7986 = vmatprep.subr.bf16.mxu0 0
    %7987 = vmatpush2.bf16.msra.mxu0 0
    %7988 = vmatprep.subr.bf16.mxu0 0
    %7989 = vmatpush2.bf16.msra.mxu0 0
    %7990 = vmatprep.subr.bf16.mxu0 0
    %7991 = vmatpush2.bf16.msra.mxu0 %v7944
    %7992 = vmatprep.subr.bf16.mxu0 0
    %7993 = vmatpush2.bf16.msra.mxu0 %v7943
    %7994 = vmatprep.mubr.bf16.mxu0 %v7957
    %7995 = vmatmul.mubr.bf16.gmra.mxu0 %v7871
    %v7996 = vpop.f32.mrf.mxu0
    %v7997 = vadd.f32 0.0, %v7996
    %v7998 = vpop.f32.mrf.mxu0
    %v7999 = vpop.f32.mrf.mxu0
    %v8000 = vadd.f32 0.0, %v7999
    %v8001 = vpop.f32.mrf.mxu0
    %8002 = vmatprep.mubr.bf16.mxu0 %v7960
    %8003 = vmatmul.mubr.bf16.gmra.mxu0 %v7873
    %v8004 = vpop.f32.mrf.mxu0
    %v8005 = vadd.f32 0.0, %v8004
    %v8006 = vpop.f32.mrf.mxu0
    %v8007 = vpop.f32.mrf.mxu0
    %v8008 = vadd.f32 0.0, %v8007
    %v8009 = vpop.f32.mrf.mxu0
    %8010 = vdwg.mxu0
    %8011 = vst [vmem:[#allocation2] sm:$0xff] %v7997
    %8012 = vst [vmem:[#allocation2 + $0x8] sm:$0xff] %v8000
    %8013 = vst [vmem:[#allocation2 + $0x10] sm:$0xff] %v8005
    %8014 = vst [vmem:[#allocation2 + $0x18] sm:$0xff] %v8008
    // Predicated region
    $region38: #{tpu_custom_call.1} parent=1 // pred_check
      _
    $region39: #{tpu_custom_call.1} parent=1 // pred_check_branch
      %8016 = sbr.rel (0) target = $region41
    $region40: #{tpu_custom_call.1} parent=1 // pred_region
      %s8018 = ssub.s32 512, 512
      %8019 = vsyncadd [#allocation3], %s8018
      %s8020 = sshll.u32 [#allocation2], 4
      %s8021 = int_to_ptr.vmem [resolvable:$true] %s8020
      %8026 = dma.vmem_to_hbm [thread:$0]  %s8021, 512, %s9, [#allocation3], 128, 128, 8
    $region41: #{tpu_custom_call.1} parent=1 // pred_fallthru
      _
    // Predicated region
    $region42: #{tpu_custom_call.1} parent=1 // pred_check
      _
    $region43: #{tpu_custom_call.1} parent=1 // pred_check_branch
      %8028 = sbr.rel (0) target = $region45
    $region44: #{tpu_custom_call.1} parent=1 // pred_region
      %8029 = dma.done [#allocation3], 512
    $region45: #{tpu_custom_call.1} parent=1 // pred_fallthru
      _
    %8030 = vsyncpa [#allocation3], 1

</llo_original>
